<compile_context>
chip_gen: v7x
topology: tpu7x:2x2x1
jax: 0.10.0
libtpu: 0.0.40
codegen_flags: <defaults>
</compile_context>

<pallas_src>
import functools

import jax
import jax.numpy as jnp
import numpy as np
from jax.experimental import pallas as pl
from jax.experimental.pallas import tpu as pltpu


# ---------------------------------------------------------------------------
# Pallas kernel: one (batch_block, time_block) grid step of the recurrence
# ---------------------------------------------------------------------------
def mann_kernel(xin_ref, w_hh_ref, w_r_ref, wkk_ref, h0_ref, c0_ref, r0_ref,
                out_ref,
                h_s, r_s, c_s, mem_s,
                *, cdim, M, read_first, time_block):
    bf16, f32 = jnp.bfloat16, jnp.float32
    Tt = time_block
    Gw = 4 * cdim
    v_base = Tt * Gw          # lane offset of the packed per-block v chunk
    r_base = Tt * cdim        # lane offset of the packed per-block r output chunk

    # ---- (re)initialize recurrent state at the start of each batch block ----
    @pl.when(pl.program_id(1) == 0)
    def _init():
        h_s[...] = h0_ref[...]
        r_s[...] = r0_ref[...]
        c_s[...] = c0_ref[...]
        mem_s[...] = jnp.zeros_like(mem_s)    # reset_mem(bsz) -> zeros

    # ---- weights, loaded once per grid step (bf16 MXU operands) -------------
    w_hh = w_hh_ref[...]          # (cdim, 4*cdim)
    w_r = w_r_ref[...]            # (M,    4*cdim)
    wkk = wkk_ref[...]            # (cdim, 2*M) = [wk | wkw]

    # ---- state carried in registers across the unrolled time loop -----------
    h = h_s[...]                  # (Bb, cdim)
    r = r_s[...]                  # (Bb, M)
    c = c_s[...]                  # (Bb, cdim)
    mem = mem_s[...]              # (Bb, N, M)

    def att_weights(mem_, key):
        # Content attention over N slots: VPU broadcast-mul + lane reduce over M,
        # softmax with EUP exp + approximate reciprocal.  No MXU involvement.
        s = jnp.sum(mem_ * key[:, None, :], axis=-1)                  # (Bb, N)
        m_ = jnp.max(s, axis=-1, keepdims=True)
        e = jnp.exp(s - m_)
        inv = pl.reciprocal(jnp.sum(e, axis=-1, keepdims=True), approx=True)
        return e * inv                                                 # (Bb, N)

    for tt in range(Tt):          # fully unrolled; all lane offsets are static
        gate_x = xin_ref[:, tt * Gw:(tt + 1) * Gw]                     # (Bb, 4c)
        v_t = xin_ref[:, v_base + tt * M: v_base + (tt + 1) * M]       # (Bb, M)

        # LSTM cell (PyTorch gate order i, f, g, o).  Two small recurrent
        # matmuls so the h-part can issue before r (the late value) is ready.
        gates = (gate_x
                 + jnp.dot(h.astype(bf16), w_hh, preferred_element_type=f32)
                 + jnp.dot(r.astype(bf16), w_r, preferred_element_type=f32))
        sig = jax.nn.sigmoid(gates)     # full-width EUP pass
        th = jnp.tanh(gates)            # full-width EUP pass
        i_g = sig[:, 0 * cdim:1 * cdim]
        f_g = sig[:, 1 * cdim:2 * cdim]
        g_g = th[:, 2 * cdim:3 * cdim]
        o_g = sig[:, 3 * cdim:4 * cdim]
        c = f_g * c + i_g * g_g
        h = o_g * jnp.tanh(c)

        # Fused read/write key projection; lane-split afterwards.
        keys = jnp.dot(h.astype(bf16), wkk, preferred_element_type=f32)  # (Bb, 2M)
        k_r = keys[:, :M]
        k_w = keys[:, M:]

        if read_first:
            a_r = att_weights(mem, k_r)          # both attentions share `mem`
            a_w = att_weights(mem, k_w)
            r = jnp.sum(a_r[:, :, None] * mem, axis=1)                 # (Bb, M)
            mem = mem + a_w[:, :, None] * v_t[:, None, :]
        else:
            a_w = att_weights(mem, k_w)
            mem = mem + a_w[:, :, None] * v_t[:, None, :]
            a_r = att_weights(mem, k_r)
            r = jnp.sum(a_r[:, :, None] * mem, axis=1)

        # Packed lane-dense output block: [h_0..h_{Tt-1} | r_0..r_{Tt-1}];
        # the whole (Bb, Tt*(cdim+M)) block is one dense DMA per grid step.
        out_ref[:, tt * cdim:(tt + 1) * cdim] = h
        out_ref[:, r_base + tt * M: r_base + (tt + 1) * M] = r

    # Persist state for the next time block (once per block, not per step).
    h_s[...] = h
    r_s[...] = r
    c_s[...] = c
    mem_s[...] = mem


# ---------------------------------------------------------------------------
# Wrapper
# ---------------------------------------------------------------------------
def mann_forward(embs, params, *, N, M, cdim, read_first=True,
                 time_block=8, batch_block=8):
    T, B, idim = embs.shape
    f32, bf16 = jnp.float32, jnp.bfloat16
    embs = embs.astype(f32)

    Bb, Tt = batch_block, time_block
    assert Bb % 8 == 0, "batch_block must be a multiple of 8 (f32 sublanes)"
    Gw = 4 * cdim
    feat = Gw + M
    C = cdim + M
    assert (Tt * feat) % 128 == 0 and (Tt * C) % 128 == 0, (
        "packed lane widths must be multiples of 128 "
        "(choose cdim, M multiples of 16 and time_block a multiple of 8)")

    Bp = pl.cdiv(B, Bb) * Bb
    Tp = pl.cdiv(T, Tt) * Tt
    nt = Tp // Tt

    w_ih = params["w_ih"].astype(f32)                        # (4c, idim+M)
    w_hh = params["w_hh"].astype(f32)                        # (4c, cdim)
    bias = (params["b_ih"] + params["b_hh"]).astype(f32)     # (4c,)

    w_emb_t = w_ih[:, :idim].T                               # (idim, 4c)
    w_r_t = w_ih[:, idim:].T.astype(bf16)                    # (M, 4c)
    w_hh_t = w_hh.T.astype(bf16)                             # (cdim, 4c)
    wkk = jnp.concatenate([params["wk"], params["wkw"]], axis=1).astype(bf16)

    # Hoisted per-timestep projections (bf16 MXU operands, f32 accumulation).
    gate_x = jnp.einsum("tbi,ic->tbc", embs.astype(bf16), w_emb_t.astype(bf16),
                        preferred_element_type=f32) + bias             # (T, B, 4c)
    v_all = jnp.einsum("tbi,im->tbm", embs.astype(bf16),
                       params["wv"].astype(bf16),
                       preferred_element_type=f32)                     # (T, B, M)

    # Pad batch/time to block multiples (padded rows/steps are discarded).
    gate_x = jnp.pad(gate_x, ((0, Tp - T), (0, Bp - B), (0, 0)))
    v_all = jnp.pad(v_all, ((0, Tp - T), (0, Bp - B), (0, 0)))

    # Pack into ONE lane-dense streamed input (Bp, Tp*feat).  Per time block:
    # [gate_x_0 .. gate_x_{Tt-1} | v_0 .. v_{Tt-1}] along lanes, so in-kernel
    # gate_x loads are 128-lane aligned and each grid step is a single dense DMA.
    gx_p = gate_x.reshape(nt, Tt, Bp, Gw).transpose(2, 0, 1, 3).reshape(Bp, nt, Tt * Gw)
    vv_p = v_all.reshape(nt, Tt, Bp, M).transpose(2, 0, 1, 3).reshape(Bp, nt, Tt * M)
    xin = jnp.concatenate([gx_p, vv_p], axis=-1).reshape(Bp, nt * Tt * feat)

    h0b = jnp.broadcast_to(params["h0"].reshape(1, cdim).astype(f32), (Bb, cdim))
    c0b = jnp.broadcast_to(params["c0"].reshape(1, cdim).astype(f32), (Bb, cdim))
    r0b = jnp.broadcast_to(params["r0"].reshape(1, M).astype(f32), (Bb, M))

    grid = (Bp // Bb, nt)   # (parallel batch blocks, sequential time blocks)

    # VMEM budget from actual block shapes, capped by device VMEM capacity.
    def nbytes(shape, dt):
        return int(np.prod(shape)) * jnp.dtype(dt).itemsize
    vmem_est = (
        2 * nbytes((Bb, Tt * feat), f32)          # streamed input (double-buffered)
        + 2 * nbytes((Bb, Tt * C), f32)           # streamed output (double-buffered)
        + nbytes((cdim, Gw), bf16) + nbytes((M, Gw), bf16) + nbytes((cdim, 2 * M), bf16)
        + 4 * nbytes((Bb, cdim), f32) + 2 * nbytes((Bb, M), f32)
        + nbytes((Bb, N, M), f32))
    try:
        vmem_cap = int(pltpu.get_tpu_info().vmem_capacity_bytes)
    except Exception:
        vmem_cap = 64 * 1024 * 1024               # v7x-safe fallback
    vmem_limit = int(min(max(4 * vmem_est, 8 * 1024 * 1024), (vmem_cap * 3) // 5))

    kernel = functools.partial(mann_kernel, cdim=cdim, M=M,
                               read_first=read_first, time_block=Tt)

    out_packed = pl.pallas_call(
        kernel,
        grid=grid,
        out_shape=jax.ShapeDtypeStruct((Bp, nt * Tt * C), f32),
        in_specs=[
            pl.BlockSpec((Bb, Tt * feat), lambda b, t: (b, t)),     # packed [gate_x|v]
            pl.BlockSpec((cdim, Gw), lambda b, t: (0, 0)),          # w_hh^T (bf16)
            pl.BlockSpec((M, Gw), lambda b, t: (0, 0)),             # w_r^T  (bf16)
            pl.BlockSpec((cdim, 2 * M), lambda b, t: (0, 0)),       # [wk|wkw] (bf16)
            pl.BlockSpec((Bb, cdim), lambda b, t: (0, 0)),          # h0
            pl.BlockSpec((Bb, cdim), lambda b, t: (0, 0)),          # c0
            pl.BlockSpec((Bb, M), lambda b, t: (0, 0)),             # r0
        ],
        out_specs=pl.BlockSpec((Bb, Tt * C), lambda b, t: (b, t)),
        scratch_shapes=[
            pltpu.VMEM((Bb, cdim), jnp.float32),   # h
            pltpu.VMEM((Bb, M), jnp.float32),      # r
            pltpu.VMEM((Bb, cdim), jnp.float32),   # c
            pltpu.VMEM((Bb, N, M), jnp.float32),   # external memory
        ],
        compiler_params=pltpu.CompilerParams(
            dimension_semantics=("parallel", "arbitrary"),
            vmem_limit_bytes=vmem_limit),
    )(xin, w_hh_t, w_r_t, wkk, h0b, c0b, r0b)

    # Unpack (Bp, nt*Tt*(cdim+M)) -> (T, B, cdim+M); drop padding.
    chunks = out_packed.reshape(Bp, nt, Tt * C)
    h_part = chunks[:, :, :Tt * cdim].reshape(Bp, nt, Tt, cdim)
    r_part = chunks[:, :, Tt * cdim:].reshape(Bp, nt, Tt, M)
    h_part = h_part.transpose(1, 2, 0, 3).reshape(Tp, Bp, cdim)
    r_part = r_part.transpose(1, 2, 0, 3).reshape(Tp, Bp, M)
    return jnp.concatenate([h_part, r_part], axis=-1)[:T, :B]


# ---------------------------------------------------------------------------
# Pure-JAX reference (mirrors the PyTorch forward; identical hoisted bf16
# projections and bf16 recurrent-matmul operands so only the approximate
# reciprocal / reduce order differ from the kernel)
# ---------------------------------------------------------------------------
def mann_forward_ref(embs, params, *, N, M, cdim, read_first=True):
    T, B, idim = embs.shape
    f32, bf16 = jnp.float32, jnp.bfloat16
    embs = embs.astype(f32)

    w_ih, w_hh = params["w_ih"].astype(f32), params["w_hh"].astype(f32)
    bias = (params["b_ih"] + params["b_hh"]).astype(f32)
    w_emb_t = w_ih[:, :idim].T
    w_r_t = w_ih[:, idim:].T
    w_hh_t = w_hh.T
    wk, wkw, wv = params["wk"], params["wkw"], params["wv"]

    def mm(a, b):
        return jnp.dot(a.astype(bf16), b.astype(bf16), preferred_element_type=f32)

    gate_x_all = jnp.einsum("tbi,ic->tbc", embs.astype(bf16), w_emb_t.astype(bf16),
                            preferred_element_type=f32) + bias
    v_all = jnp.einsum("tbi,im->tbm", embs.astype(bf16), wv.astype(bf16),
                       preferred_element_type=f32)

    h = jnp.broadcast_to(params["h0"].reshape(1, cdim), (B, cdim)).astype(f32)
    c = jnp.broadcast_to(params["c0"].reshape(1, cdim), (B, cdim)).astype(f32)
    r = jnp.broadcast_to(params["r0"].reshape(1, M), (B, M)).astype(f32)
    mem = jnp.zeros((B, N, M), f32)

    def att(mem_, k):
        s = jnp.sum(mem_ * k[:, None, :], axis=-1)
        return jax.nn.softmax(s, axis=-1)

    outs = []
    for t in range(T):
        gates = gate_x_all[t] + mm(h, w_hh_t) + mm(r, w_r_t)
        i_g = jax.nn.sigmoid(gates[:, :cdim])
        f_g = jax.nn.sigmoid(gates[:, cdim:2 * cdim])
        g_g = jnp.tanh(gates[:, 2 * cdim:3 * cdim])
        o_g = jax.nn.sigmoid(gates[:, 3 * cdim:])
        c = f_g * c + i_g * g_g
        h = o_g * jnp.tanh(c)

        k_r = mm(h, wk)
        k_w = mm(h, wkw)
        v = v_all[t]

        if read_first:
            a_r = att(mem, k_r)
            r = jnp.sum(a_r[:, :, None] * mem, axis=1)
            a_w = att(mem, k_w)
            mem = mem + a_w[:, :, None] * v[:, None, :]
        else:
            a_w = att(mem, k_w)
            mem = mem + a_w[:, :, None] * v[:, None, :]
            a_r = att(mem, k_r)
            r = jnp.sum(a_r[:, :, None] * mem, axis=1)
        outs.append(jnp.concatenate([h, r], axis=-1))
    return jnp.stack(outs, axis=0)


# ---------------------------------------------------------------------------
# Deterministic parameter construction (mirrors __init__ / _reset_controller)
# ---------------------------------------------------------------------------
def make_params(key, idim, cdim, N, M):
    ks = jax.random.split(key, 8)
    stdev = 5.0 / np.sqrt(idim + M + cdim)
    return {
        "w_ih": jax.random.uniform(ks[0], (4 * cdim, idim + M),
                                   minval=-stdev, maxval=stdev, dtype=jnp.float32),
        "w_hh": jax.random.uniform(ks[1], (4 * cdim, cdim),
                                   minval=-stdev, maxval=stdev, dtype=jnp.float32),
        "b_ih": jnp.zeros((4 * cdim,), jnp.float32),      # constant_(p, 0)
        "b_hh": jnp.zeros((4 * cdim,), jnp.float32),
        "h0": jax.random.normal(ks[2], (1, 1, cdim), jnp.float32) * 0.05,
        "c0": jax.random.normal(ks[3], (1, 1, cdim), jnp.float32) * 0.05,
        "r0": jax.random.normal(ks[4], (1, M), jnp.float32) * 0.02,
        # TODO(synk): read()/write()/reset_mem() are abstract in MANNBaseEncoder;
        # these projections implement a concrete NTM-style content-addressed memory.
        "wk": jax.random.normal(ks[5], (cdim, M), jnp.float32) * 0.1,
        "wkw": jax.random.normal(ks[6], (cdim, M), jnp.float32) * 0.1,
        "wv": jax.random.normal(ks[7], (idim, M), jnp.float32) * 0.1,
    }


if __name__ == "__main__":
    # T=10 steps (padded to 16 -> 2 time blocks), batch=12 (padded to 16 ->
    # 2 parallel batch blocks of 8), idim=16, cdim=32 (4*cdim = 128 lanes),
    # N=8 memory slots, M=16.
    T, B, idim, cdim, N, M = 10, 12, 16, 32, 8, 16
    read_first = True

    key = jax.random.PRNGKey(0)
    k_emb, k_par = jax.random.split(key)
    embs = jax.random.normal(k_emb, (T, B, idim), jnp.float32)   # (T, B, idim)
    params = make_params(k_par, idim, cdim, N, M)

    out = mann_forward(embs, params, N=N, M=M, cdim=cdim, read_first=read_first,
                       time_block=8, batch_block=8)
    out = jax.block_until_ready(out)

    ref = mann_forward_ref(embs, params, N=N, M=M, cdim=cdim, read_first=read_first)
    ref = jax.block_until_ready(ref)

    assert out.shape == (T, B, cdim + M), out.shape
    assert np.all(np.isfinite(np.asarray(out)))
    # Kernel uses bf16 MXU operands (f32 accumulation) and an EUP approximate
    # reciprocal in the softmax; the reference matches the bf16 matmul numerics,
    # leaving only approx-reciprocal / reduce-order error.
    np.testing.assert_allclose(np.asarray(out), np.asarray(ref), rtol=2e-2, atol=2e-2)

    print("KERNEL_OK")
</pallas_src>

<mosaic_0001>
module attributes {stable_mosaic.version = 11 : i64} {
  func.func @mann_kernel(%arg0: i32, %arg1: i32, %arg2: memref<8x1152xf32, #tpu.memory_space<vmem>>, %arg3: memref<32x128xbf16, #tpu.memory_space<vmem>>, %arg4: memref<16x128xbf16, #tpu.memory_space<vmem>>, %arg5: memref<32x32xbf16, #tpu.memory_space<vmem>>, %arg6: memref<8x32xf32, #tpu.memory_space<vmem>>, %arg7: memref<8x32xf32, #tpu.memory_space<vmem>>, %arg8: memref<8x16xf32, #tpu.memory_space<vmem>>, %arg9: memref<8x384xf32, #tpu.memory_space<vmem>>, %arg10: memref<8x32xf32, #tpu.memory_space<vmem>>, %arg11: memref<8x16xf32, #tpu.memory_space<vmem>>, %arg12: memref<8x32xf32, #tpu.memory_space<vmem>>, %arg13: memref<8x8x16xf32, #tpu.memory_space<vmem>>) attributes {dimension_semantics = [#tpu.dimension_semantics<parallel>, #tpu.dimension_semantics<arbitrary>], iteration_bounds = array<i64: 2, 2>, scalar_prefetch = 0 : i64, scratch_operands = 4 : i64, tpu.core_type = #tpu.core_type<tc>, window_params = [{transform_indices = @transform_0, window_bounds = array<i64: 8, 1152>}, {pipeline_mode = #tpu.pipeline_mode<synchronous>, transform_indices = @transform_1, window_bounds = array<i64: 32, 128>}, {pipeline_mode = #tpu.pipeline_mode<synchronous>, transform_indices = @transform_2, window_bounds = array<i64: 16, 128>}, {pipeline_mode = #tpu.pipeline_mode<synchronous>, transform_indices = @transform_3, window_bounds = array<i64: 32, 32>}, {pipeline_mode = #tpu.pipeline_mode<synchronous>, transform_indices = @transform_4, window_bounds = array<i64: 8, 32>}, {pipeline_mode = #tpu.pipeline_mode<synchronous>, transform_indices = @transform_5, window_bounds = array<i64: 8, 32>}, {pipeline_mode = #tpu.pipeline_mode<synchronous>, transform_indices = @transform_6, window_bounds = array<i64: 8, 16>}, {transform_indices = @transform_7, window_bounds = array<i64: 8, 384>}]} {
    %c0_i32 = arith.constant 0 : i32
    %0 = arith.cmpi eq, %arg1, %c0_i32 : i32
    %1 = arith.extui %0 : i1 to i32
    %c0_i32_0 = arith.constant 0 : i32
    %2 = arith.cmpi ne, %1, %c0_i32_0 : i32
    scf.if %2 {
      %c0_147 = arith.constant 0 : index
      %c0_148 = arith.constant 0 : index
      %550 = vector.load %arg6[%c0_147, %c0_148] : memref<8x32xf32, #tpu.memory_space<vmem>>, vector<8x32xf32>
      %c0_149 = arith.constant 0 : index
      %c0_150 = arith.constant 0 : index
      %551 = vector.load %arg10[%c0_149, %c0_150] : memref<8x32xf32, #tpu.memory_space<vmem>>, vector<8x32xf32>
      tpu.vector_store %arg10[%c0_149, %c0_150], %550 {strides = array<i32>} : memref<8x32xf32, #tpu.memory_space<vmem>>, vector<8x32xf32>,
      %c0_151 = arith.constant 0 : index
      %c0_152 = arith.constant 0 : index
      %552 = vector.load %arg8[%c0_151, %c0_152] : memref<8x16xf32, #tpu.memory_space<vmem>>, vector<8x16xf32>
      %c0_153 = arith.constant 0 : index
      %c0_154 = arith.constant 0 : index
      %553 = vector.load %arg11[%c0_153, %c0_154] : memref<8x16xf32, #tpu.memory_space<vmem>>, vector<8x16xf32>
      tpu.vector_store %arg11[%c0_153, %c0_154], %552 {strides = array<i32>} : memref<8x16xf32, #tpu.memory_space<vmem>>, vector<8x16xf32>,
      %c0_155 = arith.constant 0 : index
      %c0_156 = arith.constant 0 : index
      %554 = vector.load %arg7[%c0_155, %c0_156] : memref<8x32xf32, #tpu.memory_space<vmem>>, vector<8x32xf32>
      %c0_157 = arith.constant 0 : index
      %c0_158 = arith.constant 0 : index
      %555 = vector.load %arg12[%c0_157, %c0_158] : memref<8x32xf32, #tpu.memory_space<vmem>>, vector<8x32xf32>
      tpu.vector_store %arg12[%c0_157, %c0_158], %554 {strides = array<i32>} : memref<8x32xf32, #tpu.memory_space<vmem>>, vector<8x32xf32>,
      %cst_159 = arith.constant 0.000000e+00 : f32
      %556 = vector.broadcast %cst_159 : f32 to vector<8x8x16xf32>
      %c0_160 = arith.constant 0 : index
      %c0_161 = arith.constant 0 : index
      %c0_162 = arith.constant 0 : index
      %557 = vector.load %arg13[%c0_160, %c0_161, %c0_162] : memref<8x8x16xf32, #tpu.memory_space<vmem>>, vector<8x8x16xf32>
      tpu.vector_store %arg13[%c0_160, %c0_161, %c0_162], %556 {strides = array<i32>} : memref<8x8x16xf32, #tpu.memory_space<vmem>>, vector<8x8x16xf32>,
    } else {
    }
    %c0 = arith.constant 0 : index
    %c0_1 = arith.constant 0 : index
    %3 = vector.load %arg3[%c0, %c0_1] : memref<32x128xbf16, #tpu.memory_space<vmem>>, vector<32x128xbf16>
    %c0_2 = arith.constant 0 : index
    %c0_3 = arith.constant 0 : index
    %4 = vector.load %arg4[%c0_2, %c0_3] : memref<16x128xbf16, #tpu.memory_space<vmem>>, vector<16x128xbf16>
    %c0_4 = arith.constant 0 : index
    %c0_5 = arith.constant 0 : index
    %5 = vector.load %arg5[%c0_4, %c0_5] : memref<32x32xbf16, #tpu.memory_space<vmem>>, vector<32x32xbf16>
    %c0_6 = arith.constant 0 : index
    %c0_7 = arith.constant 0 : index
    %6 = vector.load %arg10[%c0_6, %c0_7] : memref<8x32xf32, #tpu.memory_space<vmem>>, vector<8x32xf32>
    %c0_8 = arith.constant 0 : index
    %c0_9 = arith.constant 0 : index
    %7 = vector.load %arg11[%c0_8, %c0_9] : memref<8x16xf32, #tpu.memory_space<vmem>>, vector<8x16xf32>
    %c0_10 = arith.constant 0 : index
    %c0_11 = arith.constant 0 : index
    %8 = vector.load %arg12[%c0_10, %c0_11] : memref<8x32xf32, #tpu.memory_space<vmem>>, vector<8x32xf32>
    %c0_12 = arith.constant 0 : index
    %c0_13 = arith.constant 0 : index
    %c0_14 = arith.constant 0 : index
    %9 = vector.load %arg13[%c0_12, %c0_13, %c0_14] : memref<8x8x16xf32, #tpu.memory_space<vmem>>, vector<8x8x16xf32>
    %c0_15 = arith.constant 0 : index
    %c0_16 = arith.constant 0 : index
    %10 = vector.load %arg2[%c0_15, %c0_16] : memref<8x1152xf32, #tpu.memory_space<vmem>>, vector<8x128xf32>
    %c0_17 = arith.constant 0 : index
    %c1024 = arith.constant 1024 : index
    %11 = vector.load %arg2[%c0_17, %c1024] : memref<8x1152xf32, #tpu.memory_space<vmem>>, vector<8x16xf32>
    %12 = arith.truncf %6 : vector<8x32xf32> to vector<8x32xbf16>
    %cst = arith.constant dense<0.000000e+00> : vector<8x128xf32>
    %13 = tpu.matmul %12, %3, %cst {dimension_numbers = #tpu.dot_dimension_numbers<[1], [0], [0], [1], [0, 0, 1, 1], [], []>} : vector<8x32xbf16>, vector<32x128xbf16>, vector<8x128xf32> -> vector<8x128xf32>
    %14 = arith.addf %10, %13 : vector<8x128xf32>
    %15 = arith.truncf %7 : vector<8x16xf32> to vector<8x16xbf16>
    %cst_18 = arith.constant dense<0.000000e+00> : vector<8x128xf32>
    %16 = tpu.matmul %15, %4, %cst_18 {dimension_numbers = #tpu.dot_dimension_numbers<[1], [0], [0], [1], [0, 0, 1, 1], [], []>} : vector<8x16xbf16>, vector<16x128xbf16>, vector<8x128xf32> -> vector<8x128xf32>
    %17 = arith.addf %14, %16 : vector<8x128xf32>
    %18 = arith.negf %17 : vector<8x128xf32>
    %19 = math.exp %18 : vector<8x128xf32>
    %cst_19 = arith.constant 1.000000e+00 : f32
    %20 = vector.broadcast %cst_19 : f32 to vector<8x128xf32>
    %21 = arith.addf %20, %19 : vector<8x128xf32>
    %22 = arith.divf %20, %21 : vector<8x128xf32>
    %23 = math.tanh %17 : vector<8x128xf32>
    %24 = vector.extract_strided_slice %22 {offsets = [0, 0], sizes = [8, 32], strides = [1, 1]} : vector<8x128xf32> to vector<8x32xf32>
    %25 = vector.extract_strided_slice %22 {offsets = [0, 32], sizes = [8, 32], strides = [1, 1]} : vector<8x128xf32> to vector<8x32xf32>
    %26 = vector.extract_strided_slice %23 {offsets = [0, 64], sizes = [8, 32], strides = [1, 1]} : vector<8x128xf32> to vector<8x32xf32>
    %27 = vector.extract_strided_slice %22 {offsets = [0, 96], sizes = [8, 32], strides = [1, 1]} : vector<8x128xf32> to vector<8x32xf32>
    %28 = arith.mulf %25, %8 : vector<8x32xf32>
    %29 = arith.mulf %24, %26 : vector<8x32xf32>
    %30 = arith.addf %28, %29 : vector<8x32xf32>
    %31 = math.tanh %30 : vector<8x32xf32>
    %32 = arith.mulf %27, %31 : vector<8x32xf32>
    %33 = arith.truncf %32 : vector<8x32xf32> to vector<8x32xbf16>
    %cst_20 = arith.constant dense<0.000000e+00> : vector<8x32xf32>
    %34 = tpu.matmul %33, %5, %cst_20 {dimension_numbers = #tpu.dot_dimension_numbers<[1], [0], [0], [1], [0, 0, 1, 1], [], []>} : vector<8x32xbf16>, vector<32x32xbf16>, vector<8x32xf32> -> vector<8x32xf32>
    %35 = vector.extract_strided_slice %34 {offsets = [0, 0], sizes = [8, 16], strides = [1, 1]} : vector<8x32xf32> to vector<8x16xf32>
    %36 = vector.extract_strided_slice %34 {offsets = [0, 16], sizes = [8, 16], strides = [1, 1]} : vector<8x32xf32> to vector<8x16xf32>
    %37 = vector.shape_cast %35 : vector<8x16xf32> to vector<8x1x16xf32>
    %38 = vector.broadcast %37 : vector<8x1x16xf32> to vector<8x8x16xf32>
    %39 = arith.mulf %9, %38 : vector<8x8x16xf32>
    %cst_21 = arith.constant dense<0.000000e+00> : vector<8x8xf32>
    %40 = vector.multi_reduction <add>, %39, %cst_21 [2] : vector<8x8x16xf32> to vector<8x8xf32>
    %cst_22 = arith.constant dense<0xFF800000> : vector<8xf32>
    %41 = vector.multi_reduction <maximumf>, %40, %cst_22 [1] : vector<8x8xf32> to vector<8xf32>
    %42 = vector.shape_cast %41 : vector<8xf32> to vector<8x1xf32>
    %43 = vector.broadcast %42 : vector<8x1xf32> to vector<8x8xf32>
    %44 = arith.subf %40, %43 : vector<8x8xf32>
    %45 = math.exp %44 : vector<8x8xf32>
    %cst_23 = arith.constant dense<0.000000e+00> : vector<8xf32>
    %46 = vector.multi_reduction <add>, %45, %cst_23 [1] : vector<8x8xf32> to vector<8xf32>
    %47 = vector.shape_cast %46 : vector<8xf32> to vector<8x1xf32>
    %48 = tpu.reciprocal %47 {approx = true} : vector<8x1xf32> -> vector<8x1xf32>
    %49 = vector.broadcast %48 : vector<8x1xf32> to vector<8x8xf32>
    %50 = arith.mulf %45, %49 : vector<8x8xf32>
    %51 = vector.shape_cast %36 : vector<8x16xf32> to vector<8x1x16xf32>
    %52 = vector.broadcast %51 : vector<8x1x16xf32> to vector<8x8x16xf32>
    %53 = arith.mulf %9, %52 : vector<8x8x16xf32>
    %cst_24 = arith.constant dense<0.000000e+00> : vector<8x8xf32>
    %54 = vector.multi_reduction <add>, %53, %cst_24 [2] : vector<8x8x16xf32> to vector<8x8xf32>
    %cst_25 = arith.constant dense<0xFF800000> : vector<8xf32>
    %55 = vector.multi_reduction <maximumf>, %54, %cst_25 [1] : vector<8x8xf32> to vector<8xf32>
    %56 = vector.shape_cast %55 : vector<8xf32> to vector<8x1xf32>
    %57 = vector.broadcast %56 : vector<8x1xf32> to vector<8x8xf32>
    %58 = arith.subf %54, %57 : vector<8x8xf32>
    %59 = math.exp %58 : vector<8x8xf32>
    %cst_26 = arith.constant dense<0.000000e+00> : vector<8xf32>
    %60 = vector.multi_reduction <add>, %59, %cst_26 [1] : vector<8x8xf32> to vector<8xf32>
    %61 = vector.shape_cast %60 : vector<8xf32> to vector<8x1xf32>
    %62 = tpu.reciprocal %61 {approx = true} : vector<8x1xf32> -> vector<8x1xf32>
    %63 = vector.broadcast %62 : vector<8x1xf32> to vector<8x8xf32>
    %64 = arith.mulf %59, %63 : vector<8x8xf32>
    %65 = vector.shape_cast %50 : vector<8x8xf32> to vector<8x8x1xf32>
    %66 = vector.broadcast %65 : vector<8x8x1xf32> to vector<8x8x16xf32>
    %67 = arith.mulf %66, %9 : vector<8x8x16xf32>
    %cst_27 = arith.constant dense<0.000000e+00> : vector<8x16xf32>
    %68 = vector.multi_reduction <add>, %67, %cst_27 [1] : vector<8x8x16xf32> to vector<8x16xf32>
    %69 = vector.shape_cast %64 : vector<8x8xf32> to vector<8x8x1xf32>
    %70 = vector.shape_cast %11 : vector<8x16xf32> to vector<8x1x16xf32>
    %71 = vector.broadcast %69 : vector<8x8x1xf32> to vector<8x8x16xf32>
    %72 = vector.broadcast %70 : vector<8x1x16xf32> to vector<8x8x16xf32>
    %73 = arith.mulf %71, %72 : vector<8x8x16xf32>
    %74 = arith.addf %9, %73 : vector<8x8x16xf32>
    %c0_28 = arith.constant 0 : index
    %c0_29 = arith.constant 0 : index
    %75 = vector.load %arg9[%c0_28, %c0_29] : memref<8x384xf32, #tpu.memory_space<vmem>>, vector<8x32xf32>
    tpu.vector_store %arg9[%c0_28, %c0_29], %32 {strides = array<i32>} : memref<8x384xf32, #tpu.memory_space<vmem>>, vector<8x32xf32>,
    %c0_30 = arith.constant 0 : index
    %c256 = arith.constant 256 : index
    %76 = vector.load %arg9[%c0_30, %c256] : memref<8x384xf32, #tpu.memory_space<vmem>>, vector<8x16xf32>
    tpu.vector_store %arg9[%c0_30, %c256], %68 {strides = array<i32>} : memref<8x384xf32, #tpu.memory_space<vmem>>, vector<8x16xf32>,
    %c0_31 = arith.constant 0 : index
    %c128 = arith.constant 128 : index
    %77 = vector.load %arg2[%c0_31, %c128] : memref<8x1152xf32, #tpu.memory_space<vmem>>, vector<8x128xf32>
    %c0_32 = arith.constant 0 : index
    %c1040 = arith.constant 1040 : index
    %78 = vector.load %arg2[%c0_32, %c1040] : memref<8x1152xf32, #tpu.memory_space<vmem>>, vector<8x16xf32>
    %79 = arith.truncf %32 : vector<8x32xf32> to vector<8x32xbf16>
    %cst_33 = arith.constant dense<0.000000e+00> : vector<8x128xf32>
    %80 = tpu.matmul %79, %3, %cst_33 {dimension_numbers = #tpu.dot_dimension_numbers<[1], [0], [0], [1], [0, 0, 1, 1], [], []>} : vector<8x32xbf16>, vector<32x128xbf16>, vector<8x128xf32> -> vector<8x128xf32>
    %81 = arith.addf %77, %80 : vector<8x128xf32>
    %82 = arith.truncf %68 : vector<8x16xf32> to vector<8x16xbf16>
    %cst_34 = arith.constant dense<0.000000e+00> : vector<8x128xf32>
    %83 = tpu.matmul %82, %4, %cst_34 {dimension_numbers = #tpu.dot_dimension_numbers<[1], [0], [0], [1], [0, 0, 1, 1], [], []>} : vector<8x16xbf16>, vector<16x128xbf16>, vector<8x128xf32> -> vector<8x128xf32>
    %84 = arith.addf %81, %83 : vector<8x128xf32>
    %85 = arith.negf %84 : vector<8x128xf32>
    %86 = math.exp %85 : vector<8x128xf32>
    %cst_35 = arith.constant 1.000000e+00 : f32
    %87 = vector.broadcast %cst_35 : f32 to vector<8x128xf32>
    %88 = arith.addf %87, %86 : vector<8x128xf32>
    %89 = arith.divf %87, %88 : vector<8x128xf32>
    %90 = math.tanh %84 : vector<8x128xf32>
    %91 = vector.extract_strided_slice %89 {offsets = [0, 0], sizes = [8, 32], strides = [1, 1]} : vector<8x128xf32> to vector<8x32xf32>
    %92 = vector.extract_strided_slice %89 {offsets = [0, 32], sizes = [8, 32], strides = [1, 1]} : vector<8x128xf32> to vector<8x32xf32>
    %93 = vector.extract_strided_slice %90 {offsets = [0, 64], sizes = [8, 32], strides = [1, 1]} : vector<8x128xf32> to vector<8x32xf32>
    %94 = vector.extract_strided_slice %89 {offsets = [0, 96], sizes = [8, 32], strides = [1, 1]} : vector<8x128xf32> to vector<8x32xf32>
    %95 = arith.mulf %92, %30 : vector<8x32xf32>
    %96 = arith.mulf %91, %93 : vector<8x32xf32>
    %97 = arith.addf %95, %96 : vector<8x32xf32>
    %98 = math.tanh %97 : vector<8x32xf32>
    %99 = arith.mulf %94, %98 : vector<8x32xf32>
    %100 = arith.truncf %99 : vector<8x32xf32> to vector<8x32xbf16>
    %cst_36 = arith.constant dense<0.000000e+00> : vector<8x32xf32>
    %101 = tpu.matmul %100, %5, %cst_36 {dimension_numbers = #tpu.dot_dimension_numbers<[1], [0], [0], [1], [0, 0, 1, 1], [], []>} : vector<8x32xbf16>, vector<32x32xbf16>, vector<8x32xf32> -> vector<8x32xf32>
    %102 = vector.extract_strided_slice %101 {offsets = [0, 0], sizes = [8, 16], strides = [1, 1]} : vector<8x32xf32> to vector<8x16xf32>
    %103 = vector.extract_strided_slice %101 {offsets = [0, 16], sizes = [8, 16], strides = [1, 1]} : vector<8x32xf32> to vector<8x16xf32>
    %104 = vector.shape_cast %102 : vector<8x16xf32> to vector<8x1x16xf32>
    %105 = vector.broadcast %104 : vector<8x1x16xf32> to vector<8x8x16xf32>
    %106 = arith.mulf %74, %105 : vector<8x8x16xf32>
    %cst_37 = arith.constant dense<0.000000e+00> : vector<8x8xf32>
    %107 = vector.multi_reduction <add>, %106, %cst_37 [2] : vector<8x8x16xf32> to vector<8x8xf32>
    %cst_38 = arith.constant dense<0xFF800000> : vector<8xf32>
    %108 = vector.multi_reduction <maximumf>, %107, %cst_38 [1] : vector<8x8xf32> to vector<8xf32>
    %109 = vector.shape_cast %108 : vector<8xf32> to vector<8x1xf32>
    %110 = vector.broadcast %109 : vector<8x1xf32> to vector<8x8xf32>
    %111 = arith.subf %107, %110 : vector<8x8xf32>
    %112 = math.exp %111 : vector<8x8xf32>
    %cst_39 = arith.constant dense<0.000000e+00> : vector<8xf32>
    %113 = vector.multi_reduction <add>, %112, %cst_39 [1] : vector<8x8xf32> to vector<8xf32>
    %114 = vector.shape_cast %113 : vector<8xf32> to vector<8x1xf32>
    %115 = tpu.reciprocal %114 {approx = true} : vector<8x1xf32> -> vector<8x1xf32>
    %116 = vector.broadcast %115 : vector<8x1xf32> to vector<8x8xf32>
    %117 = arith.mulf %112, %116 : vector<8x8xf32>
    %118 = vector.shape_cast %103 : vector<8x16xf32> to vector<8x1x16xf32>
    %119 = vector.broadcast %118 : vector<8x1x16xf32> to vector<8x8x16xf32>
    %120 = arith.mulf %74, %119 : vector<8x8x16xf32>
    %cst_40 = arith.constant dense<0.000000e+00> : vector<8x8xf32>
    %121 = vector.multi_reduction <add>, %120, %cst_40 [2] : vector<8x8x16xf32> to vector<8x8xf32>
    %cst_41 = arith.constant dense<0xFF800000> : vector<8xf32>
    %122 = vector.multi_reduction <maximumf>, %121, %cst_41 [1] : vector<8x8xf32> to vector<8xf32>
    %123 = vector.shape_cast %122 : vector<8xf32> to vector<8x1xf32>
    %124 = vector.broadcast %123 : vector<8x1xf32> to vector<8x8xf32>
    %125 = arith.subf %121, %124 : vector<8x8xf32>
    %126 = math.exp %125 : vector<8x8xf32>
    %cst_42 = arith.constant dense<0.000000e+00> : vector<8xf32>
    %127 = vector.multi_reduction <add>, %126, %cst_42 [1] : vector<8x8xf32> to vector<8xf32>
    %128 = vector.shape_cast %127 : vector<8xf32> to vector<8x1xf32>
    %129 = tpu.reciprocal %128 {approx = true} : vector<8x1xf32> -> vector<8x1xf32>
    %130 = vector.broadcast %129 : vector<8x1xf32> to vector<8x8xf32>
    %131 = arith.mulf %126, %130 : vector<8x8xf32>
    %132 = vector.shape_cast %117 : vector<8x8xf32> to vector<8x8x1xf32>
    %133 = vector.broadcast %132 : vector<8x8x1xf32> to vector<8x8x16xf32>
    %134 = arith.mulf %133, %74 : vector<8x8x16xf32>
    %cst_43 = arith.constant dense<0.000000e+00> : vector<8x16xf32>
    %135 = vector.multi_reduction <add>, %134, %cst_43 [1] : vector<8x8x16xf32> to vector<8x16xf32>
    %136 = vector.shape_cast %131 : vector<8x8xf32> to vector<8x8x1xf32>
    %137 = vector.shape_cast %78 : vector<8x16xf32> to vector<8x1x16xf32>
    %138 = vector.broadcast %136 : vector<8x8x1xf32> to vector<8x8x16xf32>
    %139 = vector.broadcast %137 : vector<8x1x16xf32> to vector<8x8x16xf32>
    %140 = arith.mulf %138, %139 : vector<8x8x16xf32>
    %141 = arith.addf %74, %140 : vector<8x8x16xf32>
    %c0_44 = arith.constant 0 : index
    %c32 = arith.constant 32 : index
    %142 = vector.load %arg9[%c0_44, %c32] : memref<8x384xf32, #tpu.memory_space<vmem>>, vector<8x32xf32>
    tpu.vector_store %arg9[%c0_44, %c32], %99 {strides = array<i32>} : memref<8x384xf32, #tpu.memory_space<vmem>>, vector<8x32xf32>,
    %c0_45 = arith.constant 0 : index
    %c272 = arith.constant 272 : index
    %143 = vector.load %arg9[%c0_45, %c272] : memref<8x384xf32, #tpu.memory_space<vmem>>, vector<8x16xf32>
    tpu.vector_store %arg9[%c0_45, %c272], %135 {strides = array<i32>} : memref<8x384xf32, #tpu.memory_space<vmem>>, vector<8x16xf32>,
    %c0_46 = arith.constant 0 : index
    %c256_47 = arith.constant 256 : index
    %144 = vector.load %arg2[%c0_46, %c256_47] : memref<8x1152xf32, #tpu.memory_space<vmem>>, vector<8x128xf32>
    %c0_48 = arith.constant 0 : index
    %c1056 = arith.constant 1056 : index
    %145 = vector.load %arg2[%c0_48, %c1056] : memref<8x1152xf32, #tpu.memory_space<vmem>>, vector<8x16xf32>
    %146 = arith.truncf %99 : vector<8x32xf32> to vector<8x32xbf16>
    %cst_49 = arith.constant dense<0.000000e+00> : vector<8x128xf32>
    %147 = tpu.matmul %146, %3, %cst_49 {dimension_numbers = #tpu.dot_dimension_numbers<[1], [0], [0], [1], [0, 0, 1, 1], [], []>} : vector<8x32xbf16>, vector<32x128xbf16>, vector<8x128xf32> -> vector<8x128xf32>
    %148 = arith.addf %144, %147 : vector<8x128xf32>
    %149 = arith.truncf %135 : vector<8x16xf32> to vector<8x16xbf16>
    %cst_50 = arith.constant dense<0.000000e+00> : vector<8x128xf32>
    %150 = tpu.matmul %149, %4, %cst_50 {dimension_numbers = #tpu.dot_dimension_numbers<[1], [0], [0], [1], [0, 0, 1, 1], [], []>} : vector<8x16xbf16>, vector<16x128xbf16>, vector<8x128xf32> -> vector<8x128xf32>
    %151 = arith.addf %148, %150 : vector<8x128xf32>
    %152 = arith.negf %151 : vector<8x128xf32>
    %153 = math.exp %152 : vector<8x128xf32>
    %cst_51 = arith.constant 1.000000e+00 : f32
    %154 = vector.broadcast %cst_51 : f32 to vector<8x128xf32>
    %155 = arith.addf %154, %153 : vector<8x128xf32>
    %156 = arith.divf %154, %155 : vector<8x128xf32>
    %157 = math.tanh %151 : vector<8x128xf32>
    %158 = vector.extract_strided_slice %156 {offsets = [0, 0], sizes = [8, 32], strides = [1, 1]} : vector<8x128xf32> to vector<8x32xf32>
    %159 = vector.extract_strided_slice %156 {offsets = [0, 32], sizes = [8, 32], strides = [1, 1]} : vector<8x128xf32> to vector<8x32xf32>
    %160 = vector.extract_strided_slice %157 {offsets = [0, 64], sizes = [8, 32], strides = [1, 1]} : vector<8x128xf32> to vector<8x32xf32>
    %161 = vector.extract_strided_slice %156 {offsets = [0, 96], sizes = [8, 32], strides = [1, 1]} : vector<8x128xf32> to vector<8x32xf32>
    %162 = arith.mulf %159, %97 : vector<8x32xf32>
    %163 = arith.mulf %158, %160 : vector<8x32xf32>
    %164 = arith.addf %162, %163 : vector<8x32xf32>
    %165 = math.tanh %164 : vector<8x32xf32>
    %166 = arith.mulf %161, %165 : vector<8x32xf32>
    %167 = arith.truncf %166 : vector<8x32xf32> to vector<8x32xbf16>
    %cst_52 = arith.constant dense<0.000000e+00> : vector<8x32xf32>
    %168 = tpu.matmul %167, %5, %cst_52 {dimension_numbers = #tpu.dot_dimension_numbers<[1], [0], [0], [1], [0, 0, 1, 1], [], []>} : vector<8x32xbf16>, vector<32x32xbf16>, vector<8x32xf32> -> vector<8x32xf32>
    %169 = vector.extract_strided_slice %168 {offsets = [0, 0], sizes = [8, 16], strides = [1, 1]} : vector<8x32xf32> to vector<8x16xf32>
    %170 = vector.extract_strided_slice %168 {offsets = [0, 16], sizes = [8, 16], strides = [1, 1]} : vector<8x32xf32> to vector<8x16xf32>
    %171 = vector.shape_cast %169 : vector<8x16xf32> to vector<8x1x16xf32>
    %172 = vector.broadcast %171 : vector<8x1x16xf32> to vector<8x8x16xf32>
    %173 = arith.mulf %141, %172 : vector<8x8x16xf32>
    %cst_53 = arith.constant dense<0.000000e+00> : vector<8x8xf32>
    %174 = vector.multi_reduction <add>, %173, %cst_53 [2] : vector<8x8x16xf32> to vector<8x8xf32>
    %cst_54 = arith.constant dense<0xFF800000> : vector<8xf32>
    %175 = vector.multi_reduction <maximumf>, %174, %cst_54 [1] : vector<8x8xf32> to vector<8xf32>
    %176 = vector.shape_cast %175 : vector<8xf32> to vector<8x1xf32>
    %177 = vector.broadcast %176 : vector<8x1xf32> to vector<8x8xf32>
    %178 = arith.subf %174, %177 : vector<8x8xf32>
    %179 = math.exp %178 : vector<8x8xf32>
    %cst_55 = arith.constant dense<0.000000e+00> : vector<8xf32>
    %180 = vector.multi_reduction <add>, %179, %cst_55 [1] : vector<8x8xf32> to vector<8xf32>
    %181 = vector.shape_cast %180 : vector<8xf32> to vector<8x1xf32>
    %182 = tpu.reciprocal %181 {approx = true} : vector<8x1xf32> -> vector<8x1xf32>
    %183 = vector.broadcast %182 : vector<8x1xf32> to vector<8x8xf32>
    %184 = arith.mulf %179, %183 : vector<8x8xf32>
    %185 = vector.shape_cast %170 : vector<8x16xf32> to vector<8x1x16xf32>
    %186 = vector.broadcast %185 : vector<8x1x16xf32> to vector<8x8x16xf32>
    %187 = arith.mulf %141, %186 : vector<8x8x16xf32>
    %cst_56 = arith.constant dense<0.000000e+00> : vector<8x8xf32>
    %188 = vector.multi_reduction <add>, %187, %cst_56 [2] : vector<8x8x16xf32> to vector<8x8xf32>
    %cst_57 = arith.constant dense<0xFF800000> : vector<8xf32>
    %189 = vector.multi_reduction <maximumf>, %188, %cst_57 [1] : vector<8x8xf32> to vector<8xf32>
    %190 = vector.shape_cast %189 : vector<8xf32> to vector<8x1xf32>
    %191 = vector.broadcast %190 : vector<8x1xf32> to vector<8x8xf32>
    %192 = arith.subf %188, %191 : vector<8x8xf32>
    %193 = math.exp %192 : vector<8x8xf32>
    %cst_58 = arith.constant dense<0.000000e+00> : vector<8xf32>
    %194 = vector.multi_reduction <add>, %193, %cst_58 [1] : vector<8x8xf32> to vector<8xf32>
    %195 = vector.shape_cast %194 : vector<8xf32> to vector<8x1xf32>
    %196 = tpu.reciprocal %195 {approx = true} : vector<8x1xf32> -> vector<8x1xf32>
    %197 = vector.broadcast %196 : vector<8x1xf32> to vector<8x8xf32>
    %198 = arith.mulf %193, %197 : vector<8x8xf32>
    %199 = vector.shape_cast %184 : vector<8x8xf32> to vector<8x8x1xf32>
    %200 = vector.broadcast %199 : vector<8x8x1xf32> to vector<8x8x16xf32>
    %201 = arith.mulf %200, %141 : vector<8x8x16xf32>
    %cst_59 = arith.constant dense<0.000000e+00> : vector<8x16xf32>
    %202 = vector.multi_reduction <add>, %201, %cst_59 [1] : vector<8x8x16xf32> to vector<8x16xf32>
    %203 = vector.shape_cast %198 : vector<8x8xf32> to vector<8x8x1xf32>
    %204 = vector.shape_cast %145 : vector<8x16xf32> to vector<8x1x16xf32>
    %205 = vector.broadcast %203 : vector<8x8x1xf32> to vector<8x8x16xf32>
    %206 = vector.broadcast %204 : vector<8x1x16xf32> to vector<8x8x16xf32>
    %207 = arith.mulf %205, %206 : vector<8x8x16xf32>
    %208 = arith.addf %141, %207 : vector<8x8x16xf32>
    %c0_60 = arith.constant 0 : index
    %c64 = arith.constant 64 : index
    %209 = vector.load %arg9[%c0_60, %c64] : memref<8x384xf32, #tpu.memory_space<vmem>>, vector<8x32xf32>
    tpu.vector_store %arg9[%c0_60, %c64], %166 {strides = array<i32>} : memref<8x384xf32, #tpu.memory_space<vmem>>, vector<8x32xf32>,
    %c0_61 = arith.constant 0 : index
    %c288 = arith.constant 288 : index
    %210 = vector.load %arg9[%c0_61, %c288] : memref<8x384xf32, #tpu.memory_space<vmem>>, vector<8x16xf32>
    tpu.vector_store %arg9[%c0_61, %c288], %202 {strides = array<i32>} : memref<8x384xf32, #tpu.memory_space<vmem>>, vector<8x16xf32>,
    %c0_62 = arith.constant 0 : index
    %c384 = arith.constant 384 : index
    %211 = vector.load %arg2[%c0_62, %c384] : memref<8x1152xf32, #tpu.memory_space<vmem>>, vector<8x128xf32>
    %c0_63 = arith.constant 0 : index
    %c1072 = arith.constant 1072 : index
    %212 = vector.load %arg2[%c0_63, %c1072] : memref<8x1152xf32, #tpu.memory_space<vmem>>, vector<8x16xf32>
    %213 = arith.truncf %166 : vector<8x32xf32> to vector<8x32xbf16>
    %cst_64 = arith.constant dense<0.000000e+00> : vector<8x128xf32>
    %214 = tpu.matmul %213, %3, %cst_64 {dimension_numbers = #tpu.dot_dimension_numbers<[1], [0], [0], [1], [0, 0, 1, 1], [], []>} : vector<8x32xbf16>, vector<32x128xbf16>, vector<8x128xf32> -> vector<8x128xf32>
    %215 = arith.addf %211, %214 : vector<8x128xf32>
    %216 = arith.truncf %202 : vector<8x16xf32> to vector<8x16xbf16>
    %cst_65 = arith.constant dense<0.000000e+00> : vector<8x128xf32>
    %217 = tpu.matmul %216, %4, %cst_65 {dimension_numbers = #tpu.dot_dimension_numbers<[1], [0], [0], [1], [0, 0, 1, 1], [], []>} : vector<8x16xbf16>, vector<16x128xbf16>, vector<8x128xf32> -> vector<8x128xf32>
    %218 = arith.addf %215, %217 : vector<8x128xf32>
    %219 = arith.negf %218 : vector<8x128xf32>
    %220 = math.exp %219 : vector<8x128xf32>
    %cst_66 = arith.constant 1.000000e+00 : f32
    %221 = vector.broadcast %cst_66 : f32 to vector<8x128xf32>
    %222 = arith.addf %221, %220 : vector<8x128xf32>
    %223 = arith.divf %221, %222 : vector<8x128xf32>
    %224 = math.tanh %218 : vector<8x128xf32>
    %225 = vector.extract_strided_slice %223 {offsets = [0, 0], sizes = [8, 32], strides = [1, 1]} : vector<8x128xf32> to vector<8x32xf32>
    %226 = vector.extract_strided_slice %223 {offsets = [0, 32], sizes = [8, 32], strides = [1, 1]} : vector<8x128xf32> to vector<8x32xf32>
    %227 = vector.extract_strided_slice %224 {offsets = [0, 64], sizes = [8, 32], strides = [1, 1]} : vector<8x128xf32> to vector<8x32xf32>
    %228 = vector.extract_strided_slice %223 {offsets = [0, 96], sizes = [8, 32], strides = [1, 1]} : vector<8x128xf32> to vector<8x32xf32>
    %229 = arith.mulf %226, %164 : vector<8x32xf32>
    %230 = arith.mulf %225, %227 : vector<8x32xf32>
    %231 = arith.addf %229, %230 : vector<8x32xf32>
    %232 = math.tanh %231 : vector<8x32xf32>
    %233 = arith.mulf %228, %232 : vector<8x32xf32>
    %234 = arith.truncf %233 : vector<8x32xf32> to vector<8x32xbf16>
    %cst_67 = arith.constant dense<0.000000e+00> : vector<8x32xf32>
    %235 = tpu.matmul %234, %5, %cst_67 {dimension_numbers = #tpu.dot_dimension_numbers<[1], [0], [0], [1], [0, 0, 1, 1], [], []>} : vector<8x32xbf16>, vector<32x32xbf16>, vector<8x32xf32> -> vector<8x32xf32>
    %236 = vector.extract_strided_slice %235 {offsets = [0, 0], sizes = [8, 16], strides = [1, 1]} : vector<8x32xf32> to vector<8x16xf32>
    %237 = vector.extract_strided_slice %235 {offsets = [0, 16], sizes = [8, 16], strides = [1, 1]} : vector<8x32xf32> to vector<8x16xf32>
    %238 = vector.shape_cast %236 : vector<8x16xf32> to vector<8x1x16xf32>
    %239 = vector.broadcast %238 : vector<8x1x16xf32> to vector<8x8x16xf32>
    %240 = arith.mulf %208, %239 : vector<8x8x16xf32>
    %cst_68 = arith.constant dense<0.000000e+00> : vector<8x8xf32>
    %241 = vector.multi_reduction <add>, %240, %cst_68 [2] : vector<8x8x16xf32> to vector<8x8xf32>
    %cst_69 = arith.constant dense<0xFF800000> : vector<8xf32>
    %242 = vector.multi_reduction <maximumf>, %241, %cst_69 [1] : vector<8x8xf32> to vector<8xf32>
    %243 = vector.shape_cast %242 : vector<8xf32> to vector<8x1xf32>
    %244 = vector.broadcast %243 : vector<8x1xf32> to vector<8x8xf32>
    %245 = arith.subf %241, %244 : vector<8x8xf32>
    %246 = math.exp %245 : vector<8x8xf32>
    %cst_70 = arith.constant dense<0.000000e+00> : vector<8xf32>
    %247 = vector.multi_reduction <add>, %246, %cst_70 [1] : vector<8x8xf32> to vector<8xf32>
    %248 = vector.shape_cast %247 : vector<8xf32> to vector<8x1xf32>
    %249 = tpu.reciprocal %248 {approx = true} : vector<8x1xf32> -> vector<8x1xf32>
    %250 = vector.broadcast %249 : vector<8x1xf32> to vector<8x8xf32>
    %251 = arith.mulf %246, %250 : vector<8x8xf32>
    %252 = vector.shape_cast %237 : vector<8x16xf32> to vector<8x1x16xf32>
    %253 = vector.broadcast %252 : vector<8x1x16xf32> to vector<8x8x16xf32>
    %254 = arith.mulf %208, %253 : vector<8x8x16xf32>
    %cst_71 = arith.constant dense<0.000000e+00> : vector<8x8xf32>
    %255 = vector.multi_reduction <add>, %254, %cst_71 [2] : vector<8x8x16xf32> to vector<8x8xf32>
    %cst_72 = arith.constant dense<0xFF800000> : vector<8xf32>
    %256 = vector.multi_reduction <maximumf>, %255, %cst_72 [1] : vector<8x8xf32> to vector<8xf32>
    %257 = vector.shape_cast %256 : vector<8xf32> to vector<8x1xf32>
    %258 = vector.broadcast %257 : vector<8x1xf32> to vector<8x8xf32>
    %259 = arith.subf %255, %258 : vector<8x8xf32>
    %260 = math.exp %259 : vector<8x8xf32>
    %cst_73 = arith.constant dense<0.000000e+00> : vector<8xf32>
    %261 = vector.multi_reduction <add>, %260, %cst_73 [1] : vector<8x8xf32> to vector<8xf32>
    %262 = vector.shape_cast %261 : vector<8xf32> to vector<8x1xf32>
    %263 = tpu.reciprocal %262 {approx = true} : vector<8x1xf32> -> vector<8x1xf32>
    %264 = vector.broadcast %263 : vector<8x1xf32> to vector<8x8xf32>
    %265 = arith.mulf %260, %264 : vector<8x8xf32>
    %266 = vector.shape_cast %251 : vector<8x8xf32> to vector<8x8x1xf32>
    %267 = vector.broadcast %266 : vector<8x8x1xf32> to vector<8x8x16xf32>
    %268 = arith.mulf %267, %208 : vector<8x8x16xf32>
    %cst_74 = arith.constant dense<0.000000e+00> : vector<8x16xf32>
    %269 = vector.multi_reduction <add>, %268, %cst_74 [1] : vector<8x8x16xf32> to vector<8x16xf32>
    %270 = vector.shape_cast %265 : vector<8x8xf32> to vector<8x8x1xf32>
    %271 = vector.shape_cast %212 : vector<8x16xf32> to vector<8x1x16xf32>
    %272 = vector.broadcast %270 : vector<8x8x1xf32> to vector<8x8x16xf32>
    %273 = vector.broadcast %271 : vector<8x1x16xf32> to vector<8x8x16xf32>
    %274 = arith.mulf %272, %273 : vector<8x8x16xf32>
    %275 = arith.addf %208, %274 : vector<8x8x16xf32>
    %c0_75 = arith.constant 0 : index
    %c96 = arith.constant 96 : index
    %276 = vector.load %arg9[%c0_75, %c96] : memref<8x384xf32, #tpu.memory_space<vmem>>, vector<8x32xf32>
    tpu.vector_store %arg9[%c0_75, %c96], %233 {strides = array<i32>} : memref<8x384xf32, #tpu.memory_space<vmem>>, vector<8x32xf32>,
    %c0_76 = arith.constant 0 : index
    %c304 = arith.constant 304 : index
    %277 = vector.load %arg9[%c0_76, %c304] : memref<8x384xf32, #tpu.memory_space<vmem>>, vector<8x16xf32>
    tpu.vector_store %arg9[%c0_76, %c304], %269 {strides = array<i32>} : memref<8x384xf32, #tpu.memory_space<vmem>>, vector<8x16xf32>,
    %c0_77 = arith.constant 0 : index
    %c512 = arith.constant 512 : index
    %278 = vector.load %arg2[%c0_77, %c512] : memref<8x1152xf32, #tpu.memory_space<vmem>>, vector<8x128xf32>
    %c0_78 = arith.constant 0 : index
    %c1088 = arith.constant 1088 : index
    %279 = vector.load %arg2[%c0_78, %c1088] : memref<8x1152xf32, #tpu.memory_space<vmem>>, vector<8x16xf32>
    %280 = arith.truncf %233 : vector<8x32xf32> to vector<8x32xbf16>
    %cst_79 = arith.constant dense<0.000000e+00> : vector<8x128xf32>
    %281 = tpu.matmul %280, %3, %cst_79 {dimension_numbers = #tpu.dot_dimension_numbers<[1], [0], [0], [1], [0, 0, 1, 1], [], []>} : vector<8x32xbf16>, vector<32x128xbf16>, vector<8x128xf32> -> vector<8x128xf32>
    %282 = arith.addf %278, %281 : vector<8x128xf32>
    %283 = arith.truncf %269 : vector<8x16xf32> to vector<8x16xbf16>
    %cst_80 = arith.constant dense<0.000000e+00> : vector<8x128xf32>
    %284 = tpu.matmul %283, %4, %cst_80 {dimension_numbers = #tpu.dot_dimension_numbers<[1], [0], [0], [1], [0, 0, 1, 1], [], []>} : vector<8x16xbf16>, vector<16x128xbf16>, vector<8x128xf32> -> vector<8x128xf32>
    %285 = arith.addf %282, %284 : vector<8x128xf32>
    %286 = arith.negf %285 : vector<8x128xf32>
    %287 = math.exp %286 : vector<8x128xf32>
    %cst_81 = arith.constant 1.000000e+00 : f32
    %288 = vector.broadcast %cst_81 : f32 to vector<8x128xf32>
    %289 = arith.addf %288, %287 : vector<8x128xf32>
    %290 = arith.divf %288, %289 : vector<8x128xf32>
    %291 = math.tanh %285 : vector<8x128xf32>
    %292 = vector.extract_strided_slice %290 {offsets = [0, 0], sizes = [8, 32], strides = [1, 1]} : vector<8x128xf32> to vector<8x32xf32>
    %293 = vector.extract_strided_slice %290 {offsets = [0, 32], sizes = [8, 32], strides = [1, 1]} : vector<8x128xf32> to vector<8x32xf32>
    %294 = vector.extract_strided_slice %291 {offsets = [0, 64], sizes = [8, 32], strides = [1, 1]} : vector<8x128xf32> to vector<8x32xf32>
    %295 = vector.extract_strided_slice %290 {offsets = [0, 96], sizes = [8, 32], strides = [1, 1]} : vector<8x128xf32> to vector<8x32xf32>
    %296 = arith.mulf %293, %231 : vector<8x32xf32>
    %297 = arith.mulf %292, %294 : vector<8x32xf32>
    %298 = arith.addf %296, %297 : vector<8x32xf32>
    %299 = math.tanh %298 : vector<8x32xf32>
    %300 = arith.mulf %295, %299 : vector<8x32xf32>
    %301 = arith.truncf %300 : vector<8x32xf32> to vector<8x32xbf16>
    %cst_82 = arith.constant dense<0.000000e+00> : vector<8x32xf32>
    %302 = tpu.matmul %301, %5, %cst_82 {dimension_numbers = #tpu.dot_dimension_numbers<[1], [0], [0], [1], [0, 0, 1, 1], [], []>} : vector<8x32xbf16>, vector<32x32xbf16>, vector<8x32xf32> -> vector<8x32xf32>
    %303 = vector.extract_strided_slice %302 {offsets = [0, 0], sizes = [8, 16], strides = [1, 1]} : vector<8x32xf32> to vector<8x16xf32>
    %304 = vector.extract_strided_slice %302 {offsets = [0, 16], sizes = [8, 16], strides = [1, 1]} : vector<8x32xf32> to vector<8x16xf32>
    %305 = vector.shape_cast %303 : vector<8x16xf32> to vector<8x1x16xf32>
    %306 = vector.broadcast %305 : vector<8x1x16xf32> to vector<8x8x16xf32>
    %307 = arith.mulf %275, %306 : vector<8x8x16xf32>
    %cst_83 = arith.constant dense<0.000000e+00> : vector<8x8xf32>
    %308 = vector.multi_reduction <add>, %307, %cst_83 [2] : vector<8x8x16xf32> to vector<8x8xf32>
    %cst_84 = arith.constant dense<0xFF800000> : vector<8xf32>
    %309 = vector.multi_reduction <maximumf>, %308, %cst_84 [1] : vector<8x8xf32> to vector<8xf32>
    %310 = vector.shape_cast %309 : vector<8xf32> to vector<8x1xf32>
    %311 = vector.broadcast %310 : vector<8x1xf32> to vector<8x8xf32>
    %312 = arith.subf %308, %311 : vector<8x8xf32>
    %313 = math.exp %312 : vector<8x8xf32>
    %cst_85 = arith.constant dense<0.000000e+00> : vector<8xf32>
    %314 = vector.multi_reduction <add>, %313, %cst_85 [1] : vector<8x8xf32> to vector<8xf32>
    %315 = vector.shape_cast %314 : vector<8xf32> to vector<8x1xf32>
    %316 = tpu.reciprocal %315 {approx = true} : vector<8x1xf32> -> vector<8x1xf32>
    %317 = vector.broadcast %316 : vector<8x1xf32> to vector<8x8xf32>
    %318 = arith.mulf %313, %317 : vector<8x8xf32>
    %319 = vector.shape_cast %304 : vector<8x16xf32> to vector<8x1x16xf32>
    %320 = vector.broadcast %319 : vector<8x1x16xf32> to vector<8x8x16xf32>
    %321 = arith.mulf %275, %320 : vector<8x8x16xf32>
    %cst_86 = arith.constant dense<0.000000e+00> : vector<8x8xf32>
    %322 = vector.multi_reduction <add>, %321, %cst_86 [2] : vector<8x8x16xf32> to vector<8x8xf32>
    %cst_87 = arith.constant dense<0xFF800000> : vector<8xf32>
    %323 = vector.multi_reduction <maximumf>, %322, %cst_87 [1] : vector<8x8xf32> to vector<8xf32>
    %324 = vector.shape_cast %323 : vector<8xf32> to vector<8x1xf32>
    %325 = vector.broadcast %324 : vector<8x1xf32> to vector<8x8xf32>
    %326 = arith.subf %322, %325 : vector<8x8xf32>
    %327 = math.exp %326 : vector<8x8xf32>
    %cst_88 = arith.constant dense<0.000000e+00> : vector<8xf32>
    %328 = vector.multi_reduction <add>, %327, %cst_88 [1] : vector<8x8xf32> to vector<8xf32>
    %329 = vector.shape_cast %328 : vector<8xf32> to vector<8x1xf32>
    %330 = tpu.reciprocal %329 {approx = true} : vector<8x1xf32> -> vector<8x1xf32>
    %331 = vector.broadcast %330 : vector<8x1xf32> to vector<8x8xf32>
    %332 = arith.mulf %327, %331 : vector<8x8xf32>
    %333 = vector.shape_cast %318 : vector<8x8xf32> to vector<8x8x1xf32>
    %334 = vector.broadcast %333 : vector<8x8x1xf32> to vector<8x8x16xf32>
    %335 = arith.mulf %334, %275 : vector<8x8x16xf32>
    %cst_89 = arith.constant dense<0.000000e+00> : vector<8x16xf32>
    %336 = vector.multi_reduction <add>, %335, %cst_89 [1] : vector<8x8x16xf32> to vector<8x16xf32>
    %337 = vector.shape_cast %332 : vector<8x8xf32> to vector<8x8x1xf32>
    %338 = vector.shape_cast %279 : vector<8x16xf32> to vector<8x1x16xf32>
    %339 = vector.broadcast %337 : vector<8x8x1xf32> to vector<8x8x16xf32>
    %340 = vector.broadcast %338 : vector<8x1x16xf32> to vector<8x8x16xf32>
    %341 = arith.mulf %339, %340 : vector<8x8x16xf32>
    %342 = arith.addf %275, %341 : vector<8x8x16xf32>
    %c0_90 = arith.constant 0 : index
    %c128_91 = arith.constant 128 : index
    %343 = vector.load %arg9[%c0_90, %c128_91] : memref<8x384xf32, #tpu.memory_space<vmem>>, vector<8x32xf32>
    tpu.vector_store %arg9[%c0_90, %c128_91], %300 {strides = array<i32>} : memref<8x384xf32, #tpu.memory_space<vmem>>, vector<8x32xf32>,
    %c0_92 = arith.constant 0 : index
    %c320 = arith.constant 320 : index
    %344 = vector.load %arg9[%c0_92, %c320] : memref<8x384xf32, #tpu.memory_space<vmem>>, vector<8x16xf32>
    tpu.vector_store %arg9[%c0_92, %c320], %336 {strides = array<i32>} : memref<8x384xf32, #tpu.memory_space<vmem>>, vector<8x16xf32>,
    %c0_93 = arith.constant 0 : index
    %c640 = arith.constant 640 : index
    %345 = vector.load %arg2[%c0_93, %c640] : memref<8x1152xf32, #tpu.memory_space<vmem>>, vector<8x128xf32>
    %c0_94 = arith.constant 0 : index
    %c1104 = arith.constant 1104 : index
    %346 = vector.load %arg2[%c0_94, %c1104] : memref<8x1152xf32, #tpu.memory_space<vmem>>, vector<8x16xf32>
    %347 = arith.truncf %300 : vector<8x32xf32> to vector<8x32xbf16>
    %cst_95 = arith.constant dense<0.000000e+00> : vector<8x128xf32>
    %348 = tpu.matmul %347, %3, %cst_95 {dimension_numbers = #tpu.dot_dimension_numbers<[1], [0], [0], [1], [0, 0, 1, 1], [], []>} : vector<8x32xbf16>, vector<32x128xbf16>, vector<8x128xf32> -> vector<8x128xf32>
    %349 = arith.addf %345, %348 : vector<8x128xf32>
    %350 = arith.truncf %336 : vector<8x16xf32> to vector<8x16xbf16>
    %cst_96 = arith.constant dense<0.000000e+00> : vector<8x128xf32>
    %351 = tpu.matmul %350, %4, %cst_96 {dimension_numbers = #tpu.dot_dimension_numbers<[1], [0], [0], [1], [0, 0, 1, 1], [], []>} : vector<8x16xbf16>, vector<16x128xbf16>, vector<8x128xf32> -> vector<8x128xf32>
    %352 = arith.addf %349, %351 : vector<8x128xf32>
    %353 = arith.negf %352 : vector<8x128xf32>
    %354 = math.exp %353 : vector<8x128xf32>
    %cst_97 = arith.constant 1.000000e+00 : f32
    %355 = vector.broadcast %cst_97 : f32 to vector<8x128xf32>
    %356 = arith.addf %355, %354 : vector<8x128xf32>
    %357 = arith.divf %355, %356 : vector<8x128xf32>
    %358 = math.tanh %352 : vector<8x128xf32>
    %359 = vector.extract_strided_slice %357 {offsets = [0, 0], sizes = [8, 32], strides = [1, 1]} : vector<8x128xf32> to vector<8x32xf32>
    %360 = vector.extract_strided_slice %357 {offsets = [0, 32], sizes = [8, 32], strides = [1, 1]} : vector<8x128xf32> to vector<8x32xf32>
    %361 = vector.extract_strided_slice %358 {offsets = [0, 64], sizes = [8, 32], strides = [1, 1]} : vector<8x128xf32> to vector<8x32xf32>
    %362 = vector.extract_strided_slice %357 {offsets = [0, 96], sizes = [8, 32], strides = [1, 1]} : vector<8x128xf32> to vector<8x32xf32>
    %363 = arith.mulf %360, %298 : vector<8x32xf32>
    %364 = arith.mulf %359, %361 : vector<8x32xf32>
    %365 = arith.addf %363, %364 : vector<8x32xf32>
    %366 = math.tanh %365 : vector<8x32xf32>
    %367 = arith.mulf %362, %366 : vector<8x32xf32>
    %368 = arith.truncf %367 : vector<8x32xf32> to vector<8x32xbf16>
    %cst_98 = arith.constant dense<0.000000e+00> : vector<8x32xf32>
    %369 = tpu.matmul %368, %5, %cst_98 {dimension_numbers = #tpu.dot_dimension_numbers<[1], [0], [0], [1], [0, 0, 1, 1], [], []>} : vector<8x32xbf16>, vector<32x32xbf16>, vector<8x32xf32> -> vector<8x32xf32>
    %370 = vector.extract_strided_slice %369 {offsets = [0, 0], sizes = [8, 16], strides = [1, 1]} : vector<8x32xf32> to vector<8x16xf32>
    %371 = vector.extract_strided_slice %369 {offsets = [0, 16], sizes = [8, 16], strides = [1, 1]} : vector<8x32xf32> to vector<8x16xf32>
    %372 = vector.shape_cast %370 : vector<8x16xf32> to vector<8x1x16xf32>
    %373 = vector.broadcast %372 : vector<8x1x16xf32> to vector<8x8x16xf32>
    %374 = arith.mulf %342, %373 : vector<8x8x16xf32>
    %cst_99 = arith.constant dense<0.000000e+00> : vector<8x8xf32>
    %375 = vector.multi_reduction <add>, %374, %cst_99 [2] : vector<8x8x16xf32> to vector<8x8xf32>
    %cst_100 = arith.constant dense<0xFF800000> : vector<8xf32>
    %376 = vector.multi_reduction <maximumf>, %375, %cst_100 [1] : vector<8x8xf32> to vector<8xf32>
    %377 = vector.shape_cast %376 : vector<8xf32> to vector<8x1xf32>
    %378 = vector.broadcast %377 : vector<8x1xf32> to vector<8x8xf32>
    %379 = arith.subf %375, %378 : vector<8x8xf32>
    %380 = math.exp %379 : vector<8x8xf32>
    %cst_101 = arith.constant dense<0.000000e+00> : vector<8xf32>
    %381 = vector.multi_reduction <add>, %380, %cst_101 [1] : vector<8x8xf32> to vector<8xf32>
    %382 = vector.shape_cast %381 : vector<8xf32> to vector<8x1xf32>
    %383 = tpu.reciprocal %382 {approx = true} : vector<8x1xf32> -> vector<8x1xf32>
    %384 = vector.broadcast %383 : vector<8x1xf32> to vector<8x8xf32>
    %385 = arith.mulf %380, %384 : vector<8x8xf32>
    %386 = vector.shape_cast %371 : vector<8x16xf32> to vector<8x1x16xf32>
    %387 = vector.broadcast %386 : vector<8x1x16xf32> to vector<8x8x16xf32>
    %388 = arith.mulf %342, %387 : vector<8x8x16xf32>
    %cst_102 = arith.constant dense<0.000000e+00> : vector<8x8xf32>
    %389 = vector.multi_reduction <add>, %388, %cst_102 [2] : vector<8x8x16xf32> to vector<8x8xf32>
    %cst_103 = arith.constant dense<0xFF800000> : vector<8xf32>
    %390 = vector.multi_reduction <maximumf>, %389, %cst_103 [1] : vector<8x8xf32> to vector<8xf32>
    %391 = vector.shape_cast %390 : vector<8xf32> to vector<8x1xf32>
    %392 = vector.broadcast %391 : vector<8x1xf32> to vector<8x8xf32>
    %393 = arith.subf %389, %392 : vector<8x8xf32>
    %394 = math.exp %393 : vector<8x8xf32>
    %cst_104 = arith.constant dense<0.000000e+00> : vector<8xf32>
    %395 = vector.multi_reduction <add>, %394, %cst_104 [1] : vector<8x8xf32> to vector<8xf32>
    %396 = vector.shape_cast %395 : vector<8xf32> to vector<8x1xf32>
    %397 = tpu.reciprocal %396 {approx = true} : vector<8x1xf32> -> vector<8x1xf32>
    %398 = vector.broadcast %397 : vector<8x1xf32> to vector<8x8xf32>
    %399 = arith.mulf %394, %398 : vector<8x8xf32>
    %400 = vector.shape_cast %385 : vector<8x8xf32> to vector<8x8x1xf32>
    %401 = vector.broadcast %400 : vector<8x8x1xf32> to vector<8x8x16xf32>
    %402 = arith.mulf %401, %342 : vector<8x8x16xf32>
    %cst_105 = arith.constant dense<0.000000e+00> : vector<8x16xf32>
    %403 = vector.multi_reduction <add>, %402, %cst_105 [1] : vector<8x8x16xf32> to vector<8x16xf32>
    %404 = vector.shape_cast %399 : vector<8x8xf32> to vector<8x8x1xf32>
    %405 = vector.shape_cast %346 : vector<8x16xf32> to vector<8x1x16xf32>
    %406 = vector.broadcast %404 : vector<8x8x1xf32> to vector<8x8x16xf32>
    %407 = vector.broadcast %405 : vector<8x1x16xf32> to vector<8x8x16xf32>
    %408 = arith.mulf %406, %407 : vector<8x8x16xf32>
    %409 = arith.addf %342, %408 : vector<8x8x16xf32>
    %c0_106 = arith.constant 0 : index
    %c160 = arith.constant 160 : index
    %410 = vector.load %arg9[%c0_106, %c160] : memref<8x384xf32, #tpu.memory_space<vmem>>, vector<8x32xf32>
    tpu.vector_store %arg9[%c0_106, %c160], %367 {strides = array<i32>} : memref<8x384xf32, #tpu.memory_space<vmem>>, vector<8x32xf32>,
    %c0_107 = arith.constant 0 : index
    %c336 = arith.constant 336 : index
    %411 = vector.load %arg9[%c0_107, %c336] : memref<8x384xf32, #tpu.memory_space<vmem>>, vector<8x16xf32>
    tpu.vector_store %arg9[%c0_107, %c336], %403 {strides = array<i32>} : memref<8x384xf32, #tpu.memory_space<vmem>>, vector<8x16xf32>,
    %c0_108 = arith.constant 0 : index
    %c768 = arith.constant 768 : index
    %412 = vector.load %arg2[%c0_108, %c768] : memref<8x1152xf32, #tpu.memory_space<vmem>>, vector<8x128xf32>
    %c0_109 = arith.constant 0 : index
    %c1120 = arith.constant 1120 : index
    %413 = vector.load %arg2[%c0_109, %c1120] : memref<8x1152xf32, #tpu.memory_space<vmem>>, vector<8x16xf32>
    %414 = arith.truncf %367 : vector<8x32xf32> to vector<8x32xbf16>
    %cst_110 = arith.constant dense<0.000000e+00> : vector<8x128xf32>
    %415 = tpu.matmul %414, %3, %cst_110 {dimension_numbers = #tpu.dot_dimension_numbers<[1], [0], [0], [1], [0, 0, 1, 1], [], []>} : vector<8x32xbf16>, vector<32x128xbf16>, vector<8x128xf32> -> vector<8x128xf32>
    %416 = arith.addf %412, %415 : vector<8x128xf32>
    %417 = arith.truncf %403 : vector<8x16xf32> to vector<8x16xbf16>
    %cst_111 = arith.constant dense<0.000000e+00> : vector<8x128xf32>
    %418 = tpu.matmul %417, %4, %cst_111 {dimension_numbers = #tpu.dot_dimension_numbers<[1], [0], [0], [1], [0, 0, 1, 1], [], []>} : vector<8x16xbf16>, vector<16x128xbf16>, vector<8x128xf32> -> vector<8x128xf32>
    %419 = arith.addf %416, %418 : vector<8x128xf32>
    %420 = arith.negf %419 : vector<8x128xf32>
    %421 = math.exp %420 : vector<8x128xf32>
    %cst_112 = arith.constant 1.000000e+00 : f32
    %422 = vector.broadcast %cst_112 : f32 to vector<8x128xf32>
    %423 = arith.addf %422, %421 : vector<8x128xf32>
    %424 = arith.divf %422, %423 : vector<8x128xf32>
    %425 = math.tanh %419 : vector<8x128xf32>
    %426 = vector.extract_strided_slice %424 {offsets = [0, 0], sizes = [8, 32], strides = [1, 1]} : vector<8x128xf32> to vector<8x32xf32>
    %427 = vector.extract_strided_slice %424 {offsets = [0, 32], sizes = [8, 32], strides = [1, 1]} : vector<8x128xf32> to vector<8x32xf32>
    %428 = vector.extract_strided_slice %425 {offsets = [0, 64], sizes = [8, 32], strides = [1, 1]} : vector<8x128xf32> to vector<8x32xf32>
    %429 = vector.extract_strided_slice %424 {offsets = [0, 96], sizes = [8, 32], strides = [1, 1]} : vector<8x128xf32> to vector<8x32xf32>
    %430 = arith.mulf %427, %365 : vector<8x32xf32>
    %431 = arith.mulf %426, %428 : vector<8x32xf32>
    %432 = arith.addf %430, %431 : vector<8x32xf32>
    %433 = math.tanh %432 : vector<8x32xf32>
    %434 = arith.mulf %429, %433 : vector<8x32xf32>
    %435 = arith.truncf %434 : vector<8x32xf32> to vector<8x32xbf16>
    %cst_113 = arith.constant dense<0.000000e+00> : vector<8x32xf32>
    %436 = tpu.matmul %435, %5, %cst_113 {dimension_numbers = #tpu.dot_dimension_numbers<[1], [0], [0], [1], [0, 0, 1, 1], [], []>} : vector<8x32xbf16>, vector<32x32xbf16>, vector<8x32xf32> -> vector<8x32xf32>
    %437 = vector.extract_strided_slice %436 {offsets = [0, 0], sizes = [8, 16], strides = [1, 1]} : vector<8x32xf32> to vector<8x16xf32>
    %438 = vector.extract_strided_slice %436 {offsets = [0, 16], sizes = [8, 16], strides = [1, 1]} : vector<8x32xf32> to vector<8x16xf32>
    %439 = vector.shape_cast %437 : vector<8x16xf32> to vector<8x1x16xf32>
    %440 = vector.broadcast %439 : vector<8x1x16xf32> to vector<8x8x16xf32>
    %441 = arith.mulf %409, %440 : vector<8x8x16xf32>
    %cst_114 = arith.constant dense<0.000000e+00> : vector<8x8xf32>
    %442 = vector.multi_reduction <add>, %441, %cst_114 [2] : vector<8x8x16xf32> to vector<8x8xf32>
    %cst_115 = arith.constant dense<0xFF800000> : vector<8xf32>
    %443 = vector.multi_reduction <maximumf>, %442, %cst_115 [1] : vector<8x8xf32> to vector<8xf32>
    %444 = vector.shape_cast %443 : vector<8xf32> to vector<8x1xf32>
    %445 = vector.broadcast %444 : vector<8x1xf32> to vector<8x8xf32>
    %446 = arith.subf %442, %445 : vector<8x8xf32>
    %447 = math.exp %446 : vector<8x8xf32>
    %cst_116 = arith.constant dense<0.000000e+00> : vector<8xf32>
    %448 = vector.multi_reduction <add>, %447, %cst_116 [1] : vector<8x8xf32> to vector<8xf32>
    %449 = vector.shape_cast %448 : vector<8xf32> to vector<8x1xf32>
    %450 = tpu.reciprocal %449 {approx = true} : vector<8x1xf32> -> vector<8x1xf32>
    %451 = vector.broadcast %450 : vector<8x1xf32> to vector<8x8xf32>
    %452 = arith.mulf %447, %451 : vector<8x8xf32>
    %453 = vector.shape_cast %438 : vector<8x16xf32> to vector<8x1x16xf32>
    %454 = vector.broadcast %453 : vector<8x1x16xf32> to vector<8x8x16xf32>
    %455 = arith.mulf %409, %454 : vector<8x8x16xf32>
    %cst_117 = arith.constant dense<0.000000e+00> : vector<8x8xf32>
    %456 = vector.multi_reduction <add>, %455, %cst_117 [2] : vector<8x8x16xf32> to vector<8x8xf32>
    %cst_118 = arith.constant dense<0xFF800000> : vector<8xf32>
    %457 = vector.multi_reduction <maximumf>, %456, %cst_118 [1] : vector<8x8xf32> to vector<8xf32>
    %458 = vector.shape_cast %457 : vector<8xf32> to vector<8x1xf32>
    %459 = vector.broadcast %458 : vector<8x1xf32> to vector<8x8xf32>
    %460 = arith.subf %456, %459 : vector<8x8xf32>
    %461 = math.exp %460 : vector<8x8xf32>
    %cst_119 = arith.constant dense<0.000000e+00> : vector<8xf32>
    %462 = vector.multi_reduction <add>, %461, %cst_119 [1] : vector<8x8xf32> to vector<8xf32>
    %463 = vector.shape_cast %462 : vector<8xf32> to vector<8x1xf32>
    %464 = tpu.reciprocal %463 {approx = true} : vector<8x1xf32> -> vector<8x1xf32>
    %465 = vector.broadcast %464 : vector<8x1xf32> to vector<8x8xf32>
    %466 = arith.mulf %461, %465 : vector<8x8xf32>
    %467 = vector.shape_cast %452 : vector<8x8xf32> to vector<8x8x1xf32>
    %468 = vector.broadcast %467 : vector<8x8x1xf32> to vector<8x8x16xf32>
    %469 = arith.mulf %468, %409 : vector<8x8x16xf32>
    %cst_120 = arith.constant dense<0.000000e+00> : vector<8x16xf32>
    %470 = vector.multi_reduction <add>, %469, %cst_120 [1] : vector<8x8x16xf32> to vector<8x16xf32>
    %471 = vector.shape_cast %466 : vector<8x8xf32> to vector<8x8x1xf32>
    %472 = vector.shape_cast %413 : vector<8x16xf32> to vector<8x1x16xf32>
    %473 = vector.broadcast %471 : vector<8x8x1xf32> to vector<8x8x16xf32>
    %474 = vector.broadcast %472 : vector<8x1x16xf32> to vector<8x8x16xf32>
    %475 = arith.mulf %473, %474 : vector<8x8x16xf32>
    %476 = arith.addf %409, %475 : vector<8x8x16xf32>
    %c0_121 = arith.constant 0 : index
    %c192 = arith.constant 192 : index
    %477 = vector.load %arg9[%c0_121, %c192] : memref<8x384xf32, #tpu.memory_space<vmem>>, vector<8x32xf32>
    tpu.vector_store %arg9[%c0_121, %c192], %434 {strides = array<i32>} : memref<8x384xf32, #tpu.memory_space<vmem>>, vector<8x32xf32>,
    %c0_122 = arith.constant 0 : index
    %c352 = arith.constant 352 : index
    %478 = vector.load %arg9[%c0_122, %c352] : memref<8x384xf32, #tpu.memory_space<vmem>>, vector<8x16xf32>
    tpu.vector_store %arg9[%c0_122, %c352], %470 {strides = array<i32>} : memref<8x384xf32, #tpu.memory_space<vmem>>, vector<8x16xf32>,
    %c0_123 = arith.constant 0 : index
    %c896 = arith.constant 896 : index
    %479 = vector.load %arg2[%c0_123, %c896] : memref<8x1152xf32, #tpu.memory_space<vmem>>, vector<8x128xf32>
    %c0_124 = arith.constant 0 : index
    %c1136 = arith.constant 1136 : index
    %480 = vector.load %arg2[%c0_124, %c1136] : memref<8x1152xf32, #tpu.memory_space<vmem>>, vector<8x16xf32>
    %481 = arith.truncf %434 : vector<8x32xf32> to vector<8x32xbf16>
    %cst_125 = arith.constant dense<0.000000e+00> : vector<8x128xf32>
    %482 = tpu.matmul %481, %3, %cst_125 {dimension_numbers = #tpu.dot_dimension_numbers<[1], [0], [0], [1], [0, 0, 1, 1], [], []>} : vector<8x32xbf16>, vector<32x128xbf16>, vector<8x128xf32> -> vector<8x128xf32>
    %483 = arith.addf %479, %482 : vector<8x128xf32>
    %484 = arith.truncf %470 : vector<8x16xf32> to vector<8x16xbf16>
    %cst_126 = arith.constant dense<0.000000e+00> : vector<8x128xf32>
    %485 = tpu.matmul %484, %4, %cst_126 {dimension_numbers = #tpu.dot_dimension_numbers<[1], [0], [0], [1], [0, 0, 1, 1], [], []>} : vector<8x16xbf16>, vector<16x128xbf16>, vector<8x128xf32> -> vector<8x128xf32>
    %486 = arith.addf %483, %485 : vector<8x128xf32>
    %487 = arith.negf %486 : vector<8x128xf32>
    %488 = math.exp %487 : vector<8x128xf32>
    %cst_127 = arith.constant 1.000000e+00 : f32
    %489 = vector.broadcast %cst_127 : f32 to vector<8x128xf32>
    %490 = arith.addf %489, %488 : vector<8x128xf32>
    %491 = arith.divf %489, %490 : vector<8x128xf32>
    %492 = math.tanh %486 : vector<8x128xf32>
    %493 = vector.extract_strided_slice %491 {offsets = [0, 0], sizes = [8, 32], strides = [1, 1]} : vector<8x128xf32> to vector<8x32xf32>
    %494 = vector.extract_strided_slice %491 {offsets = [0, 32], sizes = [8, 32], strides = [1, 1]} : vector<8x128xf32> to vector<8x32xf32>
    %495 = vector.extract_strided_slice %492 {offsets = [0, 64], sizes = [8, 32], strides = [1, 1]} : vector<8x128xf32> to vector<8x32xf32>
    %496 = vector.extract_strided_slice %491 {offsets = [0, 96], sizes = [8, 32], strides = [1, 1]} : vector<8x128xf32> to vector<8x32xf32>
    %497 = arith.mulf %494, %432 : vector<8x32xf32>
    %498 = arith.mulf %493, %495 : vector<8x32xf32>
    %499 = arith.addf %497, %498 : vector<8x32xf32>
    %500 = math.tanh %499 : vector<8x32xf32>
    %501 = arith.mulf %496, %500 : vector<8x32xf32>
    %502 = arith.truncf %501 : vector<8x32xf32> to vector<8x32xbf16>
    %cst_128 = arith.constant dense<0.000000e+00> : vector<8x32xf32>
    %503 = tpu.matmul %502, %5, %cst_128 {dimension_numbers = #tpu.dot_dimension_numbers<[1], [0], [0], [1], [0, 0, 1, 1], [], []>} : vector<8x32xbf16>, vector<32x32xbf16>, vector<8x32xf32> -> vector<8x32xf32>
    %504 = vector.extract_strided_slice %503 {offsets = [0, 0], sizes = [8, 16], strides = [1, 1]} : vector<8x32xf32> to vector<8x16xf32>
    %505 = vector.extract_strided_slice %503 {offsets = [0, 16], sizes = [8, 16], strides = [1, 1]} : vector<8x32xf32> to vector<8x16xf32>
    %506 = vector.shape_cast %504 : vector<8x16xf32> to vector<8x1x16xf32>
    %507 = vector.broadcast %506 : vector<8x1x16xf32> to vector<8x8x16xf32>
    %508 = arith.mulf %476, %507 : vector<8x8x16xf32>
    %cst_129 = arith.constant dense<0.000000e+00> : vector<8x8xf32>
    %509 = vector.multi_reduction <add>, %508, %cst_129 [2] : vector<8x8x16xf32> to vector<8x8xf32>
    %cst_130 = arith.constant dense<0xFF800000> : vector<8xf32>
    %510 = vector.multi_reduction <maximumf>, %509, %cst_130 [1] : vector<8x8xf32> to vector<8xf32>
    %511 = vector.shape_cast %510 : vector<8xf32> to vector<8x1xf32>
    %512 = vector.broadcast %511 : vector<8x1xf32> to vector<8x8xf32>
    %513 = arith.subf %509, %512 : vector<8x8xf32>
    %514 = math.exp %513 : vector<8x8xf32>
    %cst_131 = arith.constant dense<0.000000e+00> : vector<8xf32>
    %515 = vector.multi_reduction <add>, %514, %cst_131 [1] : vector<8x8xf32> to vector<8xf32>
    %516 = vector.shape_cast %515 : vector<8xf32> to vector<8x1xf32>
    %517 = tpu.reciprocal %516 {approx = true} : vector<8x1xf32> -> vector<8x1xf32>
    %518 = vector.broadcast %517 : vector<8x1xf32> to vector<8x8xf32>
    %519 = arith.mulf %514, %518 : vector<8x8xf32>
    %520 = vector.shape_cast %505 : vector<8x16xf32> to vector<8x1x16xf32>
    %521 = vector.broadcast %520 : vector<8x1x16xf32> to vector<8x8x16xf32>
    %522 = arith.mulf %476, %521 : vector<8x8x16xf32>
    %cst_132 = arith.constant dense<0.000000e+00> : vector<8x8xf32>
    %523 = vector.multi_reduction <add>, %522, %cst_132 [2] : vector<8x8x16xf32> to vector<8x8xf32>
    %cst_133 = arith.constant dense<0xFF800000> : vector<8xf32>
    %524 = vector.multi_reduction <maximumf>, %523, %cst_133 [1] : vector<8x8xf32> to vector<8xf32>
    %525 = vector.shape_cast %524 : vector<8xf32> to vector<8x1xf32>
    %526 = vector.broadcast %525 : vector<8x1xf32> to vector<8x8xf32>
    %527 = arith.subf %523, %526 : vector<8x8xf32>
    %528 = math.exp %527 : vector<8x8xf32>
    %cst_134 = arith.constant dense<0.000000e+00> : vector<8xf32>
    %529 = vector.multi_reduction <add>, %528, %cst_134 [1] : vector<8x8xf32> to vector<8xf32>
    %530 = vector.shape_cast %529 : vector<8xf32> to vector<8x1xf32>
    %531 = tpu.reciprocal %530 {approx = true} : vector<8x1xf32> -> vector<8x1xf32>
    %532 = vector.broadcast %531 : vector<8x1xf32> to vector<8x8xf32>
    %533 = arith.mulf %528, %532 : vector<8x8xf32>
    %534 = vector.shape_cast %519 : vector<8x8xf32> to vector<8x8x1xf32>
    %535 = vector.broadcast %534 : vector<8x8x1xf32> to vector<8x8x16xf32>
    %536 = arith.mulf %535, %476 : vector<8x8x16xf32>
    %cst_135 = arith.constant dense<0.000000e+00> : vector<8x16xf32>
    %537 = vector.multi_reduction <add>, %536, %cst_135 [1] : vector<8x8x16xf32> to vector<8x16xf32>
    %538 = vector.shape_cast %533 : vector<8x8xf32> to vector<8x8x1xf32>
    %539 = vector.shape_cast %480 : vector<8x16xf32> to vector<8x1x16xf32>
    %540 = vector.broadcast %538 : vector<8x8x1xf32> to vector<8x8x16xf32>
    %541 = vector.broadcast %539 : vector<8x1x16xf32> to vector<8x8x16xf32>
    %542 = arith.mulf %540, %541 : vector<8x8x16xf32>
    %543 = arith.addf %476, %542 : vector<8x8x16xf32>
    %c0_136 = arith.constant 0 : index
    %c224 = arith.constant 224 : index
    %544 = vector.load %arg9[%c0_136, %c224] : memref<8x384xf32, #tpu.memory_space<vmem>>, vector<8x32xf32>
    tpu.vector_store %arg9[%c0_136, %c224], %501 {strides = array<i32>} : memref<8x384xf32, #tpu.memory_space<vmem>>, vector<8x32xf32>,
    %c0_137 = arith.constant 0 : index
    %c368 = arith.constant 368 : index
    %545 = vector.load %arg9[%c0_137, %c368] : memref<8x384xf32, #tpu.memory_space<vmem>>, vector<8x16xf32>
    tpu.vector_store %arg9[%c0_137, %c368], %537 {strides = array<i32>} : memref<8x384xf32, #tpu.memory_space<vmem>>, vector<8x16xf32>,
    %c0_138 = arith.constant 0 : index
    %c0_139 = arith.constant 0 : index
    %546 = vector.load %arg10[%c0_138, %c0_139] : memref<8x32xf32, #tpu.memory_space<vmem>>, vector<8x32xf32>
    tpu.vector_store %arg10[%c0_138, %c0_139], %501 {strides = array<i32>} : memref<8x32xf32, #tpu.memory_space<vmem>>, vector<8x32xf32>,
    %c0_140 = arith.constant 0 : index
    %c0_141 = arith.constant 0 : index
    %547 = vector.load %arg11[%c0_140, %c0_141] : memref<8x16xf32, #tpu.memory_space<vmem>>, vector<8x16xf32>
    tpu.vector_store %arg11[%c0_140, %c0_141], %537 {strides = array<i32>} : memref<8x16xf32, #tpu.memory_space<vmem>>, vector<8x16xf32>,
    %c0_142 = arith.constant 0 : index
    %c0_143 = arith.constant 0 : index
    %548 = vector.load %arg12[%c0_142, %c0_143] : memref<8x32xf32, #tpu.memory_space<vmem>>, vector<8x32xf32>
    tpu.vector_store %arg12[%c0_142, %c0_143], %499 {strides = array<i32>} : memref<8x32xf32, #tpu.memory_space<vmem>>, vector<8x32xf32>,
    %c0_144 = arith.constant 0 : index
    %c0_145 = arith.constant 0 : index
    %c0_146 = arith.constant 0 : index
    %549 = vector.load %arg13[%c0_144, %c0_145, %c0_146] : memref<8x8x16xf32, #tpu.memory_space<vmem>>, vector<8x8x16xf32>
    tpu.vector_store %arg13[%c0_144, %c0_145, %c0_146], %543 {strides = array<i32>} : memref<8x8x16xf32, #tpu.memory_space<vmem>>, vector<8x8x16xf32>,
    return
  }
  func.func @transform_0(%arg0: i32, %arg1: i32) -> (i32, i32) {
    %c0_i32 = arith.constant 0 : i32
    return %arg0, %arg1 : i32, i32
  }
  func.func @transform_1(%arg0: i32, %arg1: i32) -> (i32, i32) {
    %c0_i32 = arith.constant 0 : i32
    %c0_i32_0 = arith.constant 0 : i32
    %c0_i32_1 = arith.constant 0 : i32
    return %c0_i32, %c0_i32_0 : i32, i32
  }
  func.func @transform_2(%arg0: i32, %arg1: i32) -> (i32, i32) {
    %c0_i32 = arith.constant 0 : i32
    %c0_i32_0 = arith.constant 0 : i32
    %c0_i32_1 = arith.constant 0 : i32
    return %c0_i32, %c0_i32_0 : i32, i32
  }
  func.func @transform_3(%arg0: i32, %arg1: i32) -> (i32, i32) {
    %c0_i32 = arith.constant 0 : i32
    %c0_i32_0 = arith.constant 0 : i32
    %c0_i32_1 = arith.constant 0 : i32
    return %c0_i32, %c0_i32_0 : i32, i32
  }
  func.func @transform_4(%arg0: i32, %arg1: i32) -> (i32, i32) {
    %c0_i32 = arith.constant 0 : i32
    %c0_i32_0 = arith.constant 0 : i32
    %c0_i32_1 = arith.constant 0 : i32
    return %c0_i32, %c0_i32_0 : i32, i32
  }
  func.func @transform_5(%arg0: i32, %arg1: i32) -> (i32, i32) {
    %c0_i32 = arith.constant 0 : i32
    %c0_i32_0 = arith.constant 0 : i32
    %c0_i32_1 = arith.constant 0 : i32
    return %c0_i32, %c0_i32_0 : i32, i32
  }
  func.func @transform_6(%arg0: i32, %arg1: i32) -> (i32, i32) {
    %c0_i32 = arith.constant 0 : i32
    %c0_i32_0 = arith.constant 0 : i32
    %c0_i32_1 = arith.constant 0 : i32
    return %c0_i32, %c0_i32_0 : i32, i32
  }
  func.func @transform_7(%arg0: i32, %arg1: i32) -> (i32, i32) {
    %c0_i32 = arith.constant 0 : i32
    return %arg0, %arg1 : i32, i32
  }
}

</mosaic_0001>

<llo_original>
// kernel: tpu_custom_call.1
$region0: #{tpu_custom_call.1}
  #allocation0 [shape = 'u32[]', space=smem, size = 0x4, offset = 0x4, fixed_abs, tag = 'smem constant byte address 0x4 - core index']
  #allocation1 [shape = 'u32[144,128]{1,0:T(1,128)}', space=vmem, size = 0x12000, scoped, tag = 'internal scratch']
  #allocation2 [shape = 'f32[8,32]{1,0:T(8,128)}', space=vmem, size = 0x1000, scoped, tag = 'scratch operand']
  #allocation3 [shape = 'f32[8,16]{1,0:T(8,128)}', space=vmem, size = 0x1000, scoped, tag = 'scratch operand']
  #allocation4 [shape = 'f32[8,32]{1,0:T(8,128)}', space=vmem, size = 0x1000, scoped, tag = 'scratch operand']
  #allocation5 [shape = 'f32[8,8,16]{2,1,0:T(8,128)}', space=vmem, size = 0x8000, scoped, tag = 'scratch operand']
  %s0 = inlined_call_operand.hbm [shape: f32[16,2304], index: 0, kind: input, shape index: {}]
  %s1 = inlined_call_operand.hbm [shape: bf16[32,128], index: 1, kind: input, shape index: {}]
  %s2 = inlined_call_operand.hbm [shape: bf16[16,128], index: 2, kind: input, shape index: {}]
  %s3 = inlined_call_operand.hbm [shape: bf16[32,32], index: 3, kind: input, shape index: {}]
  %s4 = inlined_call_operand.vmem [shape: f32[8,32], index: 4, kind: input, shape index: {}]
  %s5 = inlined_call_operand.vmem [shape: f32[8,32], index: 5, kind: input, shape index: {}]
  %s6 = inlined_call_operand.hbm [shape: f32[8,16], index: 6, kind: input, shape index: {}]
  %s7 = inlined_call_operand.hbm [shape: f32[16,768], index: 7, kind: output, shape index: {}]
  %s8 = sld [smem:[#allocation0]]
  $region85: #{tpu_custom_call.1} parent=0
    _
  %s10 = ssub.s32 1, %s8
  %s11 = scalar_select 0, %s10, %s8
  $region1: #{tpu_custom_call.1} parent=0
    #allocation6 [shape = 'u8[73728]{0}', space=vmem, size = 0x12000, scoped, tag = 'input window, operand 0']
    #allocation7 [shape = 's32[2]{0}', space=sflag, size = 0x8, scoped, tag = 'scoped memory for tpu_custom_call.1']
    #allocation8 [shape = 's32[2]{0}', space=sflag, size = 0x8, scoped, tag = 'scoped memory for tpu_custom_call.1']
    #allocation9 [shape = 'u8[8192]{0}', space=vmem, size = 0x2000, scoped, tag = 'input window, operand 1, single buffered']
    #allocation10 [shape = 's32[1]{0}', space=sflag, size = 0x4, scoped, tag = 'scoped memory for tpu_custom_call.1']
    #allocation11 [shape = 'u8[4096]{0}', space=vmem, size = 0x1000, scoped, tag = 'input window, operand 2, single buffered']
    #allocation12 [shape = 'u8[8192]{0}', space=vmem, size = 0x2000, scoped, tag = 'input window, operand 3, single buffered']
    #allocation13 [shape = 's32[1]{0}', space=sflag, size = 0x4, scoped, tag = 'scoped memory for tpu_custom_call.1']
    #allocation14 [shape = 'u8[4096]{0}', space=vmem, size = 0x1000, scoped, tag = 'input window, operand 6, single buffered']
    #allocation15 [shape = 'u8[24576]{0}', space=vmem, size = 0x6000, scoped, tag = 'output window, operand 0']
    %12 = vsyncpa [#allocation7], 0
    %s13 = scalar_lea.sflag [#allocation7], 1
    %14 = vsyncpa %s13, 0
    %15 = vsyncpa [#allocation10], 0
    %16 = vsyncpa [#allocation13], 0
    %17 = vsyncpa [#allocation8], 0
    %s18 = scalar_lea.sflag [#allocation8], 1
    %19 = vsyncpa %s18, 0
    loop: start=0, step=1, limit=6
    $region2: #{tpu_custom_call.1} parent=1 // loop_pre_header
      _
    $region3: #{tpu_custom_call.1} parent=1 // loop_header
      %s21 = sphi 0, %s25
      %p22 = scmp.ge.s32.totalorder %s21, 6
      %s28 = sphi 0, %s40
      %s29 = sphi 0, %s36
      %s30 = sphi 0, %s28
      %s31 = sphi 0, %s29
      %s32 = sphi 0, %s30
      %s33 = sphi 0, %s31
      %s45 = sphi 0, %s47
      %s48 = sphi 0, %s45
      %s49 = sphi 0, %s48
      %s65 = sphi 0, %s49
      %s69 = sphi 0, %s69
      %s71 = sphi 0, %s69
      %s72 = sphi 0, %s71
      %s86 = sphi 0, %s72
      %s90 = sphi 0, %s90
      %s92 = sphi 0, %s90
      %s93 = sphi 0, %s92
      %s107 = sphi 0, %s93
      %s111 = sphi 0, %s111
      %s113 = sphi 0, %s111
      %s114 = sphi 0, %s113
      %s128 = sphi 0, %s114
      %s132 = sphi 0, %s132
      %s134 = sphi 0, %s132
      %s135 = sphi 0, %s134
      %s149 = sphi 0, %s135
      %s153 = sphi 0, %s153
      %s155 = sphi 0, %s153
      %s156 = sphi 0, %s155
      %s170 = sphi 0, %s156
      %s174 = sphi 0, %s174
      %s176 = sphi 0, %s174
      %s177 = sphi 0, %s176
      %s191 = sphi 0, %s177
      %s199 = sphi 0, %s201
      %s202 = sphi 0, %s199
      %s203 = sphi 0, %s202
      %s219 = sphi 0, %s203
    $region4: #{tpu_custom_call.1} parent=1 // loop_header_branch
      %24 = sbr.rel (%p22) target = $region8
    $region5: #{tpu_custom_call.1} parent=1 // loop_body
      %s26 = ssub.s32 %s21, 1
      %s27 = ssub.s32 %s21, 2
      %s34 = sadd.s32 1, %s29
      %p35 = scmp.ge.s32.totalorder %s34, 2
      %s36 = scalar_select %p35, 0, %s34
      %s37 = sadd.s32 1, %s28
      %s38 = scalar_select %p35, %s37, %s28
      %p39 = scmp.ge.s32.totalorder %s38, 2
      %s40 = scalar_select %p39, 0, %s38
      %s41 = ssub.s32 %s28, %s40
      %s42 = ssub.s32 %s29, %s36
      %s43 = sor.u32 %s41, %s42
      %p44 = scmp.eq.s32.totalorder %s43, 0
      %s46 = sadd.s32 %s45, 1
      %s47 = scalar_select %p44, %s45, %s46
      %p50 = pneg %p44
      %p51 = scmp.eq.s32.totalorder %s21, 3
      %p52 = por %p50, %p51
      %p53 = scmp.ne.s32.totalorder %s45, %s48
      %p54 = scmp.eq.s32.totalorder %s21, 0
      %p55 = por %p53, %p54
      %p56 = scmp.ne.s32.totalorder %s45, %s48
      %p57 = scmp.eq.s32.totalorder %s26, 3
      %p58 = por %p56, %p57
      %p59 = scmp.ne.s32.totalorder %s48, %s49
      %p60 = scmp.eq.s32.totalorder %s26, 0
      %p61 = por %p59, %p60
      %p62 = scmp.ne.s32.totalorder %s48, %s49
      %p63 = scmp.eq.s32.totalorder %s27, 3
      %p64 = por %p62, %p63
      %p66 = scmp.ne.s32.totalorder %s49, %s65
      %p67 = scmp.eq.s32.totalorder %s27, 0
      %p68 = por %p66, %p67
      %s70 = sadd.s32 %s69, 1
      %p73 = scmp.eq.s32.totalorder %s21, 3
      %p74 = scmp.ne.s32.totalorder %s69, %s71
      %p75 = scmp.eq.s32.totalorder %s21, 0
      %p76 = por %p74, %p75
      %p77 = scmp.ne.s32.totalorder %s69, %s71
      %p78 = scmp.eq.s32.totalorder %s26, 3
      %p79 = por %p77, %p78
      %p80 = scmp.ne.s32.totalorder %s71, %s72
      %p81 = scmp.eq.s32.totalorder %s26, 0
      %p82 = por %p80, %p81
      %p83 = scmp.ne.s32.totalorder %s71, %s72
      %p84 = scmp.eq.s32.totalorder %s27, 3
      %p85 = por %p83, %p84
      %p87 = scmp.ne.s32.totalorder %s72, %s86
      %p88 = scmp.eq.s32.totalorder %s27, 0
      %p89 = por %p87, %p88
      %s91 = sadd.s32 %s90, 1
      %p94 = scmp.eq.s32.totalorder %s21, 3
      %p95 = scmp.ne.s32.totalorder %s90, %s92
      %p96 = scmp.eq.s32.totalorder %s21, 0
      %p97 = por %p95, %p96
      %p98 = scmp.ne.s32.totalorder %s90, %s92
      %p99 = scmp.eq.s32.totalorder %s26, 3
      %p100 = por %p98, %p99
      %p101 = scmp.ne.s32.totalorder %s92, %s93
      %p102 = scmp.eq.s32.totalorder %s26, 0
      %p103 = por %p101, %p102
      %p104 = scmp.ne.s32.totalorder %s92, %s93
      %p105 = scmp.eq.s32.totalorder %s27, 3
      %p106 = por %p104, %p105
      %p108 = scmp.ne.s32.totalorder %s93, %s107
      %p109 = scmp.eq.s32.totalorder %s27, 0
      %p110 = por %p108, %p109
      %s112 = sadd.s32 %s111, 1
      %p115 = scmp.eq.s32.totalorder %s21, 3
      %p116 = scmp.ne.s32.totalorder %s111, %s113
      %p117 = scmp.eq.s32.totalorder %s21, 0
      %p118 = por %p116, %p117
      %p119 = scmp.ne.s32.totalorder %s111, %s113
      %p120 = scmp.eq.s32.totalorder %s26, 3
      %p121 = por %p119, %p120
      %p122 = scmp.ne.s32.totalorder %s113, %s114
      %p123 = scmp.eq.s32.totalorder %s26, 0
      %p124 = por %p122, %p123
      %p125 = scmp.ne.s32.totalorder %s113, %s114
      %p126 = scmp.eq.s32.totalorder %s27, 3
      %p127 = por %p125, %p126
      %p129 = scmp.ne.s32.totalorder %s114, %s128
      %p130 = scmp.eq.s32.totalorder %s27, 0
      %p131 = por %p129, %p130
      %s133 = sadd.s32 %s132, 1
      %p136 = scmp.eq.s32.totalorder %s21, 3
      %p137 = scmp.ne.s32.totalorder %s132, %s134
      %p138 = scmp.eq.s32.totalorder %s21, 0
      %p139 = por %p137, %p138
      %p140 = scmp.ne.s32.totalorder %s132, %s134
      %p141 = scmp.eq.s32.totalorder %s26, 3
      %p142 = por %p140, %p141
      %p143 = scmp.ne.s32.totalorder %s134, %s135
      %p144 = scmp.eq.s32.totalorder %s26, 0
      %p145 = por %p143, %p144
      %p146 = scmp.ne.s32.totalorder %s134, %s135
      %p147 = scmp.eq.s32.totalorder %s27, 3
      %p148 = por %p146, %p147
      %p150 = scmp.ne.s32.totalorder %s135, %s149
      %p151 = scmp.eq.s32.totalorder %s27, 0
      %p152 = por %p150, %p151
      %s154 = sadd.s32 %s153, 1
      %p157 = scmp.eq.s32.totalorder %s21, 3
      %p158 = scmp.ne.s32.totalorder %s153, %s155
      %p159 = scmp.eq.s32.totalorder %s21, 0
      %p160 = por %p158, %p159
      %p161 = scmp.ne.s32.totalorder %s153, %s155
      %p162 = scmp.eq.s32.totalorder %s26, 3
      %p163 = por %p161, %p162
      %p164 = scmp.ne.s32.totalorder %s155, %s156
      %p165 = scmp.eq.s32.totalorder %s26, 0
      %p166 = por %p164, %p165
      %p167 = scmp.ne.s32.totalorder %s155, %s156
      %p168 = scmp.eq.s32.totalorder %s27, 3
      %p169 = por %p167, %p168
      %p171 = scmp.ne.s32.totalorder %s156, %s170
      %p172 = scmp.eq.s32.totalorder %s27, 0
      %p173 = por %p171, %p172
      %s175 = sadd.s32 %s174, 1
      %p178 = scmp.eq.s32.totalorder %s21, 3
      %p179 = scmp.ne.s32.totalorder %s174, %s176
      %p180 = scmp.eq.s32.totalorder %s21, 0
      %p181 = por %p179, %p180
      %p182 = scmp.ne.s32.totalorder %s174, %s176
      %p183 = scmp.eq.s32.totalorder %s26, 3
      %p184 = por %p182, %p183
      %p185 = scmp.ne.s32.totalorder %s176, %s177
      %p186 = scmp.eq.s32.totalorder %s26, 0
      %p187 = por %p185, %p186
      %p188 = scmp.ne.s32.totalorder %s176, %s177
      %p189 = scmp.eq.s32.totalorder %s27, 3
      %p190 = por %p188, %p189
      %p192 = scmp.ne.s32.totalorder %s177, %s191
      %p193 = scmp.eq.s32.totalorder %s27, 0
      %p194 = por %p192, %p193
      %s195 = ssub.s32 %s28, %s40
      %s196 = ssub.s32 %s29, %s36
      %s197 = sor.u32 %s195, %s196
      %p198 = scmp.eq.s32.totalorder %s197, 0
      %s200 = sadd.s32 %s199, 1
      %s201 = scalar_select %p198, %s199, %s200
      %p204 = pneg %p198
      %p205 = scmp.eq.s32.totalorder %s21, 3
      %p206 = por %p204, %p205
      %p207 = scmp.ne.s32.totalorder %s199, %s202
      %p208 = scmp.eq.s32.totalorder %s21, 0
      %p209 = por %p207, %p208
      %p210 = scmp.ne.s32.totalorder %s199, %s202
      %p211 = scmp.eq.s32.totalorder %s26, 3
      %p212 = por %p210, %p211
      %p213 = scmp.ne.s32.totalorder %s202, %s203
      %p214 = scmp.eq.s32.totalorder %s26, 0
      %p215 = por %p213, %p214
      %p216 = scmp.ne.s32.totalorder %s202, %s203
      %p217 = scmp.eq.s32.totalorder %s27, 3
      %p218 = por %p216, %p217
      %p220 = scmp.ne.s32.totalorder %s203, %s219
      %p221 = scmp.eq.s32.totalorder %s27, 0
      %p222 = por %p220, %p221
      %p223 = scmp.le.s32.totalorder 1, %s21
      %p224 = scmp.lt.s32.totalorder %s21, 5
      %p225 = pnand %p223, %p224
      %p226 = pneg %p225
      // Predicated region
      $region9: #{tpu_custom_call.1} parent=5 // pred_check
        _
      $region10: #{tpu_custom_call.1} parent=5 // pred_check_branch
        %228 = sbr.rel (%p225) target = $region12
      $region11: #{tpu_custom_call.1} parent=5 // pred_region
        %s229 = ssub.s32 %s21, 1
        // Predicated region
        $region13: #{tpu_custom_call.1} parent=11 // pred_check
          %p230 = pneg %p82
        $region14: #{tpu_custom_call.1} parent=11 // pred_check_branch
          %232 = sbr.rel (%p230) target = $region16
        $region15: #{tpu_custom_call.1} parent=11 // pred_region
          %s234 = ssub.s32 256, 256
          %235 = vsyncadd [#allocation10], %s234
          %s236 = sshll.u32 [#allocation9], 4
          %s237 = int_to_ptr.vmem [resolvable:$true] %s236
          %242 = dma.hbm_to_vmem [thread:$0]  %s1, 256, %s237, [#allocation10], 64, 64, 4
        $region16: #{tpu_custom_call.1} parent=11 // pred_fallthru
          _
        // Predicated region
        $region17: #{tpu_custom_call.1} parent=11 // pred_check
          %p243 = pneg %p103
        $region18: #{tpu_custom_call.1} parent=11 // pred_check_branch
          %245 = sbr.rel (%p243) target = $region20
        $region19: #{tpu_custom_call.1} parent=11 // pred_region
          %s247 = ssub.s32 128, 128
          %248 = vsyncadd [#allocation10], %s247
          %s249 = sshll.u32 [#allocation11], 4
          %s250 = int_to_ptr.vmem [resolvable:$true] %s249
          %255 = dma.hbm_to_vmem [thread:$0]  %s2, 128, %s250, [#allocation10], 64, 64, 4
        $region20: #{tpu_custom_call.1} parent=11 // pred_fallthru
          _
        // Predicated region
        $region21: #{tpu_custom_call.1} parent=11 // pred_check
          %p256 = pneg %p124
        $region22: #{tpu_custom_call.1} parent=11 // pred_check_branch
          %258 = sbr.rel (%p256) target = $region24
        $region23: #{tpu_custom_call.1} parent=11 // pred_region
          %s260 = ssub.s32 256, 256
          %261 = vsyncadd [#allocation13], %s260
          %s262 = sshll.u32 [#allocation12], 4
          %s263 = int_to_ptr.vmem [resolvable:$true] %s262
          %268 = dma.hbm_to_vmem [thread:$0]  %s3, 256, %s263, [#allocation13], 64, 64, 4
        $region24: #{tpu_custom_call.1} parent=11 // pred_fallthru
          _
        // Predicated region
        $region25: #{tpu_custom_call.1} parent=11 // pred_check
          %p269 = pneg %p145
        $region26: #{tpu_custom_call.1} parent=11 // pred_check_branch
          %271 = sbr.rel (%p269) target = $region28
        $region27: #{tpu_custom_call.1} parent=11 // pred_region
          _
        $region28: #{tpu_custom_call.1} parent=11 // pred_fallthru
          _
        // Predicated region
        $region29: #{tpu_custom_call.1} parent=11 // pred_check
          %p272 = pneg %p166
        $region30: #{tpu_custom_call.1} parent=11 // pred_check_branch
          %274 = sbr.rel (%p272) target = $region32
        $region31: #{tpu_custom_call.1} parent=11 // pred_region
          _
        $region32: #{tpu_custom_call.1} parent=11 // pred_fallthru
          _
        // Predicated region
        $region33: #{tpu_custom_call.1} parent=11 // pred_check
          %p275 = pneg %p187
        $region34: #{tpu_custom_call.1} parent=11 // pred_check_branch
          %277 = sbr.rel (%p275) target = $region36
        $region35: #{tpu_custom_call.1} parent=11 // pred_region
          %s279 = ssub.s32 128, 128
          %280 = vsyncadd [#allocation13], %s279
          %s282 = sshll.u32 [#allocation14], 4
          %s283 = int_to_ptr.vmem [resolvable:$true] %s282
          %285 = dma.hbm_to_vmem [thread:$0]  %s6, 128, %s283, [#allocation13]
        $region36: #{tpu_custom_call.1} parent=11 // pred_fallthru
          _
      $region12: #{tpu_custom_call.1} parent=5 // pred_fallthru
        _
      %p286 = scmp.lt.s32.totalorder %s21, 4
      // Predicated region
      $region37: #{tpu_custom_call.1} parent=5 // pred_check
        %p287 = pneg %p286
      $region38: #{tpu_custom_call.1} parent=5 // pred_check_branch
        %289 = sbr.rel (%p287) target = $region40
      $region39: #{tpu_custom_call.1} parent=5 // pred_region
        // Predicated region
        $region41: #{tpu_custom_call.1} parent=39 // pred_check
          %p290 = pneg %p55
        $region42: #{tpu_custom_call.1} parent=39 // pred_check_branch
          %292 = sbr.rel (%p290) target = $region44
        $region43: #{tpu_custom_call.1} parent=39 // pred_region
          %s293 = sand.u32 %s45, 1
          %s294 = scalar_lea.sflag [#allocation7], %s293
          %s295 = sand.u32 %s45, 1
          %s296 = smul.addr %s295, 72
          %s297 = scalar_lea.vmem [#allocation6], %s296
          %s298 = smul.u32 9, %s29
          %s300 = ssub.s32 1152, 1152
          %301 = vsyncadd %s294, %s300
          %s302 = smul.addr %s28, 18
          %s303 = sadd.s32 %s298, %s302
          %s304 = smul.addr %s303, 128
          %s305 = scalar_lea.hbm %s0, %s304
          %s307 = sshll.u32 %s297, 4
          %s308 = int_to_ptr.vmem [resolvable:$true] %s307
          %310 = dma.hbm_to_vmem [thread:$0]  %s305, 1152, %s308, %s294
        $region44: #{tpu_custom_call.1} parent=39 // pred_fallthru
          _
      $region40: #{tpu_custom_call.1} parent=5 // pred_fallthru
        _
      %p311 = scmp.le.s32.totalorder 1, %s21
      %p312 = scmp.lt.s32.totalorder %s21, 5
      %p313 = pnand %p311, %p312
      %p314 = pneg %p313
      // Predicated region
      $region45: #{tpu_custom_call.1} parent=5 // pred_check
        _
      $region46: #{tpu_custom_call.1} parent=5 // pred_check_branch
        %316 = sbr.rel (%p313) target = $region48
      $region47: #{tpu_custom_call.1} parent=5 // pred_region
        %s317 = ssub.s32 %s21, 1
        %s318 = sand.u32 %s48, 1
        %s319 = scalar_lea.sflag [#allocation7], %s318
        %s320 = sand.u32 %s48, 1
        %s321 = smul.addr %s320, 72
        %s322 = scalar_lea.vmem [#allocation6], %s321
        // Predicated region
        $region49: #{tpu_custom_call.1} parent=47 // pred_check
          %p323 = pneg %p61
        $region50: #{tpu_custom_call.1} parent=47 // pred_check_branch
          %325 = sbr.rel (%p323) target = $region52
        $region51: #{tpu_custom_call.1} parent=47 // pred_region
          %326 = dma.done %s319, 1152
        $region52: #{tpu_custom_call.1} parent=47 // pred_fallthru
          _
        // Predicated region
        $region53: #{tpu_custom_call.1} parent=47 // pred_check
          %p327 = pneg %p82
        $region54: #{tpu_custom_call.1} parent=47 // pred_check_branch
          %329 = sbr.rel (%p327) target = $region56
        $region55: #{tpu_custom_call.1} parent=47 // pred_region
          %330 = dma.done [#allocation10], 256
        $region56: #{tpu_custom_call.1} parent=47 // pred_fallthru
          _
        // Predicated region
        $region57: #{tpu_custom_call.1} parent=47 // pred_check
          %p331 = pneg %p103
        $region58: #{tpu_custom_call.1} parent=47 // pred_check_branch
          %333 = sbr.rel (%p331) target = $region60
        $region59: #{tpu_custom_call.1} parent=47 // pred_region
          %334 = dma.done [#allocation10], 128
        $region60: #{tpu_custom_call.1} parent=47 // pred_fallthru
          _
        // Predicated region
        $region61: #{tpu_custom_call.1} parent=47 // pred_check
          %p335 = pneg %p124
        $region62: #{tpu_custom_call.1} parent=47 // pred_check_branch
          %337 = sbr.rel (%p335) target = $region64
        $region63: #{tpu_custom_call.1} parent=47 // pred_region
          %338 = dma.done [#allocation13], 256
        $region64: #{tpu_custom_call.1} parent=47 // pred_fallthru
          _
        // Predicated region
        $region65: #{tpu_custom_call.1} parent=47 // pred_check
          %p339 = pneg %p187
        $region66: #{tpu_custom_call.1} parent=47 // pred_check_branch
          %341 = sbr.rel (%p339) target = $region68
        $region67: #{tpu_custom_call.1} parent=47 // pred_region
          %342 = dma.done [#allocation13], 128
        $region68: #{tpu_custom_call.1} parent=47 // pred_fallthru
          _
        %s343 = sand.u32 %s48, 1
        %s344 = scalar_lea.sflag [#allocation7], %s343
        %s345 = sand.u32 %s48, 1
        %s346 = smul.addr %s345, 72
        %s347 = scalar_lea.vmem [#allocation6], %s346
        %p348 = pneg %p61
        %p349 = pneg %p58
        %p350 = pneg %p82
        %p351 = pneg %p79
        %p352 = pneg %p103
        %p353 = pneg %p100
        %p354 = pneg %p124
        %p355 = pneg %p121
        %p356 = pneg %p145
        %p357 = pneg %p142
        %p358 = pneg %p166
        %p359 = pneg %p163
        %p360 = pneg %p187
        %p361 = pneg %p184
        %p362 = pneg %p215
        %p363 = pneg %p212
        %s364 = sand.u32 %s202, 1
        %s365 = scalar_lea.sflag [#allocation8], %s364
        %s366 = sand.u32 %s202, 1
        %s367 = smul.addr %s366, 24
        %s368 = scalar_lea.vmem [#allocation15], %s367
        %s369 = smul.u32 9, %s31
        %s370 = smul.u32 3, %s31
        %p372 = scmp.eq.s32.totalorder %s31, 0
        // Predicated region
        $region69: #{tpu_custom_call.1} parent=47 // pred_check
          %p373 = pneg %p372
        $region70: #{tpu_custom_call.1} parent=47 // pred_check_branch
          %375 = sbr.rel (%p373) target = $region72
        $region71: #{tpu_custom_call.1} parent=47 // pred_region
          %v376 = vld [vmem:[%s4] sm:$0xff]
          %vm377 = vcmask 261120
          %378 = vst.msk [vmem:[#allocation2] sm:$0xff] %vm377, %v376
          %v379 = vld [vmem:[#allocation14] sm:$0xff]
          %vm380 = vcmask 130048
          %381 = vst.msk [vmem:[#allocation3] sm:$0xff] %vm380, %v379
          %v382 = vld [vmem:[%s5] sm:$0xff]
          %383 = vst.msk [vmem:[#allocation4] sm:$0xff] %vm377, %v382
          %384 = vst.msk [vmem:[#allocation5] sm:$0xff] %vm380, 0.0
          %385 = vst.msk [vmem:[#allocation5 + $0x8] sm:$0xff] %vm380, 0.0
          %386 = vst.msk [vmem:[#allocation5 + $0x10] sm:$0xff] %vm380, 0.0
          %387 = vst.msk [vmem:[#allocation5 + $0x18] sm:$0xff] %vm380, 0.0
          %388 = vst.msk [vmem:[#allocation5 + $0x20] sm:$0xff] %vm380, 0.0
          %389 = vst.msk [vmem:[#allocation5 + $0x28] sm:$0xff] %vm380, 0.0
          %390 = vst.msk [vmem:[#allocation5 + $0x30] sm:$0xff] %vm380, 0.0
          %391 = vst.msk [vmem:[#allocation5 + $0x38] sm:$0xff] %vm380, 0.0
        $region72: #{tpu_custom_call.1} parent=47 // pred_fallthru
          _
        %v392 = vld [vmem:[#allocation9] sm:$0xf]
        %v393 = vld [vmem:[#allocation9 + $0x4] sm:$0xf]
        %v394 = vld [vmem:[#allocation9 + $0x8] sm:$0xf]
        %v395 = vld [vmem:[#allocation9 + $0xc] sm:$0xf]
        %v396 = vld [vmem:[#allocation11] sm:$0xf]
        %v397 = vld [vmem:[#allocation11 + $0x4] sm:$0xf]
        %v398 = vld [vmem:[#allocation12] sm:$0xf]
        %v399 = vld [vmem:[#allocation12 + $0x4] sm:$0xf]
        %v400 = vld [vmem:[#allocation12 + $0x8] sm:$0xf]
        %v401 = vld [vmem:[#allocation12 + $0xc] sm:$0xf]
        %v402 = vld [vmem:[#allocation2] sm:$0xff]
        %v403 = vld [vmem:[#allocation3] sm:$0xff]
        %v404 = vld [vmem:[#allocation4] sm:$0xff]
        %v405 = vld [vmem:[#allocation5] sm:$0xff]
        %v406 = vld [vmem:[#allocation5 + $0x8] sm:$0xff]
        %v407 = vld [vmem:[#allocation5 + $0x10] sm:$0xff]
        %v408 = vld [vmem:[#allocation5 + $0x18] sm:$0xff]
        %v409 = vld [vmem:[#allocation5 + $0x20] sm:$0xff]
        %v410 = vld [vmem:[#allocation5 + $0x28] sm:$0xff]
        %v411 = vld [vmem:[#allocation5 + $0x30] sm:$0xff]
        %v412 = vld [vmem:[#allocation5 + $0x38] sm:$0xff]
        %v413 = vld [vmem:[%s322] sm:$0xff]
        %v414 = vld [vmem:[%s322 + $0x40] sm:$0xff]
        %v415 = vpack.c.bf16 %v402, %v402
        %v420 = vunpack.c.l.b16 %v392
        %v421 = vunpack.c.l.b16 %v393
        %v422 = vunpack.c.l.b16 %v394
        %v423 = vunpack.c.l.b16 %v395
        %v424 = vpack.c.b16 %v421, %v420
        %v425 = vpack.c.b16 %v423, %v422
        %vm428 = vcmask 261120
        %v430 = vsel %vm428, %v415, 0
        %432 = vmatprep.subr.bf16.mxu0 0
        %433 = vmatpush1.bf16.msra.mxu0 %v424
        %434 = vmatprep.subr.bf16.mxu0 0
        %435 = vmatpush1.bf16.msra.mxu0 %v425
        %436 = vmatprep.subr.bf16.mxu0 0
        %437 = vmatpush1.bf16.msra.mxu0 0
        %438 = vmatprep.subr.bf16.mxu0 0
        %439 = vmatpush1.bf16.msra.mxu0 0
        %440 = vmatprep.subr.bf16.mxu0 0
        %441 = vmatpush1.bf16.msra.mxu0 0
        %442 = vmatprep.subr.bf16.mxu0 0
        %443 = vmatpush1.bf16.msra.mxu0 0
        %444 = vmatprep.subr.bf16.mxu0 0
        %445 = vmatpush1.bf16.msra.mxu0 0
        %446 = vmatprep.subr.bf16.mxu0 0
        %447 = vmatpush1.bf16.msra.mxu0 0
        %448 = vmatprep.subr.bf16.mxu0 0
        %449 = vmatpush1.bf16.msra.mxu0 0
        %450 = vmatprep.subr.bf16.mxu0 0
        %451 = vmatpush1.bf16.msra.mxu0 0
        %452 = vmatprep.subr.bf16.mxu0 0
        %453 = vmatpush1.bf16.msra.mxu0 0
        %454 = vmatprep.subr.bf16.mxu0 0
        %455 = vmatpush1.bf16.msra.mxu0 0
        %456 = vmatprep.subr.bf16.mxu0 0
        %457 = vmatpush1.bf16.msra.mxu0 0
        %458 = vmatprep.subr.bf16.mxu0 0
        %459 = vmatpush1.bf16.msra.mxu0 0
        %460 = vmatprep.subr.bf16.mxu0 0
        %461 = vmatpush1.bf16.msra.mxu0 0
        %462 = vmatprep.subr.bf16.mxu0 0
        %463 = vmatpush1.bf16.msra.mxu0 0
        %464 = vmatprep.mubr.bf16.mxu0 0
        %465 = vmatmul.mubr.bf16.gmra.mrb[0].mxu0 %v430
        %v466 = vpop.f32.mrb[0].mxu0
        %v467 = vadd.f32 0.0, %v466
        %v468 = vpop.f32.mrb[0].mxu0
        %v469 = vpop.f32.mrb[0].mxu0
        %v470 = vpop.f32.mrb[0].mxu0
        %471 = vdwg.mxu0
        %v472 = vadd.f32 %v413, %v467
        %v473 = vpack.c.bf16 %v403, %v403
        %v476 = vunpack.c.l.b16 %v396
        %v477 = vunpack.c.l.b16 %v397
        %v478 = vpack.c.b16 %v477, %v476
        %vm480 = vcmask 130048
        %v482 = vsel %vm480, %v473, 0
        %484 = vmatprep.subr.bf16.mxu0 0
        %485 = vmatpush1.bf16.msra.mxu0 %v478
        %486 = vmatprep.subr.bf16.mxu0 0
        %487 = vmatpush1.bf16.msra.mxu0 0
        %488 = vmatprep.subr.bf16.mxu0 0
        %489 = vmatpush1.bf16.msra.mxu0 0
        %490 = vmatprep.subr.bf16.mxu0 0
        %491 = vmatpush1.bf16.msra.mxu0 0
        %492 = vmatprep.subr.bf16.mxu0 0
        %493 = vmatpush1.bf16.msra.mxu0 0
        %494 = vmatprep.subr.bf16.mxu0 0
        %495 = vmatpush1.bf16.msra.mxu0 0
        %496 = vmatprep.subr.bf16.mxu0 0
        %497 = vmatpush1.bf16.msra.mxu0 0
        %498 = vmatprep.subr.bf16.mxu0 0
        %499 = vmatpush1.bf16.msra.mxu0 0
        %500 = vmatprep.subr.bf16.mxu0 0
        %501 = vmatpush1.bf16.msra.mxu0 0
        %502 = vmatprep.subr.bf16.mxu0 0
        %503 = vmatpush1.bf16.msra.mxu0 0
        %504 = vmatprep.subr.bf16.mxu0 0
        %505 = vmatpush1.bf16.msra.mxu0 0
        %506 = vmatprep.subr.bf16.mxu0 0
        %507 = vmatpush1.bf16.msra.mxu0 0
        %508 = vmatprep.subr.bf16.mxu0 0
        %509 = vmatpush1.bf16.msra.mxu0 0
        %510 = vmatprep.subr.bf16.mxu0 0
        %511 = vmatpush1.bf16.msra.mxu0 0
        %512 = vmatprep.subr.bf16.mxu0 0
        %513 = vmatpush1.bf16.msra.mxu0 0
        %514 = vmatprep.subr.bf16.mxu0 0
        %515 = vmatpush1.bf16.msra.mxu0 0
        %516 = vmatprep.mubr.bf16.mxu0 0
        %517 = vmatmul.mubr.bf16.gmra.mrb[0].mxu0 %v482
        %v518 = vpop.f32.mrb[0].mxu0
        %v519 = vadd.f32 0.0, %v518
        %v520 = vpop.f32.mrb[0].mxu0
        %v521 = vpop.f32.mrb[0].mxu0
        %v522 = vpop.f32.mrb[0].mxu0
        %523 = vdwg.mxu0
        %v524 = vadd.f32 %v472, %v519
        %v525 = vxor.u32 %v524, 2147483648
        %v526 = vmul.f32 %v525, 1.442695
        %v527 = vpow.pop %v526
        %v528 = vadd.f32 %v527, 1.0
        %v529 = vrcp.pop %v528
        %v530 = vmul.f32 1.0, %v529
        %v531 = vtanh.pop %v524
        %533 = vrot.lane.b32.xlu0 %v404, 32
        %v534 = vpop.permute.xlu0 %533
        %v536 = vmul.f32 %v530, %v534
        %538 = vrot.lane.b32.xlu0 %v531, 64
        %v539 = vpop.permute.xlu0 %538
        %v541 = vmul.f32 %v530, %v539
        %543 = vrot.lane.b32.xlu0 %v541, 32
        %v544 = vpop.permute.xlu0 %543
        %v546 = vadd.f32 %v536, %v544
        %v547 = vtanh.pop %v546
        %549 = vrot.lane.b32.xlu0 %v547, 64
        %v550 = vpop.permute.xlu0 %549
        %v552 = vmul.f32 %v530, %v550
        %v553 = vpack.c.bf16 %v552, %v552
        %555 = vrot.lane.b32.xlu0 %v553, 32
        %v556 = vpop.permute.xlu0 %555
        %v561 = vunpack.c.l.b16 %v398
        %v562 = vunpack.c.l.b16 %v399
        %v563 = vunpack.c.l.b16 %v400
        %v564 = vunpack.c.l.b16 %v401
        %v565 = vpack.c.b16 %v562, %v561
        %v566 = vpack.c.b16 %v564, %v563
        %v570 = vsel %vm428, %v556, 0
        %572 = vmatprep.subr.bf16.mxu0 0
        %573 = vmatpush1.bf16.msra.mxu0 %v565
        %574 = vmatprep.subr.bf16.mxu0 0
        %575 = vmatpush1.bf16.msra.mxu0 %v566
        %576 = vmatprep.subr.bf16.mxu0 0
        %577 = vmatpush1.bf16.msra.mxu0 0
        %578 = vmatprep.subr.bf16.mxu0 0
        %579 = vmatpush1.bf16.msra.mxu0 0
        %580 = vmatprep.subr.bf16.mxu0 0
        %581 = vmatpush1.bf16.msra.mxu0 0
        %582 = vmatprep.subr.bf16.mxu0 0
        %583 = vmatpush1.bf16.msra.mxu0 0
        %584 = vmatprep.subr.bf16.mxu0 0
        %585 = vmatpush1.bf16.msra.mxu0 0
        %586 = vmatprep.subr.bf16.mxu0 0
        %587 = vmatpush1.bf16.msra.mxu0 0
        %588 = vmatprep.subr.bf16.mxu0 0
        %589 = vmatpush1.bf16.msra.mxu0 0
        %590 = vmatprep.subr.bf16.mxu0 0
        %591 = vmatpush1.bf16.msra.mxu0 0
        %592 = vmatprep.subr.bf16.mxu0 0
        %593 = vmatpush1.bf16.msra.mxu0 0
        %594 = vmatprep.subr.bf16.mxu0 0
        %595 = vmatpush1.bf16.msra.mxu0 0
        %596 = vmatprep.subr.bf16.mxu0 0
        %597 = vmatpush1.bf16.msra.mxu0 0
        %598 = vmatprep.subr.bf16.mxu0 0
        %599 = vmatpush1.bf16.msra.mxu0 0
        %600 = vmatprep.subr.bf16.mxu0 0
        %601 = vmatpush1.bf16.msra.mxu0 0
        %602 = vmatprep.subr.bf16.mxu0 0
        %603 = vmatpush1.bf16.msra.mxu0 0
        %604 = vmatprep.mubr.bf16.mxu0 0
        %605 = vmatmul.mubr.bf16.gmra.mrb[0].mxu0 %v570
        %v606 = vpop.f32.mrb[0].mxu0
        %v607 = vadd.f32 0.0, %v606
        %v608 = vpop.f32.mrb[0].mxu0
        %v609 = vpop.f32.mrb[0].mxu0
        %v610 = vpop.f32.mrb[0].mxu0
        %611 = vdwg.mxu0
        %v613 = vcombine.high %v607, %v607
        %v615 = vunpack.c.l.s4 1966171168
        %v616 = vunpack.c.0.s8 %v615
        %v617 = vlaneseq
        %v618 = vshrl.u32 %v617, 7
        %v619 = vsub.s32 %v616, %v618
        %v620 = vrot.slane %v607, %v619
        %v622 = vunpack.c.l.s4 1966171168
        %v623 = vunpack.c.0.s8 %v622
        %v624 = vlaneseq
        %v625 = vshrl.u32 %v624, 7
        %v626 = vsub.s32 %v623, %v625
        %v627 = vrot.slane %v613, %v626
        %v628 = vcombine.high %v620, %v620
        %v629 = vcombine.high %v627, %v627
        %v631 = vunpack.c.l.s4 1966171168
        %v632 = vunpack.c.0.s8 %v631
        %v633 = vlaneseq
        %v634 = vshrl.u32 %v633, 7
        %v635 = vsub.s32 %v632, %v634
        %v636 = vrot.slane %v620, %v635
        %v638 = vunpack.c.l.s4 1966171168
        %v639 = vunpack.c.0.s8 %v638
        %v640 = vlaneseq
        %v641 = vshrl.u32 %v640, 7
        %v642 = vsub.s32 %v639, %v641
        %v643 = vrot.slane %v627, %v642
        %v645 = vunpack.c.l.s4 1966171168
        %v646 = vunpack.c.0.s8 %v645
        %v647 = vlaneseq
        %v648 = vshrl.u32 %v647, 7
        %v649 = vsub.s32 %v646, %v648
        %v650 = vrot.slane %v628, %v649
        %v652 = vunpack.c.l.s4 1966171168
        %v653 = vunpack.c.0.s8 %v652
        %v654 = vlaneseq
        %v655 = vshrl.u32 %v654, 7
        %v656 = vsub.s32 %v653, %v655
        %v657 = vrot.slane %v629, %v656
        %v658 = vcombine.high %v636, %v636
        %v659 = vcombine.high %v643, %v643
        %v660 = vcombine.high %v650, %v650
        %v661 = vcombine.high %v657, %v657
        %v662 = vlaneseq
        %v663 = vshrl.u32 %v662, 7
        %v664 = vsub.s32 0, %v663
        %v665 = vrot.slane %v636, %v664
        %v666 = vlaneseq
        %v667 = vshrl.u32 %v666, 7
        %v668 = vsub.s32 0, %v667
        %v669 = vrot.slane %v650, %v668
        %v670 = vlaneseq
        %v671 = vshrl.u32 %v670, 7
        %v672 = vsub.s32 0, %v671
        %v673 = vrot.slane %v658, %v672
        %v674 = vlaneseq
        %v675 = vshrl.u32 %v674, 7
        %v676 = vsub.s32 0, %v675
        %v677 = vrot.slane %v660, %v676
        %v678 = vlaneseq
        %v679 = vshrl.u32 %v678, 7
        %v680 = vsub.s32 0, %v679
        %v681 = vrot.slane %v643, %v680
        %v682 = vlaneseq
        %v683 = vshrl.u32 %v682, 7
        %v684 = vsub.s32 0, %v683
        %v685 = vrot.slane %v657, %v684
        %v686 = vlaneseq
        %v687 = vshrl.u32 %v686, 7
        %v688 = vsub.s32 0, %v687
        %v689 = vrot.slane %v659, %v688
        %v690 = vlaneseq
        %v691 = vshrl.u32 %v690, 7
        %v692 = vsub.s32 0, %v691
        %v693 = vrot.slane %v661, %v692
        %v702 = vmul.f32 %v405, %v665
        %v703 = vmul.f32 %v406, %v669
        %v704 = vmul.f32 %v407, %v673
        %v705 = vmul.f32 %v408, %v677
        %v706 = vmul.f32 %v409, %v681
        %v707 = vmul.f32 %v410, %v685
        %v708 = vmul.f32 %v411, %v689
        %v709 = vmul.f32 %v412, %v693
        %v710 = vsel %vm480, %v702, 0.0
        %711 = vadd.xlane.f32.xlu0 %v710
        %v712 = vpop.xlane.xlu0 %711
        %v713 = vsel %vm480, %v703, 0.0
        %714 = vadd.xlane.f32.xlu0 %v713
        %v715 = vpop.xlane.xlu0 %714
        %v716 = vsel %vm480, %v704, 0.0
        %717 = vadd.xlane.f32.xlu0 %v716
        %v718 = vpop.xlane.xlu0 %717
        %v719 = vsel %vm480, %v705, 0.0
        %720 = vadd.xlane.f32.xlu0 %v719
        %v721 = vpop.xlane.xlu0 %720
        %v722 = vsel %vm480, %v706, 0.0
        %723 = vadd.xlane.f32.xlu0 %v722
        %v724 = vpop.xlane.xlu0 %723
        %v725 = vsel %vm480, %v707, 0.0
        %726 = vadd.xlane.f32.xlu0 %v725
        %v727 = vpop.xlane.xlu0 %726
        %v728 = vsel %vm480, %v708, 0.0
        %729 = vadd.xlane.f32.xlu0 %v728
        %v730 = vpop.xlane.xlu0 %729
        %v731 = vsel %vm480, %v709, 0.0
        %732 = vadd.xlane.f32.xlu0 %v731
        %v733 = vpop.xlane.xlu0 %732
        %v742 = vlaneseq
        %v743 = vand.u32 %v742, 127
        %v744 = vlaneseq
        %v745 = vshrl.u32 %v744, 7
        %v746 = vsub.s32 %v743, %v745
        %v747 = vrot.slane %v712, %v746
        %v748 = vlaneseq
        %v749 = vshrl.u32 %v748, 7
        %v750 = vsub.s32 %v743, %v749
        %v751 = vrot.slane %v715, %v750
        %v752 = vlaneseq
        %v753 = vshrl.u32 %v752, 7
        %v754 = vsub.s32 %v743, %v753
        %v755 = vrot.slane %v718, %v754
        %v756 = vlaneseq
        %v757 = vshrl.u32 %v756, 7
        %v758 = vsub.s32 %v743, %v757
        %v759 = vrot.slane %v721, %v758
        %v760 = vlaneseq
        %v761 = vshrl.u32 %v760, 7
        %v762 = vsub.s32 %v743, %v761
        %v763 = vrot.slane %v724, %v762
        %v764 = vlaneseq
        %v765 = vshrl.u32 %v764, 7
        %v766 = vsub.s32 %v743, %v765
        %v767 = vrot.slane %v727, %v766
        %v768 = vlaneseq
        %v769 = vshrl.u32 %v768, 7
        %v770 = vsub.s32 %v743, %v769
        %v771 = vrot.slane %v730, %v770
        %v772 = vlaneseq
        %v773 = vshrl.u32 %v772, 7
        %v774 = vsub.s32 %v743, %v773
        %v775 = vrot.slane %v733, %v774
        %vm776 = vcmask 1041409
        %v777 = vsel %vm776, %v751, %v747
        %vm778 = vcmask 1042434
        %v779 = vsel %vm778, %v755, %v777
        %vm780 = vcmask 1043459
        %v781 = vsel %vm780, %v759, %v779
        %vm782 = vcmask 1044484
        %v783 = vsel %vm782, %v763, %v781
        %vm784 = vcmask 1045509
        %v785 = vsel %vm784, %v767, %v783
        %vm786 = vcmask 1046534
        %v787 = vsel %vm786, %v771, %v785
        %vm788 = vcmask 1047559
        %v789 = vsel %vm788, %v775, %v787
        %vm791 = vcmask 64512
        %v792 = vsel %vm791, %v789, -inf
        %793 = vmax.xlane.f32.xlu0 %v792
        %v794 = vpop.xlane.xlu0 %793
        %v796 = vlaneseq
        %v797 = vshrl.u32 %v796, 7
        %v798 = vsub.s32 0, %v797
        %v799 = vrot.slane %v794, %v798
        %v800 = vlaneseq
        %v801 = vshrl.u32 %v800, 7
        %v802 = vsub.s32 1, %v801
        %v803 = vrot.slane %v794, %v802
        %v804 = vlaneseq
        %v805 = vshrl.u32 %v804, 7
        %v806 = vsub.s32 2, %v805
        %v807 = vrot.slane %v794, %v806
        %v808 = vlaneseq
        %v809 = vshrl.u32 %v808, 7
        %v810 = vsub.s32 3, %v809
        %v811 = vrot.slane %v794, %v810
        %v812 = vlaneseq
        %v813 = vshrl.u32 %v812, 7
        %v814 = vsub.s32 4, %v813
        %v815 = vrot.slane %v794, %v814
        %v816 = vlaneseq
        %v817 = vshrl.u32 %v816, 7
        %v818 = vsub.s32 5, %v817
        %v819 = vrot.slane %v794, %v818
        %v820 = vlaneseq
        %v821 = vshrl.u32 %v820, 7
        %v822 = vsub.s32 6, %v821
        %v823 = vrot.slane %v794, %v822
        %v824 = vlaneseq
        %v825 = vshrl.u32 %v824, 7
        %v826 = vsub.s32 7, %v825
        %v827 = vrot.slane %v794, %v826
        %v836 = vsub.f32 %v712, %v799
        %v837 = vsub.f32 %v715, %v803
        %v838 = vsub.f32 %v718, %v807
        %v839 = vsub.f32 %v721, %v811
        %v840 = vsub.f32 %v724, %v815
        %v841 = vsub.f32 %v727, %v819
        %v842 = vsub.f32 %v730, %v823
        %v843 = vsub.f32 %v733, %v827
        %v844 = vmul.f32 %v836, 1.442695
        %v845 = vpow.pop %v844
        %v846 = vmul.f32 %v837, 1.442695
        %v847 = vpow.pop %v846
        %v848 = vmul.f32 %v838, 1.442695
        %v849 = vpow.pop %v848
        %v850 = vmul.f32 %v839, 1.442695
        %v851 = vpow.pop %v850
        %v852 = vmul.f32 %v840, 1.442695
        %v853 = vpow.pop %v852
        %v854 = vmul.f32 %v841, 1.442695
        %v855 = vpow.pop %v854
        %v856 = vmul.f32 %v842, 1.442695
        %v857 = vpow.pop %v856
        %v858 = vmul.f32 %v843, 1.442695
        %v859 = vpow.pop %v858
        %868 = vset.pattern.permute.xlu0 0
        %869 = vperm.xlu0 %868, %v845
        %v870 = vpop.permute.xlu0 %869
        %871 = vset.pattern.permute.xlu0 0
        %872 = vperm.xlu0 %871, %v847
        %v873 = vpop.permute.xlu0 %872
        %874 = vset.pattern.permute.xlu0 0
        %875 = vperm.xlu0 %874, %v849
        %v876 = vpop.permute.xlu0 %875
        %877 = vset.pattern.permute.xlu0 0
        %878 = vperm.xlu0 %877, %v851
        %v879 = vpop.permute.xlu0 %878
        %880 = vset.pattern.permute.xlu0 0
        %881 = vperm.xlu0 %880, %v853
        %v882 = vpop.permute.xlu0 %881
        %883 = vset.pattern.permute.xlu0 0
        %884 = vperm.xlu0 %883, %v855
        %v885 = vpop.permute.xlu0 %884
        %886 = vset.pattern.permute.xlu0 0
        %887 = vperm.xlu0 %886, %v857
        %v888 = vpop.permute.xlu0 %887
        %889 = vset.pattern.permute.xlu0 0
        %890 = vperm.xlu0 %889, %v859
        %v891 = vpop.permute.xlu0 %890
        %v892 = vlaneseq
        %v893 = vshrl.u32 %v892, 7
        %v894 = vsub.s32 %v743, %v893
        %v895 = vrot.slane %v870, %v894
        %v896 = vlaneseq
        %v897 = vshrl.u32 %v896, 7
        %v898 = vsub.s32 %v743, %v897
        %v899 = vrot.slane %v873, %v898
        %v900 = vlaneseq
        %v901 = vshrl.u32 %v900, 7
        %v902 = vsub.s32 %v743, %v901
        %v903 = vrot.slane %v876, %v902
        %v904 = vlaneseq
        %v905 = vshrl.u32 %v904, 7
        %v906 = vsub.s32 %v743, %v905
        %v907 = vrot.slane %v879, %v906
        %v908 = vlaneseq
        %v909 = vshrl.u32 %v908, 7
        %v910 = vsub.s32 %v743, %v909
        %v911 = vrot.slane %v882, %v910
        %v912 = vlaneseq
        %v913 = vshrl.u32 %v912, 7
        %v914 = vsub.s32 %v743, %v913
        %v915 = vrot.slane %v885, %v914
        %v916 = vlaneseq
        %v917 = vshrl.u32 %v916, 7
        %v918 = vsub.s32 %v743, %v917
        %v919 = vrot.slane %v888, %v918
        %v920 = vlaneseq
        %v921 = vshrl.u32 %v920, 7
        %v922 = vsub.s32 %v743, %v921
        %v923 = vrot.slane %v891, %v922
        %v924 = vsel %vm776, %v899, %v895
        %v925 = vsel %vm778, %v903, %v924
        %v926 = vsel %vm780, %v907, %v925
        %v927 = vsel %vm782, %v911, %v926
        %v928 = vsel %vm784, %v915, %v927
        %v929 = vsel %vm786, %v919, %v928
        %v930 = vsel %vm788, %v923, %v929
        %v932 = vsel %vm791, %v930, 0.0
        %933 = vadd.xlane.f32.xlu0 %v932
        %v934 = vpop.xlane.xlu0 %933
        %v935 = vrcp.pop %v934
        %v937 = vlaneseq
        %v938 = vshrl.u32 %v937, 7
        %v939 = vsub.s32 0, %v938
        %v940 = vrot.slane %v935, %v939
        %v941 = vlaneseq
        %v942 = vshrl.u32 %v941, 7
        %v943 = vsub.s32 1, %v942
        %v944 = vrot.slane %v935, %v943
        %v945 = vlaneseq
        %v946 = vshrl.u32 %v945, 7
        %v947 = vsub.s32 2, %v946
        %v948 = vrot.slane %v935, %v947
        %v949 = vlaneseq
        %v950 = vshrl.u32 %v949, 7
        %v951 = vsub.s32 3, %v950
        %v952 = vrot.slane %v935, %v951
        %v953 = vlaneseq
        %v954 = vshrl.u32 %v953, 7
        %v955 = vsub.s32 4, %v954
        %v956 = vrot.slane %v935, %v955
        %v957 = vlaneseq
        %v958 = vshrl.u32 %v957, 7
        %v959 = vsub.s32 5, %v958
        %v960 = vrot.slane %v935, %v959
        %v961 = vlaneseq
        %v962 = vshrl.u32 %v961, 7
        %v963 = vsub.s32 6, %v962
        %v964 = vrot.slane %v935, %v963
        %v965 = vlaneseq
        %v966 = vshrl.u32 %v965, 7
        %v967 = vsub.s32 7, %v966
        %v968 = vrot.slane %v935, %v967
        %v977 = vmul.f32 %v845, %v940
        %v978 = vmul.f32 %v847, %v944
        %v979 = vmul.f32 %v849, %v948
        %v980 = vmul.f32 %v851, %v952
        %v981 = vmul.f32 %v853, %v956
        %v982 = vmul.f32 %v855, %v960
        %v983 = vmul.f32 %v857, %v964
        %v984 = vmul.f32 %v859, %v968
        %985 = vrot.lane.b32.xlu0 %v665, 112
        %v986 = vpop.permute.xlu0 %985
        %987 = vrot.lane.b32.xlu0 %v669, 112
        %v988 = vpop.permute.xlu0 %987
        %989 = vrot.lane.b32.xlu0 %v673, 112
        %v990 = vpop.permute.xlu0 %989
        %991 = vrot.lane.b32.xlu0 %v677, 112
        %v992 = vpop.permute.xlu0 %991
        %993 = vrot.lane.b32.xlu0 %v681, 112
        %v994 = vpop.permute.xlu0 %993
        %995 = vrot.lane.b32.xlu0 %v685, 112
        %v996 = vpop.permute.xlu0 %995
        %997 = vrot.lane.b32.xlu0 %v689, 112
        %v998 = vpop.permute.xlu0 %997
        %999 = vrot.lane.b32.xlu0 %v693, 112
        %v1000 = vpop.permute.xlu0 %999
        %v1009 = vmul.f32 %v405, %v986
        %v1010 = vmul.f32 %v406, %v988
        %v1011 = vmul.f32 %v407, %v990
        %v1012 = vmul.f32 %v408, %v992
        %v1013 = vmul.f32 %v409, %v994
        %v1014 = vmul.f32 %v410, %v996
        %v1015 = vmul.f32 %v411, %v998
        %v1016 = vmul.f32 %v412, %v1000
        %v1017 = vsel %vm480, %v1009, 0.0
        %1018 = vadd.xlane.f32.xlu0 %v1017
        %v1019 = vpop.xlane.xlu0 %1018
        %v1020 = vsel %vm480, %v1010, 0.0
        %1021 = vadd.xlane.f32.xlu0 %v1020
        %v1022 = vpop.xlane.xlu0 %1021
        %v1023 = vsel %vm480, %v1011, 0.0
        %1024 = vadd.xlane.f32.xlu0 %v1023
        %v1025 = vpop.xlane.xlu0 %1024
        %v1026 = vsel %vm480, %v1012, 0.0
        %1027 = vadd.xlane.f32.xlu0 %v1026
        %v1028 = vpop.xlane.xlu0 %1027
        %v1029 = vsel %vm480, %v1013, 0.0
        %1030 = vadd.xlane.f32.xlu0 %v1029
        %v1031 = vpop.xlane.xlu0 %1030
        %v1032 = vsel %vm480, %v1014, 0.0
        %1033 = vadd.xlane.f32.xlu0 %v1032
        %v1034 = vpop.xlane.xlu0 %1033
        %v1035 = vsel %vm480, %v1015, 0.0
        %1036 = vadd.xlane.f32.xlu0 %v1035
        %v1037 = vpop.xlane.xlu0 %1036
        %v1038 = vsel %vm480, %v1016, 0.0
        %1039 = vadd.xlane.f32.xlu0 %v1038
        %v1040 = vpop.xlane.xlu0 %1039
        %v1049 = vlaneseq
        %v1050 = vshrl.u32 %v1049, 7
        %v1051 = vsub.s32 %v743, %v1050
        %v1052 = vrot.slane %v1019, %v1051
        %v1053 = vlaneseq
        %v1054 = vshrl.u32 %v1053, 7
        %v1055 = vsub.s32 %v743, %v1054
        %v1056 = vrot.slane %v1022, %v1055
        %v1057 = vlaneseq
        %v1058 = vshrl.u32 %v1057, 7
        %v1059 = vsub.s32 %v743, %v1058
        %v1060 = vrot.slane %v1025, %v1059
        %v1061 = vlaneseq
        %v1062 = vshrl.u32 %v1061, 7
        %v1063 = vsub.s32 %v743, %v1062
        %v1064 = vrot.slane %v1028, %v1063
        %v1065 = vlaneseq
        %v1066 = vshrl.u32 %v1065, 7
        %v1067 = vsub.s32 %v743, %v1066
        %v1068 = vrot.slane %v1031, %v1067
        %v1069 = vlaneseq
        %v1070 = vshrl.u32 %v1069, 7
        %v1071 = vsub.s32 %v743, %v1070
        %v1072 = vrot.slane %v1034, %v1071
        %v1073 = vlaneseq
        %v1074 = vshrl.u32 %v1073, 7
        %v1075 = vsub.s32 %v743, %v1074
        %v1076 = vrot.slane %v1037, %v1075
        %v1077 = vlaneseq
        %v1078 = vshrl.u32 %v1077, 7
        %v1079 = vsub.s32 %v743, %v1078
        %v1080 = vrot.slane %v1040, %v1079
        %v1081 = vsel %vm776, %v1056, %v1052
        %v1082 = vsel %vm778, %v1060, %v1081
        %v1083 = vsel %vm780, %v1064, %v1082
        %v1084 = vsel %vm782, %v1068, %v1083
        %v1085 = vsel %vm784, %v1072, %v1084
        %v1086 = vsel %vm786, %v1076, %v1085
        %v1087 = vsel %vm788, %v1080, %v1086
        %v1089 = vsel %vm791, %v1087, -inf
        %1090 = vmax.xlane.f32.xlu0 %v1089
        %v1091 = vpop.xlane.xlu0 %1090
        %v1093 = vlaneseq
        %v1094 = vshrl.u32 %v1093, 7
        %v1095 = vsub.s32 0, %v1094
        %v1096 = vrot.slane %v1091, %v1095
        %v1097 = vlaneseq
        %v1098 = vshrl.u32 %v1097, 7
        %v1099 = vsub.s32 1, %v1098
        %v1100 = vrot.slane %v1091, %v1099
        %v1101 = vlaneseq
        %v1102 = vshrl.u32 %v1101, 7
        %v1103 = vsub.s32 2, %v1102
        %v1104 = vrot.slane %v1091, %v1103
        %v1105 = vlaneseq
        %v1106 = vshrl.u32 %v1105, 7
        %v1107 = vsub.s32 3, %v1106
        %v1108 = vrot.slane %v1091, %v1107
        %v1109 = vlaneseq
        %v1110 = vshrl.u32 %v1109, 7
        %v1111 = vsub.s32 4, %v1110
        %v1112 = vrot.slane %v1091, %v1111
        %v1113 = vlaneseq
        %v1114 = vshrl.u32 %v1113, 7
        %v1115 = vsub.s32 5, %v1114
        %v1116 = vrot.slane %v1091, %v1115
        %v1117 = vlaneseq
        %v1118 = vshrl.u32 %v1117, 7
        %v1119 = vsub.s32 6, %v1118
        %v1120 = vrot.slane %v1091, %v1119
        %v1121 = vlaneseq
        %v1122 = vshrl.u32 %v1121, 7
        %v1123 = vsub.s32 7, %v1122
        %v1124 = vrot.slane %v1091, %v1123
        %v1133 = vsub.f32 %v1019, %v1096
        %v1134 = vsub.f32 %v1022, %v1100
        %v1135 = vsub.f32 %v1025, %v1104
        %v1136 = vsub.f32 %v1028, %v1108
        %v1137 = vsub.f32 %v1031, %v1112
        %v1138 = vsub.f32 %v1034, %v1116
        %v1139 = vsub.f32 %v1037, %v1120
        %v1140 = vsub.f32 %v1040, %v1124
        %v1141 = vmul.f32 %v1133, 1.442695
        %v1142 = vpow.pop %v1141
        %v1143 = vmul.f32 %v1134, 1.442695
        %v1144 = vpow.pop %v1143
        %v1145 = vmul.f32 %v1135, 1.442695
        %v1146 = vpow.pop %v1145
        %v1147 = vmul.f32 %v1136, 1.442695
        %v1148 = vpow.pop %v1147
        %v1149 = vmul.f32 %v1137, 1.442695
        %v1150 = vpow.pop %v1149
        %v1151 = vmul.f32 %v1138, 1.442695
        %v1152 = vpow.pop %v1151
        %v1153 = vmul.f32 %v1139, 1.442695
        %v1154 = vpow.pop %v1153
        %v1155 = vmul.f32 %v1140, 1.442695
        %v1156 = vpow.pop %v1155
        %1165 = vset.pattern.permute.xlu0 0
        %1166 = vperm.xlu0 %1165, %v1142
        %v1167 = vpop.permute.xlu0 %1166
        %1168 = vset.pattern.permute.xlu0 0
        %1169 = vperm.xlu0 %1168, %v1144
        %v1170 = vpop.permute.xlu0 %1169
        %1171 = vset.pattern.permute.xlu0 0
        %1172 = vperm.xlu0 %1171, %v1146
        %v1173 = vpop.permute.xlu0 %1172
        %1174 = vset.pattern.permute.xlu0 0
        %1175 = vperm.xlu0 %1174, %v1148
        %v1176 = vpop.permute.xlu0 %1175
        %1177 = vset.pattern.permute.xlu0 0
        %1178 = vperm.xlu0 %1177, %v1150
        %v1179 = vpop.permute.xlu0 %1178
        %1180 = vset.pattern.permute.xlu0 0
        %1181 = vperm.xlu0 %1180, %v1152
        %v1182 = vpop.permute.xlu0 %1181
        %1183 = vset.pattern.permute.xlu0 0
        %1184 = vperm.xlu0 %1183, %v1154
        %v1185 = vpop.permute.xlu0 %1184
        %1186 = vset.pattern.permute.xlu0 0
        %1187 = vperm.xlu0 %1186, %v1156
        %v1188 = vpop.permute.xlu0 %1187
        %v1189 = vlaneseq
        %v1190 = vshrl.u32 %v1189, 7
        %v1191 = vsub.s32 %v743, %v1190
        %v1192 = vrot.slane %v1167, %v1191
        %v1193 = vlaneseq
        %v1194 = vshrl.u32 %v1193, 7
        %v1195 = vsub.s32 %v743, %v1194
        %v1196 = vrot.slane %v1170, %v1195
        %v1197 = vlaneseq
        %v1198 = vshrl.u32 %v1197, 7
        %v1199 = vsub.s32 %v743, %v1198
        %v1200 = vrot.slane %v1173, %v1199
        %v1201 = vlaneseq
        %v1202 = vshrl.u32 %v1201, 7
        %v1203 = vsub.s32 %v743, %v1202
        %v1204 = vrot.slane %v1176, %v1203
        %v1205 = vlaneseq
        %v1206 = vshrl.u32 %v1205, 7
        %v1207 = vsub.s32 %v743, %v1206
        %v1208 = vrot.slane %v1179, %v1207
        %v1209 = vlaneseq
        %v1210 = vshrl.u32 %v1209, 7
        %v1211 = vsub.s32 %v743, %v1210
        %v1212 = vrot.slane %v1182, %v1211
        %v1213 = vlaneseq
        %v1214 = vshrl.u32 %v1213, 7
        %v1215 = vsub.s32 %v743, %v1214
        %v1216 = vrot.slane %v1185, %v1215
        %v1217 = vlaneseq
        %v1218 = vshrl.u32 %v1217, 7
        %v1219 = vsub.s32 %v743, %v1218
        %v1220 = vrot.slane %v1188, %v1219
        %v1221 = vsel %vm776, %v1196, %v1192
        %v1222 = vsel %vm778, %v1200, %v1221
        %v1223 = vsel %vm780, %v1204, %v1222
        %v1224 = vsel %vm782, %v1208, %v1223
        %v1225 = vsel %vm784, %v1212, %v1224
        %v1226 = vsel %vm786, %v1216, %v1225
        %v1227 = vsel %vm788, %v1220, %v1226
        %v1229 = vsel %vm791, %v1227, 0.0
        %1230 = vadd.xlane.f32.xlu0 %v1229
        %v1231 = vpop.xlane.xlu0 %1230
        %v1232 = vrcp.pop %v1231
        %v1234 = vlaneseq
        %v1235 = vshrl.u32 %v1234, 7
        %v1236 = vsub.s32 0, %v1235
        %v1237 = vrot.slane %v1232, %v1236
        %v1238 = vlaneseq
        %v1239 = vshrl.u32 %v1238, 7
        %v1240 = vsub.s32 1, %v1239
        %v1241 = vrot.slane %v1232, %v1240
        %v1242 = vlaneseq
        %v1243 = vshrl.u32 %v1242, 7
        %v1244 = vsub.s32 2, %v1243
        %v1245 = vrot.slane %v1232, %v1244
        %v1246 = vlaneseq
        %v1247 = vshrl.u32 %v1246, 7
        %v1248 = vsub.s32 3, %v1247
        %v1249 = vrot.slane %v1232, %v1248
        %v1250 = vlaneseq
        %v1251 = vshrl.u32 %v1250, 7
        %v1252 = vsub.s32 4, %v1251
        %v1253 = vrot.slane %v1232, %v1252
        %v1254 = vlaneseq
        %v1255 = vshrl.u32 %v1254, 7
        %v1256 = vsub.s32 5, %v1255
        %v1257 = vrot.slane %v1232, %v1256
        %v1258 = vlaneseq
        %v1259 = vshrl.u32 %v1258, 7
        %v1260 = vsub.s32 6, %v1259
        %v1261 = vrot.slane %v1232, %v1260
        %v1262 = vlaneseq
        %v1263 = vshrl.u32 %v1262, 7
        %v1264 = vsub.s32 7, %v1263
        %v1265 = vrot.slane %v1232, %v1264
        %v1274 = vmul.f32 %v1142, %v1237
        %v1275 = vmul.f32 %v1144, %v1241
        %v1276 = vmul.f32 %v1146, %v1245
        %v1277 = vmul.f32 %v1148, %v1249
        %v1278 = vmul.f32 %v1150, %v1253
        %v1279 = vmul.f32 %v1152, %v1257
        %v1280 = vmul.f32 %v1154, %v1261
        %v1281 = vmul.f32 %v1156, %v1265
        %1283 = vset.pattern.permute.xlu0 0
        %1284 = vperm.xlu0 %1283, %v977
        %v1285 = vpop.permute.xlu0 %1284
        %1288 = vset.pattern.permute.xlu0 0
        %1289 = vperm.xlu0 %1288, %v978
        %v1290 = vpop.permute.xlu0 %1289
        %1293 = vset.pattern.permute.xlu0 0
        %1294 = vperm.xlu0 %1293, %v979
        %v1295 = vpop.permute.xlu0 %1294
        %1298 = vset.pattern.permute.xlu0 0
        %1299 = vperm.xlu0 %1298, %v980
        %v1300 = vpop.permute.xlu0 %1299
        %1303 = vset.pattern.permute.xlu0 0
        %1304 = vperm.xlu0 %1303, %v981
        %v1305 = vpop.permute.xlu0 %1304
        %1308 = vset.pattern.permute.xlu0 0
        %1309 = vperm.xlu0 %1308, %v982
        %v1310 = vpop.permute.xlu0 %1309
        %1313 = vset.pattern.permute.xlu0 0
        %1314 = vperm.xlu0 %1313, %v983
        %v1315 = vpop.permute.xlu0 %1314
        %1318 = vset.pattern.permute.xlu0 0
        %1319 = vperm.xlu0 %1318, %v984
        %v1320 = vpop.permute.xlu0 %1319
        %v1322 = vmul.f32 %v1285, %v405
        %v1323 = vmul.f32 %v1290, %v406
        %v1324 = vmul.f32 %v1295, %v407
        %v1325 = vmul.f32 %v1300, %v408
        %v1326 = vmul.f32 %v1305, %v409
        %v1327 = vmul.f32 %v1310, %v410
        %v1328 = vmul.f32 %v1315, %v411
        %v1329 = vmul.f32 %v1320, %v412
        %v1330 = vsel %vm480, %v1322, 0.0
        %v1331 = vrot.slane %v1330, 4
        %v1332 = vadd.f32 %v1330, %v1331
        %v1333 = vrot.slane %v1332, 2
        %v1334 = vadd.f32 %v1332, %v1333
        %v1335 = vrot.slane %v1334, 1
        %v1336 = vadd.f32 %v1334, %v1335
        %v1337 = vsel %vm480, %v1323, 0.0
        %v1338 = vrot.slane %v1337, 4
        %v1339 = vadd.f32 %v1337, %v1338
        %v1340 = vrot.slane %v1339, 2
        %v1341 = vadd.f32 %v1339, %v1340
        %v1342 = vrot.slane %v1341, 1
        %v1343 = vadd.f32 %v1341, %v1342
        %v1344 = vsel %vm480, %v1324, 0.0
        %v1345 = vrot.slane %v1344, 4
        %v1346 = vadd.f32 %v1344, %v1345
        %v1347 = vrot.slane %v1346, 2
        %v1348 = vadd.f32 %v1346, %v1347
        %v1349 = vrot.slane %v1348, 1
        %v1350 = vadd.f32 %v1348, %v1349
        %v1351 = vsel %vm480, %v1325, 0.0
        %v1352 = vrot.slane %v1351, 4
        %v1353 = vadd.f32 %v1351, %v1352
        %v1354 = vrot.slane %v1353, 2
        %v1355 = vadd.f32 %v1353, %v1354
        %v1356 = vrot.slane %v1355, 1
        %v1357 = vadd.f32 %v1355, %v1356
        %v1358 = vsel %vm480, %v1326, 0.0
        %v1359 = vrot.slane %v1358, 4
        %v1360 = vadd.f32 %v1358, %v1359
        %v1361 = vrot.slane %v1360, 2
        %v1362 = vadd.f32 %v1360, %v1361
        %v1363 = vrot.slane %v1362, 1
        %v1364 = vadd.f32 %v1362, %v1363
        %v1365 = vsel %vm480, %v1327, 0.0
        %v1366 = vrot.slane %v1365, 4
        %v1367 = vadd.f32 %v1365, %v1366
        %v1368 = vrot.slane %v1367, 2
        %v1369 = vadd.f32 %v1367, %v1368
        %v1370 = vrot.slane %v1369, 1
        %v1371 = vadd.f32 %v1369, %v1370
        %v1372 = vsel %vm480, %v1328, 0.0
        %v1373 = vrot.slane %v1372, 4
        %v1374 = vadd.f32 %v1372, %v1373
        %v1375 = vrot.slane %v1374, 2
        %v1376 = vadd.f32 %v1374, %v1375
        %v1377 = vrot.slane %v1376, 1
        %v1378 = vadd.f32 %v1376, %v1377
        %v1379 = vsel %vm480, %v1329, 0.0
        %v1380 = vrot.slane %v1379, 4
        %v1381 = vadd.f32 %v1379, %v1380
        %v1382 = vrot.slane %v1381, 2
        %v1383 = vadd.f32 %v1381, %v1382
        %v1384 = vrot.slane %v1383, 1
        %v1385 = vadd.f32 %v1383, %v1384
        %v1387 = vcombine.high %v414, %v414
        %v1389 = vunpack.c.l.s4 1966171168
        %v1390 = vunpack.c.0.s8 %v1389
        %v1391 = vlaneseq
        %v1392 = vshrl.u32 %v1391, 7
        %v1393 = vsub.s32 %v1390, %v1392
        %v1394 = vrot.slane %v414, %v1393
        %v1396 = vunpack.c.l.s4 1966171168
        %v1397 = vunpack.c.0.s8 %v1396
        %v1398 = vlaneseq
        %v1399 = vshrl.u32 %v1398, 7
        %v1400 = vsub.s32 %v1397, %v1399
        %v1401 = vrot.slane %v1387, %v1400
        %v1402 = vcombine.high %v1394, %v1394
        %v1403 = vcombine.high %v1401, %v1401
        %v1405 = vunpack.c.l.s4 1966171168
        %v1406 = vunpack.c.0.s8 %v1405
        %v1407 = vlaneseq
        %v1408 = vshrl.u32 %v1407, 7
        %v1409 = vsub.s32 %v1406, %v1408
        %v1410 = vrot.slane %v1394, %v1409
        %v1412 = vunpack.c.l.s4 1966171168
        %v1413 = vunpack.c.0.s8 %v1412
        %v1414 = vlaneseq
        %v1415 = vshrl.u32 %v1414, 7
        %v1416 = vsub.s32 %v1413, %v1415
        %v1417 = vrot.slane %v1401, %v1416
        %v1419 = vunpack.c.l.s4 1966171168
        %v1420 = vunpack.c.0.s8 %v1419
        %v1421 = vlaneseq
        %v1422 = vshrl.u32 %v1421, 7
        %v1423 = vsub.s32 %v1420, %v1422
        %v1424 = vrot.slane %v1402, %v1423
        %v1426 = vunpack.c.l.s4 1966171168
        %v1427 = vunpack.c.0.s8 %v1426
        %v1428 = vlaneseq
        %v1429 = vshrl.u32 %v1428, 7
        %v1430 = vsub.s32 %v1427, %v1429
        %v1431 = vrot.slane %v1403, %v1430
        %v1432 = vcombine.high %v1410, %v1410
        %v1433 = vcombine.high %v1417, %v1417
        %v1434 = vcombine.high %v1424, %v1424
        %v1435 = vcombine.high %v1431, %v1431
        %1437 = vset.pattern.permute.xlu0 0
        %1438 = vperm.xlu0 %1437, %v1274
        %v1439 = vpop.permute.xlu0 %1438
        %1442 = vset.pattern.permute.xlu0 0
        %1443 = vperm.xlu0 %1442, %v1275
        %v1444 = vpop.permute.xlu0 %1443
        %1447 = vset.pattern.permute.xlu0 0
        %1448 = vperm.xlu0 %1447, %v1276
        %v1449 = vpop.permute.xlu0 %1448
        %1452 = vset.pattern.permute.xlu0 0
        %1453 = vperm.xlu0 %1452, %v1277
        %v1454 = vpop.permute.xlu0 %1453
        %1457 = vset.pattern.permute.xlu0 0
        %1458 = vperm.xlu0 %1457, %v1278
        %v1459 = vpop.permute.xlu0 %1458
        %1462 = vset.pattern.permute.xlu0 0
        %1463 = vperm.xlu0 %1462, %v1279
        %v1464 = vpop.permute.xlu0 %1463
        %1467 = vset.pattern.permute.xlu0 0
        %1468 = vperm.xlu0 %1467, %v1280
        %v1469 = vpop.permute.xlu0 %1468
        %1472 = vset.pattern.permute.xlu0 0
        %1473 = vperm.xlu0 %1472, %v1281
        %v1474 = vpop.permute.xlu0 %1473
        %v1476 = vlaneseq
        %v1477 = vshrl.u32 %v1476, 7
        %v1478 = vsub.s32 0, %v1477
        %v1479 = vrot.slane %v1410, %v1478
        %v1480 = vlaneseq
        %v1481 = vshrl.u32 %v1480, 7
        %v1482 = vsub.s32 0, %v1481
        %v1483 = vrot.slane %v1424, %v1482
        %v1484 = vlaneseq
        %v1485 = vshrl.u32 %v1484, 7
        %v1486 = vsub.s32 0, %v1485
        %v1487 = vrot.slane %v1432, %v1486
        %v1488 = vlaneseq
        %v1489 = vshrl.u32 %v1488, 7
        %v1490 = vsub.s32 0, %v1489
        %v1491 = vrot.slane %v1434, %v1490
        %v1492 = vlaneseq
        %v1493 = vshrl.u32 %v1492, 7
        %v1494 = vsub.s32 0, %v1493
        %v1495 = vrot.slane %v1417, %v1494
        %v1496 = vlaneseq
        %v1497 = vshrl.u32 %v1496, 7
        %v1498 = vsub.s32 0, %v1497
        %v1499 = vrot.slane %v1431, %v1498
        %v1500 = vlaneseq
        %v1501 = vshrl.u32 %v1500, 7
        %v1502 = vsub.s32 0, %v1501
        %v1503 = vrot.slane %v1433, %v1502
        %v1504 = vlaneseq
        %v1505 = vshrl.u32 %v1504, 7
        %v1506 = vsub.s32 0, %v1505
        %v1507 = vrot.slane %v1435, %v1506
        %v1516 = vmul.f32 %v1439, %v1479
        %v1517 = vmul.f32 %v1444, %v1483
        %v1518 = vmul.f32 %v1449, %v1487
        %v1519 = vmul.f32 %v1454, %v1491
        %v1520 = vmul.f32 %v1459, %v1495
        %v1521 = vmul.f32 %v1464, %v1499
        %v1522 = vmul.f32 %v1469, %v1503
        %v1523 = vmul.f32 %v1474, %v1507
        %v1524 = vadd.f32 %v405, %v1516
        %v1525 = vadd.f32 %v406, %v1517
        %v1526 = vadd.f32 %v407, %v1518
        %v1527 = vadd.f32 %v408, %v1519
        %v1528 = vadd.f32 %v409, %v1520
        %v1529 = vadd.f32 %v410, %v1521
        %v1530 = vadd.f32 %v411, %v1522
        %v1531 = vadd.f32 %v412, %v1523
        %1533 = vrot.lane.b32.xlu0 %v552, 32
        %v1534 = vpop.permute.xlu0 %1533
        %1536 = vst.msk [vmem:[%s368] sm:$0xff] %vm428, %v1534
        %v1545 = vsel %vm776, %v1343, %v1336
        %v1546 = vsel %vm778, %v1350, %v1545
        %v1547 = vsel %vm780, %v1357, %v1546
        %v1548 = vsel %vm782, %v1364, %v1547
        %v1549 = vsel %vm784, %v1371, %v1548
        %v1550 = vsel %vm786, %v1378, %v1549
        %v1551 = vsel %vm788, %v1385, %v1550
        %1553 = vst.msk [vmem:[%s368 + $0x10] sm:$0xff] %vm480, %v1551
        %v1554 = vld [vmem:[%s322 + $0x8] sm:$0xff]
        %v1555 = vld [vmem:[%s322 + $0x40] sm:$0xff]
        %1556 = vmatprep.subr.bf16.mxu0 0
        %1557 = vmatpush1.bf16.msra.mxu0 %v424
        %1558 = vmatprep.subr.bf16.mxu0 0
        %1559 = vmatpush1.bf16.msra.mxu0 %v425
        %1560 = vmatprep.subr.bf16.mxu0 0
        %1561 = vmatpush1.bf16.msra.mxu0 0
        %1562 = vmatprep.subr.bf16.mxu0 0
        %1563 = vmatpush1.bf16.msra.mxu0 0
        %1564 = vmatprep.subr.bf16.mxu0 0
        %1565 = vmatpush1.bf16.msra.mxu0 0
        %1566 = vmatprep.subr.bf16.mxu0 0
        %1567 = vmatpush1.bf16.msra.mxu0 0
        %1568 = vmatprep.subr.bf16.mxu0 0
        %1569 = vmatpush1.bf16.msra.mxu0 0
        %1570 = vmatprep.subr.bf16.mxu0 0
        %1571 = vmatpush1.bf16.msra.mxu0 0
        %1572 = vmatprep.subr.bf16.mxu0 0
        %1573 = vmatpush1.bf16.msra.mxu0 0
        %1574 = vmatprep.subr.bf16.mxu0 0
        %1575 = vmatpush1.bf16.msra.mxu0 0
        %1576 = vmatprep.subr.bf16.mxu0 0
        %1577 = vmatpush1.bf16.msra.mxu0 0
        %1578 = vmatprep.subr.bf16.mxu0 0
        %1579 = vmatpush1.bf16.msra.mxu0 0
        %1580 = vmatprep.subr.bf16.mxu0 0
        %1581 = vmatpush1.bf16.msra.mxu0 0
        %1582 = vmatprep.subr.bf16.mxu0 0
        %1583 = vmatpush1.bf16.msra.mxu0 0
        %1584 = vmatprep.subr.bf16.mxu0 0
        %1585 = vmatpush1.bf16.msra.mxu0 0
        %1586 = vmatprep.subr.bf16.mxu0 0
        %1587 = vmatpush1.bf16.msra.mxu0 0
        %1588 = vmatprep.mubr.bf16.mxu0 0
        %1589 = vmatmul.mubr.bf16.gmra.mrb[0].mxu0 %v570
        %v1590 = vpop.f32.mrb[0].mxu0
        %v1591 = vadd.f32 0.0, %v1590
        %v1592 = vpop.f32.mrb[0].mxu0
        %v1593 = vpop.f32.mrb[0].mxu0
        %v1594 = vpop.f32.mrb[0].mxu0
        %1595 = vdwg.mxu0
        %v1596 = vadd.f32 %v1554, %v1591
        %v1597 = vpack.c.bf16 %v1336, %v1336
        %v1598 = vpack.c.bf16 %v1343, %v1343
        %v1599 = vpack.c.bf16 %v1350, %v1350
        %v1600 = vpack.c.bf16 %v1357, %v1357
        %v1601 = vpack.c.bf16 %v1364, %v1364
        %v1602 = vpack.c.bf16 %v1371, %v1371
        %v1603 = vpack.c.bf16 %v1378, %v1378
        %v1604 = vpack.c.bf16 %v1385, %v1385
        %v1613 = vunpack.c.l.b16 %v1597
        %v1614 = vunpack.c.l.b16 %v1598
        %v1615 = vunpack.c.l.b16 %v1599
        %v1616 = vunpack.c.l.b16 %v1600
        %v1617 = vunpack.c.l.b16 %v1601
        %v1618 = vunpack.c.l.b16 %v1602
        %v1619 = vunpack.c.l.b16 %v1603
        %v1620 = vunpack.c.l.b16 %v1604
        %v1621 = vsel %vm776, %v1614, %v1613
        %v1622 = vsel %vm778, %v1615, %v1621
        %v1623 = vsel %vm780, %v1616, %v1622
        %v1624 = vsel %vm782, %v1617, %v1623
        %v1625 = vsel %vm784, %v1618, %v1624
        %v1626 = vsel %vm786, %v1619, %v1625
        %v1627 = vsel %vm788, %v1620, %v1626
        %v1628 = vpack.c.b16 %v1627, %v1627
        %v1630 = vsel %vm480, %v1628, 0
        %1632 = vmatprep.subr.bf16.mxu0 0
        %1633 = vmatpush1.bf16.msra.mxu0 %v478
        %1634 = vmatprep.subr.bf16.mxu0 0
        %1635 = vmatpush1.bf16.msra.mxu0 0
        %1636 = vmatprep.subr.bf16.mxu0 0
        %1637 = vmatpush1.bf16.msra.mxu0 0
        %1638 = vmatprep.subr.bf16.mxu0 0
        %1639 = vmatpush1.bf16.msra.mxu0 0
        %1640 = vmatprep.subr.bf16.mxu0 0
        %1641 = vmatpush1.bf16.msra.mxu0 0
        %1642 = vmatprep.subr.bf16.mxu0 0
        %1643 = vmatpush1.bf16.msra.mxu0 0
        %1644 = vmatprep.subr.bf16.mxu0 0
        %1645 = vmatpush1.bf16.msra.mxu0 0
        %1646 = vmatprep.subr.bf16.mxu0 0
        %1647 = vmatpush1.bf16.msra.mxu0 0
        %1648 = vmatprep.subr.bf16.mxu0 0
        %1649 = vmatpush1.bf16.msra.mxu0 0
        %1650 = vmatprep.subr.bf16.mxu0 0
        %1651 = vmatpush1.bf16.msra.mxu0 0
        %1652 = vmatprep.subr.bf16.mxu0 0
        %1653 = vmatpush1.bf16.msra.mxu0 0
        %1654 = vmatprep.subr.bf16.mxu0 0
        %1655 = vmatpush1.bf16.msra.mxu0 0
        %1656 = vmatprep.subr.bf16.mxu0 0
        %1657 = vmatpush1.bf16.msra.mxu0 0
        %1658 = vmatprep.subr.bf16.mxu0 0
        %1659 = vmatpush1.bf16.msra.mxu0 0
        %1660 = vmatprep.subr.bf16.mxu0 0
        %1661 = vmatpush1.bf16.msra.mxu0 0
        %1662 = vmatprep.subr.bf16.mxu0 0
        %1663 = vmatpush1.bf16.msra.mxu0 0
        %1664 = vmatprep.mubr.bf16.mxu0 0
        %1665 = vmatmul.mubr.bf16.gmra.mrb[0].mxu0 %v1630
        %v1666 = vpop.f32.mrb[0].mxu0
        %v1667 = vadd.f32 0.0, %v1666
        %v1668 = vpop.f32.mrb[0].mxu0
        %v1669 = vpop.f32.mrb[0].mxu0
        %v1670 = vpop.f32.mrb[0].mxu0
        %1671 = vdwg.mxu0
        %v1672 = vadd.f32 %v1596, %v1667
        %v1673 = vxor.u32 %v1672, 2147483648
        %v1674 = vmul.f32 %v1673, 1.442695
        %v1675 = vpow.pop %v1674
        %v1676 = vadd.f32 %v1675, 1.0
        %v1677 = vrcp.pop %v1676
        %v1678 = vmul.f32 1.0, %v1677
        %v1679 = vtanh.pop %v1672
        %v1680 = vmul.f32 %v1678, %v546
        %1682 = vrot.lane.b32.xlu0 %v1679, 64
        %v1683 = vpop.permute.xlu0 %1682
        %v1685 = vmul.f32 %v1678, %v1683
        %1687 = vrot.lane.b32.xlu0 %v1685, 32
        %v1688 = vpop.permute.xlu0 %1687
        %v1690 = vadd.f32 %v1680, %v1688
        %v1691 = vtanh.pop %v1690
        %1693 = vrot.lane.b32.xlu0 %v1691, 64
        %v1694 = vpop.permute.xlu0 %1693
        %v1696 = vmul.f32 %v1678, %v1694
        %v1697 = vpack.c.bf16 %v1696, %v1696
        %1699 = vrot.lane.b32.xlu0 %v1697, 32
        %v1700 = vpop.permute.xlu0 %1699
        %v1702 = vsel %vm428, %v1700, 0
        %1704 = vmatprep.subr.bf16.mxu0 0
        %1705 = vmatpush1.bf16.msra.mxu0 %v565
        %1706 = vmatprep.subr.bf16.mxu0 0
        %1707 = vmatpush1.bf16.msra.mxu0 %v566
        %1708 = vmatprep.subr.bf16.mxu0 0
        %1709 = vmatpush1.bf16.msra.mxu0 0
        %1710 = vmatprep.subr.bf16.mxu0 0
        %1711 = vmatpush1.bf16.msra.mxu0 0
        %1712 = vmatprep.subr.bf16.mxu0 0
        %1713 = vmatpush1.bf16.msra.mxu0 0
        %1714 = vmatprep.subr.bf16.mxu0 0
        %1715 = vmatpush1.bf16.msra.mxu0 0
        %1716 = vmatprep.subr.bf16.mxu0 0
        %1717 = vmatpush1.bf16.msra.mxu0 0
        %1718 = vmatprep.subr.bf16.mxu0 0
        %1719 = vmatpush1.bf16.msra.mxu0 0
        %1720 = vmatprep.subr.bf16.mxu0 0
        %1721 = vmatpush1.bf16.msra.mxu0 0
        %1722 = vmatprep.subr.bf16.mxu0 0
        %1723 = vmatpush1.bf16.msra.mxu0 0
        %1724 = vmatprep.subr.bf16.mxu0 0
        %1725 = vmatpush1.bf16.msra.mxu0 0
        %1726 = vmatprep.subr.bf16.mxu0 0
        %1727 = vmatpush1.bf16.msra.mxu0 0
        %1728 = vmatprep.subr.bf16.mxu0 0
        %1729 = vmatpush1.bf16.msra.mxu0 0
        %1730 = vmatprep.subr.bf16.mxu0 0
        %1731 = vmatpush1.bf16.msra.mxu0 0
        %1732 = vmatprep.subr.bf16.mxu0 0
        %1733 = vmatpush1.bf16.msra.mxu0 0
        %1734 = vmatprep.subr.bf16.mxu0 0
        %1735 = vmatpush1.bf16.msra.mxu0 0
        %1736 = vmatprep.mubr.bf16.mxu0 0
        %1737 = vmatmul.mubr.bf16.gmra.mrb[0].mxu0 %v1702
        %v1738 = vpop.f32.mrb[0].mxu0
        %v1739 = vadd.f32 0.0, %v1738
        %v1740 = vpop.f32.mrb[0].mxu0
        %v1741 = vpop.f32.mrb[0].mxu0
        %v1742 = vpop.f32.mrb[0].mxu0
        %1743 = vdwg.mxu0
        %v1745 = vcombine.high %v1739, %v1739
        %v1747 = vunpack.c.l.s4 1966171168
        %v1748 = vunpack.c.0.s8 %v1747
        %v1749 = vlaneseq
        %v1750 = vshrl.u32 %v1749, 7
        %v1751 = vsub.s32 %v1748, %v1750
        %v1752 = vrot.slane %v1739, %v1751
        %v1754 = vunpack.c.l.s4 1966171168
        %v1755 = vunpack.c.0.s8 %v1754
        %v1756 = vlaneseq
        %v1757 = vshrl.u32 %v1756, 7
        %v1758 = vsub.s32 %v1755, %v1757
        %v1759 = vrot.slane %v1745, %v1758
        %v1760 = vcombine.high %v1752, %v1752
        %v1761 = vcombine.high %v1759, %v1759
        %v1763 = vunpack.c.l.s4 1966171168
        %v1764 = vunpack.c.0.s8 %v1763
        %v1765 = vlaneseq
        %v1766 = vshrl.u32 %v1765, 7
        %v1767 = vsub.s32 %v1764, %v1766
        %v1768 = vrot.slane %v1752, %v1767
        %v1770 = vunpack.c.l.s4 1966171168
        %v1771 = vunpack.c.0.s8 %v1770
        %v1772 = vlaneseq
        %v1773 = vshrl.u32 %v1772, 7
        %v1774 = vsub.s32 %v1771, %v1773
        %v1775 = vrot.slane %v1759, %v1774
        %v1777 = vunpack.c.l.s4 1966171168
        %v1778 = vunpack.c.0.s8 %v1777
        %v1779 = vlaneseq
        %v1780 = vshrl.u32 %v1779, 7
        %v1781 = vsub.s32 %v1778, %v1780
        %v1782 = vrot.slane %v1760, %v1781
        %v1784 = vunpack.c.l.s4 1966171168
        %v1785 = vunpack.c.0.s8 %v1784
        %v1786 = vlaneseq
        %v1787 = vshrl.u32 %v1786, 7
        %v1788 = vsub.s32 %v1785, %v1787
        %v1789 = vrot.slane %v1761, %v1788
        %v1790 = vcombine.high %v1768, %v1768
        %v1791 = vcombine.high %v1775, %v1775
        %v1792 = vcombine.high %v1782, %v1782
        %v1793 = vcombine.high %v1789, %v1789
        %v1794 = vlaneseq
        %v1795 = vshrl.u32 %v1794, 7
        %v1796 = vsub.s32 0, %v1795
        %v1797 = vrot.slane %v1768, %v1796
        %v1798 = vlaneseq
        %v1799 = vshrl.u32 %v1798, 7
        %v1800 = vsub.s32 0, %v1799
        %v1801 = vrot.slane %v1782, %v1800
        %v1802 = vlaneseq
        %v1803 = vshrl.u32 %v1802, 7
        %v1804 = vsub.s32 0, %v1803
        %v1805 = vrot.slane %v1790, %v1804
        %v1806 = vlaneseq
        %v1807 = vshrl.u32 %v1806, 7
        %v1808 = vsub.s32 0, %v1807
        %v1809 = vrot.slane %v1792, %v1808
        %v1810 = vlaneseq
        %v1811 = vshrl.u32 %v1810, 7
        %v1812 = vsub.s32 0, %v1811
        %v1813 = vrot.slane %v1775, %v1812
        %v1814 = vlaneseq
        %v1815 = vshrl.u32 %v1814, 7
        %v1816 = vsub.s32 0, %v1815
        %v1817 = vrot.slane %v1789, %v1816
        %v1818 = vlaneseq
        %v1819 = vshrl.u32 %v1818, 7
        %v1820 = vsub.s32 0, %v1819
        %v1821 = vrot.slane %v1791, %v1820
        %v1822 = vlaneseq
        %v1823 = vshrl.u32 %v1822, 7
        %v1824 = vsub.s32 0, %v1823
        %v1825 = vrot.slane %v1793, %v1824
        %v1834 = vmul.f32 %v1524, %v1797
        %v1835 = vmul.f32 %v1525, %v1801
        %v1836 = vmul.f32 %v1526, %v1805
        %v1837 = vmul.f32 %v1527, %v1809
        %v1838 = vmul.f32 %v1528, %v1813
        %v1839 = vmul.f32 %v1529, %v1817
        %v1840 = vmul.f32 %v1530, %v1821
        %v1841 = vmul.f32 %v1531, %v1825
        %v1842 = vsel %vm480, %v1834, 0.0
        %1843 = vadd.xlane.f32.xlu0 %v1842
        %v1844 = vpop.xlane.xlu0 %1843
        %v1845 = vsel %vm480, %v1835, 0.0
        %1846 = vadd.xlane.f32.xlu0 %v1845
        %v1847 = vpop.xlane.xlu0 %1846
        %v1848 = vsel %vm480, %v1836, 0.0
        %1849 = vadd.xlane.f32.xlu0 %v1848
        %v1850 = vpop.xlane.xlu0 %1849
        %v1851 = vsel %vm480, %v1837, 0.0
        %1852 = vadd.xlane.f32.xlu0 %v1851
        %v1853 = vpop.xlane.xlu0 %1852
        %v1854 = vsel %vm480, %v1838, 0.0
        %1855 = vadd.xlane.f32.xlu0 %v1854
        %v1856 = vpop.xlane.xlu0 %1855
        %v1857 = vsel %vm480, %v1839, 0.0
        %1858 = vadd.xlane.f32.xlu0 %v1857
        %v1859 = vpop.xlane.xlu0 %1858
        %v1860 = vsel %vm480, %v1840, 0.0
        %1861 = vadd.xlane.f32.xlu0 %v1860
        %v1862 = vpop.xlane.xlu0 %1861
        %v1863 = vsel %vm480, %v1841, 0.0
        %1864 = vadd.xlane.f32.xlu0 %v1863
        %v1865 = vpop.xlane.xlu0 %1864
        %v1874 = vlaneseq
        %v1875 = vshrl.u32 %v1874, 7
        %v1876 = vsub.s32 %v743, %v1875
        %v1877 = vrot.slane %v1844, %v1876
        %v1878 = vlaneseq
        %v1879 = vshrl.u32 %v1878, 7
        %v1880 = vsub.s32 %v743, %v1879
        %v1881 = vrot.slane %v1847, %v1880
        %v1882 = vlaneseq
        %v1883 = vshrl.u32 %v1882, 7
        %v1884 = vsub.s32 %v743, %v1883
        %v1885 = vrot.slane %v1850, %v1884
        %v1886 = vlaneseq
        %v1887 = vshrl.u32 %v1886, 7
        %v1888 = vsub.s32 %v743, %v1887
        %v1889 = vrot.slane %v1853, %v1888
        %v1890 = vlaneseq
        %v1891 = vshrl.u32 %v1890, 7
        %v1892 = vsub.s32 %v743, %v1891
        %v1893 = vrot.slane %v1856, %v1892
        %v1894 = vlaneseq
        %v1895 = vshrl.u32 %v1894, 7
        %v1896 = vsub.s32 %v743, %v1895
        %v1897 = vrot.slane %v1859, %v1896
        %v1898 = vlaneseq
        %v1899 = vshrl.u32 %v1898, 7
        %v1900 = vsub.s32 %v743, %v1899
        %v1901 = vrot.slane %v1862, %v1900
        %v1902 = vlaneseq
        %v1903 = vshrl.u32 %v1902, 7
        %v1904 = vsub.s32 %v743, %v1903
        %v1905 = vrot.slane %v1865, %v1904
        %v1906 = vsel %vm776, %v1881, %v1877
        %v1907 = vsel %vm778, %v1885, %v1906
        %v1908 = vsel %vm780, %v1889, %v1907
        %v1909 = vsel %vm782, %v1893, %v1908
        %v1910 = vsel %vm784, %v1897, %v1909
        %v1911 = vsel %vm786, %v1901, %v1910
        %v1912 = vsel %vm788, %v1905, %v1911
        %v1914 = vsel %vm791, %v1912, -inf
        %1915 = vmax.xlane.f32.xlu0 %v1914
        %v1916 = vpop.xlane.xlu0 %1915
        %v1918 = vlaneseq
        %v1919 = vshrl.u32 %v1918, 7
        %v1920 = vsub.s32 0, %v1919
        %v1921 = vrot.slane %v1916, %v1920
        %v1922 = vlaneseq
        %v1923 = vshrl.u32 %v1922, 7
        %v1924 = vsub.s32 1, %v1923
        %v1925 = vrot.slane %v1916, %v1924
        %v1926 = vlaneseq
        %v1927 = vshrl.u32 %v1926, 7
        %v1928 = vsub.s32 2, %v1927
        %v1929 = vrot.slane %v1916, %v1928
        %v1930 = vlaneseq
        %v1931 = vshrl.u32 %v1930, 7
        %v1932 = vsub.s32 3, %v1931
        %v1933 = vrot.slane %v1916, %v1932
        %v1934 = vlaneseq
        %v1935 = vshrl.u32 %v1934, 7
        %v1936 = vsub.s32 4, %v1935
        %v1937 = vrot.slane %v1916, %v1936
        %v1938 = vlaneseq
        %v1939 = vshrl.u32 %v1938, 7
        %v1940 = vsub.s32 5, %v1939
        %v1941 = vrot.slane %v1916, %v1940
        %v1942 = vlaneseq
        %v1943 = vshrl.u32 %v1942, 7
        %v1944 = vsub.s32 6, %v1943
        %v1945 = vrot.slane %v1916, %v1944
        %v1946 = vlaneseq
        %v1947 = vshrl.u32 %v1946, 7
        %v1948 = vsub.s32 7, %v1947
        %v1949 = vrot.slane %v1916, %v1948
        %v1958 = vsub.f32 %v1844, %v1921
        %v1959 = vsub.f32 %v1847, %v1925
        %v1960 = vsub.f32 %v1850, %v1929
        %v1961 = vsub.f32 %v1853, %v1933
        %v1962 = vsub.f32 %v1856, %v1937
        %v1963 = vsub.f32 %v1859, %v1941
        %v1964 = vsub.f32 %v1862, %v1945
        %v1965 = vsub.f32 %v1865, %v1949
        %v1966 = vmul.f32 %v1958, 1.442695
        %v1967 = vpow.pop %v1966
        %v1968 = vmul.f32 %v1959, 1.442695
        %v1969 = vpow.pop %v1968
        %v1970 = vmul.f32 %v1960, 1.442695
        %v1971 = vpow.pop %v1970
        %v1972 = vmul.f32 %v1961, 1.442695
        %v1973 = vpow.pop %v1972
        %v1974 = vmul.f32 %v1962, 1.442695
        %v1975 = vpow.pop %v1974
        %v1976 = vmul.f32 %v1963, 1.442695
        %v1977 = vpow.pop %v1976
        %v1978 = vmul.f32 %v1964, 1.442695
        %v1979 = vpow.pop %v1978
        %v1980 = vmul.f32 %v1965, 1.442695
        %v1981 = vpow.pop %v1980
        %1990 = vset.pattern.permute.xlu0 0
        %1991 = vperm.xlu0 %1990, %v1967
        %v1992 = vpop.permute.xlu0 %1991
        %1993 = vset.pattern.permute.xlu0 0
        %1994 = vperm.xlu0 %1993, %v1969
        %v1995 = vpop.permute.xlu0 %1994
        %1996 = vset.pattern.permute.xlu0 0
        %1997 = vperm.xlu0 %1996, %v1971
        %v1998 = vpop.permute.xlu0 %1997
        %1999 = vset.pattern.permute.xlu0 0
        %2000 = vperm.xlu0 %1999, %v1973
        %v2001 = vpop.permute.xlu0 %2000
        %2002 = vset.pattern.permute.xlu0 0
        %2003 = vperm.xlu0 %2002, %v1975
        %v2004 = vpop.permute.xlu0 %2003
        %2005 = vset.pattern.permute.xlu0 0
        %2006 = vperm.xlu0 %2005, %v1977
        %v2007 = vpop.permute.xlu0 %2006
        %2008 = vset.pattern.permute.xlu0 0
        %2009 = vperm.xlu0 %2008, %v1979
        %v2010 = vpop.permute.xlu0 %2009
        %2011 = vset.pattern.permute.xlu0 0
        %2012 = vperm.xlu0 %2011, %v1981
        %v2013 = vpop.permute.xlu0 %2012
        %v2014 = vlaneseq
        %v2015 = vshrl.u32 %v2014, 7
        %v2016 = vsub.s32 %v743, %v2015
        %v2017 = vrot.slane %v1992, %v2016
        %v2018 = vlaneseq
        %v2019 = vshrl.u32 %v2018, 7
        %v2020 = vsub.s32 %v743, %v2019
        %v2021 = vrot.slane %v1995, %v2020
        %v2022 = vlaneseq
        %v2023 = vshrl.u32 %v2022, 7
        %v2024 = vsub.s32 %v743, %v2023
        %v2025 = vrot.slane %v1998, %v2024
        %v2026 = vlaneseq
        %v2027 = vshrl.u32 %v2026, 7
        %v2028 = vsub.s32 %v743, %v2027
        %v2029 = vrot.slane %v2001, %v2028
        %v2030 = vlaneseq
        %v2031 = vshrl.u32 %v2030, 7
        %v2032 = vsub.s32 %v743, %v2031
        %v2033 = vrot.slane %v2004, %v2032
        %v2034 = vlaneseq
        %v2035 = vshrl.u32 %v2034, 7
        %v2036 = vsub.s32 %v743, %v2035
        %v2037 = vrot.slane %v2007, %v2036
        %v2038 = vlaneseq
        %v2039 = vshrl.u32 %v2038, 7
        %v2040 = vsub.s32 %v743, %v2039
        %v2041 = vrot.slane %v2010, %v2040
        %v2042 = vlaneseq
        %v2043 = vshrl.u32 %v2042, 7
        %v2044 = vsub.s32 %v743, %v2043
        %v2045 = vrot.slane %v2013, %v2044
        %v2046 = vsel %vm776, %v2021, %v2017
        %v2047 = vsel %vm778, %v2025, %v2046
        %v2048 = vsel %vm780, %v2029, %v2047
        %v2049 = vsel %vm782, %v2033, %v2048
        %v2050 = vsel %vm784, %v2037, %v2049
        %v2051 = vsel %vm786, %v2041, %v2050
        %v2052 = vsel %vm788, %v2045, %v2051
        %v2054 = vsel %vm791, %v2052, 0.0
        %2055 = vadd.xlane.f32.xlu0 %v2054
        %v2056 = vpop.xlane.xlu0 %2055
        %v2057 = vrcp.pop %v2056
        %v2059 = vlaneseq
        %v2060 = vshrl.u32 %v2059, 7
        %v2061 = vsub.s32 0, %v2060
        %v2062 = vrot.slane %v2057, %v2061
        %v2063 = vlaneseq
        %v2064 = vshrl.u32 %v2063, 7
        %v2065 = vsub.s32 1, %v2064
        %v2066 = vrot.slane %v2057, %v2065
        %v2067 = vlaneseq
        %v2068 = vshrl.u32 %v2067, 7
        %v2069 = vsub.s32 2, %v2068
        %v2070 = vrot.slane %v2057, %v2069
        %v2071 = vlaneseq
        %v2072 = vshrl.u32 %v2071, 7
        %v2073 = vsub.s32 3, %v2072
        %v2074 = vrot.slane %v2057, %v2073
        %v2075 = vlaneseq
        %v2076 = vshrl.u32 %v2075, 7
        %v2077 = vsub.s32 4, %v2076
        %v2078 = vrot.slane %v2057, %v2077
        %v2079 = vlaneseq
        %v2080 = vshrl.u32 %v2079, 7
        %v2081 = vsub.s32 5, %v2080
        %v2082 = vrot.slane %v2057, %v2081
        %v2083 = vlaneseq
        %v2084 = vshrl.u32 %v2083, 7
        %v2085 = vsub.s32 6, %v2084
        %v2086 = vrot.slane %v2057, %v2085
        %v2087 = vlaneseq
        %v2088 = vshrl.u32 %v2087, 7
        %v2089 = vsub.s32 7, %v2088
        %v2090 = vrot.slane %v2057, %v2089
        %v2099 = vmul.f32 %v1967, %v2062
        %v2100 = vmul.f32 %v1969, %v2066
        %v2101 = vmul.f32 %v1971, %v2070
        %v2102 = vmul.f32 %v1973, %v2074
        %v2103 = vmul.f32 %v1975, %v2078
        %v2104 = vmul.f32 %v1977, %v2082
        %v2105 = vmul.f32 %v1979, %v2086
        %v2106 = vmul.f32 %v1981, %v2090
        %2107 = vrot.lane.b32.xlu0 %v1797, 112
        %v2108 = vpop.permute.xlu0 %2107
        %2109 = vrot.lane.b32.xlu0 %v1801, 112
        %v2110 = vpop.permute.xlu0 %2109
        %2111 = vrot.lane.b32.xlu0 %v1805, 112
        %v2112 = vpop.permute.xlu0 %2111
        %2113 = vrot.lane.b32.xlu0 %v1809, 112
        %v2114 = vpop.permute.xlu0 %2113
        %2115 = vrot.lane.b32.xlu0 %v1813, 112
        %v2116 = vpop.permute.xlu0 %2115
        %2117 = vrot.lane.b32.xlu0 %v1817, 112
        %v2118 = vpop.permute.xlu0 %2117
        %2119 = vrot.lane.b32.xlu0 %v1821, 112
        %v2120 = vpop.permute.xlu0 %2119
        %2121 = vrot.lane.b32.xlu0 %v1825, 112
        %v2122 = vpop.permute.xlu0 %2121
        %v2131 = vmul.f32 %v1524, %v2108
        %v2132 = vmul.f32 %v1525, %v2110
        %v2133 = vmul.f32 %v1526, %v2112
        %v2134 = vmul.f32 %v1527, %v2114
        %v2135 = vmul.f32 %v1528, %v2116
        %v2136 = vmul.f32 %v1529, %v2118
        %v2137 = vmul.f32 %v1530, %v2120
        %v2138 = vmul.f32 %v1531, %v2122
        %v2139 = vsel %vm480, %v2131, 0.0
        %2140 = vadd.xlane.f32.xlu0 %v2139
        %v2141 = vpop.xlane.xlu0 %2140
        %v2142 = vsel %vm480, %v2132, 0.0
        %2143 = vadd.xlane.f32.xlu0 %v2142
        %v2144 = vpop.xlane.xlu0 %2143
        %v2145 = vsel %vm480, %v2133, 0.0
        %2146 = vadd.xlane.f32.xlu0 %v2145
        %v2147 = vpop.xlane.xlu0 %2146
        %v2148 = vsel %vm480, %v2134, 0.0
        %2149 = vadd.xlane.f32.xlu0 %v2148
        %v2150 = vpop.xlane.xlu0 %2149
        %v2151 = vsel %vm480, %v2135, 0.0
        %2152 = vadd.xlane.f32.xlu0 %v2151
        %v2153 = vpop.xlane.xlu0 %2152
        %v2154 = vsel %vm480, %v2136, 0.0
        %2155 = vadd.xlane.f32.xlu0 %v2154
        %v2156 = vpop.xlane.xlu0 %2155
        %v2157 = vsel %vm480, %v2137, 0.0
        %2158 = vadd.xlane.f32.xlu0 %v2157
        %v2159 = vpop.xlane.xlu0 %2158
        %v2160 = vsel %vm480, %v2138, 0.0
        %2161 = vadd.xlane.f32.xlu0 %v2160
        %v2162 = vpop.xlane.xlu0 %2161
        %v2171 = vlaneseq
        %v2172 = vshrl.u32 %v2171, 7
        %v2173 = vsub.s32 %v743, %v2172
        %v2174 = vrot.slane %v2141, %v2173
        %v2175 = vlaneseq
        %v2176 = vshrl.u32 %v2175, 7
        %v2177 = vsub.s32 %v743, %v2176
        %v2178 = vrot.slane %v2144, %v2177
        %v2179 = vlaneseq
        %v2180 = vshrl.u32 %v2179, 7
        %v2181 = vsub.s32 %v743, %v2180
        %v2182 = vrot.slane %v2147, %v2181
        %v2183 = vlaneseq
        %v2184 = vshrl.u32 %v2183, 7
        %v2185 = vsub.s32 %v743, %v2184
        %v2186 = vrot.slane %v2150, %v2185
        %v2187 = vlaneseq
        %v2188 = vshrl.u32 %v2187, 7
        %v2189 = vsub.s32 %v743, %v2188
        %v2190 = vrot.slane %v2153, %v2189
        %v2191 = vlaneseq
        %v2192 = vshrl.u32 %v2191, 7
        %v2193 = vsub.s32 %v743, %v2192
        %v2194 = vrot.slane %v2156, %v2193
        %v2195 = vlaneseq
        %v2196 = vshrl.u32 %v2195, 7
        %v2197 = vsub.s32 %v743, %v2196
        %v2198 = vrot.slane %v2159, %v2197
        %v2199 = vlaneseq
        %v2200 = vshrl.u32 %v2199, 7
        %v2201 = vsub.s32 %v743, %v2200
        %v2202 = vrot.slane %v2162, %v2201
        %v2203 = vsel %vm776, %v2178, %v2174
        %v2204 = vsel %vm778, %v2182, %v2203
        %v2205 = vsel %vm780, %v2186, %v2204
        %v2206 = vsel %vm782, %v2190, %v2205
        %v2207 = vsel %vm784, %v2194, %v2206
        %v2208 = vsel %vm786, %v2198, %v2207
        %v2209 = vsel %vm788, %v2202, %v2208
        %v2211 = vsel %vm791, %v2209, -inf
        %2212 = vmax.xlane.f32.xlu0 %v2211
        %v2213 = vpop.xlane.xlu0 %2212
        %v2215 = vlaneseq
        %v2216 = vshrl.u32 %v2215, 7
        %v2217 = vsub.s32 0, %v2216
        %v2218 = vrot.slane %v2213, %v2217
        %v2219 = vlaneseq
        %v2220 = vshrl.u32 %v2219, 7
        %v2221 = vsub.s32 1, %v2220
        %v2222 = vrot.slane %v2213, %v2221
        %v2223 = vlaneseq
        %v2224 = vshrl.u32 %v2223, 7
        %v2225 = vsub.s32 2, %v2224
        %v2226 = vrot.slane %v2213, %v2225
        %v2227 = vlaneseq
        %v2228 = vshrl.u32 %v2227, 7
        %v2229 = vsub.s32 3, %v2228
        %v2230 = vrot.slane %v2213, %v2229
        %v2231 = vlaneseq
        %v2232 = vshrl.u32 %v2231, 7
        %v2233 = vsub.s32 4, %v2232
        %v2234 = vrot.slane %v2213, %v2233
        %v2235 = vlaneseq
        %v2236 = vshrl.u32 %v2235, 7
        %v2237 = vsub.s32 5, %v2236
        %v2238 = vrot.slane %v2213, %v2237
        %v2239 = vlaneseq
        %v2240 = vshrl.u32 %v2239, 7
        %v2241 = vsub.s32 6, %v2240
        %v2242 = vrot.slane %v2213, %v2241
        %v2243 = vlaneseq
        %v2244 = vshrl.u32 %v2243, 7
        %v2245 = vsub.s32 7, %v2244
        %v2246 = vrot.slane %v2213, %v2245
        %v2255 = vsub.f32 %v2141, %v2218
        %v2256 = vsub.f32 %v2144, %v2222
        %v2257 = vsub.f32 %v2147, %v2226
        %v2258 = vsub.f32 %v2150, %v2230
        %v2259 = vsub.f32 %v2153, %v2234
        %v2260 = vsub.f32 %v2156, %v2238
        %v2261 = vsub.f32 %v2159, %v2242
        %v2262 = vsub.f32 %v2162, %v2246
        %v2263 = vmul.f32 %v2255, 1.442695
        %v2264 = vpow.pop %v2263
        %v2265 = vmul.f32 %v2256, 1.442695
        %v2266 = vpow.pop %v2265
        %v2267 = vmul.f32 %v2257, 1.442695
        %v2268 = vpow.pop %v2267
        %v2269 = vmul.f32 %v2258, 1.442695
        %v2270 = vpow.pop %v2269
        %v2271 = vmul.f32 %v2259, 1.442695
        %v2272 = vpow.pop %v2271
        %v2273 = vmul.f32 %v2260, 1.442695
        %v2274 = vpow.pop %v2273
        %v2275 = vmul.f32 %v2261, 1.442695
        %v2276 = vpow.pop %v2275
        %v2277 = vmul.f32 %v2262, 1.442695
        %v2278 = vpow.pop %v2277
        %2287 = vset.pattern.permute.xlu0 0
        %2288 = vperm.xlu0 %2287, %v2264
        %v2289 = vpop.permute.xlu0 %2288
        %2290 = vset.pattern.permute.xlu0 0
        %2291 = vperm.xlu0 %2290, %v2266
        %v2292 = vpop.permute.xlu0 %2291
        %2293 = vset.pattern.permute.xlu0 0
        %2294 = vperm.xlu0 %2293, %v2268
        %v2295 = vpop.permute.xlu0 %2294
        %2296 = vset.pattern.permute.xlu0 0
        %2297 = vperm.xlu0 %2296, %v2270
        %v2298 = vpop.permute.xlu0 %2297
        %2299 = vset.pattern.permute.xlu0 0
        %2300 = vperm.xlu0 %2299, %v2272
        %v2301 = vpop.permute.xlu0 %2300
        %2302 = vset.pattern.permute.xlu0 0
        %2303 = vperm.xlu0 %2302, %v2274
        %v2304 = vpop.permute.xlu0 %2303
        %2305 = vset.pattern.permute.xlu0 0
        %2306 = vperm.xlu0 %2305, %v2276
        %v2307 = vpop.permute.xlu0 %2306
        %2308 = vset.pattern.permute.xlu0 0
        %2309 = vperm.xlu0 %2308, %v2278
        %v2310 = vpop.permute.xlu0 %2309
        %v2311 = vlaneseq
        %v2312 = vshrl.u32 %v2311, 7
        %v2313 = vsub.s32 %v743, %v2312
        %v2314 = vrot.slane %v2289, %v2313
        %v2315 = vlaneseq
        %v2316 = vshrl.u32 %v2315, 7
        %v2317 = vsub.s32 %v743, %v2316
        %v2318 = vrot.slane %v2292, %v2317
        %v2319 = vlaneseq
        %v2320 = vshrl.u32 %v2319, 7
        %v2321 = vsub.s32 %v743, %v2320
        %v2322 = vrot.slane %v2295, %v2321
        %v2323 = vlaneseq
        %v2324 = vshrl.u32 %v2323, 7
        %v2325 = vsub.s32 %v743, %v2324
        %v2326 = vrot.slane %v2298, %v2325
        %v2327 = vlaneseq
        %v2328 = vshrl.u32 %v2327, 7
        %v2329 = vsub.s32 %v743, %v2328
        %v2330 = vrot.slane %v2301, %v2329
        %v2331 = vlaneseq
        %v2332 = vshrl.u32 %v2331, 7
        %v2333 = vsub.s32 %v743, %v2332
        %v2334 = vrot.slane %v2304, %v2333
        %v2335 = vlaneseq
        %v2336 = vshrl.u32 %v2335, 7
        %v2337 = vsub.s32 %v743, %v2336
        %v2338 = vrot.slane %v2307, %v2337
        %v2339 = vlaneseq
        %v2340 = vshrl.u32 %v2339, 7
        %v2341 = vsub.s32 %v743, %v2340
        %v2342 = vrot.slane %v2310, %v2341
        %v2343 = vsel %vm776, %v2318, %v2314
        %v2344 = vsel %vm778, %v2322, %v2343
        %v2345 = vsel %vm780, %v2326, %v2344
        %v2346 = vsel %vm782, %v2330, %v2345
        %v2347 = vsel %vm784, %v2334, %v2346
        %v2348 = vsel %vm786, %v2338, %v2347
        %v2349 = vsel %vm788, %v2342, %v2348
        %v2351 = vsel %vm791, %v2349, 0.0
        %2352 = vadd.xlane.f32.xlu0 %v2351
        %v2353 = vpop.xlane.xlu0 %2352
        %v2354 = vrcp.pop %v2353
        %v2356 = vlaneseq
        %v2357 = vshrl.u32 %v2356, 7
        %v2358 = vsub.s32 0, %v2357
        %v2359 = vrot.slane %v2354, %v2358
        %v2360 = vlaneseq
        %v2361 = vshrl.u32 %v2360, 7
        %v2362 = vsub.s32 1, %v2361
        %v2363 = vrot.slane %v2354, %v2362
        %v2364 = vlaneseq
        %v2365 = vshrl.u32 %v2364, 7
        %v2366 = vsub.s32 2, %v2365
        %v2367 = vrot.slane %v2354, %v2366
        %v2368 = vlaneseq
        %v2369 = vshrl.u32 %v2368, 7
        %v2370 = vsub.s32 3, %v2369
        %v2371 = vrot.slane %v2354, %v2370
        %v2372 = vlaneseq
        %v2373 = vshrl.u32 %v2372, 7
        %v2374 = vsub.s32 4, %v2373
        %v2375 = vrot.slane %v2354, %v2374
        %v2376 = vlaneseq
        %v2377 = vshrl.u32 %v2376, 7
        %v2378 = vsub.s32 5, %v2377
        %v2379 = vrot.slane %v2354, %v2378
        %v2380 = vlaneseq
        %v2381 = vshrl.u32 %v2380, 7
        %v2382 = vsub.s32 6, %v2381
        %v2383 = vrot.slane %v2354, %v2382
        %v2384 = vlaneseq
        %v2385 = vshrl.u32 %v2384, 7
        %v2386 = vsub.s32 7, %v2385
        %v2387 = vrot.slane %v2354, %v2386
        %v2396 = vmul.f32 %v2264, %v2359
        %v2397 = vmul.f32 %v2266, %v2363
        %v2398 = vmul.f32 %v2268, %v2367
        %v2399 = vmul.f32 %v2270, %v2371
        %v2400 = vmul.f32 %v2272, %v2375
        %v2401 = vmul.f32 %v2274, %v2379
        %v2402 = vmul.f32 %v2276, %v2383
        %v2403 = vmul.f32 %v2278, %v2387
        %2405 = vset.pattern.permute.xlu0 0
        %2406 = vperm.xlu0 %2405, %v2099
        %v2407 = vpop.permute.xlu0 %2406
        %2410 = vset.pattern.permute.xlu0 0
        %2411 = vperm.xlu0 %2410, %v2100
        %v2412 = vpop.permute.xlu0 %2411
        %2415 = vset.pattern.permute.xlu0 0
        %2416 = vperm.xlu0 %2415, %v2101
        %v2417 = vpop.permute.xlu0 %2416
        %2420 = vset.pattern.permute.xlu0 0
        %2421 = vperm.xlu0 %2420, %v2102
        %v2422 = vpop.permute.xlu0 %2421
        %2425 = vset.pattern.permute.xlu0 0
        %2426 = vperm.xlu0 %2425, %v2103
        %v2427 = vpop.permute.xlu0 %2426
        %2430 = vset.pattern.permute.xlu0 0
        %2431 = vperm.xlu0 %2430, %v2104
        %v2432 = vpop.permute.xlu0 %2431
        %2435 = vset.pattern.permute.xlu0 0
        %2436 = vperm.xlu0 %2435, %v2105
        %v2437 = vpop.permute.xlu0 %2436
        %2440 = vset.pattern.permute.xlu0 0
        %2441 = vperm.xlu0 %2440, %v2106
        %v2442 = vpop.permute.xlu0 %2441
        %v2444 = vmul.f32 %v2407, %v1524
        %v2445 = vmul.f32 %v2412, %v1525
        %v2446 = vmul.f32 %v2417, %v1526
        %v2447 = vmul.f32 %v2422, %v1527
        %v2448 = vmul.f32 %v2427, %v1528
        %v2449 = vmul.f32 %v2432, %v1529
        %v2450 = vmul.f32 %v2437, %v1530
        %v2451 = vmul.f32 %v2442, %v1531
        %v2452 = vsel %vm480, %v2444, 0.0
        %v2453 = vrot.slane %v2452, 4
        %v2454 = vadd.f32 %v2452, %v2453
        %v2455 = vrot.slane %v2454, 2
        %v2456 = vadd.f32 %v2454, %v2455
        %v2457 = vrot.slane %v2456, 1
        %v2458 = vadd.f32 %v2456, %v2457
        %v2459 = vsel %vm480, %v2445, 0.0
        %v2460 = vrot.slane %v2459, 4
        %v2461 = vadd.f32 %v2459, %v2460
        %v2462 = vrot.slane %v2461, 2
        %v2463 = vadd.f32 %v2461, %v2462
        %v2464 = vrot.slane %v2463, 1
        %v2465 = vadd.f32 %v2463, %v2464
        %v2466 = vsel %vm480, %v2446, 0.0
        %v2467 = vrot.slane %v2466, 4
        %v2468 = vadd.f32 %v2466, %v2467
        %v2469 = vrot.slane %v2468, 2
        %v2470 = vadd.f32 %v2468, %v2469
        %v2471 = vrot.slane %v2470, 1
        %v2472 = vadd.f32 %v2470, %v2471
        %v2473 = vsel %vm480, %v2447, 0.0
        %v2474 = vrot.slane %v2473, 4
        %v2475 = vadd.f32 %v2473, %v2474
        %v2476 = vrot.slane %v2475, 2
        %v2477 = vadd.f32 %v2475, %v2476
        %v2478 = vrot.slane %v2477, 1
        %v2479 = vadd.f32 %v2477, %v2478
        %v2480 = vsel %vm480, %v2448, 0.0
        %v2481 = vrot.slane %v2480, 4
        %v2482 = vadd.f32 %v2480, %v2481
        %v2483 = vrot.slane %v2482, 2
        %v2484 = vadd.f32 %v2482, %v2483
        %v2485 = vrot.slane %v2484, 1
        %v2486 = vadd.f32 %v2484, %v2485
        %v2487 = vsel %vm480, %v2449, 0.0
        %v2488 = vrot.slane %v2487, 4
        %v2489 = vadd.f32 %v2487, %v2488
        %v2490 = vrot.slane %v2489, 2
        %v2491 = vadd.f32 %v2489, %v2490
        %v2492 = vrot.slane %v2491, 1
        %v2493 = vadd.f32 %v2491, %v2492
        %v2494 = vsel %vm480, %v2450, 0.0
        %v2495 = vrot.slane %v2494, 4
        %v2496 = vadd.f32 %v2494, %v2495
        %v2497 = vrot.slane %v2496, 2
        %v2498 = vadd.f32 %v2496, %v2497
        %v2499 = vrot.slane %v2498, 1
        %v2500 = vadd.f32 %v2498, %v2499
        %v2501 = vsel %vm480, %v2451, 0.0
        %v2502 = vrot.slane %v2501, 4
        %v2503 = vadd.f32 %v2501, %v2502
        %v2504 = vrot.slane %v2503, 2
        %v2505 = vadd.f32 %v2503, %v2504
        %v2506 = vrot.slane %v2505, 1
        %v2507 = vadd.f32 %v2505, %v2506
        %v2509 = vcombine.high %v1555, %v1555
        %v2511 = vunpack.c.l.s4 1966171168
        %v2512 = vunpack.c.0.s8 %v2511
        %v2513 = vlaneseq
        %v2514 = vshrl.u32 %v2513, 7
        %v2515 = vsub.s32 %v2512, %v2514
        %v2516 = vrot.slane %v1555, %v2515
        %v2518 = vunpack.c.l.s4 1966171168
        %v2519 = vunpack.c.0.s8 %v2518
        %v2520 = vlaneseq
        %v2521 = vshrl.u32 %v2520, 7
        %v2522 = vsub.s32 %v2519, %v2521
        %v2523 = vrot.slane %v2509, %v2522
        %v2524 = vcombine.high %v2516, %v2516
        %v2525 = vcombine.high %v2523, %v2523
        %v2527 = vunpack.c.l.s4 1966171168
        %v2528 = vunpack.c.0.s8 %v2527
        %v2529 = vlaneseq
        %v2530 = vshrl.u32 %v2529, 7
        %v2531 = vsub.s32 %v2528, %v2530
        %v2532 = vrot.slane %v2516, %v2531
        %v2534 = vunpack.c.l.s4 1966171168
        %v2535 = vunpack.c.0.s8 %v2534
        %v2536 = vlaneseq
        %v2537 = vshrl.u32 %v2536, 7
        %v2538 = vsub.s32 %v2535, %v2537
        %v2539 = vrot.slane %v2523, %v2538
        %v2541 = vunpack.c.l.s4 1966171168
        %v2542 = vunpack.c.0.s8 %v2541
        %v2543 = vlaneseq
        %v2544 = vshrl.u32 %v2543, 7
        %v2545 = vsub.s32 %v2542, %v2544
        %v2546 = vrot.slane %v2524, %v2545
        %v2548 = vunpack.c.l.s4 1966171168
        %v2549 = vunpack.c.0.s8 %v2548
        %v2550 = vlaneseq
        %v2551 = vshrl.u32 %v2550, 7
        %v2552 = vsub.s32 %v2549, %v2551
        %v2553 = vrot.slane %v2525, %v2552
        %v2554 = vcombine.high %v2532, %v2532
        %v2555 = vcombine.high %v2539, %v2539
        %v2556 = vcombine.high %v2546, %v2546
        %v2557 = vcombine.high %v2553, %v2553
        %2559 = vset.pattern.permute.xlu0 0
        %2560 = vperm.xlu0 %2559, %v2396
        %v2561 = vpop.permute.xlu0 %2560
        %2564 = vset.pattern.permute.xlu0 0
        %2565 = vperm.xlu0 %2564, %v2397
        %v2566 = vpop.permute.xlu0 %2565
        %2569 = vset.pattern.permute.xlu0 0
        %2570 = vperm.xlu0 %2569, %v2398
        %v2571 = vpop.permute.xlu0 %2570
        %2574 = vset.pattern.permute.xlu0 0
        %2575 = vperm.xlu0 %2574, %v2399
        %v2576 = vpop.permute.xlu0 %2575
        %2579 = vset.pattern.permute.xlu0 0
        %2580 = vperm.xlu0 %2579, %v2400
        %v2581 = vpop.permute.xlu0 %2580
        %2584 = vset.pattern.permute.xlu0 0
        %2585 = vperm.xlu0 %2584, %v2401
        %v2586 = vpop.permute.xlu0 %2585
        %2589 = vset.pattern.permute.xlu0 0
        %2590 = vperm.xlu0 %2589, %v2402
        %v2591 = vpop.permute.xlu0 %2590
        %2594 = vset.pattern.permute.xlu0 0
        %2595 = vperm.xlu0 %2594, %v2403
        %v2596 = vpop.permute.xlu0 %2595
        %v2598 = vlaneseq
        %v2599 = vshrl.u32 %v2598, 7
        %v2600 = vsub.s32 0, %v2599
        %v2601 = vrot.slane %v2532, %v2600
        %v2602 = vlaneseq
        %v2603 = vshrl.u32 %v2602, 7
        %v2604 = vsub.s32 0, %v2603
        %v2605 = vrot.slane %v2546, %v2604
        %v2606 = vlaneseq
        %v2607 = vshrl.u32 %v2606, 7
        %v2608 = vsub.s32 0, %v2607
        %v2609 = vrot.slane %v2554, %v2608
        %v2610 = vlaneseq
        %v2611 = vshrl.u32 %v2610, 7
        %v2612 = vsub.s32 0, %v2611
        %v2613 = vrot.slane %v2556, %v2612
        %v2614 = vlaneseq
        %v2615 = vshrl.u32 %v2614, 7
        %v2616 = vsub.s32 0, %v2615
        %v2617 = vrot.slane %v2539, %v2616
        %v2618 = vlaneseq
        %v2619 = vshrl.u32 %v2618, 7
        %v2620 = vsub.s32 0, %v2619
        %v2621 = vrot.slane %v2553, %v2620
        %v2622 = vlaneseq
        %v2623 = vshrl.u32 %v2622, 7
        %v2624 = vsub.s32 0, %v2623
        %v2625 = vrot.slane %v2555, %v2624
        %v2626 = vlaneseq
        %v2627 = vshrl.u32 %v2626, 7
        %v2628 = vsub.s32 0, %v2627
        %v2629 = vrot.slane %v2557, %v2628
        %v2638 = vmul.f32 %v2561, %v2601
        %v2639 = vmul.f32 %v2566, %v2605
        %v2640 = vmul.f32 %v2571, %v2609
        %v2641 = vmul.f32 %v2576, %v2613
        %v2642 = vmul.f32 %v2581, %v2617
        %v2643 = vmul.f32 %v2586, %v2621
        %v2644 = vmul.f32 %v2591, %v2625
        %v2645 = vmul.f32 %v2596, %v2629
        %2654 = vrot.lane.b32.xlu0 %v2638, 112
        %v2655 = vpop.permute.xlu0 %2654
        %2656 = vrot.lane.b32.xlu0 %v2639, 112
        %v2657 = vpop.permute.xlu0 %2656
        %2658 = vrot.lane.b32.xlu0 %v2640, 112
        %v2659 = vpop.permute.xlu0 %2658
        %2660 = vrot.lane.b32.xlu0 %v2641, 112
        %v2661 = vpop.permute.xlu0 %2660
        %2662 = vrot.lane.b32.xlu0 %v2642, 112
        %v2663 = vpop.permute.xlu0 %2662
        %2664 = vrot.lane.b32.xlu0 %v2643, 112
        %v2665 = vpop.permute.xlu0 %2664
        %2666 = vrot.lane.b32.xlu0 %v2644, 112
        %v2667 = vpop.permute.xlu0 %2666
        %2668 = vrot.lane.b32.xlu0 %v2645, 112
        %v2669 = vpop.permute.xlu0 %2668
        %v2678 = vadd.f32 %v1524, %v2655
        %v2679 = vadd.f32 %v1525, %v2657
        %v2680 = vadd.f32 %v1526, %v2659
        %v2681 = vadd.f32 %v1527, %v2661
        %v2682 = vadd.f32 %v1528, %v2663
        %v2683 = vadd.f32 %v1529, %v2665
        %v2684 = vadd.f32 %v1530, %v2667
        %v2685 = vadd.f32 %v1531, %v2669
        %2687 = vrot.lane.b32.xlu0 %v1696, 64
        %v2688 = vpop.permute.xlu0 %2687
        %vm2690 = vcmask 523520
        %2691 = vst.msk [vmem:[%s368] sm:$0xff] %vm2690, %v2688
        %v2700 = vsel %vm776, %v2465, %v2458
        %v2701 = vsel %vm778, %v2472, %v2700
        %v2702 = vsel %vm780, %v2479, %v2701
        %v2703 = vsel %vm782, %v2486, %v2702
        %v2704 = vsel %vm784, %v2493, %v2703
        %v2705 = vsel %vm786, %v2500, %v2704
        %v2706 = vsel %vm788, %v2507, %v2705
        %2707 = vrot.lane.b32.xlu0 %v2706, 16
        %v2708 = vpop.permute.xlu0 %2707
        %vm2710 = vcmask 261248
        %2711 = vst.msk [vmem:[%s368 + $0x10] sm:$0xff] %vm2710, %v2708
        %v2712 = vld [vmem:[%s322 + $0x10] sm:$0xff]
        %v2713 = vld [vmem:[%s322 + $0x40] sm:$0xff]
        %2714 = vmatprep.subr.bf16.mxu0 0
        %2715 = vmatpush1.bf16.msra.mxu0 %v424
        %2716 = vmatprep.subr.bf16.mxu0 0
        %2717 = vmatpush1.bf16.msra.mxu0 %v425
        %2718 = vmatprep.subr.bf16.mxu0 0
        %2719 = vmatpush1.bf16.msra.mxu0 0
        %2720 = vmatprep.subr.bf16.mxu0 0
        %2721 = vmatpush1.bf16.msra.mxu0 0
        %2722 = vmatprep.subr.bf16.mxu0 0
        %2723 = vmatpush1.bf16.msra.mxu0 0
        %2724 = vmatprep.subr.bf16.mxu0 0
        %2725 = vmatpush1.bf16.msra.mxu0 0
        %2726 = vmatprep.subr.bf16.mxu0 0
        %2727 = vmatpush1.bf16.msra.mxu0 0
        %2728 = vmatprep.subr.bf16.mxu0 0
        %2729 = vmatpush1.bf16.msra.mxu0 0
        %2730 = vmatprep.subr.bf16.mxu0 0
        %2731 = vmatpush1.bf16.msra.mxu0 0
        %2732 = vmatprep.subr.bf16.mxu0 0
        %2733 = vmatpush1.bf16.msra.mxu0 0
        %2734 = vmatprep.subr.bf16.mxu0 0
        %2735 = vmatpush1.bf16.msra.mxu0 0
        %2736 = vmatprep.subr.bf16.mxu0 0
        %2737 = vmatpush1.bf16.msra.mxu0 0
        %2738 = vmatprep.subr.bf16.mxu0 0
        %2739 = vmatpush1.bf16.msra.mxu0 0
        %2740 = vmatprep.subr.bf16.mxu0 0
        %2741 = vmatpush1.bf16.msra.mxu0 0
        %2742 = vmatprep.subr.bf16.mxu0 0
        %2743 = vmatpush1.bf16.msra.mxu0 0
        %2744 = vmatprep.subr.bf16.mxu0 0
        %2745 = vmatpush1.bf16.msra.mxu0 0
        %2746 = vmatprep.mubr.bf16.mxu0 0
        %2747 = vmatmul.mubr.bf16.gmra.mrb[0].mxu0 %v1702
        %v2748 = vpop.f32.mrb[0].mxu0
        %v2749 = vadd.f32 0.0, %v2748
        %v2750 = vpop.f32.mrb[0].mxu0
        %v2751 = vpop.f32.mrb[0].mxu0
        %v2752 = vpop.f32.mrb[0].mxu0
        %2753 = vdwg.mxu0
        %v2754 = vadd.f32 %v2712, %v2749
        %v2755 = vpack.c.bf16 %v2458, %v2458
        %v2756 = vpack.c.bf16 %v2465, %v2465
        %v2757 = vpack.c.bf16 %v2472, %v2472
        %v2758 = vpack.c.bf16 %v2479, %v2479
        %v2759 = vpack.c.bf16 %v2486, %v2486
        %v2760 = vpack.c.bf16 %v2493, %v2493
        %v2761 = vpack.c.bf16 %v2500, %v2500
        %v2762 = vpack.c.bf16 %v2507, %v2507
        %v2771 = vunpack.c.l.b16 %v2755
        %v2772 = vunpack.c.l.b16 %v2756
        %v2773 = vunpack.c.l.b16 %v2757
        %v2774 = vunpack.c.l.b16 %v2758
        %v2775 = vunpack.c.l.b16 %v2759
        %v2776 = vunpack.c.l.b16 %v2760
        %v2777 = vunpack.c.l.b16 %v2761
        %v2778 = vunpack.c.l.b16 %v2762
        %v2779 = vsel %vm776, %v2772, %v2771
        %v2780 = vsel %vm778, %v2773, %v2779
        %v2781 = vsel %vm780, %v2774, %v2780
        %v2782 = vsel %vm782, %v2775, %v2781
        %v2783 = vsel %vm784, %v2776, %v2782
        %v2784 = vsel %vm786, %v2777, %v2783
        %v2785 = vsel %vm788, %v2778, %v2784
        %v2786 = vpack.c.b16 %v2785, %v2785
        %v2788 = vsel %vm480, %v2786, 0
        %2790 = vmatprep.subr.bf16.mxu0 0
        %2791 = vmatpush1.bf16.msra.mxu0 %v478
        %2792 = vmatprep.subr.bf16.mxu0 0
        %2793 = vmatpush1.bf16.msra.mxu0 0
        %2794 = vmatprep.subr.bf16.mxu0 0
        %2795 = vmatpush1.bf16.msra.mxu0 0
        %2796 = vmatprep.subr.bf16.mxu0 0
        %2797 = vmatpush1.bf16.msra.mxu0 0
        %2798 = vmatprep.subr.bf16.mxu0 0
        %2799 = vmatpush1.bf16.msra.mxu0 0
        %2800 = vmatprep.subr.bf16.mxu0 0
        %2801 = vmatpush1.bf16.msra.mxu0 0
        %2802 = vmatprep.subr.bf16.mxu0 0
        %2803 = vmatpush1.bf16.msra.mxu0 0
        %2804 = vmatprep.subr.bf16.mxu0 0
        %2805 = vmatpush1.bf16.msra.mxu0 0
        %2806 = vmatprep.subr.bf16.mxu0 0
        %2807 = vmatpush1.bf16.msra.mxu0 0
        %2808 = vmatprep.subr.bf16.mxu0 0
        %2809 = vmatpush1.bf16.msra.mxu0 0
        %2810 = vmatprep.subr.bf16.mxu0 0
        %2811 = vmatpush1.bf16.msra.mxu0 0
        %2812 = vmatprep.subr.bf16.mxu0 0
        %2813 = vmatpush1.bf16.msra.mxu0 0
        %2814 = vmatprep.subr.bf16.mxu0 0
        %2815 = vmatpush1.bf16.msra.mxu0 0
        %2816 = vmatprep.subr.bf16.mxu0 0
        %2817 = vmatpush1.bf16.msra.mxu0 0
        %2818 = vmatprep.subr.bf16.mxu0 0
        %2819 = vmatpush1.bf16.msra.mxu0 0
        %2820 = vmatprep.subr.bf16.mxu0 0
        %2821 = vmatpush1.bf16.msra.mxu0 0
        %2822 = vmatprep.mubr.bf16.mxu0 0
        %2823 = vmatmul.mubr.bf16.gmra.mrb[0].mxu0 %v2788
        %v2824 = vpop.f32.mrb[0].mxu0
        %v2825 = vadd.f32 0.0, %v2824
        %v2826 = vpop.f32.mrb[0].mxu0
        %v2827 = vpop.f32.mrb[0].mxu0
        %v2828 = vpop.f32.mrb[0].mxu0
        %2829 = vdwg.mxu0
        %v2830 = vadd.f32 %v2754, %v2825
        %v2831 = vxor.u32 %v2830, 2147483648
        %v2832 = vmul.f32 %v2831, 1.442695
        %v2833 = vpow.pop %v2832
        %v2834 = vadd.f32 %v2833, 1.0
        %v2835 = vrcp.pop %v2834
        %v2836 = vmul.f32 1.0, %v2835
        %v2837 = vtanh.pop %v2830
        %v2838 = vmul.f32 %v2836, %v1690
        %2840 = vrot.lane.b32.xlu0 %v2837, 64
        %v2841 = vpop.permute.xlu0 %2840
        %v2843 = vmul.f32 %v2836, %v2841
        %2845 = vrot.lane.b32.xlu0 %v2843, 32
        %v2846 = vpop.permute.xlu0 %2845
        %v2848 = vadd.f32 %v2838, %v2846
        %v2849 = vtanh.pop %v2848
        %2851 = vrot.lane.b32.xlu0 %v2849, 64
        %v2852 = vpop.permute.xlu0 %2851
        %v2854 = vmul.f32 %v2836, %v2852
        %v2855 = vpack.c.bf16 %v2854, %v2854
        %2857 = vrot.lane.b32.xlu0 %v2855, 32
        %v2858 = vpop.permute.xlu0 %2857
        %v2860 = vsel %vm428, %v2858, 0
        %2862 = vmatprep.subr.bf16.mxu0 0
        %2863 = vmatpush1.bf16.msra.mxu0 %v565
        %2864 = vmatprep.subr.bf16.mxu0 0
        %2865 = vmatpush1.bf16.msra.mxu0 %v566
        %2866 = vmatprep.subr.bf16.mxu0 0
        %2867 = vmatpush1.bf16.msra.mxu0 0
        %2868 = vmatprep.subr.bf16.mxu0 0
        %2869 = vmatpush1.bf16.msra.mxu0 0
        %2870 = vmatprep.subr.bf16.mxu0 0
        %2871 = vmatpush1.bf16.msra.mxu0 0
        %2872 = vmatprep.subr.bf16.mxu0 0
        %2873 = vmatpush1.bf16.msra.mxu0 0
        %2874 = vmatprep.subr.bf16.mxu0 0
        %2875 = vmatpush1.bf16.msra.mxu0 0
        %2876 = vmatprep.subr.bf16.mxu0 0
        %2877 = vmatpush1.bf16.msra.mxu0 0
        %2878 = vmatprep.subr.bf16.mxu0 0
        %2879 = vmatpush1.bf16.msra.mxu0 0
        %2880 = vmatprep.subr.bf16.mxu0 0
        %2881 = vmatpush1.bf16.msra.mxu0 0
        %2882 = vmatprep.subr.bf16.mxu0 0
        %2883 = vmatpush1.bf16.msra.mxu0 0
        %2884 = vmatprep.subr.bf16.mxu0 0
        %2885 = vmatpush1.bf16.msra.mxu0 0
        %2886 = vmatprep.subr.bf16.mxu0 0
        %2887 = vmatpush1.bf16.msra.mxu0 0
        %2888 = vmatprep.subr.bf16.mxu0 0
        %2889 = vmatpush1.bf16.msra.mxu0 0
        %2890 = vmatprep.subr.bf16.mxu0 0
        %2891 = vmatpush1.bf16.msra.mxu0 0
        %2892 = vmatprep.subr.bf16.mxu0 0
        %2893 = vmatpush1.bf16.msra.mxu0 0
        %2894 = vmatprep.mubr.bf16.mxu0 0
        %2895 = vmatmul.mubr.bf16.gmra.mrb[0].mxu0 %v2860
        %v2896 = vpop.f32.mrb[0].mxu0
        %v2897 = vadd.f32 0.0, %v2896
        %v2898 = vpop.f32.mrb[0].mxu0
        %v2899 = vpop.f32.mrb[0].mxu0
        %v2900 = vpop.f32.mrb[0].mxu0
        %2901 = vdwg.mxu0
        %v2903 = vcombine.high %v2897, %v2897
        %v2905 = vunpack.c.l.s4 1966171168
        %v2906 = vunpack.c.0.s8 %v2905
        %v2907 = vlaneseq
        %v2908 = vshrl.u32 %v2907, 7
        %v2909 = vsub.s32 %v2906, %v2908
        %v2910 = vrot.slane %v2897, %v2909
        %v2912 = vunpack.c.l.s4 1966171168
        %v2913 = vunpack.c.0.s8 %v2912
        %v2914 = vlaneseq
        %v2915 = vshrl.u32 %v2914, 7
        %v2916 = vsub.s32 %v2913, %v2915
        %v2917 = vrot.slane %v2903, %v2916
        %v2918 = vcombine.high %v2910, %v2910
        %v2919 = vcombine.high %v2917, %v2917
        %v2921 = vunpack.c.l.s4 1966171168
        %v2922 = vunpack.c.0.s8 %v2921
        %v2923 = vlaneseq
        %v2924 = vshrl.u32 %v2923, 7
        %v2925 = vsub.s32 %v2922, %v2924
        %v2926 = vrot.slane %v2910, %v2925
        %v2928 = vunpack.c.l.s4 1966171168
        %v2929 = vunpack.c.0.s8 %v2928
        %v2930 = vlaneseq
        %v2931 = vshrl.u32 %v2930, 7
        %v2932 = vsub.s32 %v2929, %v2931
        %v2933 = vrot.slane %v2917, %v2932
        %v2935 = vunpack.c.l.s4 1966171168
        %v2936 = vunpack.c.0.s8 %v2935
        %v2937 = vlaneseq
        %v2938 = vshrl.u32 %v2937, 7
        %v2939 = vsub.s32 %v2936, %v2938
        %v2940 = vrot.slane %v2918, %v2939
        %v2942 = vunpack.c.l.s4 1966171168
        %v2943 = vunpack.c.0.s8 %v2942
        %v2944 = vlaneseq
        %v2945 = vshrl.u32 %v2944, 7
        %v2946 = vsub.s32 %v2943, %v2945
        %v2947 = vrot.slane %v2919, %v2946
        %v2948 = vcombine.high %v2926, %v2926
        %v2949 = vcombine.high %v2933, %v2933
        %v2950 = vcombine.high %v2940, %v2940
        %v2951 = vcombine.high %v2947, %v2947
        %v2952 = vlaneseq
        %v2953 = vshrl.u32 %v2952, 7
        %v2954 = vsub.s32 0, %v2953
        %v2955 = vrot.slane %v2926, %v2954
        %v2956 = vlaneseq
        %v2957 = vshrl.u32 %v2956, 7
        %v2958 = vsub.s32 0, %v2957
        %v2959 = vrot.slane %v2940, %v2958
        %v2960 = vlaneseq
        %v2961 = vshrl.u32 %v2960, 7
        %v2962 = vsub.s32 0, %v2961
        %v2963 = vrot.slane %v2948, %v2962
        %v2964 = vlaneseq
        %v2965 = vshrl.u32 %v2964, 7
        %v2966 = vsub.s32 0, %v2965
        %v2967 = vrot.slane %v2950, %v2966
        %v2968 = vlaneseq
        %v2969 = vshrl.u32 %v2968, 7
        %v2970 = vsub.s32 0, %v2969
        %v2971 = vrot.slane %v2933, %v2970
        %v2972 = vlaneseq
        %v2973 = vshrl.u32 %v2972, 7
        %v2974 = vsub.s32 0, %v2973
        %v2975 = vrot.slane %v2947, %v2974
        %v2976 = vlaneseq
        %v2977 = vshrl.u32 %v2976, 7
        %v2978 = vsub.s32 0, %v2977
        %v2979 = vrot.slane %v2949, %v2978
        %v2980 = vlaneseq
        %v2981 = vshrl.u32 %v2980, 7
        %v2982 = vsub.s32 0, %v2981
        %v2983 = vrot.slane %v2951, %v2982
        %v2992 = vmul.f32 %v2678, %v2955
        %v2993 = vmul.f32 %v2679, %v2959
        %v2994 = vmul.f32 %v2680, %v2963
        %v2995 = vmul.f32 %v2681, %v2967
        %v2996 = vmul.f32 %v2682, %v2971
        %v2997 = vmul.f32 %v2683, %v2975
        %v2998 = vmul.f32 %v2684, %v2979
        %v2999 = vmul.f32 %v2685, %v2983
        %v3000 = vsel %vm480, %v2992, 0.0
        %3001 = vadd.xlane.f32.xlu0 %v3000
        %v3002 = vpop.xlane.xlu0 %3001
        %v3003 = vsel %vm480, %v2993, 0.0
        %3004 = vadd.xlane.f32.xlu0 %v3003
        %v3005 = vpop.xlane.xlu0 %3004
        %v3006 = vsel %vm480, %v2994, 0.0
        %3007 = vadd.xlane.f32.xlu0 %v3006
        %v3008 = vpop.xlane.xlu0 %3007
        %v3009 = vsel %vm480, %v2995, 0.0
        %3010 = vadd.xlane.f32.xlu0 %v3009
        %v3011 = vpop.xlane.xlu0 %3010
        %v3012 = vsel %vm480, %v2996, 0.0
        %3013 = vadd.xlane.f32.xlu0 %v3012
        %v3014 = vpop.xlane.xlu0 %3013
        %v3015 = vsel %vm480, %v2997, 0.0
        %3016 = vadd.xlane.f32.xlu0 %v3015
        %v3017 = vpop.xlane.xlu0 %3016
        %v3018 = vsel %vm480, %v2998, 0.0
        %3019 = vadd.xlane.f32.xlu0 %v3018
        %v3020 = vpop.xlane.xlu0 %3019
        %v3021 = vsel %vm480, %v2999, 0.0
        %3022 = vadd.xlane.f32.xlu0 %v3021
        %v3023 = vpop.xlane.xlu0 %3022
        %v3032 = vlaneseq
        %v3033 = vshrl.u32 %v3032, 7
        %v3034 = vsub.s32 %v743, %v3033
        %v3035 = vrot.slane %v3002, %v3034
        %v3036 = vlaneseq
        %v3037 = vshrl.u32 %v3036, 7
        %v3038 = vsub.s32 %v743, %v3037
        %v3039 = vrot.slane %v3005, %v3038
        %v3040 = vlaneseq
        %v3041 = vshrl.u32 %v3040, 7
        %v3042 = vsub.s32 %v743, %v3041
        %v3043 = vrot.slane %v3008, %v3042
        %v3044 = vlaneseq
        %v3045 = vshrl.u32 %v3044, 7
        %v3046 = vsub.s32 %v743, %v3045
        %v3047 = vrot.slane %v3011, %v3046
        %v3048 = vlaneseq
        %v3049 = vshrl.u32 %v3048, 7
        %v3050 = vsub.s32 %v743, %v3049
        %v3051 = vrot.slane %v3014, %v3050
        %v3052 = vlaneseq
        %v3053 = vshrl.u32 %v3052, 7
        %v3054 = vsub.s32 %v743, %v3053
        %v3055 = vrot.slane %v3017, %v3054
        %v3056 = vlaneseq
        %v3057 = vshrl.u32 %v3056, 7
        %v3058 = vsub.s32 %v743, %v3057
        %v3059 = vrot.slane %v3020, %v3058
        %v3060 = vlaneseq
        %v3061 = vshrl.u32 %v3060, 7
        %v3062 = vsub.s32 %v743, %v3061
        %v3063 = vrot.slane %v3023, %v3062
        %v3064 = vsel %vm776, %v3039, %v3035
        %v3065 = vsel %vm778, %v3043, %v3064
        %v3066 = vsel %vm780, %v3047, %v3065
        %v3067 = vsel %vm782, %v3051, %v3066
        %v3068 = vsel %vm784, %v3055, %v3067
        %v3069 = vsel %vm786, %v3059, %v3068
        %v3070 = vsel %vm788, %v3063, %v3069
        %v3072 = vsel %vm791, %v3070, -inf
        %3073 = vmax.xlane.f32.xlu0 %v3072
        %v3074 = vpop.xlane.xlu0 %3073
        %v3076 = vlaneseq
        %v3077 = vshrl.u32 %v3076, 7
        %v3078 = vsub.s32 0, %v3077
        %v3079 = vrot.slane %v3074, %v3078
        %v3080 = vlaneseq
        %v3081 = vshrl.u32 %v3080, 7
        %v3082 = vsub.s32 1, %v3081
        %v3083 = vrot.slane %v3074, %v3082
        %v3084 = vlaneseq
        %v3085 = vshrl.u32 %v3084, 7
        %v3086 = vsub.s32 2, %v3085
        %v3087 = vrot.slane %v3074, %v3086
        %v3088 = vlaneseq
        %v3089 = vshrl.u32 %v3088, 7
        %v3090 = vsub.s32 3, %v3089
        %v3091 = vrot.slane %v3074, %v3090
        %v3092 = vlaneseq
        %v3093 = vshrl.u32 %v3092, 7
        %v3094 = vsub.s32 4, %v3093
        %v3095 = vrot.slane %v3074, %v3094
        %v3096 = vlaneseq
        %v3097 = vshrl.u32 %v3096, 7
        %v3098 = vsub.s32 5, %v3097
        %v3099 = vrot.slane %v3074, %v3098
        %v3100 = vlaneseq
        %v3101 = vshrl.u32 %v3100, 7
        %v3102 = vsub.s32 6, %v3101
        %v3103 = vrot.slane %v3074, %v3102
        %v3104 = vlaneseq
        %v3105 = vshrl.u32 %v3104, 7
        %v3106 = vsub.s32 7, %v3105
        %v3107 = vrot.slane %v3074, %v3106
        %v3116 = vsub.f32 %v3002, %v3079
        %v3117 = vsub.f32 %v3005, %v3083
        %v3118 = vsub.f32 %v3008, %v3087
        %v3119 = vsub.f32 %v3011, %v3091
        %v3120 = vsub.f32 %v3014, %v3095
        %v3121 = vsub.f32 %v3017, %v3099
        %v3122 = vsub.f32 %v3020, %v3103
        %v3123 = vsub.f32 %v3023, %v3107
        %v3124 = vmul.f32 %v3116, 1.442695
        %v3125 = vpow.pop %v3124
        %v3126 = vmul.f32 %v3117, 1.442695
        %v3127 = vpow.pop %v3126
        %v3128 = vmul.f32 %v3118, 1.442695
        %v3129 = vpow.pop %v3128
        %v3130 = vmul.f32 %v3119, 1.442695
        %v3131 = vpow.pop %v3130
        %v3132 = vmul.f32 %v3120, 1.442695
        %v3133 = vpow.pop %v3132
        %v3134 = vmul.f32 %v3121, 1.442695
        %v3135 = vpow.pop %v3134
        %v3136 = vmul.f32 %v3122, 1.442695
        %v3137 = vpow.pop %v3136
        %v3138 = vmul.f32 %v3123, 1.442695
        %v3139 = vpow.pop %v3138
        %3148 = vset.pattern.permute.xlu0 0
        %3149 = vperm.xlu0 %3148, %v3125
        %v3150 = vpop.permute.xlu0 %3149
        %3151 = vset.pattern.permute.xlu0 0
        %3152 = vperm.xlu0 %3151, %v3127
        %v3153 = vpop.permute.xlu0 %3152
        %3154 = vset.pattern.permute.xlu0 0
        %3155 = vperm.xlu0 %3154, %v3129
        %v3156 = vpop.permute.xlu0 %3155
        %3157 = vset.pattern.permute.xlu0 0
        %3158 = vperm.xlu0 %3157, %v3131
        %v3159 = vpop.permute.xlu0 %3158
        %3160 = vset.pattern.permute.xlu0 0
        %3161 = vperm.xlu0 %3160, %v3133
        %v3162 = vpop.permute.xlu0 %3161
        %3163 = vset.pattern.permute.xlu0 0
        %3164 = vperm.xlu0 %3163, %v3135
        %v3165 = vpop.permute.xlu0 %3164
        %3166 = vset.pattern.permute.xlu0 0
        %3167 = vperm.xlu0 %3166, %v3137
        %v3168 = vpop.permute.xlu0 %3167
        %3169 = vset.pattern.permute.xlu0 0
        %3170 = vperm.xlu0 %3169, %v3139
        %v3171 = vpop.permute.xlu0 %3170
        %v3172 = vlaneseq
        %v3173 = vshrl.u32 %v3172, 7
        %v3174 = vsub.s32 %v743, %v3173
        %v3175 = vrot.slane %v3150, %v3174
        %v3176 = vlaneseq
        %v3177 = vshrl.u32 %v3176, 7
        %v3178 = vsub.s32 %v743, %v3177
        %v3179 = vrot.slane %v3153, %v3178
        %v3180 = vlaneseq
        %v3181 = vshrl.u32 %v3180, 7
        %v3182 = vsub.s32 %v743, %v3181
        %v3183 = vrot.slane %v3156, %v3182
        %v3184 = vlaneseq
        %v3185 = vshrl.u32 %v3184, 7
        %v3186 = vsub.s32 %v743, %v3185
        %v3187 = vrot.slane %v3159, %v3186
        %v3188 = vlaneseq
        %v3189 = vshrl.u32 %v3188, 7
        %v3190 = vsub.s32 %v743, %v3189
        %v3191 = vrot.slane %v3162, %v3190
        %v3192 = vlaneseq
        %v3193 = vshrl.u32 %v3192, 7
        %v3194 = vsub.s32 %v743, %v3193
        %v3195 = vrot.slane %v3165, %v3194
        %v3196 = vlaneseq
        %v3197 = vshrl.u32 %v3196, 7
        %v3198 = vsub.s32 %v743, %v3197
        %v3199 = vrot.slane %v3168, %v3198
        %v3200 = vlaneseq
        %v3201 = vshrl.u32 %v3200, 7
        %v3202 = vsub.s32 %v743, %v3201
        %v3203 = vrot.slane %v3171, %v3202
        %v3204 = vsel %vm776, %v3179, %v3175
        %v3205 = vsel %vm778, %v3183, %v3204
        %v3206 = vsel %vm780, %v3187, %v3205
        %v3207 = vsel %vm782, %v3191, %v3206
        %v3208 = vsel %vm784, %v3195, %v3207
        %v3209 = vsel %vm786, %v3199, %v3208
        %v3210 = vsel %vm788, %v3203, %v3209
        %v3212 = vsel %vm791, %v3210, 0.0
        %3213 = vadd.xlane.f32.xlu0 %v3212
        %v3214 = vpop.xlane.xlu0 %3213
        %v3215 = vrcp.pop %v3214
        %v3217 = vlaneseq
        %v3218 = vshrl.u32 %v3217, 7
        %v3219 = vsub.s32 0, %v3218
        %v3220 = vrot.slane %v3215, %v3219
        %v3221 = vlaneseq
        %v3222 = vshrl.u32 %v3221, 7
        %v3223 = vsub.s32 1, %v3222
        %v3224 = vrot.slane %v3215, %v3223
        %v3225 = vlaneseq
        %v3226 = vshrl.u32 %v3225, 7
        %v3227 = vsub.s32 2, %v3226
        %v3228 = vrot.slane %v3215, %v3227
        %v3229 = vlaneseq
        %v3230 = vshrl.u32 %v3229, 7
        %v3231 = vsub.s32 3, %v3230
        %v3232 = vrot.slane %v3215, %v3231
        %v3233 = vlaneseq
        %v3234 = vshrl.u32 %v3233, 7
        %v3235 = vsub.s32 4, %v3234
        %v3236 = vrot.slane %v3215, %v3235
        %v3237 = vlaneseq
        %v3238 = vshrl.u32 %v3237, 7
        %v3239 = vsub.s32 5, %v3238
        %v3240 = vrot.slane %v3215, %v3239
        %v3241 = vlaneseq
        %v3242 = vshrl.u32 %v3241, 7
        %v3243 = vsub.s32 6, %v3242
        %v3244 = vrot.slane %v3215, %v3243
        %v3245 = vlaneseq
        %v3246 = vshrl.u32 %v3245, 7
        %v3247 = vsub.s32 7, %v3246
        %v3248 = vrot.slane %v3215, %v3247
        %v3257 = vmul.f32 %v3125, %v3220
        %v3258 = vmul.f32 %v3127, %v3224
        %v3259 = vmul.f32 %v3129, %v3228
        %v3260 = vmul.f32 %v3131, %v3232
        %v3261 = vmul.f32 %v3133, %v3236
        %v3262 = vmul.f32 %v3135, %v3240
        %v3263 = vmul.f32 %v3137, %v3244
        %v3264 = vmul.f32 %v3139, %v3248
        %3265 = vrot.lane.b32.xlu0 %v2955, 112
        %v3266 = vpop.permute.xlu0 %3265
        %3267 = vrot.lane.b32.xlu0 %v2959, 112
        %v3268 = vpop.permute.xlu0 %3267
        %3269 = vrot.lane.b32.xlu0 %v2963, 112
        %v3270 = vpop.permute.xlu0 %3269
        %3271 = vrot.lane.b32.xlu0 %v2967, 112
        %v3272 = vpop.permute.xlu0 %3271
        %3273 = vrot.lane.b32.xlu0 %v2971, 112
        %v3274 = vpop.permute.xlu0 %3273
        %3275 = vrot.lane.b32.xlu0 %v2975, 112
        %v3276 = vpop.permute.xlu0 %3275
        %3277 = vrot.lane.b32.xlu0 %v2979, 112
        %v3278 = vpop.permute.xlu0 %3277
        %3279 = vrot.lane.b32.xlu0 %v2983, 112
        %v3280 = vpop.permute.xlu0 %3279
        %v3289 = vmul.f32 %v2678, %v3266
        %v3290 = vmul.f32 %v2679, %v3268
        %v3291 = vmul.f32 %v2680, %v3270
        %v3292 = vmul.f32 %v2681, %v3272
        %v3293 = vmul.f32 %v2682, %v3274
        %v3294 = vmul.f32 %v2683, %v3276
        %v3295 = vmul.f32 %v2684, %v3278
        %v3296 = vmul.f32 %v2685, %v3280
        %v3297 = vsel %vm480, %v3289, 0.0
        %3298 = vadd.xlane.f32.xlu0 %v3297
        %v3299 = vpop.xlane.xlu0 %3298
        %v3300 = vsel %vm480, %v3290, 0.0
        %3301 = vadd.xlane.f32.xlu0 %v3300
        %v3302 = vpop.xlane.xlu0 %3301
        %v3303 = vsel %vm480, %v3291, 0.0
        %3304 = vadd.xlane.f32.xlu0 %v3303
        %v3305 = vpop.xlane.xlu0 %3304
        %v3306 = vsel %vm480, %v3292, 0.0
        %3307 = vadd.xlane.f32.xlu0 %v3306
        %v3308 = vpop.xlane.xlu0 %3307
        %v3309 = vsel %vm480, %v3293, 0.0
        %3310 = vadd.xlane.f32.xlu0 %v3309
        %v3311 = vpop.xlane.xlu0 %3310
        %v3312 = vsel %vm480, %v3294, 0.0
        %3313 = vadd.xlane.f32.xlu0 %v3312
        %v3314 = vpop.xlane.xlu0 %3313
        %v3315 = vsel %vm480, %v3295, 0.0
        %3316 = vadd.xlane.f32.xlu0 %v3315
        %v3317 = vpop.xlane.xlu0 %3316
        %v3318 = vsel %vm480, %v3296, 0.0
        %3319 = vadd.xlane.f32.xlu0 %v3318
        %v3320 = vpop.xlane.xlu0 %3319
        %v3329 = vlaneseq
        %v3330 = vshrl.u32 %v3329, 7
        %v3331 = vsub.s32 %v743, %v3330
        %v3332 = vrot.slane %v3299, %v3331
        %v3333 = vlaneseq
        %v3334 = vshrl.u32 %v3333, 7
        %v3335 = vsub.s32 %v743, %v3334
        %v3336 = vrot.slane %v3302, %v3335
        %v3337 = vlaneseq
        %v3338 = vshrl.u32 %v3337, 7
        %v3339 = vsub.s32 %v743, %v3338
        %v3340 = vrot.slane %v3305, %v3339
        %v3341 = vlaneseq
        %v3342 = vshrl.u32 %v3341, 7
        %v3343 = vsub.s32 %v743, %v3342
        %v3344 = vrot.slane %v3308, %v3343
        %v3345 = vlaneseq
        %v3346 = vshrl.u32 %v3345, 7
        %v3347 = vsub.s32 %v743, %v3346
        %v3348 = vrot.slane %v3311, %v3347
        %v3349 = vlaneseq
        %v3350 = vshrl.u32 %v3349, 7
        %v3351 = vsub.s32 %v743, %v3350
        %v3352 = vrot.slane %v3314, %v3351
        %v3353 = vlaneseq
        %v3354 = vshrl.u32 %v3353, 7
        %v3355 = vsub.s32 %v743, %v3354
        %v3356 = vrot.slane %v3317, %v3355
        %v3357 = vlaneseq
        %v3358 = vshrl.u32 %v3357, 7
        %v3359 = vsub.s32 %v743, %v3358
        %v3360 = vrot.slane %v3320, %v3359
        %v3361 = vsel %vm776, %v3336, %v3332
        %v3362 = vsel %vm778, %v3340, %v3361
        %v3363 = vsel %vm780, %v3344, %v3362
        %v3364 = vsel %vm782, %v3348, %v3363
        %v3365 = vsel %vm784, %v3352, %v3364
        %v3366 = vsel %vm786, %v3356, %v3365
        %v3367 = vsel %vm788, %v3360, %v3366
        %v3369 = vsel %vm791, %v3367, -inf
        %3370 = vmax.xlane.f32.xlu0 %v3369
        %v3371 = vpop.xlane.xlu0 %3370
        %v3373 = vlaneseq
        %v3374 = vshrl.u32 %v3373, 7
        %v3375 = vsub.s32 0, %v3374
        %v3376 = vrot.slane %v3371, %v3375
        %v3377 = vlaneseq
        %v3378 = vshrl.u32 %v3377, 7
        %v3379 = vsub.s32 1, %v3378
        %v3380 = vrot.slane %v3371, %v3379
        %v3381 = vlaneseq
        %v3382 = vshrl.u32 %v3381, 7
        %v3383 = vsub.s32 2, %v3382
        %v3384 = vrot.slane %v3371, %v3383
        %v3385 = vlaneseq
        %v3386 = vshrl.u32 %v3385, 7
        %v3387 = vsub.s32 3, %v3386
        %v3388 = vrot.slane %v3371, %v3387
        %v3389 = vlaneseq
        %v3390 = vshrl.u32 %v3389, 7
        %v3391 = vsub.s32 4, %v3390
        %v3392 = vrot.slane %v3371, %v3391
        %v3393 = vlaneseq
        %v3394 = vshrl.u32 %v3393, 7
        %v3395 = vsub.s32 5, %v3394
        %v3396 = vrot.slane %v3371, %v3395
        %v3397 = vlaneseq
        %v3398 = vshrl.u32 %v3397, 7
        %v3399 = vsub.s32 6, %v3398
        %v3400 = vrot.slane %v3371, %v3399
        %v3401 = vlaneseq
        %v3402 = vshrl.u32 %v3401, 7
        %v3403 = vsub.s32 7, %v3402
        %v3404 = vrot.slane %v3371, %v3403
        %v3413 = vsub.f32 %v3299, %v3376
        %v3414 = vsub.f32 %v3302, %v3380
        %v3415 = vsub.f32 %v3305, %v3384
        %v3416 = vsub.f32 %v3308, %v3388
        %v3417 = vsub.f32 %v3311, %v3392
        %v3418 = vsub.f32 %v3314, %v3396
        %v3419 = vsub.f32 %v3317, %v3400
        %v3420 = vsub.f32 %v3320, %v3404
        %v3421 = vmul.f32 %v3413, 1.442695
        %v3422 = vpow.pop %v3421
        %v3423 = vmul.f32 %v3414, 1.442695
        %v3424 = vpow.pop %v3423
        %v3425 = vmul.f32 %v3415, 1.442695
        %v3426 = vpow.pop %v3425
        %v3427 = vmul.f32 %v3416, 1.442695
        %v3428 = vpow.pop %v3427
        %v3429 = vmul.f32 %v3417, 1.442695
        %v3430 = vpow.pop %v3429
        %v3431 = vmul.f32 %v3418, 1.442695
        %v3432 = vpow.pop %v3431
        %v3433 = vmul.f32 %v3419, 1.442695
        %v3434 = vpow.pop %v3433
        %v3435 = vmul.f32 %v3420, 1.442695
        %v3436 = vpow.pop %v3435
        %3445 = vset.pattern.permute.xlu0 0
        %3446 = vperm.xlu0 %3445, %v3422
        %v3447 = vpop.permute.xlu0 %3446
        %3448 = vset.pattern.permute.xlu0 0
        %3449 = vperm.xlu0 %3448, %v3424
        %v3450 = vpop.permute.xlu0 %3449
        %3451 = vset.pattern.permute.xlu0 0
        %3452 = vperm.xlu0 %3451, %v3426
        %v3453 = vpop.permute.xlu0 %3452
        %3454 = vset.pattern.permute.xlu0 0
        %3455 = vperm.xlu0 %3454, %v3428
        %v3456 = vpop.permute.xlu0 %3455
        %3457 = vset.pattern.permute.xlu0 0
        %3458 = vperm.xlu0 %3457, %v3430
        %v3459 = vpop.permute.xlu0 %3458
        %3460 = vset.pattern.permute.xlu0 0
        %3461 = vperm.xlu0 %3460, %v3432
        %v3462 = vpop.permute.xlu0 %3461
        %3463 = vset.pattern.permute.xlu0 0
        %3464 = vperm.xlu0 %3463, %v3434
        %v3465 = vpop.permute.xlu0 %3464
        %3466 = vset.pattern.permute.xlu0 0
        %3467 = vperm.xlu0 %3466, %v3436
        %v3468 = vpop.permute.xlu0 %3467
        %v3469 = vlaneseq
        %v3470 = vshrl.u32 %v3469, 7
        %v3471 = vsub.s32 %v743, %v3470
        %v3472 = vrot.slane %v3447, %v3471
        %v3473 = vlaneseq
        %v3474 = vshrl.u32 %v3473, 7
        %v3475 = vsub.s32 %v743, %v3474
        %v3476 = vrot.slane %v3450, %v3475
        %v3477 = vlaneseq
        %v3478 = vshrl.u32 %v3477, 7
        %v3479 = vsub.s32 %v743, %v3478
        %v3480 = vrot.slane %v3453, %v3479
        %v3481 = vlaneseq
        %v3482 = vshrl.u32 %v3481, 7
        %v3483 = vsub.s32 %v743, %v3482
        %v3484 = vrot.slane %v3456, %v3483
        %v3485 = vlaneseq
        %v3486 = vshrl.u32 %v3485, 7
        %v3487 = vsub.s32 %v743, %v3486
        %v3488 = vrot.slane %v3459, %v3487
        %v3489 = vlaneseq
        %v3490 = vshrl.u32 %v3489, 7
        %v3491 = vsub.s32 %v743, %v3490
        %v3492 = vrot.slane %v3462, %v3491
        %v3493 = vlaneseq
        %v3494 = vshrl.u32 %v3493, 7
        %v3495 = vsub.s32 %v743, %v3494
        %v3496 = vrot.slane %v3465, %v3495
        %v3497 = vlaneseq
        %v3498 = vshrl.u32 %v3497, 7
        %v3499 = vsub.s32 %v743, %v3498
        %v3500 = vrot.slane %v3468, %v3499
        %v3501 = vsel %vm776, %v3476, %v3472
        %v3502 = vsel %vm778, %v3480, %v3501
        %v3503 = vsel %vm780, %v3484, %v3502
        %v3504 = vsel %vm782, %v3488, %v3503
        %v3505 = vsel %vm784, %v3492, %v3504
        %v3506 = vsel %vm786, %v3496, %v3505
        %v3507 = vsel %vm788, %v3500, %v3506
        %v3509 = vsel %vm791, %v3507, 0.0
        %3510 = vadd.xlane.f32.xlu0 %v3509
        %v3511 = vpop.xlane.xlu0 %3510
        %v3512 = vrcp.pop %v3511
        %v3514 = vlaneseq
        %v3515 = vshrl.u32 %v3514, 7
        %v3516 = vsub.s32 0, %v3515
        %v3517 = vrot.slane %v3512, %v3516
        %v3518 = vlaneseq
        %v3519 = vshrl.u32 %v3518, 7
        %v3520 = vsub.s32 1, %v3519
        %v3521 = vrot.slane %v3512, %v3520
        %v3522 = vlaneseq
        %v3523 = vshrl.u32 %v3522, 7
        %v3524 = vsub.s32 2, %v3523
        %v3525 = vrot.slane %v3512, %v3524
        %v3526 = vlaneseq
        %v3527 = vshrl.u32 %v3526, 7
        %v3528 = vsub.s32 3, %v3527
        %v3529 = vrot.slane %v3512, %v3528
        %v3530 = vlaneseq
        %v3531 = vshrl.u32 %v3530, 7
        %v3532 = vsub.s32 4, %v3531
        %v3533 = vrot.slane %v3512, %v3532
        %v3534 = vlaneseq
        %v3535 = vshrl.u32 %v3534, 7
        %v3536 = vsub.s32 5, %v3535
        %v3537 = vrot.slane %v3512, %v3536
        %v3538 = vlaneseq
        %v3539 = vshrl.u32 %v3538, 7
        %v3540 = vsub.s32 6, %v3539
        %v3541 = vrot.slane %v3512, %v3540
        %v3542 = vlaneseq
        %v3543 = vshrl.u32 %v3542, 7
        %v3544 = vsub.s32 7, %v3543
        %v3545 = vrot.slane %v3512, %v3544
        %v3554 = vmul.f32 %v3422, %v3517
        %v3555 = vmul.f32 %v3424, %v3521
        %v3556 = vmul.f32 %v3426, %v3525
        %v3557 = vmul.f32 %v3428, %v3529
        %v3558 = vmul.f32 %v3430, %v3533
        %v3559 = vmul.f32 %v3432, %v3537
        %v3560 = vmul.f32 %v3434, %v3541
        %v3561 = vmul.f32 %v3436, %v3545
        %3563 = vset.pattern.permute.xlu0 0
        %3564 = vperm.xlu0 %3563, %v3257
        %v3565 = vpop.permute.xlu0 %3564
        %3568 = vset.pattern.permute.xlu0 0
        %3569 = vperm.xlu0 %3568, %v3258
        %v3570 = vpop.permute.xlu0 %3569
        %3573 = vset.pattern.permute.xlu0 0
        %3574 = vperm.xlu0 %3573, %v3259
        %v3575 = vpop.permute.xlu0 %3574
        %3578 = vset.pattern.permute.xlu0 0
        %3579 = vperm.xlu0 %3578, %v3260
        %v3580 = vpop.permute.xlu0 %3579
        %3583 = vset.pattern.permute.xlu0 0
        %3584 = vperm.xlu0 %3583, %v3261
        %v3585 = vpop.permute.xlu0 %3584
        %3588 = vset.pattern.permute.xlu0 0
        %3589 = vperm.xlu0 %3588, %v3262
        %v3590 = vpop.permute.xlu0 %3589
        %3593 = vset.pattern.permute.xlu0 0
        %3594 = vperm.xlu0 %3593, %v3263
        %v3595 = vpop.permute.xlu0 %3594
        %3598 = vset.pattern.permute.xlu0 0
        %3599 = vperm.xlu0 %3598, %v3264
        %v3600 = vpop.permute.xlu0 %3599
        %v3602 = vmul.f32 %v3565, %v2678
        %v3603 = vmul.f32 %v3570, %v2679
        %v3604 = vmul.f32 %v3575, %v2680
        %v3605 = vmul.f32 %v3580, %v2681
        %v3606 = vmul.f32 %v3585, %v2682
        %v3607 = vmul.f32 %v3590, %v2683
        %v3608 = vmul.f32 %v3595, %v2684
        %v3609 = vmul.f32 %v3600, %v2685
        %v3610 = vsel %vm480, %v3602, 0.0
        %v3611 = vrot.slane %v3610, 4
        %v3612 = vadd.f32 %v3610, %v3611
        %v3613 = vrot.slane %v3612, 2
        %v3614 = vadd.f32 %v3612, %v3613
        %v3615 = vrot.slane %v3614, 1
        %v3616 = vadd.f32 %v3614, %v3615
        %v3617 = vsel %vm480, %v3603, 0.0
        %v3618 = vrot.slane %v3617, 4
        %v3619 = vadd.f32 %v3617, %v3618
        %v3620 = vrot.slane %v3619, 2
        %v3621 = vadd.f32 %v3619, %v3620
        %v3622 = vrot.slane %v3621, 1
        %v3623 = vadd.f32 %v3621, %v3622
        %v3624 = vsel %vm480, %v3604, 0.0
        %v3625 = vrot.slane %v3624, 4
        %v3626 = vadd.f32 %v3624, %v3625
        %v3627 = vrot.slane %v3626, 2
        %v3628 = vadd.f32 %v3626, %v3627
        %v3629 = vrot.slane %v3628, 1
        %v3630 = vadd.f32 %v3628, %v3629
        %v3631 = vsel %vm480, %v3605, 0.0
        %v3632 = vrot.slane %v3631, 4
        %v3633 = vadd.f32 %v3631, %v3632
        %v3634 = vrot.slane %v3633, 2
        %v3635 = vadd.f32 %v3633, %v3634
        %v3636 = vrot.slane %v3635, 1
        %v3637 = vadd.f32 %v3635, %v3636
        %v3638 = vsel %vm480, %v3606, 0.0
        %v3639 = vrot.slane %v3638, 4
        %v3640 = vadd.f32 %v3638, %v3639
        %v3641 = vrot.slane %v3640, 2
        %v3642 = vadd.f32 %v3640, %v3641
        %v3643 = vrot.slane %v3642, 1
        %v3644 = vadd.f32 %v3642, %v3643
        %v3645 = vsel %vm480, %v3607, 0.0
        %v3646 = vrot.slane %v3645, 4
        %v3647 = vadd.f32 %v3645, %v3646
        %v3648 = vrot.slane %v3647, 2
        %v3649 = vadd.f32 %v3647, %v3648
        %v3650 = vrot.slane %v3649, 1
        %v3651 = vadd.f32 %v3649, %v3650
        %v3652 = vsel %vm480, %v3608, 0.0
        %v3653 = vrot.slane %v3652, 4
        %v3654 = vadd.f32 %v3652, %v3653
        %v3655 = vrot.slane %v3654, 2
        %v3656 = vadd.f32 %v3654, %v3655
        %v3657 = vrot.slane %v3656, 1
        %v3658 = vadd.f32 %v3656, %v3657
        %v3659 = vsel %vm480, %v3609, 0.0
        %v3660 = vrot.slane %v3659, 4
        %v3661 = vadd.f32 %v3659, %v3660
        %v3662 = vrot.slane %v3661, 2
        %v3663 = vadd.f32 %v3661, %v3662
        %v3664 = vrot.slane %v3663, 1
        %v3665 = vadd.f32 %v3663, %v3664
        %v3667 = vcombine.high %v2713, %v2713
        %v3669 = vunpack.c.l.s4 1966171168
        %v3670 = vunpack.c.0.s8 %v3669
        %v3671 = vlaneseq
        %v3672 = vshrl.u32 %v3671, 7
        %v3673 = vsub.s32 %v3670, %v3672
        %v3674 = vrot.slane %v2713, %v3673
        %v3676 = vunpack.c.l.s4 1966171168
        %v3677 = vunpack.c.0.s8 %v3676
        %v3678 = vlaneseq
        %v3679 = vshrl.u32 %v3678, 7
        %v3680 = vsub.s32 %v3677, %v3679
        %v3681 = vrot.slane %v3667, %v3680
        %v3682 = vcombine.high %v3674, %v3674
        %v3683 = vcombine.high %v3681, %v3681
        %v3685 = vunpack.c.l.s4 1966171168
        %v3686 = vunpack.c.0.s8 %v3685
        %v3687 = vlaneseq
        %v3688 = vshrl.u32 %v3687, 7
        %v3689 = vsub.s32 %v3686, %v3688
        %v3690 = vrot.slane %v3674, %v3689
        %v3692 = vunpack.c.l.s4 1966171168
        %v3693 = vunpack.c.0.s8 %v3692
        %v3694 = vlaneseq
        %v3695 = vshrl.u32 %v3694, 7
        %v3696 = vsub.s32 %v3693, %v3695
        %v3697 = vrot.slane %v3681, %v3696
        %v3699 = vunpack.c.l.s4 1966171168
        %v3700 = vunpack.c.0.s8 %v3699
        %v3701 = vlaneseq
        %v3702 = vshrl.u32 %v3701, 7
        %v3703 = vsub.s32 %v3700, %v3702
        %v3704 = vrot.slane %v3682, %v3703
        %v3706 = vunpack.c.l.s4 1966171168
        %v3707 = vunpack.c.0.s8 %v3706
        %v3708 = vlaneseq
        %v3709 = vshrl.u32 %v3708, 7
        %v3710 = vsub.s32 %v3707, %v3709
        %v3711 = vrot.slane %v3683, %v3710
        %v3712 = vcombine.high %v3690, %v3690
        %v3713 = vcombine.high %v3697, %v3697
        %v3714 = vcombine.high %v3704, %v3704
        %v3715 = vcombine.high %v3711, %v3711
        %3717 = vset.pattern.permute.xlu0 0
        %3718 = vperm.xlu0 %3717, %v3554
        %v3719 = vpop.permute.xlu0 %3718
        %3722 = vset.pattern.permute.xlu0 0
        %3723 = vperm.xlu0 %3722, %v3555
        %v3724 = vpop.permute.xlu0 %3723
        %3727 = vset.pattern.permute.xlu0 0
        %3728 = vperm.xlu0 %3727, %v3556
        %v3729 = vpop.permute.xlu0 %3728
        %3732 = vset.pattern.permute.xlu0 0
        %3733 = vperm.xlu0 %3732, %v3557
        %v3734 = vpop.permute.xlu0 %3733
        %3737 = vset.pattern.permute.xlu0 0
        %3738 = vperm.xlu0 %3737, %v3558
        %v3739 = vpop.permute.xlu0 %3738
        %3742 = vset.pattern.permute.xlu0 0
        %3743 = vperm.xlu0 %3742, %v3559
        %v3744 = vpop.permute.xlu0 %3743
        %3747 = vset.pattern.permute.xlu0 0
        %3748 = vperm.xlu0 %3747, %v3560
        %v3749 = vpop.permute.xlu0 %3748
        %3752 = vset.pattern.permute.xlu0 0
        %3753 = vperm.xlu0 %3752, %v3561
        %v3754 = vpop.permute.xlu0 %3753
        %v3756 = vlaneseq
        %v3757 = vshrl.u32 %v3756, 7
        %v3758 = vsub.s32 0, %v3757
        %v3759 = vrot.slane %v3690, %v3758
        %v3760 = vlaneseq
        %v3761 = vshrl.u32 %v3760, 7
        %v3762 = vsub.s32 0, %v3761
        %v3763 = vrot.slane %v3704, %v3762
        %v3764 = vlaneseq
        %v3765 = vshrl.u32 %v3764, 7
        %v3766 = vsub.s32 0, %v3765
        %v3767 = vrot.slane %v3712, %v3766
        %v3768 = vlaneseq
        %v3769 = vshrl.u32 %v3768, 7
        %v3770 = vsub.s32 0, %v3769
        %v3771 = vrot.slane %v3714, %v3770
        %v3772 = vlaneseq
        %v3773 = vshrl.u32 %v3772, 7
        %v3774 = vsub.s32 0, %v3773
        %v3775 = vrot.slane %v3697, %v3774
        %v3776 = vlaneseq
        %v3777 = vshrl.u32 %v3776, 7
        %v3778 = vsub.s32 0, %v3777
        %v3779 = vrot.slane %v3711, %v3778
        %v3780 = vlaneseq
        %v3781 = vshrl.u32 %v3780, 7
        %v3782 = vsub.s32 0, %v3781
        %v3783 = vrot.slane %v3713, %v3782
        %v3784 = vlaneseq
        %v3785 = vshrl.u32 %v3784, 7
        %v3786 = vsub.s32 0, %v3785
        %v3787 = vrot.slane %v3715, %v3786
        %v3796 = vmul.f32 %v3719, %v3759
        %v3797 = vmul.f32 %v3724, %v3763
        %v3798 = vmul.f32 %v3729, %v3767
        %v3799 = vmul.f32 %v3734, %v3771
        %v3800 = vmul.f32 %v3739, %v3775
        %v3801 = vmul.f32 %v3744, %v3779
        %v3802 = vmul.f32 %v3749, %v3783
        %v3803 = vmul.f32 %v3754, %v3787
        %3812 = vrot.lane.b32.xlu0 %v3796, 96
        %v3813 = vpop.permute.xlu0 %3812
        %3814 = vrot.lane.b32.xlu0 %v3797, 96
        %v3815 = vpop.permute.xlu0 %3814
        %3816 = vrot.lane.b32.xlu0 %v3798, 96
        %v3817 = vpop.permute.xlu0 %3816
        %3818 = vrot.lane.b32.xlu0 %v3799, 96
        %v3819 = vpop.permute.xlu0 %3818
        %3820 = vrot.lane.b32.xlu0 %v3800, 96
        %v3821 = vpop.permute.xlu0 %3820
        %3822 = vrot.lane.b32.xlu0 %v3801, 96
        %v3823 = vpop.permute.xlu0 %3822
        %3824 = vrot.lane.b32.xlu0 %v3802, 96
        %v3825 = vpop.permute.xlu0 %3824
        %3826 = vrot.lane.b32.xlu0 %v3803, 96
        %v3827 = vpop.permute.xlu0 %3826
        %v3836 = vadd.f32 %v2678, %v3813
        %v3837 = vadd.f32 %v2679, %v3815
        %v3838 = vadd.f32 %v2680, %v3817
        %v3839 = vadd.f32 %v2681, %v3819
        %v3840 = vadd.f32 %v2682, %v3821
        %v3841 = vadd.f32 %v2683, %v3823
        %v3842 = vadd.f32 %v2684, %v3825
        %v3843 = vadd.f32 %v2685, %v3827
        %3845 = vrot.lane.b32.xlu0 %v2854, 96
        %v3846 = vpop.permute.xlu0 %3845
        %vm3848 = vcmask 785920
        %3849 = vst.msk [vmem:[%s368] sm:$0xff] %vm3848, %v3846
        %v3858 = vsel %vm776, %v3623, %v3616
        %v3859 = vsel %vm778, %v3630, %v3858
        %v3860 = vsel %vm780, %v3637, %v3859
        %v3861 = vsel %vm782, %v3644, %v3860
        %v3862 = vsel %vm784, %v3651, %v3861
        %v3863 = vsel %vm786, %v3658, %v3862
        %v3864 = vsel %vm788, %v3665, %v3863
        %3865 = vrot.lane.b32.xlu0 %v3864, 32
        %v3866 = vpop.permute.xlu0 %3865
        %vm3868 = vcmask 392448
        %3869 = vst.msk [vmem:[%s368 + $0x10] sm:$0xff] %vm3868, %v3866
        %v3870 = vld [vmem:[%s322 + $0x18] sm:$0xff]
        %v3871 = vld [vmem:[%s322 + $0x40] sm:$0xff]
        %3872 = vmatprep.subr.bf16.mxu0 0
        %3873 = vmatpush1.bf16.msra.mxu0 %v424
        %3874 = vmatprep.subr.bf16.mxu0 0
        %3875 = vmatpush1.bf16.msra.mxu0 %v425
        %3876 = vmatprep.subr.bf16.mxu0 0
        %3877 = vmatpush1.bf16.msra.mxu0 0
        %3878 = vmatprep.subr.bf16.mxu0 0
        %3879 = vmatpush1.bf16.msra.mxu0 0
        %3880 = vmatprep.subr.bf16.mxu0 0
        %3881 = vmatpush1.bf16.msra.mxu0 0
        %3882 = vmatprep.subr.bf16.mxu0 0
        %3883 = vmatpush1.bf16.msra.mxu0 0
        %3884 = vmatprep.subr.bf16.mxu0 0
        %3885 = vmatpush1.bf16.msra.mxu0 0
        %3886 = vmatprep.subr.bf16.mxu0 0
        %3887 = vmatpush1.bf16.msra.mxu0 0
        %3888 = vmatprep.subr.bf16.mxu0 0
        %3889 = vmatpush1.bf16.msra.mxu0 0
        %3890 = vmatprep.subr.bf16.mxu0 0
        %3891 = vmatpush1.bf16.msra.mxu0 0
        %3892 = vmatprep.subr.bf16.mxu0 0
        %3893 = vmatpush1.bf16.msra.mxu0 0
        %3894 = vmatprep.subr.bf16.mxu0 0
        %3895 = vmatpush1.bf16.msra.mxu0 0
        %3896 = vmatprep.subr.bf16.mxu0 0
        %3897 = vmatpush1.bf16.msra.mxu0 0
        %3898 = vmatprep.subr.bf16.mxu0 0
        %3899 = vmatpush1.bf16.msra.mxu0 0
        %3900 = vmatprep.subr.bf16.mxu0 0
        %3901 = vmatpush1.bf16.msra.mxu0 0
        %3902 = vmatprep.subr.bf16.mxu0 0
        %3903 = vmatpush1.bf16.msra.mxu0 0
        %3904 = vmatprep.mubr.bf16.mxu0 0
        %3905 = vmatmul.mubr.bf16.gmra.mrb[0].mxu0 %v2860
        %v3906 = vpop.f32.mrb[0].mxu0
        %v3907 = vadd.f32 0.0, %v3906
        %v3908 = vpop.f32.mrb[0].mxu0
        %v3909 = vpop.f32.mrb[0].mxu0
        %v3910 = vpop.f32.mrb[0].mxu0
        %3911 = vdwg.mxu0
        %v3912 = vadd.f32 %v3870, %v3907
        %v3913 = vpack.c.bf16 %v3616, %v3616
        %v3914 = vpack.c.bf16 %v3623, %v3623
        %v3915 = vpack.c.bf16 %v3630, %v3630
        %v3916 = vpack.c.bf16 %v3637, %v3637
        %v3917 = vpack.c.bf16 %v3644, %v3644
        %v3918 = vpack.c.bf16 %v3651, %v3651
        %v3919 = vpack.c.bf16 %v3658, %v3658
        %v3920 = vpack.c.bf16 %v3665, %v3665
        %v3929 = vunpack.c.l.b16 %v3913
        %v3930 = vunpack.c.l.b16 %v3914
        %v3931 = vunpack.c.l.b16 %v3915
        %v3932 = vunpack.c.l.b16 %v3916
        %v3933 = vunpack.c.l.b16 %v3917
        %v3934 = vunpack.c.l.b16 %v3918
        %v3935 = vunpack.c.l.b16 %v3919
        %v3936 = vunpack.c.l.b16 %v3920
        %v3937 = vsel %vm776, %v3930, %v3929
        %v3938 = vsel %vm778, %v3931, %v3937
        %v3939 = vsel %vm780, %v3932, %v3938
        %v3940 = vsel %vm782, %v3933, %v3939
        %v3941 = vsel %vm784, %v3934, %v3940
        %v3942 = vsel %vm786, %v3935, %v3941
        %v3943 = vsel %vm788, %v3936, %v3942
        %v3944 = vpack.c.b16 %v3943, %v3943
        %v3946 = vsel %vm480, %v3944, 0
        %3948 = vmatprep.subr.bf16.mxu0 0
        %3949 = vmatpush1.bf16.msra.mxu0 %v478
        %3950 = vmatprep.subr.bf16.mxu0 0
        %3951 = vmatpush1.bf16.msra.mxu0 0
        %3952 = vmatprep.subr.bf16.mxu0 0
        %3953 = vmatpush1.bf16.msra.mxu0 0
        %3954 = vmatprep.subr.bf16.mxu0 0
        %3955 = vmatpush1.bf16.msra.mxu0 0
        %3956 = vmatprep.subr.bf16.mxu0 0
        %3957 = vmatpush1.bf16.msra.mxu0 0
        %3958 = vmatprep.subr.bf16.mxu0 0
        %3959 = vmatpush1.bf16.msra.mxu0 0
        %3960 = vmatprep.subr.bf16.mxu0 0
        %3961 = vmatpush1.bf16.msra.mxu0 0
        %3962 = vmatprep.subr.bf16.mxu0 0
        %3963 = vmatpush1.bf16.msra.mxu0 0
        %3964 = vmatprep.subr.bf16.mxu0 0
        %3965 = vmatpush1.bf16.msra.mxu0 0
        %3966 = vmatprep.subr.bf16.mxu0 0
        %3967 = vmatpush1.bf16.msra.mxu0 0
        %3968 = vmatprep.subr.bf16.mxu0 0
        %3969 = vmatpush1.bf16.msra.mxu0 0
        %3970 = vmatprep.subr.bf16.mxu0 0
        %3971 = vmatpush1.bf16.msra.mxu0 0
        %3972 = vmatprep.subr.bf16.mxu0 0
        %3973 = vmatpush1.bf16.msra.mxu0 0
        %3974 = vmatprep.subr.bf16.mxu0 0
        %3975 = vmatpush1.bf16.msra.mxu0 0
        %3976 = vmatprep.subr.bf16.mxu0 0
        %3977 = vmatpush1.bf16.msra.mxu0 0
        %3978 = vmatprep.subr.bf16.mxu0 0
        %3979 = vmatpush1.bf16.msra.mxu0 0
        %3980 = vmatprep.mubr.bf16.mxu0 0
        %3981 = vmatmul.mubr.bf16.gmra.mrb[0].mxu0 %v3946
        %v3982 = vpop.f32.mrb[0].mxu0
        %v3983 = vadd.f32 0.0, %v3982
        %v3984 = vpop.f32.mrb[0].mxu0
        %v3985 = vpop.f32.mrb[0].mxu0
        %v3986 = vpop.f32.mrb[0].mxu0
        %3987 = vdwg.mxu0
        %v3988 = vadd.f32 %v3912, %v3983
        %v3989 = vxor.u32 %v3988, 2147483648
        %v3990 = vmul.f32 %v3989, 1.442695
        %v3991 = vpow.pop %v3990
        %v3992 = vadd.f32 %v3991, 1.0
        %v3993 = vrcp.pop %v3992
        %v3994 = vmul.f32 1.0, %v3993
        %v3995 = vtanh.pop %v3988
        %v3996 = vmul.f32 %v3994, %v2848
        %3998 = vrot.lane.b32.xlu0 %v3995, 64
        %v3999 = vpop.permute.xlu0 %3998
        %v4001 = vmul.f32 %v3994, %v3999
        %4003 = vrot.lane.b32.xlu0 %v4001, 32
        %v4004 = vpop.permute.xlu0 %4003
        %v4006 = vadd.f32 %v3996, %v4004
        %v4007 = vtanh.pop %v4006
        %4009 = vrot.lane.b32.xlu0 %v4007, 64
        %v4010 = vpop.permute.xlu0 %4009
        %v4012 = vmul.f32 %v3994, %v4010
        %v4013 = vpack.c.bf16 %v4012, %v4012
        %4015 = vrot.lane.b32.xlu0 %v4013, 32
        %v4016 = vpop.permute.xlu0 %4015
        %v4018 = vsel %vm428, %v4016, 0
        %4020 = vmatprep.subr.bf16.mxu0 0
        %4021 = vmatpush1.bf16.msra.mxu0 %v565
        %4022 = vmatprep.subr.bf16.mxu0 0
        %4023 = vmatpush1.bf16.msra.mxu0 %v566
        %4024 = vmatprep.subr.bf16.mxu0 0
        %4025 = vmatpush1.bf16.msra.mxu0 0
        %4026 = vmatprep.subr.bf16.mxu0 0
        %4027 = vmatpush1.bf16.msra.mxu0 0
        %4028 = vmatprep.subr.bf16.mxu0 0
        %4029 = vmatpush1.bf16.msra.mxu0 0
        %4030 = vmatprep.subr.bf16.mxu0 0
        %4031 = vmatpush1.bf16.msra.mxu0 0
        %4032 = vmatprep.subr.bf16.mxu0 0
        %4033 = vmatpush1.bf16.msra.mxu0 0
        %4034 = vmatprep.subr.bf16.mxu0 0
        %4035 = vmatpush1.bf16.msra.mxu0 0
        %4036 = vmatprep.subr.bf16.mxu0 0
        %4037 = vmatpush1.bf16.msra.mxu0 0
        %4038 = vmatprep.subr.bf16.mxu0 0
        %4039 = vmatpush1.bf16.msra.mxu0 0
        %4040 = vmatprep.subr.bf16.mxu0 0
        %4041 = vmatpush1.bf16.msra.mxu0 0
        %4042 = vmatprep.subr.bf16.mxu0 0
        %4043 = vmatpush1.bf16.msra.mxu0 0
        %4044 = vmatprep.subr.bf16.mxu0 0
        %4045 = vmatpush1.bf16.msra.mxu0 0
        %4046 = vmatprep.subr.bf16.mxu0 0
        %4047 = vmatpush1.bf16.msra.mxu0 0
        %4048 = vmatprep.subr.bf16.mxu0 0
        %4049 = vmatpush1.bf16.msra.mxu0 0
        %4050 = vmatprep.subr.bf16.mxu0 0
        %4051 = vmatpush1.bf16.msra.mxu0 0
        %4052 = vmatprep.mubr.bf16.mxu0 0
        %4053 = vmatmul.mubr.bf16.gmra.mrb[0].mxu0 %v4018
        %v4054 = vpop.f32.mrb[0].mxu0
        %v4055 = vadd.f32 0.0, %v4054
        %v4056 = vpop.f32.mrb[0].mxu0
        %v4057 = vpop.f32.mrb[0].mxu0
        %v4058 = vpop.f32.mrb[0].mxu0
        %4059 = vdwg.mxu0
        %v4061 = vcombine.high %v4055, %v4055
        %v4063 = vunpack.c.l.s4 1966171168
        %v4064 = vunpack.c.0.s8 %v4063
        %v4065 = vlaneseq
        %v4066 = vshrl.u32 %v4065, 7
        %v4067 = vsub.s32 %v4064, %v4066
        %v4068 = vrot.slane %v4055, %v4067
        %v4070 = vunpack.c.l.s4 1966171168
        %v4071 = vunpack.c.0.s8 %v4070
        %v4072 = vlaneseq
        %v4073 = vshrl.u32 %v4072, 7
        %v4074 = vsub.s32 %v4071, %v4073
        %v4075 = vrot.slane %v4061, %v4074
        %v4076 = vcombine.high %v4068, %v4068
        %v4077 = vcombine.high %v4075, %v4075
        %v4079 = vunpack.c.l.s4 1966171168
        %v4080 = vunpack.c.0.s8 %v4079
        %v4081 = vlaneseq
        %v4082 = vshrl.u32 %v4081, 7
        %v4083 = vsub.s32 %v4080, %v4082
        %v4084 = vrot.slane %v4068, %v4083
        %v4086 = vunpack.c.l.s4 1966171168
        %v4087 = vunpack.c.0.s8 %v4086
        %v4088 = vlaneseq
        %v4089 = vshrl.u32 %v4088, 7
        %v4090 = vsub.s32 %v4087, %v4089
        %v4091 = vrot.slane %v4075, %v4090
        %v4093 = vunpack.c.l.s4 1966171168
        %v4094 = vunpack.c.0.s8 %v4093
        %v4095 = vlaneseq
        %v4096 = vshrl.u32 %v4095, 7
        %v4097 = vsub.s32 %v4094, %v4096
        %v4098 = vrot.slane %v4076, %v4097
        %v4100 = vunpack.c.l.s4 1966171168
        %v4101 = vunpack.c.0.s8 %v4100
        %v4102 = vlaneseq
        %v4103 = vshrl.u32 %v4102, 7
        %v4104 = vsub.s32 %v4101, %v4103
        %v4105 = vrot.slane %v4077, %v4104
        %v4106 = vcombine.high %v4084, %v4084
        %v4107 = vcombine.high %v4091, %v4091
        %v4108 = vcombine.high %v4098, %v4098
        %v4109 = vcombine.high %v4105, %v4105
        %v4110 = vlaneseq
        %v4111 = vshrl.u32 %v4110, 7
        %v4112 = vsub.s32 0, %v4111
        %v4113 = vrot.slane %v4084, %v4112
        %v4114 = vlaneseq
        %v4115 = vshrl.u32 %v4114, 7
        %v4116 = vsub.s32 0, %v4115
        %v4117 = vrot.slane %v4098, %v4116
        %v4118 = vlaneseq
        %v4119 = vshrl.u32 %v4118, 7
        %v4120 = vsub.s32 0, %v4119
        %v4121 = vrot.slane %v4106, %v4120
        %v4122 = vlaneseq
        %v4123 = vshrl.u32 %v4122, 7
        %v4124 = vsub.s32 0, %v4123
        %v4125 = vrot.slane %v4108, %v4124
        %v4126 = vlaneseq
        %v4127 = vshrl.u32 %v4126, 7
        %v4128 = vsub.s32 0, %v4127
        %v4129 = vrot.slane %v4091, %v4128
        %v4130 = vlaneseq
        %v4131 = vshrl.u32 %v4130, 7
        %v4132 = vsub.s32 0, %v4131
        %v4133 = vrot.slane %v4105, %v4132
        %v4134 = vlaneseq
        %v4135 = vshrl.u32 %v4134, 7
        %v4136 = vsub.s32 0, %v4135
        %v4137 = vrot.slane %v4107, %v4136
        %v4138 = vlaneseq
        %v4139 = vshrl.u32 %v4138, 7
        %v4140 = vsub.s32 0, %v4139
        %v4141 = vrot.slane %v4109, %v4140
        %v4150 = vmul.f32 %v3836, %v4113
        %v4151 = vmul.f32 %v3837, %v4117
        %v4152 = vmul.f32 %v3838, %v4121
        %v4153 = vmul.f32 %v3839, %v4125
        %v4154 = vmul.f32 %v3840, %v4129
        %v4155 = vmul.f32 %v3841, %v4133
        %v4156 = vmul.f32 %v3842, %v4137
        %v4157 = vmul.f32 %v3843, %v4141
        %v4158 = vsel %vm480, %v4150, 0.0
        %4159 = vadd.xlane.f32.xlu0 %v4158
        %v4160 = vpop.xlane.xlu0 %4159
        %v4161 = vsel %vm480, %v4151, 0.0
        %4162 = vadd.xlane.f32.xlu0 %v4161
        %v4163 = vpop.xlane.xlu0 %4162
        %v4164 = vsel %vm480, %v4152, 0.0
        %4165 = vadd.xlane.f32.xlu0 %v4164
        %v4166 = vpop.xlane.xlu0 %4165
        %v4167 = vsel %vm480, %v4153, 0.0
        %4168 = vadd.xlane.f32.xlu0 %v4167
        %v4169 = vpop.xlane.xlu0 %4168
        %v4170 = vsel %vm480, %v4154, 0.0
        %4171 = vadd.xlane.f32.xlu0 %v4170
        %v4172 = vpop.xlane.xlu0 %4171
        %v4173 = vsel %vm480, %v4155, 0.0
        %4174 = vadd.xlane.f32.xlu0 %v4173
        %v4175 = vpop.xlane.xlu0 %4174
        %v4176 = vsel %vm480, %v4156, 0.0
        %4177 = vadd.xlane.f32.xlu0 %v4176
        %v4178 = vpop.xlane.xlu0 %4177
        %v4179 = vsel %vm480, %v4157, 0.0
        %4180 = vadd.xlane.f32.xlu0 %v4179
        %v4181 = vpop.xlane.xlu0 %4180
        %v4190 = vlaneseq
        %v4191 = vshrl.u32 %v4190, 7
        %v4192 = vsub.s32 %v743, %v4191
        %v4193 = vrot.slane %v4160, %v4192
        %v4194 = vlaneseq
        %v4195 = vshrl.u32 %v4194, 7
        %v4196 = vsub.s32 %v743, %v4195
        %v4197 = vrot.slane %v4163, %v4196
        %v4198 = vlaneseq
        %v4199 = vshrl.u32 %v4198, 7
        %v4200 = vsub.s32 %v743, %v4199
        %v4201 = vrot.slane %v4166, %v4200
        %v4202 = vlaneseq
        %v4203 = vshrl.u32 %v4202, 7
        %v4204 = vsub.s32 %v743, %v4203
        %v4205 = vrot.slane %v4169, %v4204
        %v4206 = vlaneseq
        %v4207 = vshrl.u32 %v4206, 7
        %v4208 = vsub.s32 %v743, %v4207
        %v4209 = vrot.slane %v4172, %v4208
        %v4210 = vlaneseq
        %v4211 = vshrl.u32 %v4210, 7
        %v4212 = vsub.s32 %v743, %v4211
        %v4213 = vrot.slane %v4175, %v4212
        %v4214 = vlaneseq
        %v4215 = vshrl.u32 %v4214, 7
        %v4216 = vsub.s32 %v743, %v4215
        %v4217 = vrot.slane %v4178, %v4216
        %v4218 = vlaneseq
        %v4219 = vshrl.u32 %v4218, 7
        %v4220 = vsub.s32 %v743, %v4219
        %v4221 = vrot.slane %v4181, %v4220
        %v4222 = vsel %vm776, %v4197, %v4193
        %v4223 = vsel %vm778, %v4201, %v4222
        %v4224 = vsel %vm780, %v4205, %v4223
        %v4225 = vsel %vm782, %v4209, %v4224
        %v4226 = vsel %vm784, %v4213, %v4225
        %v4227 = vsel %vm786, %v4217, %v4226
        %v4228 = vsel %vm788, %v4221, %v4227
        %v4230 = vsel %vm791, %v4228, -inf
        %4231 = vmax.xlane.f32.xlu0 %v4230
        %v4232 = vpop.xlane.xlu0 %4231
        %v4234 = vlaneseq
        %v4235 = vshrl.u32 %v4234, 7
        %v4236 = vsub.s32 0, %v4235
        %v4237 = vrot.slane %v4232, %v4236
        %v4238 = vlaneseq
        %v4239 = vshrl.u32 %v4238, 7
        %v4240 = vsub.s32 1, %v4239
        %v4241 = vrot.slane %v4232, %v4240
        %v4242 = vlaneseq
        %v4243 = vshrl.u32 %v4242, 7
        %v4244 = vsub.s32 2, %v4243
        %v4245 = vrot.slane %v4232, %v4244
        %v4246 = vlaneseq
        %v4247 = vshrl.u32 %v4246, 7
        %v4248 = vsub.s32 3, %v4247
        %v4249 = vrot.slane %v4232, %v4248
        %v4250 = vlaneseq
        %v4251 = vshrl.u32 %v4250, 7
        %v4252 = vsub.s32 4, %v4251
        %v4253 = vrot.slane %v4232, %v4252
        %v4254 = vlaneseq
        %v4255 = vshrl.u32 %v4254, 7
        %v4256 = vsub.s32 5, %v4255
        %v4257 = vrot.slane %v4232, %v4256
        %v4258 = vlaneseq
        %v4259 = vshrl.u32 %v4258, 7
        %v4260 = vsub.s32 6, %v4259
        %v4261 = vrot.slane %v4232, %v4260
        %v4262 = vlaneseq
        %v4263 = vshrl.u32 %v4262, 7
        %v4264 = vsub.s32 7, %v4263
        %v4265 = vrot.slane %v4232, %v4264
        %v4274 = vsub.f32 %v4160, %v4237
        %v4275 = vsub.f32 %v4163, %v4241
        %v4276 = vsub.f32 %v4166, %v4245
        %v4277 = vsub.f32 %v4169, %v4249
        %v4278 = vsub.f32 %v4172, %v4253
        %v4279 = vsub.f32 %v4175, %v4257
        %v4280 = vsub.f32 %v4178, %v4261
        %v4281 = vsub.f32 %v4181, %v4265
        %v4282 = vmul.f32 %v4274, 1.442695
        %v4283 = vpow.pop %v4282
        %v4284 = vmul.f32 %v4275, 1.442695
        %v4285 = vpow.pop %v4284
        %v4286 = vmul.f32 %v4276, 1.442695
        %v4287 = vpow.pop %v4286
        %v4288 = vmul.f32 %v4277, 1.442695
        %v4289 = vpow.pop %v4288
        %v4290 = vmul.f32 %v4278, 1.442695
        %v4291 = vpow.pop %v4290
        %v4292 = vmul.f32 %v4279, 1.442695
        %v4293 = vpow.pop %v4292
        %v4294 = vmul.f32 %v4280, 1.442695
        %v4295 = vpow.pop %v4294
        %v4296 = vmul.f32 %v4281, 1.442695
        %v4297 = vpow.pop %v4296
        %4306 = vset.pattern.permute.xlu0 0
        %4307 = vperm.xlu0 %4306, %v4283
        %v4308 = vpop.permute.xlu0 %4307
        %4309 = vset.pattern.permute.xlu0 0
        %4310 = vperm.xlu0 %4309, %v4285
        %v4311 = vpop.permute.xlu0 %4310
        %4312 = vset.pattern.permute.xlu0 0
        %4313 = vperm.xlu0 %4312, %v4287
        %v4314 = vpop.permute.xlu0 %4313
        %4315 = vset.pattern.permute.xlu0 0
        %4316 = vperm.xlu0 %4315, %v4289
        %v4317 = vpop.permute.xlu0 %4316
        %4318 = vset.pattern.permute.xlu0 0
        %4319 = vperm.xlu0 %4318, %v4291
        %v4320 = vpop.permute.xlu0 %4319
        %4321 = vset.pattern.permute.xlu0 0
        %4322 = vperm.xlu0 %4321, %v4293
        %v4323 = vpop.permute.xlu0 %4322
        %4324 = vset.pattern.permute.xlu0 0
        %4325 = vperm.xlu0 %4324, %v4295
        %v4326 = vpop.permute.xlu0 %4325
        %4327 = vset.pattern.permute.xlu0 0
        %4328 = vperm.xlu0 %4327, %v4297
        %v4329 = vpop.permute.xlu0 %4328
        %v4330 = vlaneseq
        %v4331 = vshrl.u32 %v4330, 7
        %v4332 = vsub.s32 %v743, %v4331
        %v4333 = vrot.slane %v4308, %v4332
        %v4334 = vlaneseq
        %v4335 = vshrl.u32 %v4334, 7
        %v4336 = vsub.s32 %v743, %v4335
        %v4337 = vrot.slane %v4311, %v4336
        %v4338 = vlaneseq
        %v4339 = vshrl.u32 %v4338, 7
        %v4340 = vsub.s32 %v743, %v4339
        %v4341 = vrot.slane %v4314, %v4340
        %v4342 = vlaneseq
        %v4343 = vshrl.u32 %v4342, 7
        %v4344 = vsub.s32 %v743, %v4343
        %v4345 = vrot.slane %v4317, %v4344
        %v4346 = vlaneseq
        %v4347 = vshrl.u32 %v4346, 7
        %v4348 = vsub.s32 %v743, %v4347
        %v4349 = vrot.slane %v4320, %v4348
        %v4350 = vlaneseq
        %v4351 = vshrl.u32 %v4350, 7
        %v4352 = vsub.s32 %v743, %v4351
        %v4353 = vrot.slane %v4323, %v4352
        %v4354 = vlaneseq
        %v4355 = vshrl.u32 %v4354, 7
        %v4356 = vsub.s32 %v743, %v4355
        %v4357 = vrot.slane %v4326, %v4356
        %v4358 = vlaneseq
        %v4359 = vshrl.u32 %v4358, 7
        %v4360 = vsub.s32 %v743, %v4359
        %v4361 = vrot.slane %v4329, %v4360
        %v4362 = vsel %vm776, %v4337, %v4333
        %v4363 = vsel %vm778, %v4341, %v4362
        %v4364 = vsel %vm780, %v4345, %v4363
        %v4365 = vsel %vm782, %v4349, %v4364
        %v4366 = vsel %vm784, %v4353, %v4365
        %v4367 = vsel %vm786, %v4357, %v4366
        %v4368 = vsel %vm788, %v4361, %v4367
        %v4370 = vsel %vm791, %v4368, 0.0
        %4371 = vadd.xlane.f32.xlu0 %v4370
        %v4372 = vpop.xlane.xlu0 %4371
        %v4373 = vrcp.pop %v4372
        %v4375 = vlaneseq
        %v4376 = vshrl.u32 %v4375, 7
        %v4377 = vsub.s32 0, %v4376
        %v4378 = vrot.slane %v4373, %v4377
        %v4379 = vlaneseq
        %v4380 = vshrl.u32 %v4379, 7
        %v4381 = vsub.s32 1, %v4380
        %v4382 = vrot.slane %v4373, %v4381
        %v4383 = vlaneseq
        %v4384 = vshrl.u32 %v4383, 7
        %v4385 = vsub.s32 2, %v4384
        %v4386 = vrot.slane %v4373, %v4385
        %v4387 = vlaneseq
        %v4388 = vshrl.u32 %v4387, 7
        %v4389 = vsub.s32 3, %v4388
        %v4390 = vrot.slane %v4373, %v4389
        %v4391 = vlaneseq
        %v4392 = vshrl.u32 %v4391, 7
        %v4393 = vsub.s32 4, %v4392
        %v4394 = vrot.slane %v4373, %v4393
        %v4395 = vlaneseq
        %v4396 = vshrl.u32 %v4395, 7
        %v4397 = vsub.s32 5, %v4396
        %v4398 = vrot.slane %v4373, %v4397
        %v4399 = vlaneseq
        %v4400 = vshrl.u32 %v4399, 7
        %v4401 = vsub.s32 6, %v4400
        %v4402 = vrot.slane %v4373, %v4401
        %v4403 = vlaneseq
        %v4404 = vshrl.u32 %v4403, 7
        %v4405 = vsub.s32 7, %v4404
        %v4406 = vrot.slane %v4373, %v4405
        %v4415 = vmul.f32 %v4283, %v4378
        %v4416 = vmul.f32 %v4285, %v4382
        %v4417 = vmul.f32 %v4287, %v4386
        %v4418 = vmul.f32 %v4289, %v4390
        %v4419 = vmul.f32 %v4291, %v4394
        %v4420 = vmul.f32 %v4293, %v4398
        %v4421 = vmul.f32 %v4295, %v4402
        %v4422 = vmul.f32 %v4297, %v4406
        %4423 = vrot.lane.b32.xlu0 %v4113, 112
        %v4424 = vpop.permute.xlu0 %4423
        %4425 = vrot.lane.b32.xlu0 %v4117, 112
        %v4426 = vpop.permute.xlu0 %4425
        %4427 = vrot.lane.b32.xlu0 %v4121, 112
        %v4428 = vpop.permute.xlu0 %4427
        %4429 = vrot.lane.b32.xlu0 %v4125, 112
        %v4430 = vpop.permute.xlu0 %4429
        %4431 = vrot.lane.b32.xlu0 %v4129, 112
        %v4432 = vpop.permute.xlu0 %4431
        %4433 = vrot.lane.b32.xlu0 %v4133, 112
        %v4434 = vpop.permute.xlu0 %4433
        %4435 = vrot.lane.b32.xlu0 %v4137, 112
        %v4436 = vpop.permute.xlu0 %4435
        %4437 = vrot.lane.b32.xlu0 %v4141, 112
        %v4438 = vpop.permute.xlu0 %4437
        %v4447 = vmul.f32 %v3836, %v4424
        %v4448 = vmul.f32 %v3837, %v4426
        %v4449 = vmul.f32 %v3838, %v4428
        %v4450 = vmul.f32 %v3839, %v4430
        %v4451 = vmul.f32 %v3840, %v4432
        %v4452 = vmul.f32 %v3841, %v4434
        %v4453 = vmul.f32 %v3842, %v4436
        %v4454 = vmul.f32 %v3843, %v4438
        %v4455 = vsel %vm480, %v4447, 0.0
        %4456 = vadd.xlane.f32.xlu0 %v4455
        %v4457 = vpop.xlane.xlu0 %4456
        %v4458 = vsel %vm480, %v4448, 0.0
        %4459 = vadd.xlane.f32.xlu0 %v4458
        %v4460 = vpop.xlane.xlu0 %4459
        %v4461 = vsel %vm480, %v4449, 0.0
        %4462 = vadd.xlane.f32.xlu0 %v4461
        %v4463 = vpop.xlane.xlu0 %4462
        %v4464 = vsel %vm480, %v4450, 0.0
        %4465 = vadd.xlane.f32.xlu0 %v4464
        %v4466 = vpop.xlane.xlu0 %4465
        %v4467 = vsel %vm480, %v4451, 0.0
        %4468 = vadd.xlane.f32.xlu0 %v4467
        %v4469 = vpop.xlane.xlu0 %4468
        %v4470 = vsel %vm480, %v4452, 0.0
        %4471 = vadd.xlane.f32.xlu0 %v4470
        %v4472 = vpop.xlane.xlu0 %4471
        %v4473 = vsel %vm480, %v4453, 0.0
        %4474 = vadd.xlane.f32.xlu0 %v4473
        %v4475 = vpop.xlane.xlu0 %4474
        %v4476 = vsel %vm480, %v4454, 0.0
        %4477 = vadd.xlane.f32.xlu0 %v4476
        %v4478 = vpop.xlane.xlu0 %4477
        %v4487 = vlaneseq
        %v4488 = vshrl.u32 %v4487, 7
        %v4489 = vsub.s32 %v743, %v4488
        %v4490 = vrot.slane %v4457, %v4489
        %v4491 = vlaneseq
        %v4492 = vshrl.u32 %v4491, 7
        %v4493 = vsub.s32 %v743, %v4492
        %v4494 = vrot.slane %v4460, %v4493
        %v4495 = vlaneseq
        %v4496 = vshrl.u32 %v4495, 7
        %v4497 = vsub.s32 %v743, %v4496
        %v4498 = vrot.slane %v4463, %v4497
        %v4499 = vlaneseq
        %v4500 = vshrl.u32 %v4499, 7
        %v4501 = vsub.s32 %v743, %v4500
        %v4502 = vrot.slane %v4466, %v4501
        %v4503 = vlaneseq
        %v4504 = vshrl.u32 %v4503, 7
        %v4505 = vsub.s32 %v743, %v4504
        %v4506 = vrot.slane %v4469, %v4505
        %v4507 = vlaneseq
        %v4508 = vshrl.u32 %v4507, 7
        %v4509 = vsub.s32 %v743, %v4508
        %v4510 = vrot.slane %v4472, %v4509
        %v4511 = vlaneseq
        %v4512 = vshrl.u32 %v4511, 7
        %v4513 = vsub.s32 %v743, %v4512
        %v4514 = vrot.slane %v4475, %v4513
        %v4515 = vlaneseq
        %v4516 = vshrl.u32 %v4515, 7
        %v4517 = vsub.s32 %v743, %v4516
        %v4518 = vrot.slane %v4478, %v4517
        %v4519 = vsel %vm776, %v4494, %v4490
        %v4520 = vsel %vm778, %v4498, %v4519
        %v4521 = vsel %vm780, %v4502, %v4520
        %v4522 = vsel %vm782, %v4506, %v4521
        %v4523 = vsel %vm784, %v4510, %v4522
        %v4524 = vsel %vm786, %v4514, %v4523
        %v4525 = vsel %vm788, %v4518, %v4524
        %v4527 = vsel %vm791, %v4525, -inf
        %4528 = vmax.xlane.f32.xlu0 %v4527
        %v4529 = vpop.xlane.xlu0 %4528
        %v4531 = vlaneseq
        %v4532 = vshrl.u32 %v4531, 7
        %v4533 = vsub.s32 0, %v4532
        %v4534 = vrot.slane %v4529, %v4533
        %v4535 = vlaneseq
        %v4536 = vshrl.u32 %v4535, 7
        %v4537 = vsub.s32 1, %v4536
        %v4538 = vrot.slane %v4529, %v4537
        %v4539 = vlaneseq
        %v4540 = vshrl.u32 %v4539, 7
        %v4541 = vsub.s32 2, %v4540
        %v4542 = vrot.slane %v4529, %v4541
        %v4543 = vlaneseq
        %v4544 = vshrl.u32 %v4543, 7
        %v4545 = vsub.s32 3, %v4544
        %v4546 = vrot.slane %v4529, %v4545
        %v4547 = vlaneseq
        %v4548 = vshrl.u32 %v4547, 7
        %v4549 = vsub.s32 4, %v4548
        %v4550 = vrot.slane %v4529, %v4549
        %v4551 = vlaneseq
        %v4552 = vshrl.u32 %v4551, 7
        %v4553 = vsub.s32 5, %v4552
        %v4554 = vrot.slane %v4529, %v4553
        %v4555 = vlaneseq
        %v4556 = vshrl.u32 %v4555, 7
        %v4557 = vsub.s32 6, %v4556
        %v4558 = vrot.slane %v4529, %v4557
        %v4559 = vlaneseq
        %v4560 = vshrl.u32 %v4559, 7
        %v4561 = vsub.s32 7, %v4560
        %v4562 = vrot.slane %v4529, %v4561
        %v4571 = vsub.f32 %v4457, %v4534
        %v4572 = vsub.f32 %v4460, %v4538
        %v4573 = vsub.f32 %v4463, %v4542
        %v4574 = vsub.f32 %v4466, %v4546
        %v4575 = vsub.f32 %v4469, %v4550
        %v4576 = vsub.f32 %v4472, %v4554
        %v4577 = vsub.f32 %v4475, %v4558
        %v4578 = vsub.f32 %v4478, %v4562
        %v4579 = vmul.f32 %v4571, 1.442695
        %v4580 = vpow.pop %v4579
        %v4581 = vmul.f32 %v4572, 1.442695
        %v4582 = vpow.pop %v4581
        %v4583 = vmul.f32 %v4573, 1.442695
        %v4584 = vpow.pop %v4583
        %v4585 = vmul.f32 %v4574, 1.442695
        %v4586 = vpow.pop %v4585
        %v4587 = vmul.f32 %v4575, 1.442695
        %v4588 = vpow.pop %v4587
        %v4589 = vmul.f32 %v4576, 1.442695
        %v4590 = vpow.pop %v4589
        %v4591 = vmul.f32 %v4577, 1.442695
        %v4592 = vpow.pop %v4591
        %v4593 = vmul.f32 %v4578, 1.442695
        %v4594 = vpow.pop %v4593
        %4603 = vset.pattern.permute.xlu0 0
        %4604 = vperm.xlu0 %4603, %v4580
        %v4605 = vpop.permute.xlu0 %4604
        %4606 = vset.pattern.permute.xlu0 0
        %4607 = vperm.xlu0 %4606, %v4582
        %v4608 = vpop.permute.xlu0 %4607
        %4609 = vset.pattern.permute.xlu0 0
        %4610 = vperm.xlu0 %4609, %v4584
        %v4611 = vpop.permute.xlu0 %4610
        %4612 = vset.pattern.permute.xlu0 0
        %4613 = vperm.xlu0 %4612, %v4586
        %v4614 = vpop.permute.xlu0 %4613
        %4615 = vset.pattern.permute.xlu0 0
        %4616 = vperm.xlu0 %4615, %v4588
        %v4617 = vpop.permute.xlu0 %4616
        %4618 = vset.pattern.permute.xlu0 0
        %4619 = vperm.xlu0 %4618, %v4590
        %v4620 = vpop.permute.xlu0 %4619
        %4621 = vset.pattern.permute.xlu0 0
        %4622 = vperm.xlu0 %4621, %v4592
        %v4623 = vpop.permute.xlu0 %4622
        %4624 = vset.pattern.permute.xlu0 0
        %4625 = vperm.xlu0 %4624, %v4594
        %v4626 = vpop.permute.xlu0 %4625
        %v4627 = vlaneseq
        %v4628 = vshrl.u32 %v4627, 7
        %v4629 = vsub.s32 %v743, %v4628
        %v4630 = vrot.slane %v4605, %v4629
        %v4631 = vlaneseq
        %v4632 = vshrl.u32 %v4631, 7
        %v4633 = vsub.s32 %v743, %v4632
        %v4634 = vrot.slane %v4608, %v4633
        %v4635 = vlaneseq
        %v4636 = vshrl.u32 %v4635, 7
        %v4637 = vsub.s32 %v743, %v4636
        %v4638 = vrot.slane %v4611, %v4637
        %v4639 = vlaneseq
        %v4640 = vshrl.u32 %v4639, 7
        %v4641 = vsub.s32 %v743, %v4640
        %v4642 = vrot.slane %v4614, %v4641
        %v4643 = vlaneseq
        %v4644 = vshrl.u32 %v4643, 7
        %v4645 = vsub.s32 %v743, %v4644
        %v4646 = vrot.slane %v4617, %v4645
        %v4647 = vlaneseq
        %v4648 = vshrl.u32 %v4647, 7
        %v4649 = vsub.s32 %v743, %v4648
        %v4650 = vrot.slane %v4620, %v4649
        %v4651 = vlaneseq
        %v4652 = vshrl.u32 %v4651, 7
        %v4653 = vsub.s32 %v743, %v4652
        %v4654 = vrot.slane %v4623, %v4653
        %v4655 = vlaneseq
        %v4656 = vshrl.u32 %v4655, 7
        %v4657 = vsub.s32 %v743, %v4656
        %v4658 = vrot.slane %v4626, %v4657
        %v4659 = vsel %vm776, %v4634, %v4630
        %v4660 = vsel %vm778, %v4638, %v4659
        %v4661 = vsel %vm780, %v4642, %v4660
        %v4662 = vsel %vm782, %v4646, %v4661
        %v4663 = vsel %vm784, %v4650, %v4662
        %v4664 = vsel %vm786, %v4654, %v4663
        %v4665 = vsel %vm788, %v4658, %v4664
        %v4667 = vsel %vm791, %v4665, 0.0
        %4668 = vadd.xlane.f32.xlu0 %v4667
        %v4669 = vpop.xlane.xlu0 %4668
        %v4670 = vrcp.pop %v4669
        %v4672 = vlaneseq
        %v4673 = vshrl.u32 %v4672, 7
        %v4674 = vsub.s32 0, %v4673
        %v4675 = vrot.slane %v4670, %v4674
        %v4676 = vlaneseq
        %v4677 = vshrl.u32 %v4676, 7
        %v4678 = vsub.s32 1, %v4677
        %v4679 = vrot.slane %v4670, %v4678
        %v4680 = vlaneseq
        %v4681 = vshrl.u32 %v4680, 7
        %v4682 = vsub.s32 2, %v4681
        %v4683 = vrot.slane %v4670, %v4682
        %v4684 = vlaneseq
        %v4685 = vshrl.u32 %v4684, 7
        %v4686 = vsub.s32 3, %v4685
        %v4687 = vrot.slane %v4670, %v4686
        %v4688 = vlaneseq
        %v4689 = vshrl.u32 %v4688, 7
        %v4690 = vsub.s32 4, %v4689
        %v4691 = vrot.slane %v4670, %v4690
        %v4692 = vlaneseq
        %v4693 = vshrl.u32 %v4692, 7
        %v4694 = vsub.s32 5, %v4693
        %v4695 = vrot.slane %v4670, %v4694
        %v4696 = vlaneseq
        %v4697 = vshrl.u32 %v4696, 7
        %v4698 = vsub.s32 6, %v4697
        %v4699 = vrot.slane %v4670, %v4698
        %v4700 = vlaneseq
        %v4701 = vshrl.u32 %v4700, 7
        %v4702 = vsub.s32 7, %v4701
        %v4703 = vrot.slane %v4670, %v4702
        %v4712 = vmul.f32 %v4580, %v4675
        %v4713 = vmul.f32 %v4582, %v4679
        %v4714 = vmul.f32 %v4584, %v4683
        %v4715 = vmul.f32 %v4586, %v4687
        %v4716 = vmul.f32 %v4588, %v4691
        %v4717 = vmul.f32 %v4590, %v4695
        %v4718 = vmul.f32 %v4592, %v4699
        %v4719 = vmul.f32 %v4594, %v4703
        %4721 = vset.pattern.permute.xlu0 0
        %4722 = vperm.xlu0 %4721, %v4415
        %v4723 = vpop.permute.xlu0 %4722
        %4726 = vset.pattern.permute.xlu0 0
        %4727 = vperm.xlu0 %4726, %v4416
        %v4728 = vpop.permute.xlu0 %4727
        %4731 = vset.pattern.permute.xlu0 0
        %4732 = vperm.xlu0 %4731, %v4417
        %v4733 = vpop.permute.xlu0 %4732
        %4736 = vset.pattern.permute.xlu0 0
        %4737 = vperm.xlu0 %4736, %v4418
        %v4738 = vpop.permute.xlu0 %4737
        %4741 = vset.pattern.permute.xlu0 0
        %4742 = vperm.xlu0 %4741, %v4419
        %v4743 = vpop.permute.xlu0 %4742
        %4746 = vset.pattern.permute.xlu0 0
        %4747 = vperm.xlu0 %4746, %v4420
        %v4748 = vpop.permute.xlu0 %4747
        %4751 = vset.pattern.permute.xlu0 0
        %4752 = vperm.xlu0 %4751, %v4421
        %v4753 = vpop.permute.xlu0 %4752
        %4756 = vset.pattern.permute.xlu0 0
        %4757 = vperm.xlu0 %4756, %v4422
        %v4758 = vpop.permute.xlu0 %4757
        %v4760 = vmul.f32 %v4723, %v3836
        %v4761 = vmul.f32 %v4728, %v3837
        %v4762 = vmul.f32 %v4733, %v3838
        %v4763 = vmul.f32 %v4738, %v3839
        %v4764 = vmul.f32 %v4743, %v3840
        %v4765 = vmul.f32 %v4748, %v3841
        %v4766 = vmul.f32 %v4753, %v3842
        %v4767 = vmul.f32 %v4758, %v3843
        %v4768 = vsel %vm480, %v4760, 0.0
        %v4769 = vrot.slane %v4768, 4
        %v4770 = vadd.f32 %v4768, %v4769
        %v4771 = vrot.slane %v4770, 2
        %v4772 = vadd.f32 %v4770, %v4771
        %v4773 = vrot.slane %v4772, 1
        %v4774 = vadd.f32 %v4772, %v4773
        %v4775 = vsel %vm480, %v4761, 0.0
        %v4776 = vrot.slane %v4775, 4
        %v4777 = vadd.f32 %v4775, %v4776
        %v4778 = vrot.slane %v4777, 2
        %v4779 = vadd.f32 %v4777, %v4778
        %v4780 = vrot.slane %v4779, 1
        %v4781 = vadd.f32 %v4779, %v4780
        %v4782 = vsel %vm480, %v4762, 0.0
        %v4783 = vrot.slane %v4782, 4
        %v4784 = vadd.f32 %v4782, %v4783
        %v4785 = vrot.slane %v4784, 2
        %v4786 = vadd.f32 %v4784, %v4785
        %v4787 = vrot.slane %v4786, 1
        %v4788 = vadd.f32 %v4786, %v4787
        %v4789 = vsel %vm480, %v4763, 0.0
        %v4790 = vrot.slane %v4789, 4
        %v4791 = vadd.f32 %v4789, %v4790
        %v4792 = vrot.slane %v4791, 2
        %v4793 = vadd.f32 %v4791, %v4792
        %v4794 = vrot.slane %v4793, 1
        %v4795 = vadd.f32 %v4793, %v4794
        %v4796 = vsel %vm480, %v4764, 0.0
        %v4797 = vrot.slane %v4796, 4
        %v4798 = vadd.f32 %v4796, %v4797
        %v4799 = vrot.slane %v4798, 2
        %v4800 = vadd.f32 %v4798, %v4799
        %v4801 = vrot.slane %v4800, 1
        %v4802 = vadd.f32 %v4800, %v4801
        %v4803 = vsel %vm480, %v4765, 0.0
        %v4804 = vrot.slane %v4803, 4
        %v4805 = vadd.f32 %v4803, %v4804
        %v4806 = vrot.slane %v4805, 2
        %v4807 = vadd.f32 %v4805, %v4806
        %v4808 = vrot.slane %v4807, 1
        %v4809 = vadd.f32 %v4807, %v4808
        %v4810 = vsel %vm480, %v4766, 0.0
        %v4811 = vrot.slane %v4810, 4
        %v4812 = vadd.f32 %v4810, %v4811
        %v4813 = vrot.slane %v4812, 2
        %v4814 = vadd.f32 %v4812, %v4813
        %v4815 = vrot.slane %v4814, 1
        %v4816 = vadd.f32 %v4814, %v4815
        %v4817 = vsel %vm480, %v4767, 0.0
        %v4818 = vrot.slane %v4817, 4
        %v4819 = vadd.f32 %v4817, %v4818
        %v4820 = vrot.slane %v4819, 2
        %v4821 = vadd.f32 %v4819, %v4820
        %v4822 = vrot.slane %v4821, 1
        %v4823 = vadd.f32 %v4821, %v4822
        %v4825 = vcombine.high %v3871, %v3871
        %v4827 = vunpack.c.l.s4 1966171168
        %v4828 = vunpack.c.0.s8 %v4827
        %v4829 = vlaneseq
        %v4830 = vshrl.u32 %v4829, 7
        %v4831 = vsub.s32 %v4828, %v4830
        %v4832 = vrot.slane %v3871, %v4831
        %v4834 = vunpack.c.l.s4 1966171168
        %v4835 = vunpack.c.0.s8 %v4834
        %v4836 = vlaneseq
        %v4837 = vshrl.u32 %v4836, 7
        %v4838 = vsub.s32 %v4835, %v4837
        %v4839 = vrot.slane %v4825, %v4838
        %v4840 = vcombine.high %v4832, %v4832
        %v4841 = vcombine.high %v4839, %v4839
        %v4843 = vunpack.c.l.s4 1966171168
        %v4844 = vunpack.c.0.s8 %v4843
        %v4845 = vlaneseq
        %v4846 = vshrl.u32 %v4845, 7
        %v4847 = vsub.s32 %v4844, %v4846
        %v4848 = vrot.slane %v4832, %v4847
        %v4850 = vunpack.c.l.s4 1966171168
        %v4851 = vunpack.c.0.s8 %v4850
        %v4852 = vlaneseq
        %v4853 = vshrl.u32 %v4852, 7
        %v4854 = vsub.s32 %v4851, %v4853
        %v4855 = vrot.slane %v4839, %v4854
        %v4857 = vunpack.c.l.s4 1966171168
        %v4858 = vunpack.c.0.s8 %v4857
        %v4859 = vlaneseq
        %v4860 = vshrl.u32 %v4859, 7
        %v4861 = vsub.s32 %v4858, %v4860
        %v4862 = vrot.slane %v4840, %v4861
        %v4864 = vunpack.c.l.s4 1966171168
        %v4865 = vunpack.c.0.s8 %v4864
        %v4866 = vlaneseq
        %v4867 = vshrl.u32 %v4866, 7
        %v4868 = vsub.s32 %v4865, %v4867
        %v4869 = vrot.slane %v4841, %v4868
        %v4870 = vcombine.high %v4848, %v4848
        %v4871 = vcombine.high %v4855, %v4855
        %v4872 = vcombine.high %v4862, %v4862
        %v4873 = vcombine.high %v4869, %v4869
        %4875 = vset.pattern.permute.xlu0 0
        %4876 = vperm.xlu0 %4875, %v4712
        %v4877 = vpop.permute.xlu0 %4876
        %4880 = vset.pattern.permute.xlu0 0
        %4881 = vperm.xlu0 %4880, %v4713
        %v4882 = vpop.permute.xlu0 %4881
        %4885 = vset.pattern.permute.xlu0 0
        %4886 = vperm.xlu0 %4885, %v4714
        %v4887 = vpop.permute.xlu0 %4886
        %4890 = vset.pattern.permute.xlu0 0
        %4891 = vperm.xlu0 %4890, %v4715
        %v4892 = vpop.permute.xlu0 %4891
        %4895 = vset.pattern.permute.xlu0 0
        %4896 = vperm.xlu0 %4895, %v4716
        %v4897 = vpop.permute.xlu0 %4896
        %4900 = vset.pattern.permute.xlu0 0
        %4901 = vperm.xlu0 %4900, %v4717
        %v4902 = vpop.permute.xlu0 %4901
        %4905 = vset.pattern.permute.xlu0 0
        %4906 = vperm.xlu0 %4905, %v4718
        %v4907 = vpop.permute.xlu0 %4906
        %4910 = vset.pattern.permute.xlu0 0
        %4911 = vperm.xlu0 %4910, %v4719
        %v4912 = vpop.permute.xlu0 %4911
        %v4914 = vlaneseq
        %v4915 = vshrl.u32 %v4914, 7
        %v4916 = vsub.s32 0, %v4915
        %v4917 = vrot.slane %v4848, %v4916
        %v4918 = vlaneseq
        %v4919 = vshrl.u32 %v4918, 7
        %v4920 = vsub.s32 0, %v4919
        %v4921 = vrot.slane %v4862, %v4920
        %v4922 = vlaneseq
        %v4923 = vshrl.u32 %v4922, 7
        %v4924 = vsub.s32 0, %v4923
        %v4925 = vrot.slane %v4870, %v4924
        %v4926 = vlaneseq
        %v4927 = vshrl.u32 %v4926, 7
        %v4928 = vsub.s32 0, %v4927
        %v4929 = vrot.slane %v4872, %v4928
        %v4930 = vlaneseq
        %v4931 = vshrl.u32 %v4930, 7
        %v4932 = vsub.s32 0, %v4931
        %v4933 = vrot.slane %v4855, %v4932
        %v4934 = vlaneseq
        %v4935 = vshrl.u32 %v4934, 7
        %v4936 = vsub.s32 0, %v4935
        %v4937 = vrot.slane %v4869, %v4936
        %v4938 = vlaneseq
        %v4939 = vshrl.u32 %v4938, 7
        %v4940 = vsub.s32 0, %v4939
        %v4941 = vrot.slane %v4871, %v4940
        %v4942 = vlaneseq
        %v4943 = vshrl.u32 %v4942, 7
        %v4944 = vsub.s32 0, %v4943
        %v4945 = vrot.slane %v4873, %v4944
        %v4954 = vmul.f32 %v4877, %v4917
        %v4955 = vmul.f32 %v4882, %v4921
        %v4956 = vmul.f32 %v4887, %v4925
        %v4957 = vmul.f32 %v4892, %v4929
        %v4958 = vmul.f32 %v4897, %v4933
        %v4959 = vmul.f32 %v4902, %v4937
        %v4960 = vmul.f32 %v4907, %v4941
        %v4961 = vmul.f32 %v4912, %v4945
        %4970 = vrot.lane.b32.xlu0 %v4954, 80
        %v4971 = vpop.permute.xlu0 %4970
        %4972 = vrot.lane.b32.xlu0 %v4955, 80
        %v4973 = vpop.permute.xlu0 %4972
        %4974 = vrot.lane.b32.xlu0 %v4956, 80
        %v4975 = vpop.permute.xlu0 %4974
        %4976 = vrot.lane.b32.xlu0 %v4957, 80
        %v4977 = vpop.permute.xlu0 %4976
        %4978 = vrot.lane.b32.xlu0 %v4958, 80
        %v4979 = vpop.permute.xlu0 %4978
        %4980 = vrot.lane.b32.xlu0 %v4959, 80
        %v4981 = vpop.permute.xlu0 %4980
        %4982 = vrot.lane.b32.xlu0 %v4960, 80
        %v4983 = vpop.permute.xlu0 %4982
        %4984 = vrot.lane.b32.xlu0 %v4961, 80
        %v4985 = vpop.permute.xlu0 %4984
        %v4994 = vadd.f32 %v3836, %v4971
        %v4995 = vadd.f32 %v3837, %v4973
        %v4996 = vadd.f32 %v3838, %v4975
        %v4997 = vadd.f32 %v3839, %v4977
        %v4998 = vadd.f32 %v3840, %v4979
        %v4999 = vadd.f32 %v3841, %v4981
        %v5000 = vadd.f32 %v3842, %v4983
        %v5001 = vadd.f32 %v3843, %v4985
        %vm5002 = vcmask 1048320
        %5003 = vst.msk [vmem:[%s368] sm:$0xff] %vm5002, %v4012
        %v5012 = vsel %vm776, %v4781, %v4774
        %v5013 = vsel %vm778, %v4788, %v5012
        %v5014 = vsel %vm780, %v4795, %v5013
        %v5015 = vsel %vm782, %v4802, %v5014
        %v5016 = vsel %vm784, %v4809, %v5015
        %v5017 = vsel %vm786, %v4816, %v5016
        %v5018 = vsel %vm788, %v4823, %v5017
        %5019 = vrot.lane.b32.xlu0 %v5018, 48
        %v5020 = vpop.permute.xlu0 %5019
        %vm5022 = vcmask 523648
        %5023 = vst.msk [vmem:[%s368 + $0x10] sm:$0xff] %vm5022, %v5020
        %v5024 = vld [vmem:[%s322 + $0x20] sm:$0xff]
        %v5025 = vld [vmem:[%s322 + $0x40] sm:$0xff]
        %5026 = vmatprep.subr.bf16.mxu0 0
        %5027 = vmatpush1.bf16.msra.mxu0 %v424
        %5028 = vmatprep.subr.bf16.mxu0 0
        %5029 = vmatpush1.bf16.msra.mxu0 %v425
        %5030 = vmatprep.subr.bf16.mxu0 0
        %5031 = vmatpush1.bf16.msra.mxu0 0
        %5032 = vmatprep.subr.bf16.mxu0 0
        %5033 = vmatpush1.bf16.msra.mxu0 0
        %5034 = vmatprep.subr.bf16.mxu0 0
        %5035 = vmatpush1.bf16.msra.mxu0 0
        %5036 = vmatprep.subr.bf16.mxu0 0
        %5037 = vmatpush1.bf16.msra.mxu0 0
        %5038 = vmatprep.subr.bf16.mxu0 0
        %5039 = vmatpush1.bf16.msra.mxu0 0
        %5040 = vmatprep.subr.bf16.mxu0 0
        %5041 = vmatpush1.bf16.msra.mxu0 0
        %5042 = vmatprep.subr.bf16.mxu0 0
        %5043 = vmatpush1.bf16.msra.mxu0 0
        %5044 = vmatprep.subr.bf16.mxu0 0
        %5045 = vmatpush1.bf16.msra.mxu0 0
        %5046 = vmatprep.subr.bf16.mxu0 0
        %5047 = vmatpush1.bf16.msra.mxu0 0
        %5048 = vmatprep.subr.bf16.mxu0 0
        %5049 = vmatpush1.bf16.msra.mxu0 0
        %5050 = vmatprep.subr.bf16.mxu0 0
        %5051 = vmatpush1.bf16.msra.mxu0 0
        %5052 = vmatprep.subr.bf16.mxu0 0
        %5053 = vmatpush1.bf16.msra.mxu0 0
        %5054 = vmatprep.subr.bf16.mxu0 0
        %5055 = vmatpush1.bf16.msra.mxu0 0
        %5056 = vmatprep.subr.bf16.mxu0 0
        %5057 = vmatpush1.bf16.msra.mxu0 0
        %5058 = vmatprep.mubr.bf16.mxu0 0
        %5059 = vmatmul.mubr.bf16.gmra.mrb[0].mxu0 %v4018
        %v5060 = vpop.f32.mrb[0].mxu0
        %v5061 = vadd.f32 0.0, %v5060
        %v5062 = vpop.f32.mrb[0].mxu0
        %v5063 = vpop.f32.mrb[0].mxu0
        %v5064 = vpop.f32.mrb[0].mxu0
        %5065 = vdwg.mxu0
        %v5066 = vadd.f32 %v5024, %v5061
        %v5067 = vpack.c.bf16 %v4774, %v4774
        %v5068 = vpack.c.bf16 %v4781, %v4781
        %v5069 = vpack.c.bf16 %v4788, %v4788
        %v5070 = vpack.c.bf16 %v4795, %v4795
        %v5071 = vpack.c.bf16 %v4802, %v4802
        %v5072 = vpack.c.bf16 %v4809, %v4809
        %v5073 = vpack.c.bf16 %v4816, %v4816
        %v5074 = vpack.c.bf16 %v4823, %v4823
        %v5083 = vunpack.c.l.b16 %v5067
        %v5084 = vunpack.c.l.b16 %v5068
        %v5085 = vunpack.c.l.b16 %v5069
        %v5086 = vunpack.c.l.b16 %v5070
        %v5087 = vunpack.c.l.b16 %v5071
        %v5088 = vunpack.c.l.b16 %v5072
        %v5089 = vunpack.c.l.b16 %v5073
        %v5090 = vunpack.c.l.b16 %v5074
        %v5091 = vsel %vm776, %v5084, %v5083
        %v5092 = vsel %vm778, %v5085, %v5091
        %v5093 = vsel %vm780, %v5086, %v5092
        %v5094 = vsel %vm782, %v5087, %v5093
        %v5095 = vsel %vm784, %v5088, %v5094
        %v5096 = vsel %vm786, %v5089, %v5095
        %v5097 = vsel %vm788, %v5090, %v5096
        %v5098 = vpack.c.b16 %v5097, %v5097
        %v5100 = vsel %vm480, %v5098, 0
        %5102 = vmatprep.subr.bf16.mxu0 0
        %5103 = vmatpush1.bf16.msra.mxu0 %v478
        %5104 = vmatprep.subr.bf16.mxu0 0
        %5105 = vmatpush1.bf16.msra.mxu0 0
        %5106 = vmatprep.subr.bf16.mxu0 0
        %5107 = vmatpush1.bf16.msra.mxu0 0
        %5108 = vmatprep.subr.bf16.mxu0 0
        %5109 = vmatpush1.bf16.msra.mxu0 0
        %5110 = vmatprep.subr.bf16.mxu0 0
        %5111 = vmatpush1.bf16.msra.mxu0 0
        %5112 = vmatprep.subr.bf16.mxu0 0
        %5113 = vmatpush1.bf16.msra.mxu0 0
        %5114 = vmatprep.subr.bf16.mxu0 0
        %5115 = vmatpush1.bf16.msra.mxu0 0
        %5116 = vmatprep.subr.bf16.mxu0 0
        %5117 = vmatpush1.bf16.msra.mxu0 0
        %5118 = vmatprep.subr.bf16.mxu0 0
        %5119 = vmatpush1.bf16.msra.mxu0 0
        %5120 = vmatprep.subr.bf16.mxu0 0
        %5121 = vmatpush1.bf16.msra.mxu0 0
        %5122 = vmatprep.subr.bf16.mxu0 0
        %5123 = vmatpush1.bf16.msra.mxu0 0
        %5124 = vmatprep.subr.bf16.mxu0 0
        %5125 = vmatpush1.bf16.msra.mxu0 0
        %5126 = vmatprep.subr.bf16.mxu0 0
        %5127 = vmatpush1.bf16.msra.mxu0 0
        %5128 = vmatprep.subr.bf16.mxu0 0
        %5129 = vmatpush1.bf16.msra.mxu0 0
        %5130 = vmatprep.subr.bf16.mxu0 0
        %5131 = vmatpush1.bf16.msra.mxu0 0
        %5132 = vmatprep.subr.bf16.mxu0 0
        %5133 = vmatpush1.bf16.msra.mxu0 0
        %5134 = vmatprep.mubr.bf16.mxu0 0
        %5135 = vmatmul.mubr.bf16.gmra.mrb[0].mxu0 %v5100
        %v5136 = vpop.f32.mrb[0].mxu0
        %v5137 = vadd.f32 0.0, %v5136
        %v5138 = vpop.f32.mrb[0].mxu0
        %v5139 = vpop.f32.mrb[0].mxu0
        %v5140 = vpop.f32.mrb[0].mxu0
        %5141 = vdwg.mxu0
        %v5142 = vadd.f32 %v5066, %v5137
        %v5143 = vxor.u32 %v5142, 2147483648
        %v5144 = vmul.f32 %v5143, 1.442695
        %v5145 = vpow.pop %v5144
        %v5146 = vadd.f32 %v5145, 1.0
        %v5147 = vrcp.pop %v5146
        %v5148 = vmul.f32 1.0, %v5147
        %v5149 = vtanh.pop %v5142
        %v5150 = vmul.f32 %v5148, %v4006
        %5152 = vrot.lane.b32.xlu0 %v5149, 64
        %v5153 = vpop.permute.xlu0 %5152
        %v5155 = vmul.f32 %v5148, %v5153
        %5157 = vrot.lane.b32.xlu0 %v5155, 32
        %v5158 = vpop.permute.xlu0 %5157
        %v5160 = vadd.f32 %v5150, %v5158
        %v5161 = vtanh.pop %v5160
        %5163 = vrot.lane.b32.xlu0 %v5161, 64
        %v5164 = vpop.permute.xlu0 %5163
        %v5166 = vmul.f32 %v5148, %v5164
        %v5167 = vpack.c.bf16 %v5166, %v5166
        %5169 = vrot.lane.b32.xlu0 %v5167, 32
        %v5170 = vpop.permute.xlu0 %5169
        %v5172 = vsel %vm428, %v5170, 0
        %5174 = vmatprep.subr.bf16.mxu0 0
        %5175 = vmatpush1.bf16.msra.mxu0 %v565
        %5176 = vmatprep.subr.bf16.mxu0 0
        %5177 = vmatpush1.bf16.msra.mxu0 %v566
        %5178 = vmatprep.subr.bf16.mxu0 0
        %5179 = vmatpush1.bf16.msra.mxu0 0
        %5180 = vmatprep.subr.bf16.mxu0 0
        %5181 = vmatpush1.bf16.msra.mxu0 0
        %5182 = vmatprep.subr.bf16.mxu0 0
        %5183 = vmatpush1.bf16.msra.mxu0 0
        %5184 = vmatprep.subr.bf16.mxu0 0
        %5185 = vmatpush1.bf16.msra.mxu0 0
        %5186 = vmatprep.subr.bf16.mxu0 0
        %5187 = vmatpush1.bf16.msra.mxu0 0
        %5188 = vmatprep.subr.bf16.mxu0 0
        %5189 = vmatpush1.bf16.msra.mxu0 0
        %5190 = vmatprep.subr.bf16.mxu0 0
        %5191 = vmatpush1.bf16.msra.mxu0 0
        %5192 = vmatprep.subr.bf16.mxu0 0
        %5193 = vmatpush1.bf16.msra.mxu0 0
        %5194 = vmatprep.subr.bf16.mxu0 0
        %5195 = vmatpush1.bf16.msra.mxu0 0
        %5196 = vmatprep.subr.bf16.mxu0 0
        %5197 = vmatpush1.bf16.msra.mxu0 0
        %5198 = vmatprep.subr.bf16.mxu0 0
        %5199 = vmatpush1.bf16.msra.mxu0 0
        %5200 = vmatprep.subr.bf16.mxu0 0
        %5201 = vmatpush1.bf16.msra.mxu0 0
        %5202 = vmatprep.subr.bf16.mxu0 0
        %5203 = vmatpush1.bf16.msra.mxu0 0
        %5204 = vmatprep.subr.bf16.mxu0 0
        %5205 = vmatpush1.bf16.msra.mxu0 0
        %5206 = vmatprep.mubr.bf16.mxu0 0
        %5207 = vmatmul.mubr.bf16.gmra.mrb[0].mxu0 %v5172
        %v5208 = vpop.f32.mrb[0].mxu0
        %v5209 = vadd.f32 0.0, %v5208
        %v5210 = vpop.f32.mrb[0].mxu0
        %v5211 = vpop.f32.mrb[0].mxu0
        %v5212 = vpop.f32.mrb[0].mxu0
        %5213 = vdwg.mxu0
        %v5215 = vcombine.high %v5209, %v5209
        %v5217 = vunpack.c.l.s4 1966171168
        %v5218 = vunpack.c.0.s8 %v5217
        %v5219 = vlaneseq
        %v5220 = vshrl.u32 %v5219, 7
        %v5221 = vsub.s32 %v5218, %v5220
        %v5222 = vrot.slane %v5209, %v5221
        %v5224 = vunpack.c.l.s4 1966171168
        %v5225 = vunpack.c.0.s8 %v5224
        %v5226 = vlaneseq
        %v5227 = vshrl.u32 %v5226, 7
        %v5228 = vsub.s32 %v5225, %v5227
        %v5229 = vrot.slane %v5215, %v5228
        %v5230 = vcombine.high %v5222, %v5222
        %v5231 = vcombine.high %v5229, %v5229
        %v5233 = vunpack.c.l.s4 1966171168
        %v5234 = vunpack.c.0.s8 %v5233
        %v5235 = vlaneseq
        %v5236 = vshrl.u32 %v5235, 7
        %v5237 = vsub.s32 %v5234, %v5236
        %v5238 = vrot.slane %v5222, %v5237
        %v5240 = vunpack.c.l.s4 1966171168
        %v5241 = vunpack.c.0.s8 %v5240
        %v5242 = vlaneseq
        %v5243 = vshrl.u32 %v5242, 7
        %v5244 = vsub.s32 %v5241, %v5243
        %v5245 = vrot.slane %v5229, %v5244
        %v5247 = vunpack.c.l.s4 1966171168
        %v5248 = vunpack.c.0.s8 %v5247
        %v5249 = vlaneseq
        %v5250 = vshrl.u32 %v5249, 7
        %v5251 = vsub.s32 %v5248, %v5250
        %v5252 = vrot.slane %v5230, %v5251
        %v5254 = vunpack.c.l.s4 1966171168
        %v5255 = vunpack.c.0.s8 %v5254
        %v5256 = vlaneseq
        %v5257 = vshrl.u32 %v5256, 7
        %v5258 = vsub.s32 %v5255, %v5257
        %v5259 = vrot.slane %v5231, %v5258
        %v5260 = vcombine.high %v5238, %v5238
        %v5261 = vcombine.high %v5245, %v5245
        %v5262 = vcombine.high %v5252, %v5252
        %v5263 = vcombine.high %v5259, %v5259
        %v5264 = vlaneseq
        %v5265 = vshrl.u32 %v5264, 7
        %v5266 = vsub.s32 0, %v5265
        %v5267 = vrot.slane %v5238, %v5266
        %v5268 = vlaneseq
        %v5269 = vshrl.u32 %v5268, 7
        %v5270 = vsub.s32 0, %v5269
        %v5271 = vrot.slane %v5252, %v5270
        %v5272 = vlaneseq
        %v5273 = vshrl.u32 %v5272, 7
        %v5274 = vsub.s32 0, %v5273
        %v5275 = vrot.slane %v5260, %v5274
        %v5276 = vlaneseq
        %v5277 = vshrl.u32 %v5276, 7
        %v5278 = vsub.s32 0, %v5277
        %v5279 = vrot.slane %v5262, %v5278
        %v5280 = vlaneseq
        %v5281 = vshrl.u32 %v5280, 7
        %v5282 = vsub.s32 0, %v5281
        %v5283 = vrot.slane %v5245, %v5282
        %v5284 = vlaneseq
        %v5285 = vshrl.u32 %v5284, 7
        %v5286 = vsub.s32 0, %v5285
        %v5287 = vrot.slane %v5259, %v5286
        %v5288 = vlaneseq
        %v5289 = vshrl.u32 %v5288, 7
        %v5290 = vsub.s32 0, %v5289
        %v5291 = vrot.slane %v5261, %v5290
        %v5292 = vlaneseq
        %v5293 = vshrl.u32 %v5292, 7
        %v5294 = vsub.s32 0, %v5293
        %v5295 = vrot.slane %v5263, %v5294
        %v5304 = vmul.f32 %v4994, %v5267
        %v5305 = vmul.f32 %v4995, %v5271
        %v5306 = vmul.f32 %v4996, %v5275
        %v5307 = vmul.f32 %v4997, %v5279
        %v5308 = vmul.f32 %v4998, %v5283
        %v5309 = vmul.f32 %v4999, %v5287
        %v5310 = vmul.f32 %v5000, %v5291
        %v5311 = vmul.f32 %v5001, %v5295
        %v5312 = vsel %vm480, %v5304, 0.0
        %5313 = vadd.xlane.f32.xlu0 %v5312
        %v5314 = vpop.xlane.xlu0 %5313
        %v5315 = vsel %vm480, %v5305, 0.0
        %5316 = vadd.xlane.f32.xlu0 %v5315
        %v5317 = vpop.xlane.xlu0 %5316
        %v5318 = vsel %vm480, %v5306, 0.0
        %5319 = vadd.xlane.f32.xlu0 %v5318
        %v5320 = vpop.xlane.xlu0 %5319
        %v5321 = vsel %vm480, %v5307, 0.0
        %5322 = vadd.xlane.f32.xlu0 %v5321
        %v5323 = vpop.xlane.xlu0 %5322
        %v5324 = vsel %vm480, %v5308, 0.0
        %5325 = vadd.xlane.f32.xlu0 %v5324
        %v5326 = vpop.xlane.xlu0 %5325
        %v5327 = vsel %vm480, %v5309, 0.0
        %5328 = vadd.xlane.f32.xlu0 %v5327
        %v5329 = vpop.xlane.xlu0 %5328
        %v5330 = vsel %vm480, %v5310, 0.0
        %5331 = vadd.xlane.f32.xlu0 %v5330
        %v5332 = vpop.xlane.xlu0 %5331
        %v5333 = vsel %vm480, %v5311, 0.0
        %5334 = vadd.xlane.f32.xlu0 %v5333
        %v5335 = vpop.xlane.xlu0 %5334
        %v5344 = vlaneseq
        %v5345 = vshrl.u32 %v5344, 7
        %v5346 = vsub.s32 %v743, %v5345
        %v5347 = vrot.slane %v5314, %v5346
        %v5348 = vlaneseq
        %v5349 = vshrl.u32 %v5348, 7
        %v5350 = vsub.s32 %v743, %v5349
        %v5351 = vrot.slane %v5317, %v5350
        %v5352 = vlaneseq
        %v5353 = vshrl.u32 %v5352, 7
        %v5354 = vsub.s32 %v743, %v5353
        %v5355 = vrot.slane %v5320, %v5354
        %v5356 = vlaneseq
        %v5357 = vshrl.u32 %v5356, 7
        %v5358 = vsub.s32 %v743, %v5357
        %v5359 = vrot.slane %v5323, %v5358
        %v5360 = vlaneseq
        %v5361 = vshrl.u32 %v5360, 7
        %v5362 = vsub.s32 %v743, %v5361
        %v5363 = vrot.slane %v5326, %v5362
        %v5364 = vlaneseq
        %v5365 = vshrl.u32 %v5364, 7
        %v5366 = vsub.s32 %v743, %v5365
        %v5367 = vrot.slane %v5329, %v5366
        %v5368 = vlaneseq
        %v5369 = vshrl.u32 %v5368, 7
        %v5370 = vsub.s32 %v743, %v5369
        %v5371 = vrot.slane %v5332, %v5370
        %v5372 = vlaneseq
        %v5373 = vshrl.u32 %v5372, 7
        %v5374 = vsub.s32 %v743, %v5373
        %v5375 = vrot.slane %v5335, %v5374
        %v5376 = vsel %vm776, %v5351, %v5347
        %v5377 = vsel %vm778, %v5355, %v5376
        %v5378 = vsel %vm780, %v5359, %v5377
        %v5379 = vsel %vm782, %v5363, %v5378
        %v5380 = vsel %vm784, %v5367, %v5379
        %v5381 = vsel %vm786, %v5371, %v5380
        %v5382 = vsel %vm788, %v5375, %v5381
        %v5384 = vsel %vm791, %v5382, -inf
        %5385 = vmax.xlane.f32.xlu0 %v5384
        %v5386 = vpop.xlane.xlu0 %5385
        %v5388 = vlaneseq
        %v5389 = vshrl.u32 %v5388, 7
        %v5390 = vsub.s32 0, %v5389
        %v5391 = vrot.slane %v5386, %v5390
        %v5392 = vlaneseq
        %v5393 = vshrl.u32 %v5392, 7
        %v5394 = vsub.s32 1, %v5393
        %v5395 = vrot.slane %v5386, %v5394
        %v5396 = vlaneseq
        %v5397 = vshrl.u32 %v5396, 7
        %v5398 = vsub.s32 2, %v5397
        %v5399 = vrot.slane %v5386, %v5398
        %v5400 = vlaneseq
        %v5401 = vshrl.u32 %v5400, 7
        %v5402 = vsub.s32 3, %v5401
        %v5403 = vrot.slane %v5386, %v5402
        %v5404 = vlaneseq
        %v5405 = vshrl.u32 %v5404, 7
        %v5406 = vsub.s32 4, %v5405
        %v5407 = vrot.slane %v5386, %v5406
        %v5408 = vlaneseq
        %v5409 = vshrl.u32 %v5408, 7
        %v5410 = vsub.s32 5, %v5409
        %v5411 = vrot.slane %v5386, %v5410
        %v5412 = vlaneseq
        %v5413 = vshrl.u32 %v5412, 7
        %v5414 = vsub.s32 6, %v5413
        %v5415 = vrot.slane %v5386, %v5414
        %v5416 = vlaneseq
        %v5417 = vshrl.u32 %v5416, 7
        %v5418 = vsub.s32 7, %v5417
        %v5419 = vrot.slane %v5386, %v5418
        %v5428 = vsub.f32 %v5314, %v5391
        %v5429 = vsub.f32 %v5317, %v5395
        %v5430 = vsub.f32 %v5320, %v5399
        %v5431 = vsub.f32 %v5323, %v5403
        %v5432 = vsub.f32 %v5326, %v5407
        %v5433 = vsub.f32 %v5329, %v5411
        %v5434 = vsub.f32 %v5332, %v5415
        %v5435 = vsub.f32 %v5335, %v5419
        %v5436 = vmul.f32 %v5428, 1.442695
        %v5437 = vpow.pop %v5436
        %v5438 = vmul.f32 %v5429, 1.442695
        %v5439 = vpow.pop %v5438
        %v5440 = vmul.f32 %v5430, 1.442695
        %v5441 = vpow.pop %v5440
        %v5442 = vmul.f32 %v5431, 1.442695
        %v5443 = vpow.pop %v5442
        %v5444 = vmul.f32 %v5432, 1.442695
        %v5445 = vpow.pop %v5444
        %v5446 = vmul.f32 %v5433, 1.442695
        %v5447 = vpow.pop %v5446
        %v5448 = vmul.f32 %v5434, 1.442695
        %v5449 = vpow.pop %v5448
        %v5450 = vmul.f32 %v5435, 1.442695
        %v5451 = vpow.pop %v5450
        %5460 = vset.pattern.permute.xlu0 0
        %5461 = vperm.xlu0 %5460, %v5437
        %v5462 = vpop.permute.xlu0 %5461
        %5463 = vset.pattern.permute.xlu0 0
        %5464 = vperm.xlu0 %5463, %v5439
        %v5465 = vpop.permute.xlu0 %5464
        %5466 = vset.pattern.permute.xlu0 0
        %5467 = vperm.xlu0 %5466, %v5441
        %v5468 = vpop.permute.xlu0 %5467
        %5469 = vset.pattern.permute.xlu0 0
        %5470 = vperm.xlu0 %5469, %v5443
        %v5471 = vpop.permute.xlu0 %5470
        %5472 = vset.pattern.permute.xlu0 0
        %5473 = vperm.xlu0 %5472, %v5445
        %v5474 = vpop.permute.xlu0 %5473
        %5475 = vset.pattern.permute.xlu0 0
        %5476 = vperm.xlu0 %5475, %v5447
        %v5477 = vpop.permute.xlu0 %5476
        %5478 = vset.pattern.permute.xlu0 0
        %5479 = vperm.xlu0 %5478, %v5449
        %v5480 = vpop.permute.xlu0 %5479
        %5481 = vset.pattern.permute.xlu0 0
        %5482 = vperm.xlu0 %5481, %v5451
        %v5483 = vpop.permute.xlu0 %5482
        %v5484 = vlaneseq
        %v5485 = vshrl.u32 %v5484, 7
        %v5486 = vsub.s32 %v743, %v5485
        %v5487 = vrot.slane %v5462, %v5486
        %v5488 = vlaneseq
        %v5489 = vshrl.u32 %v5488, 7
        %v5490 = vsub.s32 %v743, %v5489
        %v5491 = vrot.slane %v5465, %v5490
        %v5492 = vlaneseq
        %v5493 = vshrl.u32 %v5492, 7
        %v5494 = vsub.s32 %v743, %v5493
        %v5495 = vrot.slane %v5468, %v5494
        %v5496 = vlaneseq
        %v5497 = vshrl.u32 %v5496, 7
        %v5498 = vsub.s32 %v743, %v5497
        %v5499 = vrot.slane %v5471, %v5498
        %v5500 = vlaneseq
        %v5501 = vshrl.u32 %v5500, 7
        %v5502 = vsub.s32 %v743, %v5501
        %v5503 = vrot.slane %v5474, %v5502
        %v5504 = vlaneseq
        %v5505 = vshrl.u32 %v5504, 7
        %v5506 = vsub.s32 %v743, %v5505
        %v5507 = vrot.slane %v5477, %v5506
        %v5508 = vlaneseq
        %v5509 = vshrl.u32 %v5508, 7
        %v5510 = vsub.s32 %v743, %v5509
        %v5511 = vrot.slane %v5480, %v5510
        %v5512 = vlaneseq
        %v5513 = vshrl.u32 %v5512, 7
        %v5514 = vsub.s32 %v743, %v5513
        %v5515 = vrot.slane %v5483, %v5514
        %v5516 = vsel %vm776, %v5491, %v5487
        %v5517 = vsel %vm778, %v5495, %v5516
        %v5518 = vsel %vm780, %v5499, %v5517
        %v5519 = vsel %vm782, %v5503, %v5518
        %v5520 = vsel %vm784, %v5507, %v5519
        %v5521 = vsel %vm786, %v5511, %v5520
        %v5522 = vsel %vm788, %v5515, %v5521
        %v5524 = vsel %vm791, %v5522, 0.0
        %5525 = vadd.xlane.f32.xlu0 %v5524
        %v5526 = vpop.xlane.xlu0 %5525
        %v5527 = vrcp.pop %v5526
        %v5529 = vlaneseq
        %v5530 = vshrl.u32 %v5529, 7
        %v5531 = vsub.s32 0, %v5530
        %v5532 = vrot.slane %v5527, %v5531
        %v5533 = vlaneseq
        %v5534 = vshrl.u32 %v5533, 7
        %v5535 = vsub.s32 1, %v5534
        %v5536 = vrot.slane %v5527, %v5535
        %v5537 = vlaneseq
        %v5538 = vshrl.u32 %v5537, 7
        %v5539 = vsub.s32 2, %v5538
        %v5540 = vrot.slane %v5527, %v5539
        %v5541 = vlaneseq
        %v5542 = vshrl.u32 %v5541, 7
        %v5543 = vsub.s32 3, %v5542
        %v5544 = vrot.slane %v5527, %v5543
        %v5545 = vlaneseq
        %v5546 = vshrl.u32 %v5545, 7
        %v5547 = vsub.s32 4, %v5546
        %v5548 = vrot.slane %v5527, %v5547
        %v5549 = vlaneseq
        %v5550 = vshrl.u32 %v5549, 7
        %v5551 = vsub.s32 5, %v5550
        %v5552 = vrot.slane %v5527, %v5551
        %v5553 = vlaneseq
        %v5554 = vshrl.u32 %v5553, 7
        %v5555 = vsub.s32 6, %v5554
        %v5556 = vrot.slane %v5527, %v5555
        %v5557 = vlaneseq
        %v5558 = vshrl.u32 %v5557, 7
        %v5559 = vsub.s32 7, %v5558
        %v5560 = vrot.slane %v5527, %v5559
        %v5569 = vmul.f32 %v5437, %v5532
        %v5570 = vmul.f32 %v5439, %v5536
        %v5571 = vmul.f32 %v5441, %v5540
        %v5572 = vmul.f32 %v5443, %v5544
        %v5573 = vmul.f32 %v5445, %v5548
        %v5574 = vmul.f32 %v5447, %v5552
        %v5575 = vmul.f32 %v5449, %v5556
        %v5576 = vmul.f32 %v5451, %v5560
        %5577 = vrot.lane.b32.xlu0 %v5267, 112
        %v5578 = vpop.permute.xlu0 %5577
        %5579 = vrot.lane.b32.xlu0 %v5271, 112
        %v5580 = vpop.permute.xlu0 %5579
        %5581 = vrot.lane.b32.xlu0 %v5275, 112
        %v5582 = vpop.permute.xlu0 %5581
        %5583 = vrot.lane.b32.xlu0 %v5279, 112
        %v5584 = vpop.permute.xlu0 %5583
        %5585 = vrot.lane.b32.xlu0 %v5283, 112
        %v5586 = vpop.permute.xlu0 %5585
        %5587 = vrot.lane.b32.xlu0 %v5287, 112
        %v5588 = vpop.permute.xlu0 %5587
        %5589 = vrot.lane.b32.xlu0 %v5291, 112
        %v5590 = vpop.permute.xlu0 %5589
        %5591 = vrot.lane.b32.xlu0 %v5295, 112
        %v5592 = vpop.permute.xlu0 %5591
        %v5601 = vmul.f32 %v4994, %v5578
        %v5602 = vmul.f32 %v4995, %v5580
        %v5603 = vmul.f32 %v4996, %v5582
        %v5604 = vmul.f32 %v4997, %v5584
        %v5605 = vmul.f32 %v4998, %v5586
        %v5606 = vmul.f32 %v4999, %v5588
        %v5607 = vmul.f32 %v5000, %v5590
        %v5608 = vmul.f32 %v5001, %v5592
        %v5609 = vsel %vm480, %v5601, 0.0
        %5610 = vadd.xlane.f32.xlu0 %v5609
        %v5611 = vpop.xlane.xlu0 %5610
        %v5612 = vsel %vm480, %v5602, 0.0
        %5613 = vadd.xlane.f32.xlu0 %v5612
        %v5614 = vpop.xlane.xlu0 %5613
        %v5615 = vsel %vm480, %v5603, 0.0
        %5616 = vadd.xlane.f32.xlu0 %v5615
        %v5617 = vpop.xlane.xlu0 %5616
        %v5618 = vsel %vm480, %v5604, 0.0
        %5619 = vadd.xlane.f32.xlu0 %v5618
        %v5620 = vpop.xlane.xlu0 %5619
        %v5621 = vsel %vm480, %v5605, 0.0
        %5622 = vadd.xlane.f32.xlu0 %v5621
        %v5623 = vpop.xlane.xlu0 %5622
        %v5624 = vsel %vm480, %v5606, 0.0
        %5625 = vadd.xlane.f32.xlu0 %v5624
        %v5626 = vpop.xlane.xlu0 %5625
        %v5627 = vsel %vm480, %v5607, 0.0
        %5628 = vadd.xlane.f32.xlu0 %v5627
        %v5629 = vpop.xlane.xlu0 %5628
        %v5630 = vsel %vm480, %v5608, 0.0
        %5631 = vadd.xlane.f32.xlu0 %v5630
        %v5632 = vpop.xlane.xlu0 %5631
        %v5641 = vlaneseq
        %v5642 = vshrl.u32 %v5641, 7
        %v5643 = vsub.s32 %v743, %v5642
        %v5644 = vrot.slane %v5611, %v5643
        %v5645 = vlaneseq
        %v5646 = vshrl.u32 %v5645, 7
        %v5647 = vsub.s32 %v743, %v5646
        %v5648 = vrot.slane %v5614, %v5647
        %v5649 = vlaneseq
        %v5650 = vshrl.u32 %v5649, 7
        %v5651 = vsub.s32 %v743, %v5650
        %v5652 = vrot.slane %v5617, %v5651
        %v5653 = vlaneseq
        %v5654 = vshrl.u32 %v5653, 7
        %v5655 = vsub.s32 %v743, %v5654
        %v5656 = vrot.slane %v5620, %v5655
        %v5657 = vlaneseq
        %v5658 = vshrl.u32 %v5657, 7
        %v5659 = vsub.s32 %v743, %v5658
        %v5660 = vrot.slane %v5623, %v5659
        %v5661 = vlaneseq
        %v5662 = vshrl.u32 %v5661, 7
        %v5663 = vsub.s32 %v743, %v5662
        %v5664 = vrot.slane %v5626, %v5663
        %v5665 = vlaneseq
        %v5666 = vshrl.u32 %v5665, 7
        %v5667 = vsub.s32 %v743, %v5666
        %v5668 = vrot.slane %v5629, %v5667
        %v5669 = vlaneseq
        %v5670 = vshrl.u32 %v5669, 7
        %v5671 = vsub.s32 %v743, %v5670
        %v5672 = vrot.slane %v5632, %v5671
        %v5673 = vsel %vm776, %v5648, %v5644
        %v5674 = vsel %vm778, %v5652, %v5673
        %v5675 = vsel %vm780, %v5656, %v5674
        %v5676 = vsel %vm782, %v5660, %v5675
        %v5677 = vsel %vm784, %v5664, %v5676
        %v5678 = vsel %vm786, %v5668, %v5677
        %v5679 = vsel %vm788, %v5672, %v5678
        %v5681 = vsel %vm791, %v5679, -inf
        %5682 = vmax.xlane.f32.xlu0 %v5681
        %v5683 = vpop.xlane.xlu0 %5682
        %v5685 = vlaneseq
        %v5686 = vshrl.u32 %v5685, 7
        %v5687 = vsub.s32 0, %v5686
        %v5688 = vrot.slane %v5683, %v5687
        %v5689 = vlaneseq
        %v5690 = vshrl.u32 %v5689, 7
        %v5691 = vsub.s32 1, %v5690
        %v5692 = vrot.slane %v5683, %v5691
        %v5693 = vlaneseq
        %v5694 = vshrl.u32 %v5693, 7
        %v5695 = vsub.s32 2, %v5694
        %v5696 = vrot.slane %v5683, %v5695
        %v5697 = vlaneseq
        %v5698 = vshrl.u32 %v5697, 7
        %v5699 = vsub.s32 3, %v5698
        %v5700 = vrot.slane %v5683, %v5699
        %v5701 = vlaneseq
        %v5702 = vshrl.u32 %v5701, 7
        %v5703 = vsub.s32 4, %v5702
        %v5704 = vrot.slane %v5683, %v5703
        %v5705 = vlaneseq
        %v5706 = vshrl.u32 %v5705, 7
        %v5707 = vsub.s32 5, %v5706
        %v5708 = vrot.slane %v5683, %v5707
        %v5709 = vlaneseq
        %v5710 = vshrl.u32 %v5709, 7
        %v5711 = vsub.s32 6, %v5710
        %v5712 = vrot.slane %v5683, %v5711
        %v5713 = vlaneseq
        %v5714 = vshrl.u32 %v5713, 7
        %v5715 = vsub.s32 7, %v5714
        %v5716 = vrot.slane %v5683, %v5715
        %v5725 = vsub.f32 %v5611, %v5688
        %v5726 = vsub.f32 %v5614, %v5692
        %v5727 = vsub.f32 %v5617, %v5696
        %v5728 = vsub.f32 %v5620, %v5700
        %v5729 = vsub.f32 %v5623, %v5704
        %v5730 = vsub.f32 %v5626, %v5708
        %v5731 = vsub.f32 %v5629, %v5712
        %v5732 = vsub.f32 %v5632, %v5716
        %v5733 = vmul.f32 %v5725, 1.442695
        %v5734 = vpow.pop %v5733
        %v5735 = vmul.f32 %v5726, 1.442695
        %v5736 = vpow.pop %v5735
        %v5737 = vmul.f32 %v5727, 1.442695
        %v5738 = vpow.pop %v5737
        %v5739 = vmul.f32 %v5728, 1.442695
        %v5740 = vpow.pop %v5739
        %v5741 = vmul.f32 %v5729, 1.442695
        %v5742 = vpow.pop %v5741
        %v5743 = vmul.f32 %v5730, 1.442695
        %v5744 = vpow.pop %v5743
        %v5745 = vmul.f32 %v5731, 1.442695
        %v5746 = vpow.pop %v5745
        %v5747 = vmul.f32 %v5732, 1.442695
        %v5748 = vpow.pop %v5747
        %5757 = vset.pattern.permute.xlu0 0
        %5758 = vperm.xlu0 %5757, %v5734
        %v5759 = vpop.permute.xlu0 %5758
        %5760 = vset.pattern.permute.xlu0 0
        %5761 = vperm.xlu0 %5760, %v5736
        %v5762 = vpop.permute.xlu0 %5761
        %5763 = vset.pattern.permute.xlu0 0
        %5764 = vperm.xlu0 %5763, %v5738
        %v5765 = vpop.permute.xlu0 %5764
        %5766 = vset.pattern.permute.xlu0 0
        %5767 = vperm.xlu0 %5766, %v5740
        %v5768 = vpop.permute.xlu0 %5767
        %5769 = vset.pattern.permute.xlu0 0
        %5770 = vperm.xlu0 %5769, %v5742
        %v5771 = vpop.permute.xlu0 %5770
        %5772 = vset.pattern.permute.xlu0 0
        %5773 = vperm.xlu0 %5772, %v5744
        %v5774 = vpop.permute.xlu0 %5773
        %5775 = vset.pattern.permute.xlu0 0
        %5776 = vperm.xlu0 %5775, %v5746
        %v5777 = vpop.permute.xlu0 %5776
        %5778 = vset.pattern.permute.xlu0 0
        %5779 = vperm.xlu0 %5778, %v5748
        %v5780 = vpop.permute.xlu0 %5779
        %v5781 = vlaneseq
        %v5782 = vshrl.u32 %v5781, 7
        %v5783 = vsub.s32 %v743, %v5782
        %v5784 = vrot.slane %v5759, %v5783
        %v5785 = vlaneseq
        %v5786 = vshrl.u32 %v5785, 7
        %v5787 = vsub.s32 %v743, %v5786
        %v5788 = vrot.slane %v5762, %v5787
        %v5789 = vlaneseq
        %v5790 = vshrl.u32 %v5789, 7
        %v5791 = vsub.s32 %v743, %v5790
        %v5792 = vrot.slane %v5765, %v5791
        %v5793 = vlaneseq
        %v5794 = vshrl.u32 %v5793, 7
        %v5795 = vsub.s32 %v743, %v5794
        %v5796 = vrot.slane %v5768, %v5795
        %v5797 = vlaneseq
        %v5798 = vshrl.u32 %v5797, 7
        %v5799 = vsub.s32 %v743, %v5798
        %v5800 = vrot.slane %v5771, %v5799
        %v5801 = vlaneseq
        %v5802 = vshrl.u32 %v5801, 7
        %v5803 = vsub.s32 %v743, %v5802
        %v5804 = vrot.slane %v5774, %v5803
        %v5805 = vlaneseq
        %v5806 = vshrl.u32 %v5805, 7
        %v5807 = vsub.s32 %v743, %v5806
        %v5808 = vrot.slane %v5777, %v5807
        %v5809 = vlaneseq
        %v5810 = vshrl.u32 %v5809, 7
        %v5811 = vsub.s32 %v743, %v5810
        %v5812 = vrot.slane %v5780, %v5811
        %v5813 = vsel %vm776, %v5788, %v5784
        %v5814 = vsel %vm778, %v5792, %v5813
        %v5815 = vsel %vm780, %v5796, %v5814
        %v5816 = vsel %vm782, %v5800, %v5815
        %v5817 = vsel %vm784, %v5804, %v5816
        %v5818 = vsel %vm786, %v5808, %v5817
        %v5819 = vsel %vm788, %v5812, %v5818
        %v5821 = vsel %vm791, %v5819, 0.0
        %5822 = vadd.xlane.f32.xlu0 %v5821
        %v5823 = vpop.xlane.xlu0 %5822
        %v5824 = vrcp.pop %v5823
        %v5826 = vlaneseq
        %v5827 = vshrl.u32 %v5826, 7
        %v5828 = vsub.s32 0, %v5827
        %v5829 = vrot.slane %v5824, %v5828
        %v5830 = vlaneseq
        %v5831 = vshrl.u32 %v5830, 7
        %v5832 = vsub.s32 1, %v5831
        %v5833 = vrot.slane %v5824, %v5832
        %v5834 = vlaneseq
        %v5835 = vshrl.u32 %v5834, 7
        %v5836 = vsub.s32 2, %v5835
        %v5837 = vrot.slane %v5824, %v5836
        %v5838 = vlaneseq
        %v5839 = vshrl.u32 %v5838, 7
        %v5840 = vsub.s32 3, %v5839
        %v5841 = vrot.slane %v5824, %v5840
        %v5842 = vlaneseq
        %v5843 = vshrl.u32 %v5842, 7
        %v5844 = vsub.s32 4, %v5843
        %v5845 = vrot.slane %v5824, %v5844
        %v5846 = vlaneseq
        %v5847 = vshrl.u32 %v5846, 7
        %v5848 = vsub.s32 5, %v5847
        %v5849 = vrot.slane %v5824, %v5848
        %v5850 = vlaneseq
        %v5851 = vshrl.u32 %v5850, 7
        %v5852 = vsub.s32 6, %v5851
        %v5853 = vrot.slane %v5824, %v5852
        %v5854 = vlaneseq
        %v5855 = vshrl.u32 %v5854, 7
        %v5856 = vsub.s32 7, %v5855
        %v5857 = vrot.slane %v5824, %v5856
        %v5866 = vmul.f32 %v5734, %v5829
        %v5867 = vmul.f32 %v5736, %v5833
        %v5868 = vmul.f32 %v5738, %v5837
        %v5869 = vmul.f32 %v5740, %v5841
        %v5870 = vmul.f32 %v5742, %v5845
        %v5871 = vmul.f32 %v5744, %v5849
        %v5872 = vmul.f32 %v5746, %v5853
        %v5873 = vmul.f32 %v5748, %v5857
        %5875 = vset.pattern.permute.xlu0 0
        %5876 = vperm.xlu0 %5875, %v5569
        %v5877 = vpop.permute.xlu0 %5876
        %5880 = vset.pattern.permute.xlu0 0
        %5881 = vperm.xlu0 %5880, %v5570
        %v5882 = vpop.permute.xlu0 %5881
        %5885 = vset.pattern.permute.xlu0 0
        %5886 = vperm.xlu0 %5885, %v5571
        %v5887 = vpop.permute.xlu0 %5886
        %5890 = vset.pattern.permute.xlu0 0
        %5891 = vperm.xlu0 %5890, %v5572
        %v5892 = vpop.permute.xlu0 %5891
        %5895 = vset.pattern.permute.xlu0 0
        %5896 = vperm.xlu0 %5895, %v5573
        %v5897 = vpop.permute.xlu0 %5896
        %5900 = vset.pattern.permute.xlu0 0
        %5901 = vperm.xlu0 %5900, %v5574
        %v5902 = vpop.permute.xlu0 %5901
        %5905 = vset.pattern.permute.xlu0 0
        %5906 = vperm.xlu0 %5905, %v5575
        %v5907 = vpop.permute.xlu0 %5906
        %5910 = vset.pattern.permute.xlu0 0
        %5911 = vperm.xlu0 %5910, %v5576
        %v5912 = vpop.permute.xlu0 %5911
        %v5914 = vmul.f32 %v5877, %v4994
        %v5915 = vmul.f32 %v5882, %v4995
        %v5916 = vmul.f32 %v5887, %v4996
        %v5917 = vmul.f32 %v5892, %v4997
        %v5918 = vmul.f32 %v5897, %v4998
        %v5919 = vmul.f32 %v5902, %v4999
        %v5920 = vmul.f32 %v5907, %v5000
        %v5921 = vmul.f32 %v5912, %v5001
        %v5922 = vsel %vm480, %v5914, 0.0
        %v5923 = vrot.slane %v5922, 4
        %v5924 = vadd.f32 %v5922, %v5923
        %v5925 = vrot.slane %v5924, 2
        %v5926 = vadd.f32 %v5924, %v5925
        %v5927 = vrot.slane %v5926, 1
        %v5928 = vadd.f32 %v5926, %v5927
        %v5929 = vsel %vm480, %v5915, 0.0
        %v5930 = vrot.slane %v5929, 4
        %v5931 = vadd.f32 %v5929, %v5930
        %v5932 = vrot.slane %v5931, 2
        %v5933 = vadd.f32 %v5931, %v5932
        %v5934 = vrot.slane %v5933, 1
        %v5935 = vadd.f32 %v5933, %v5934
        %v5936 = vsel %vm480, %v5916, 0.0
        %v5937 = vrot.slane %v5936, 4
        %v5938 = vadd.f32 %v5936, %v5937
        %v5939 = vrot.slane %v5938, 2
        %v5940 = vadd.f32 %v5938, %v5939
        %v5941 = vrot.slane %v5940, 1
        %v5942 = vadd.f32 %v5940, %v5941
        %v5943 = vsel %vm480, %v5917, 0.0
        %v5944 = vrot.slane %v5943, 4
        %v5945 = vadd.f32 %v5943, %v5944
        %v5946 = vrot.slane %v5945, 2
        %v5947 = vadd.f32 %v5945, %v5946
        %v5948 = vrot.slane %v5947, 1
        %v5949 = vadd.f32 %v5947, %v5948
        %v5950 = vsel %vm480, %v5918, 0.0
        %v5951 = vrot.slane %v5950, 4
        %v5952 = vadd.f32 %v5950, %v5951
        %v5953 = vrot.slane %v5952, 2
        %v5954 = vadd.f32 %v5952, %v5953
        %v5955 = vrot.slane %v5954, 1
        %v5956 = vadd.f32 %v5954, %v5955
        %v5957 = vsel %vm480, %v5919, 0.0
        %v5958 = vrot.slane %v5957, 4
        %v5959 = vadd.f32 %v5957, %v5958
        %v5960 = vrot.slane %v5959, 2
        %v5961 = vadd.f32 %v5959, %v5960
        %v5962 = vrot.slane %v5961, 1
        %v5963 = vadd.f32 %v5961, %v5962
        %v5964 = vsel %vm480, %v5920, 0.0
        %v5965 = vrot.slane %v5964, 4
        %v5966 = vadd.f32 %v5964, %v5965
        %v5967 = vrot.slane %v5966, 2
        %v5968 = vadd.f32 %v5966, %v5967
        %v5969 = vrot.slane %v5968, 1
        %v5970 = vadd.f32 %v5968, %v5969
        %v5971 = vsel %vm480, %v5921, 0.0
        %v5972 = vrot.slane %v5971, 4
        %v5973 = vadd.f32 %v5971, %v5972
        %v5974 = vrot.slane %v5973, 2
        %v5975 = vadd.f32 %v5973, %v5974
        %v5976 = vrot.slane %v5975, 1
        %v5977 = vadd.f32 %v5975, %v5976
        %v5979 = vcombine.high %v5025, %v5025
        %v5981 = vunpack.c.l.s4 1966171168
        %v5982 = vunpack.c.0.s8 %v5981
        %v5983 = vlaneseq
        %v5984 = vshrl.u32 %v5983, 7
        %v5985 = vsub.s32 %v5982, %v5984
        %v5986 = vrot.slane %v5025, %v5985
        %v5988 = vunpack.c.l.s4 1966171168
        %v5989 = vunpack.c.0.s8 %v5988
        %v5990 = vlaneseq
        %v5991 = vshrl.u32 %v5990, 7
        %v5992 = vsub.s32 %v5989, %v5991
        %v5993 = vrot.slane %v5979, %v5992
        %v5994 = vcombine.high %v5986, %v5986
        %v5995 = vcombine.high %v5993, %v5993
        %v5997 = vunpack.c.l.s4 1966171168
        %v5998 = vunpack.c.0.s8 %v5997
        %v5999 = vlaneseq
        %v6000 = vshrl.u32 %v5999, 7
        %v6001 = vsub.s32 %v5998, %v6000
        %v6002 = vrot.slane %v5986, %v6001
        %v6004 = vunpack.c.l.s4 1966171168
        %v6005 = vunpack.c.0.s8 %v6004
        %v6006 = vlaneseq
        %v6007 = vshrl.u32 %v6006, 7
        %v6008 = vsub.s32 %v6005, %v6007
        %v6009 = vrot.slane %v5993, %v6008
        %v6011 = vunpack.c.l.s4 1966171168
        %v6012 = vunpack.c.0.s8 %v6011
        %v6013 = vlaneseq
        %v6014 = vshrl.u32 %v6013, 7
        %v6015 = vsub.s32 %v6012, %v6014
        %v6016 = vrot.slane %v5994, %v6015
        %v6018 = vunpack.c.l.s4 1966171168
        %v6019 = vunpack.c.0.s8 %v6018
        %v6020 = vlaneseq
        %v6021 = vshrl.u32 %v6020, 7
        %v6022 = vsub.s32 %v6019, %v6021
        %v6023 = vrot.slane %v5995, %v6022
        %v6024 = vcombine.high %v6002, %v6002
        %v6025 = vcombine.high %v6009, %v6009
        %v6026 = vcombine.high %v6016, %v6016
        %v6027 = vcombine.high %v6023, %v6023
        %6029 = vset.pattern.permute.xlu0 0
        %6030 = vperm.xlu0 %6029, %v5866
        %v6031 = vpop.permute.xlu0 %6030
        %6034 = vset.pattern.permute.xlu0 0
        %6035 = vperm.xlu0 %6034, %v5867
        %v6036 = vpop.permute.xlu0 %6035
        %6039 = vset.pattern.permute.xlu0 0
        %6040 = vperm.xlu0 %6039, %v5868
        %v6041 = vpop.permute.xlu0 %6040
        %6044 = vset.pattern.permute.xlu0 0
        %6045 = vperm.xlu0 %6044, %v5869
        %v6046 = vpop.permute.xlu0 %6045
        %6049 = vset.pattern.permute.xlu0 0
        %6050 = vperm.xlu0 %6049, %v5870
        %v6051 = vpop.permute.xlu0 %6050
        %6054 = vset.pattern.permute.xlu0 0
        %6055 = vperm.xlu0 %6054, %v5871
        %v6056 = vpop.permute.xlu0 %6055
        %6059 = vset.pattern.permute.xlu0 0
        %6060 = vperm.xlu0 %6059, %v5872
        %v6061 = vpop.permute.xlu0 %6060
        %6064 = vset.pattern.permute.xlu0 0
        %6065 = vperm.xlu0 %6064, %v5873
        %v6066 = vpop.permute.xlu0 %6065
        %v6068 = vlaneseq
        %v6069 = vshrl.u32 %v6068, 7
        %v6070 = vsub.s32 0, %v6069
        %v6071 = vrot.slane %v6002, %v6070
        %v6072 = vlaneseq
        %v6073 = vshrl.u32 %v6072, 7
        %v6074 = vsub.s32 0, %v6073
        %v6075 = vrot.slane %v6016, %v6074
        %v6076 = vlaneseq
        %v6077 = vshrl.u32 %v6076, 7
        %v6078 = vsub.s32 0, %v6077
        %v6079 = vrot.slane %v6024, %v6078
        %v6080 = vlaneseq
        %v6081 = vshrl.u32 %v6080, 7
        %v6082 = vsub.s32 0, %v6081
        %v6083 = vrot.slane %v6026, %v6082
        %v6084 = vlaneseq
        %v6085 = vshrl.u32 %v6084, 7
        %v6086 = vsub.s32 0, %v6085
        %v6087 = vrot.slane %v6009, %v6086
        %v6088 = vlaneseq
        %v6089 = vshrl.u32 %v6088, 7
        %v6090 = vsub.s32 0, %v6089
        %v6091 = vrot.slane %v6023, %v6090
        %v6092 = vlaneseq
        %v6093 = vshrl.u32 %v6092, 7
        %v6094 = vsub.s32 0, %v6093
        %v6095 = vrot.slane %v6025, %v6094
        %v6096 = vlaneseq
        %v6097 = vshrl.u32 %v6096, 7
        %v6098 = vsub.s32 0, %v6097
        %v6099 = vrot.slane %v6027, %v6098
        %v6108 = vmul.f32 %v6031, %v6071
        %v6109 = vmul.f32 %v6036, %v6075
        %v6110 = vmul.f32 %v6041, %v6079
        %v6111 = vmul.f32 %v6046, %v6083
        %v6112 = vmul.f32 %v6051, %v6087
        %v6113 = vmul.f32 %v6056, %v6091
        %v6114 = vmul.f32 %v6061, %v6095
        %v6115 = vmul.f32 %v6066, %v6099
        %6124 = vrot.lane.b32.xlu0 %v6108, 64
        %v6125 = vpop.permute.xlu0 %6124
        %6126 = vrot.lane.b32.xlu0 %v6109, 64
        %v6127 = vpop.permute.xlu0 %6126
        %6128 = vrot.lane.b32.xlu0 %v6110, 64
        %v6129 = vpop.permute.xlu0 %6128
        %6130 = vrot.lane.b32.xlu0 %v6111, 64
        %v6131 = vpop.permute.xlu0 %6130
        %6132 = vrot.lane.b32.xlu0 %v6112, 64
        %v6133 = vpop.permute.xlu0 %6132
        %6134 = vrot.lane.b32.xlu0 %v6113, 64
        %v6135 = vpop.permute.xlu0 %6134
        %6136 = vrot.lane.b32.xlu0 %v6114, 64
        %v6137 = vpop.permute.xlu0 %6136
        %6138 = vrot.lane.b32.xlu0 %v6115, 64
        %v6139 = vpop.permute.xlu0 %6138
        %v6148 = vadd.f32 %v4994, %v6125
        %v6149 = vadd.f32 %v4995, %v6127
        %v6150 = vadd.f32 %v4996, %v6129
        %v6151 = vadd.f32 %v4997, %v6131
        %v6152 = vadd.f32 %v4998, %v6133
        %v6153 = vadd.f32 %v4999, %v6135
        %v6154 = vadd.f32 %v5000, %v6137
        %v6155 = vadd.f32 %v5001, %v6139
        %6157 = vrot.lane.b32.xlu0 %v5166, 32
        %v6158 = vpop.permute.xlu0 %6157
        %6160 = vst.msk [vmem:[%s368 + $0x8] sm:$0xff] %vm428, %v6158
        %v6169 = vsel %vm776, %v5935, %v5928
        %v6170 = vsel %vm778, %v5942, %v6169
        %v6171 = vsel %vm780, %v5949, %v6170
        %v6172 = vsel %vm782, %v5956, %v6171
        %v6173 = vsel %vm784, %v5963, %v6172
        %v6174 = vsel %vm786, %v5970, %v6173
        %v6175 = vsel %vm788, %v5977, %v6174
        %6176 = vrot.lane.b32.xlu0 %v6175, 64
        %v6177 = vpop.permute.xlu0 %6176
        %vm6179 = vcmask 654848
        %6180 = vst.msk [vmem:[%s368 + $0x10] sm:$0xff] %vm6179, %v6177
        %v6181 = vld [vmem:[%s322 + $0x28] sm:$0xff]
        %v6182 = vld [vmem:[%s322 + $0x40] sm:$0xff]
        %6183 = vmatprep.subr.bf16.mxu0 0
        %6184 = vmatpush1.bf16.msra.mxu0 %v424
        %6185 = vmatprep.subr.bf16.mxu0 0
        %6186 = vmatpush1.bf16.msra.mxu0 %v425
        %6187 = vmatprep.subr.bf16.mxu0 0
        %6188 = vmatpush1.bf16.msra.mxu0 0
        %6189 = vmatprep.subr.bf16.mxu0 0
        %6190 = vmatpush1.bf16.msra.mxu0 0
        %6191 = vmatprep.subr.bf16.mxu0 0
        %6192 = vmatpush1.bf16.msra.mxu0 0
        %6193 = vmatprep.subr.bf16.mxu0 0
        %6194 = vmatpush1.bf16.msra.mxu0 0
        %6195 = vmatprep.subr.bf16.mxu0 0
        %6196 = vmatpush1.bf16.msra.mxu0 0
        %6197 = vmatprep.subr.bf16.mxu0 0
        %6198 = vmatpush1.bf16.msra.mxu0 0
        %6199 = vmatprep.subr.bf16.mxu0 0
        %6200 = vmatpush1.bf16.msra.mxu0 0
        %6201 = vmatprep.subr.bf16.mxu0 0
        %6202 = vmatpush1.bf16.msra.mxu0 0
        %6203 = vmatprep.subr.bf16.mxu0 0
        %6204 = vmatpush1.bf16.msra.mxu0 0
        %6205 = vmatprep.subr.bf16.mxu0 0
        %6206 = vmatpush1.bf16.msra.mxu0 0
        %6207 = vmatprep.subr.bf16.mxu0 0
        %6208 = vmatpush1.bf16.msra.mxu0 0
        %6209 = vmatprep.subr.bf16.mxu0 0
        %6210 = vmatpush1.bf16.msra.mxu0 0
        %6211 = vmatprep.subr.bf16.mxu0 0
        %6212 = vmatpush1.bf16.msra.mxu0 0
        %6213 = vmatprep.subr.bf16.mxu0 0
        %6214 = vmatpush1.bf16.msra.mxu0 0
        %6215 = vmatprep.mubr.bf16.mxu0 0
        %6216 = vmatmul.mubr.bf16.gmra.mrb[0].mxu0 %v5172
        %v6217 = vpop.f32.mrb[0].mxu0
        %v6218 = vadd.f32 0.0, %v6217
        %v6219 = vpop.f32.mrb[0].mxu0
        %v6220 = vpop.f32.mrb[0].mxu0
        %v6221 = vpop.f32.mrb[0].mxu0
        %6222 = vdwg.mxu0
        %v6223 = vadd.f32 %v6181, %v6218
        %v6224 = vpack.c.bf16 %v5928, %v5928
        %v6225 = vpack.c.bf16 %v5935, %v5935
        %v6226 = vpack.c.bf16 %v5942, %v5942
        %v6227 = vpack.c.bf16 %v5949, %v5949
        %v6228 = vpack.c.bf16 %v5956, %v5956
        %v6229 = vpack.c.bf16 %v5963, %v5963
        %v6230 = vpack.c.bf16 %v5970, %v5970
        %v6231 = vpack.c.bf16 %v5977, %v5977
        %v6240 = vunpack.c.l.b16 %v6224
        %v6241 = vunpack.c.l.b16 %v6225
        %v6242 = vunpack.c.l.b16 %v6226
        %v6243 = vunpack.c.l.b16 %v6227
        %v6244 = vunpack.c.l.b16 %v6228
        %v6245 = vunpack.c.l.b16 %v6229
        %v6246 = vunpack.c.l.b16 %v6230
        %v6247 = vunpack.c.l.b16 %v6231
        %v6248 = vsel %vm776, %v6241, %v6240
        %v6249 = vsel %vm778, %v6242, %v6248
        %v6250 = vsel %vm780, %v6243, %v6249
        %v6251 = vsel %vm782, %v6244, %v6250
        %v6252 = vsel %vm784, %v6245, %v6251
        %v6253 = vsel %vm786, %v6246, %v6252
        %v6254 = vsel %vm788, %v6247, %v6253
        %v6255 = vpack.c.b16 %v6254, %v6254
        %v6257 = vsel %vm480, %v6255, 0
        %6259 = vmatprep.subr.bf16.mxu0 0
        %6260 = vmatpush1.bf16.msra.mxu0 %v478
        %6261 = vmatprep.subr.bf16.mxu0 0
        %6262 = vmatpush1.bf16.msra.mxu0 0
        %6263 = vmatprep.subr.bf16.mxu0 0
        %6264 = vmatpush1.bf16.msra.mxu0 0
        %6265 = vmatprep.subr.bf16.mxu0 0
        %6266 = vmatpush1.bf16.msra.mxu0 0
        %6267 = vmatprep.subr.bf16.mxu0 0
        %6268 = vmatpush1.bf16.msra.mxu0 0
        %6269 = vmatprep.subr.bf16.mxu0 0
        %6270 = vmatpush1.bf16.msra.mxu0 0
        %6271 = vmatprep.subr.bf16.mxu0 0
        %6272 = vmatpush1.bf16.msra.mxu0 0
        %6273 = vmatprep.subr.bf16.mxu0 0
        %6274 = vmatpush1.bf16.msra.mxu0 0
        %6275 = vmatprep.subr.bf16.mxu0 0
        %6276 = vmatpush1.bf16.msra.mxu0 0
        %6277 = vmatprep.subr.bf16.mxu0 0
        %6278 = vmatpush1.bf16.msra.mxu0 0
        %6279 = vmatprep.subr.bf16.mxu0 0
        %6280 = vmatpush1.bf16.msra.mxu0 0
        %6281 = vmatprep.subr.bf16.mxu0 0
        %6282 = vmatpush1.bf16.msra.mxu0 0
        %6283 = vmatprep.subr.bf16.mxu0 0
        %6284 = vmatpush1.bf16.msra.mxu0 0
        %6285 = vmatprep.subr.bf16.mxu0 0
        %6286 = vmatpush1.bf16.msra.mxu0 0
        %6287 = vmatprep.subr.bf16.mxu0 0
        %6288 = vmatpush1.bf16.msra.mxu0 0
        %6289 = vmatprep.subr.bf16.mxu0 0
        %6290 = vmatpush1.bf16.msra.mxu0 0
        %6291 = vmatprep.mubr.bf16.mxu0 0
        %6292 = vmatmul.mubr.bf16.gmra.mrb[0].mxu0 %v6257
        %v6293 = vpop.f32.mrb[0].mxu0
        %v6294 = vadd.f32 0.0, %v6293
        %v6295 = vpop.f32.mrb[0].mxu0
        %v6296 = vpop.f32.mrb[0].mxu0
        %v6297 = vpop.f32.mrb[0].mxu0
        %6298 = vdwg.mxu0
        %v6299 = vadd.f32 %v6223, %v6294
        %v6300 = vxor.u32 %v6299, 2147483648
        %v6301 = vmul.f32 %v6300, 1.442695
        %v6302 = vpow.pop %v6301
        %v6303 = vadd.f32 %v6302, 1.0
        %v6304 = vrcp.pop %v6303
        %v6305 = vmul.f32 1.0, %v6304
        %v6306 = vtanh.pop %v6299
        %v6307 = vmul.f32 %v6305, %v5160
        %6309 = vrot.lane.b32.xlu0 %v6306, 64
        %v6310 = vpop.permute.xlu0 %6309
        %v6312 = vmul.f32 %v6305, %v6310
        %6314 = vrot.lane.b32.xlu0 %v6312, 32
        %v6315 = vpop.permute.xlu0 %6314
        %v6317 = vadd.f32 %v6307, %v6315
        %v6318 = vtanh.pop %v6317
        %6320 = vrot.lane.b32.xlu0 %v6318, 64
        %v6321 = vpop.permute.xlu0 %6320
        %v6323 = vmul.f32 %v6305, %v6321
        %v6324 = vpack.c.bf16 %v6323, %v6323
        %6326 = vrot.lane.b32.xlu0 %v6324, 32
        %v6327 = vpop.permute.xlu0 %6326
        %v6329 = vsel %vm428, %v6327, 0
        %6331 = vmatprep.subr.bf16.mxu0 0
        %6332 = vmatpush1.bf16.msra.mxu0 %v565
        %6333 = vmatprep.subr.bf16.mxu0 0
        %6334 = vmatpush1.bf16.msra.mxu0 %v566
        %6335 = vmatprep.subr.bf16.mxu0 0
        %6336 = vmatpush1.bf16.msra.mxu0 0
        %6337 = vmatprep.subr.bf16.mxu0 0
        %6338 = vmatpush1.bf16.msra.mxu0 0
        %6339 = vmatprep.subr.bf16.mxu0 0
        %6340 = vmatpush1.bf16.msra.mxu0 0
        %6341 = vmatprep.subr.bf16.mxu0 0
        %6342 = vmatpush1.bf16.msra.mxu0 0
        %6343 = vmatprep.subr.bf16.mxu0 0
        %6344 = vmatpush1.bf16.msra.mxu0 0
        %6345 = vmatprep.subr.bf16.mxu0 0
        %6346 = vmatpush1.bf16.msra.mxu0 0
        %6347 = vmatprep.subr.bf16.mxu0 0
        %6348 = vmatpush1.bf16.msra.mxu0 0
        %6349 = vmatprep.subr.bf16.mxu0 0
        %6350 = vmatpush1.bf16.msra.mxu0 0
        %6351 = vmatprep.subr.bf16.mxu0 0
        %6352 = vmatpush1.bf16.msra.mxu0 0
        %6353 = vmatprep.subr.bf16.mxu0 0
        %6354 = vmatpush1.bf16.msra.mxu0 0
        %6355 = vmatprep.subr.bf16.mxu0 0
        %6356 = vmatpush1.bf16.msra.mxu0 0
        %6357 = vmatprep.subr.bf16.mxu0 0
        %6358 = vmatpush1.bf16.msra.mxu0 0
        %6359 = vmatprep.subr.bf16.mxu0 0
        %6360 = vmatpush1.bf16.msra.mxu0 0
        %6361 = vmatprep.subr.bf16.mxu0 0
        %6362 = vmatpush1.bf16.msra.mxu0 0
        %6363 = vmatprep.mubr.bf16.mxu0 0
        %6364 = vmatmul.mubr.bf16.gmra.mrb[0].mxu0 %v6329
        %v6365 = vpop.f32.mrb[0].mxu0
        %v6366 = vadd.f32 0.0, %v6365
        %v6367 = vpop.f32.mrb[0].mxu0
        %v6368 = vpop.f32.mrb[0].mxu0
        %v6369 = vpop.f32.mrb[0].mxu0
        %6370 = vdwg.mxu0
        %v6372 = vcombine.high %v6366, %v6366
        %v6374 = vunpack.c.l.s4 1966171168
        %v6375 = vunpack.c.0.s8 %v6374
        %v6376 = vlaneseq
        %v6377 = vshrl.u32 %v6376, 7
        %v6378 = vsub.s32 %v6375, %v6377
        %v6379 = vrot.slane %v6366, %v6378
        %v6381 = vunpack.c.l.s4 1966171168
        %v6382 = vunpack.c.0.s8 %v6381
        %v6383 = vlaneseq
        %v6384 = vshrl.u32 %v6383, 7
        %v6385 = vsub.s32 %v6382, %v6384
        %v6386 = vrot.slane %v6372, %v6385
        %v6387 = vcombine.high %v6379, %v6379
        %v6388 = vcombine.high %v6386, %v6386
        %v6390 = vunpack.c.l.s4 1966171168
        %v6391 = vunpack.c.0.s8 %v6390
        %v6392 = vlaneseq
        %v6393 = vshrl.u32 %v6392, 7
        %v6394 = vsub.s32 %v6391, %v6393
        %v6395 = vrot.slane %v6379, %v6394
        %v6397 = vunpack.c.l.s4 1966171168
        %v6398 = vunpack.c.0.s8 %v6397
        %v6399 = vlaneseq
        %v6400 = vshrl.u32 %v6399, 7
        %v6401 = vsub.s32 %v6398, %v6400
        %v6402 = vrot.slane %v6386, %v6401
        %v6404 = vunpack.c.l.s4 1966171168
        %v6405 = vunpack.c.0.s8 %v6404
        %v6406 = vlaneseq
        %v6407 = vshrl.u32 %v6406, 7
        %v6408 = vsub.s32 %v6405, %v6407
        %v6409 = vrot.slane %v6387, %v6408
        %v6411 = vunpack.c.l.s4 1966171168
        %v6412 = vunpack.c.0.s8 %v6411
        %v6413 = vlaneseq
        %v6414 = vshrl.u32 %v6413, 7
        %v6415 = vsub.s32 %v6412, %v6414
        %v6416 = vrot.slane %v6388, %v6415
        %v6417 = vcombine.high %v6395, %v6395
        %v6418 = vcombine.high %v6402, %v6402
        %v6419 = vcombine.high %v6409, %v6409
        %v6420 = vcombine.high %v6416, %v6416
        %v6421 = vlaneseq
        %v6422 = vshrl.u32 %v6421, 7
        %v6423 = vsub.s32 0, %v6422
        %v6424 = vrot.slane %v6395, %v6423
        %v6425 = vlaneseq
        %v6426 = vshrl.u32 %v6425, 7
        %v6427 = vsub.s32 0, %v6426
        %v6428 = vrot.slane %v6409, %v6427
        %v6429 = vlaneseq
        %v6430 = vshrl.u32 %v6429, 7
        %v6431 = vsub.s32 0, %v6430
        %v6432 = vrot.slane %v6417, %v6431
        %v6433 = vlaneseq
        %v6434 = vshrl.u32 %v6433, 7
        %v6435 = vsub.s32 0, %v6434
        %v6436 = vrot.slane %v6419, %v6435
        %v6437 = vlaneseq
        %v6438 = vshrl.u32 %v6437, 7
        %v6439 = vsub.s32 0, %v6438
        %v6440 = vrot.slane %v6402, %v6439
        %v6441 = vlaneseq
        %v6442 = vshrl.u32 %v6441, 7
        %v6443 = vsub.s32 0, %v6442
        %v6444 = vrot.slane %v6416, %v6443
        %v6445 = vlaneseq
        %v6446 = vshrl.u32 %v6445, 7
        %v6447 = vsub.s32 0, %v6446
        %v6448 = vrot.slane %v6418, %v6447
        %v6449 = vlaneseq
        %v6450 = vshrl.u32 %v6449, 7
        %v6451 = vsub.s32 0, %v6450
        %v6452 = vrot.slane %v6420, %v6451
        %v6461 = vmul.f32 %v6148, %v6424
        %v6462 = vmul.f32 %v6149, %v6428
        %v6463 = vmul.f32 %v6150, %v6432
        %v6464 = vmul.f32 %v6151, %v6436
        %v6465 = vmul.f32 %v6152, %v6440
        %v6466 = vmul.f32 %v6153, %v6444
        %v6467 = vmul.f32 %v6154, %v6448
        %v6468 = vmul.f32 %v6155, %v6452
        %v6469 = vsel %vm480, %v6461, 0.0
        %6470 = vadd.xlane.f32.xlu0 %v6469
        %v6471 = vpop.xlane.xlu0 %6470
        %v6472 = vsel %vm480, %v6462, 0.0
        %6473 = vadd.xlane.f32.xlu0 %v6472
        %v6474 = vpop.xlane.xlu0 %6473
        %v6475 = vsel %vm480, %v6463, 0.0
        %6476 = vadd.xlane.f32.xlu0 %v6475
        %v6477 = vpop.xlane.xlu0 %6476
        %v6478 = vsel %vm480, %v6464, 0.0
        %6479 = vadd.xlane.f32.xlu0 %v6478
        %v6480 = vpop.xlane.xlu0 %6479
        %v6481 = vsel %vm480, %v6465, 0.0
        %6482 = vadd.xlane.f32.xlu0 %v6481
        %v6483 = vpop.xlane.xlu0 %6482
        %v6484 = vsel %vm480, %v6466, 0.0
        %6485 = vadd.xlane.f32.xlu0 %v6484
        %v6486 = vpop.xlane.xlu0 %6485
        %v6487 = vsel %vm480, %v6467, 0.0
        %6488 = vadd.xlane.f32.xlu0 %v6487
        %v6489 = vpop.xlane.xlu0 %6488
        %v6490 = vsel %vm480, %v6468, 0.0
        %6491 = vadd.xlane.f32.xlu0 %v6490
        %v6492 = vpop.xlane.xlu0 %6491
        %v6501 = vlaneseq
        %v6502 = vshrl.u32 %v6501, 7
        %v6503 = vsub.s32 %v743, %v6502
        %v6504 = vrot.slane %v6471, %v6503
        %v6505 = vlaneseq
        %v6506 = vshrl.u32 %v6505, 7
        %v6507 = vsub.s32 %v743, %v6506
        %v6508 = vrot.slane %v6474, %v6507
        %v6509 = vlaneseq
        %v6510 = vshrl.u32 %v6509, 7
        %v6511 = vsub.s32 %v743, %v6510
        %v6512 = vrot.slane %v6477, %v6511
        %v6513 = vlaneseq
        %v6514 = vshrl.u32 %v6513, 7
        %v6515 = vsub.s32 %v743, %v6514
        %v6516 = vrot.slane %v6480, %v6515
        %v6517 = vlaneseq
        %v6518 = vshrl.u32 %v6517, 7
        %v6519 = vsub.s32 %v743, %v6518
        %v6520 = vrot.slane %v6483, %v6519
        %v6521 = vlaneseq
        %v6522 = vshrl.u32 %v6521, 7
        %v6523 = vsub.s32 %v743, %v6522
        %v6524 = vrot.slane %v6486, %v6523
        %v6525 = vlaneseq
        %v6526 = vshrl.u32 %v6525, 7
        %v6527 = vsub.s32 %v743, %v6526
        %v6528 = vrot.slane %v6489, %v6527
        %v6529 = vlaneseq
        %v6530 = vshrl.u32 %v6529, 7
        %v6531 = vsub.s32 %v743, %v6530
        %v6532 = vrot.slane %v6492, %v6531
        %v6533 = vsel %vm776, %v6508, %v6504
        %v6534 = vsel %vm778, %v6512, %v6533
        %v6535 = vsel %vm780, %v6516, %v6534
        %v6536 = vsel %vm782, %v6520, %v6535
        %v6537 = vsel %vm784, %v6524, %v6536
        %v6538 = vsel %vm786, %v6528, %v6537
        %v6539 = vsel %vm788, %v6532, %v6538
        %v6541 = vsel %vm791, %v6539, -inf
        %6542 = vmax.xlane.f32.xlu0 %v6541
        %v6543 = vpop.xlane.xlu0 %6542
        %v6545 = vlaneseq
        %v6546 = vshrl.u32 %v6545, 7
        %v6547 = vsub.s32 0, %v6546
        %v6548 = vrot.slane %v6543, %v6547
        %v6549 = vlaneseq
        %v6550 = vshrl.u32 %v6549, 7
        %v6551 = vsub.s32 1, %v6550
        %v6552 = vrot.slane %v6543, %v6551
        %v6553 = vlaneseq
        %v6554 = vshrl.u32 %v6553, 7
        %v6555 = vsub.s32 2, %v6554
        %v6556 = vrot.slane %v6543, %v6555
        %v6557 = vlaneseq
        %v6558 = vshrl.u32 %v6557, 7
        %v6559 = vsub.s32 3, %v6558
        %v6560 = vrot.slane %v6543, %v6559
        %v6561 = vlaneseq
        %v6562 = vshrl.u32 %v6561, 7
        %v6563 = vsub.s32 4, %v6562
        %v6564 = vrot.slane %v6543, %v6563
        %v6565 = vlaneseq
        %v6566 = vshrl.u32 %v6565, 7
        %v6567 = vsub.s32 5, %v6566
        %v6568 = vrot.slane %v6543, %v6567
        %v6569 = vlaneseq
        %v6570 = vshrl.u32 %v6569, 7
        %v6571 = vsub.s32 6, %v6570
        %v6572 = vrot.slane %v6543, %v6571
        %v6573 = vlaneseq
        %v6574 = vshrl.u32 %v6573, 7
        %v6575 = vsub.s32 7, %v6574
        %v6576 = vrot.slane %v6543, %v6575
        %v6585 = vsub.f32 %v6471, %v6548
        %v6586 = vsub.f32 %v6474, %v6552
        %v6587 = vsub.f32 %v6477, %v6556
        %v6588 = vsub.f32 %v6480, %v6560
        %v6589 = vsub.f32 %v6483, %v6564
        %v6590 = vsub.f32 %v6486, %v6568
        %v6591 = vsub.f32 %v6489, %v6572
        %v6592 = vsub.f32 %v6492, %v6576
        %v6593 = vmul.f32 %v6585, 1.442695
        %v6594 = vpow.pop %v6593
        %v6595 = vmul.f32 %v6586, 1.442695
        %v6596 = vpow.pop %v6595
        %v6597 = vmul.f32 %v6587, 1.442695
        %v6598 = vpow.pop %v6597
        %v6599 = vmul.f32 %v6588, 1.442695
        %v6600 = vpow.pop %v6599
        %v6601 = vmul.f32 %v6589, 1.442695
        %v6602 = vpow.pop %v6601
        %v6603 = vmul.f32 %v6590, 1.442695
        %v6604 = vpow.pop %v6603
        %v6605 = vmul.f32 %v6591, 1.442695
        %v6606 = vpow.pop %v6605
        %v6607 = vmul.f32 %v6592, 1.442695
        %v6608 = vpow.pop %v6607
        %6617 = vset.pattern.permute.xlu0 0
        %6618 = vperm.xlu0 %6617, %v6594
        %v6619 = vpop.permute.xlu0 %6618
        %6620 = vset.pattern.permute.xlu0 0
        %6621 = vperm.xlu0 %6620, %v6596
        %v6622 = vpop.permute.xlu0 %6621
        %6623 = vset.pattern.permute.xlu0 0
        %6624 = vperm.xlu0 %6623, %v6598
        %v6625 = vpop.permute.xlu0 %6624
        %6626 = vset.pattern.permute.xlu0 0
        %6627 = vperm.xlu0 %6626, %v6600
        %v6628 = vpop.permute.xlu0 %6627
        %6629 = vset.pattern.permute.xlu0 0
        %6630 = vperm.xlu0 %6629, %v6602
        %v6631 = vpop.permute.xlu0 %6630
        %6632 = vset.pattern.permute.xlu0 0
        %6633 = vperm.xlu0 %6632, %v6604
        %v6634 = vpop.permute.xlu0 %6633
        %6635 = vset.pattern.permute.xlu0 0
        %6636 = vperm.xlu0 %6635, %v6606
        %v6637 = vpop.permute.xlu0 %6636
        %6638 = vset.pattern.permute.xlu0 0
        %6639 = vperm.xlu0 %6638, %v6608
        %v6640 = vpop.permute.xlu0 %6639
        %v6641 = vlaneseq
        %v6642 = vshrl.u32 %v6641, 7
        %v6643 = vsub.s32 %v743, %v6642
        %v6644 = vrot.slane %v6619, %v6643
        %v6645 = vlaneseq
        %v6646 = vshrl.u32 %v6645, 7
        %v6647 = vsub.s32 %v743, %v6646
        %v6648 = vrot.slane %v6622, %v6647
        %v6649 = vlaneseq
        %v6650 = vshrl.u32 %v6649, 7
        %v6651 = vsub.s32 %v743, %v6650
        %v6652 = vrot.slane %v6625, %v6651
        %v6653 = vlaneseq
        %v6654 = vshrl.u32 %v6653, 7
        %v6655 = vsub.s32 %v743, %v6654
        %v6656 = vrot.slane %v6628, %v6655
        %v6657 = vlaneseq
        %v6658 = vshrl.u32 %v6657, 7
        %v6659 = vsub.s32 %v743, %v6658
        %v6660 = vrot.slane %v6631, %v6659
        %v6661 = vlaneseq
        %v6662 = vshrl.u32 %v6661, 7
        %v6663 = vsub.s32 %v743, %v6662
        %v6664 = vrot.slane %v6634, %v6663
        %v6665 = vlaneseq
        %v6666 = vshrl.u32 %v6665, 7
        %v6667 = vsub.s32 %v743, %v6666
        %v6668 = vrot.slane %v6637, %v6667
        %v6669 = vlaneseq
        %v6670 = vshrl.u32 %v6669, 7
        %v6671 = vsub.s32 %v743, %v6670
        %v6672 = vrot.slane %v6640, %v6671
        %v6673 = vsel %vm776, %v6648, %v6644
        %v6674 = vsel %vm778, %v6652, %v6673
        %v6675 = vsel %vm780, %v6656, %v6674
        %v6676 = vsel %vm782, %v6660, %v6675
        %v6677 = vsel %vm784, %v6664, %v6676
        %v6678 = vsel %vm786, %v6668, %v6677
        %v6679 = vsel %vm788, %v6672, %v6678
        %v6681 = vsel %vm791, %v6679, 0.0
        %6682 = vadd.xlane.f32.xlu0 %v6681
        %v6683 = vpop.xlane.xlu0 %6682
        %v6684 = vrcp.pop %v6683
        %v6686 = vlaneseq
        %v6687 = vshrl.u32 %v6686, 7
        %v6688 = vsub.s32 0, %v6687
        %v6689 = vrot.slane %v6684, %v6688
        %v6690 = vlaneseq
        %v6691 = vshrl.u32 %v6690, 7
        %v6692 = vsub.s32 1, %v6691
        %v6693 = vrot.slane %v6684, %v6692
        %v6694 = vlaneseq
        %v6695 = vshrl.u32 %v6694, 7
        %v6696 = vsub.s32 2, %v6695
        %v6697 = vrot.slane %v6684, %v6696
        %v6698 = vlaneseq
        %v6699 = vshrl.u32 %v6698, 7
        %v6700 = vsub.s32 3, %v6699
        %v6701 = vrot.slane %v6684, %v6700
        %v6702 = vlaneseq
        %v6703 = vshrl.u32 %v6702, 7
        %v6704 = vsub.s32 4, %v6703
        %v6705 = vrot.slane %v6684, %v6704
        %v6706 = vlaneseq
        %v6707 = vshrl.u32 %v6706, 7
        %v6708 = vsub.s32 5, %v6707
        %v6709 = vrot.slane %v6684, %v6708
        %v6710 = vlaneseq
        %v6711 = vshrl.u32 %v6710, 7
        %v6712 = vsub.s32 6, %v6711
        %v6713 = vrot.slane %v6684, %v6712
        %v6714 = vlaneseq
        %v6715 = vshrl.u32 %v6714, 7
        %v6716 = vsub.s32 7, %v6715
        %v6717 = vrot.slane %v6684, %v6716
        %v6726 = vmul.f32 %v6594, %v6689
        %v6727 = vmul.f32 %v6596, %v6693
        %v6728 = vmul.f32 %v6598, %v6697
        %v6729 = vmul.f32 %v6600, %v6701
        %v6730 = vmul.f32 %v6602, %v6705
        %v6731 = vmul.f32 %v6604, %v6709
        %v6732 = vmul.f32 %v6606, %v6713
        %v6733 = vmul.f32 %v6608, %v6717
        %6734 = vrot.lane.b32.xlu0 %v6424, 112
        %v6735 = vpop.permute.xlu0 %6734
        %6736 = vrot.lane.b32.xlu0 %v6428, 112
        %v6737 = vpop.permute.xlu0 %6736
        %6738 = vrot.lane.b32.xlu0 %v6432, 112
        %v6739 = vpop.permute.xlu0 %6738
        %6740 = vrot.lane.b32.xlu0 %v6436, 112
        %v6741 = vpop.permute.xlu0 %6740
        %6742 = vrot.lane.b32.xlu0 %v6440, 112
        %v6743 = vpop.permute.xlu0 %6742
        %6744 = vrot.lane.b32.xlu0 %v6444, 112
        %v6745 = vpop.permute.xlu0 %6744
        %6746 = vrot.lane.b32.xlu0 %v6448, 112
        %v6747 = vpop.permute.xlu0 %6746
        %6748 = vrot.lane.b32.xlu0 %v6452, 112
        %v6749 = vpop.permute.xlu0 %6748
        %v6758 = vmul.f32 %v6148, %v6735
        %v6759 = vmul.f32 %v6149, %v6737
        %v6760 = vmul.f32 %v6150, %v6739
        %v6761 = vmul.f32 %v6151, %v6741
        %v6762 = vmul.f32 %v6152, %v6743
        %v6763 = vmul.f32 %v6153, %v6745
        %v6764 = vmul.f32 %v6154, %v6747
        %v6765 = vmul.f32 %v6155, %v6749
        %v6766 = vsel %vm480, %v6758, 0.0
        %6767 = vadd.xlane.f32.xlu0 %v6766
        %v6768 = vpop.xlane.xlu0 %6767
        %v6769 = vsel %vm480, %v6759, 0.0
        %6770 = vadd.xlane.f32.xlu0 %v6769
        %v6771 = vpop.xlane.xlu0 %6770
        %v6772 = vsel %vm480, %v6760, 0.0
        %6773 = vadd.xlane.f32.xlu0 %v6772
        %v6774 = vpop.xlane.xlu0 %6773
        %v6775 = vsel %vm480, %v6761, 0.0
        %6776 = vadd.xlane.f32.xlu0 %v6775
        %v6777 = vpop.xlane.xlu0 %6776
        %v6778 = vsel %vm480, %v6762, 0.0
        %6779 = vadd.xlane.f32.xlu0 %v6778
        %v6780 = vpop.xlane.xlu0 %6779
        %v6781 = vsel %vm480, %v6763, 0.0
        %6782 = vadd.xlane.f32.xlu0 %v6781
        %v6783 = vpop.xlane.xlu0 %6782
        %v6784 = vsel %vm480, %v6764, 0.0
        %6785 = vadd.xlane.f32.xlu0 %v6784
        %v6786 = vpop.xlane.xlu0 %6785
        %v6787 = vsel %vm480, %v6765, 0.0
        %6788 = vadd.xlane.f32.xlu0 %v6787
        %v6789 = vpop.xlane.xlu0 %6788
        %v6798 = vlaneseq
        %v6799 = vshrl.u32 %v6798, 7
        %v6800 = vsub.s32 %v743, %v6799
        %v6801 = vrot.slane %v6768, %v6800
        %v6802 = vlaneseq
        %v6803 = vshrl.u32 %v6802, 7
        %v6804 = vsub.s32 %v743, %v6803
        %v6805 = vrot.slane %v6771, %v6804
        %v6806 = vlaneseq
        %v6807 = vshrl.u32 %v6806, 7
        %v6808 = vsub.s32 %v743, %v6807
        %v6809 = vrot.slane %v6774, %v6808
        %v6810 = vlaneseq
        %v6811 = vshrl.u32 %v6810, 7
        %v6812 = vsub.s32 %v743, %v6811
        %v6813 = vrot.slane %v6777, %v6812
        %v6814 = vlaneseq
        %v6815 = vshrl.u32 %v6814, 7
        %v6816 = vsub.s32 %v743, %v6815
        %v6817 = vrot.slane %v6780, %v6816
        %v6818 = vlaneseq
        %v6819 = vshrl.u32 %v6818, 7
        %v6820 = vsub.s32 %v743, %v6819
        %v6821 = vrot.slane %v6783, %v6820
        %v6822 = vlaneseq
        %v6823 = vshrl.u32 %v6822, 7
        %v6824 = vsub.s32 %v743, %v6823
        %v6825 = vrot.slane %v6786, %v6824
        %v6826 = vlaneseq
        %v6827 = vshrl.u32 %v6826, 7
        %v6828 = vsub.s32 %v743, %v6827
        %v6829 = vrot.slane %v6789, %v6828
        %v6830 = vsel %vm776, %v6805, %v6801
        %v6831 = vsel %vm778, %v6809, %v6830
        %v6832 = vsel %vm780, %v6813, %v6831
        %v6833 = vsel %vm782, %v6817, %v6832
        %v6834 = vsel %vm784, %v6821, %v6833
        %v6835 = vsel %vm786, %v6825, %v6834
        %v6836 = vsel %vm788, %v6829, %v6835
        %v6838 = vsel %vm791, %v6836, -inf
        %6839 = vmax.xlane.f32.xlu0 %v6838
        %v6840 = vpop.xlane.xlu0 %6839
        %v6842 = vlaneseq
        %v6843 = vshrl.u32 %v6842, 7
        %v6844 = vsub.s32 0, %v6843
        %v6845 = vrot.slane %v6840, %v6844
        %v6846 = vlaneseq
        %v6847 = vshrl.u32 %v6846, 7
        %v6848 = vsub.s32 1, %v6847
        %v6849 = vrot.slane %v6840, %v6848
        %v6850 = vlaneseq
        %v6851 = vshrl.u32 %v6850, 7
        %v6852 = vsub.s32 2, %v6851
        %v6853 = vrot.slane %v6840, %v6852
        %v6854 = vlaneseq
        %v6855 = vshrl.u32 %v6854, 7
        %v6856 = vsub.s32 3, %v6855
        %v6857 = vrot.slane %v6840, %v6856
        %v6858 = vlaneseq
        %v6859 = vshrl.u32 %v6858, 7
        %v6860 = vsub.s32 4, %v6859
        %v6861 = vrot.slane %v6840, %v6860
        %v6862 = vlaneseq
        %v6863 = vshrl.u32 %v6862, 7
        %v6864 = vsub.s32 5, %v6863
        %v6865 = vrot.slane %v6840, %v6864
        %v6866 = vlaneseq
        %v6867 = vshrl.u32 %v6866, 7
        %v6868 = vsub.s32 6, %v6867
        %v6869 = vrot.slane %v6840, %v6868
        %v6870 = vlaneseq
        %v6871 = vshrl.u32 %v6870, 7
        %v6872 = vsub.s32 7, %v6871
        %v6873 = vrot.slane %v6840, %v6872
        %v6882 = vsub.f32 %v6768, %v6845
        %v6883 = vsub.f32 %v6771, %v6849
        %v6884 = vsub.f32 %v6774, %v6853
        %v6885 = vsub.f32 %v6777, %v6857
        %v6886 = vsub.f32 %v6780, %v6861
        %v6887 = vsub.f32 %v6783, %v6865
        %v6888 = vsub.f32 %v6786, %v6869
        %v6889 = vsub.f32 %v6789, %v6873
        %v6890 = vmul.f32 %v6882, 1.442695
        %v6891 = vpow.pop %v6890
        %v6892 = vmul.f32 %v6883, 1.442695
        %v6893 = vpow.pop %v6892
        %v6894 = vmul.f32 %v6884, 1.442695
        %v6895 = vpow.pop %v6894
        %v6896 = vmul.f32 %v6885, 1.442695
        %v6897 = vpow.pop %v6896
        %v6898 = vmul.f32 %v6886, 1.442695
        %v6899 = vpow.pop %v6898
        %v6900 = vmul.f32 %v6887, 1.442695
        %v6901 = vpow.pop %v6900
        %v6902 = vmul.f32 %v6888, 1.442695
        %v6903 = vpow.pop %v6902
        %v6904 = vmul.f32 %v6889, 1.442695
        %v6905 = vpow.pop %v6904
        %6914 = vset.pattern.permute.xlu0 0
        %6915 = vperm.xlu0 %6914, %v6891
        %v6916 = vpop.permute.xlu0 %6915
        %6917 = vset.pattern.permute.xlu0 0
        %6918 = vperm.xlu0 %6917, %v6893
        %v6919 = vpop.permute.xlu0 %6918
        %6920 = vset.pattern.permute.xlu0 0
        %6921 = vperm.xlu0 %6920, %v6895
        %v6922 = vpop.permute.xlu0 %6921
        %6923 = vset.pattern.permute.xlu0 0
        %6924 = vperm.xlu0 %6923, %v6897
        %v6925 = vpop.permute.xlu0 %6924
        %6926 = vset.pattern.permute.xlu0 0
        %6927 = vperm.xlu0 %6926, %v6899
        %v6928 = vpop.permute.xlu0 %6927
        %6929 = vset.pattern.permute.xlu0 0
        %6930 = vperm.xlu0 %6929, %v6901
        %v6931 = vpop.permute.xlu0 %6930
        %6932 = vset.pattern.permute.xlu0 0
        %6933 = vperm.xlu0 %6932, %v6903
        %v6934 = vpop.permute.xlu0 %6933
        %6935 = vset.pattern.permute.xlu0 0
        %6936 = vperm.xlu0 %6935, %v6905
        %v6937 = vpop.permute.xlu0 %6936
        %v6938 = vlaneseq
        %v6939 = vshrl.u32 %v6938, 7
        %v6940 = vsub.s32 %v743, %v6939
        %v6941 = vrot.slane %v6916, %v6940
        %v6942 = vlaneseq
        %v6943 = vshrl.u32 %v6942, 7
        %v6944 = vsub.s32 %v743, %v6943
        %v6945 = vrot.slane %v6919, %v6944
        %v6946 = vlaneseq
        %v6947 = vshrl.u32 %v6946, 7
        %v6948 = vsub.s32 %v743, %v6947
        %v6949 = vrot.slane %v6922, %v6948
        %v6950 = vlaneseq
        %v6951 = vshrl.u32 %v6950, 7
        %v6952 = vsub.s32 %v743, %v6951
        %v6953 = vrot.slane %v6925, %v6952
        %v6954 = vlaneseq
        %v6955 = vshrl.u32 %v6954, 7
        %v6956 = vsub.s32 %v743, %v6955
        %v6957 = vrot.slane %v6928, %v6956
        %v6958 = vlaneseq
        %v6959 = vshrl.u32 %v6958, 7
        %v6960 = vsub.s32 %v743, %v6959
        %v6961 = vrot.slane %v6931, %v6960
        %v6962 = vlaneseq
        %v6963 = vshrl.u32 %v6962, 7
        %v6964 = vsub.s32 %v743, %v6963
        %v6965 = vrot.slane %v6934, %v6964
        %v6966 = vlaneseq
        %v6967 = vshrl.u32 %v6966, 7
        %v6968 = vsub.s32 %v743, %v6967
        %v6969 = vrot.slane %v6937, %v6968
        %v6970 = vsel %vm776, %v6945, %v6941
        %v6971 = vsel %vm778, %v6949, %v6970
        %v6972 = vsel %vm780, %v6953, %v6971
        %v6973 = vsel %vm782, %v6957, %v6972
        %v6974 = vsel %vm784, %v6961, %v6973
        %v6975 = vsel %vm786, %v6965, %v6974
        %v6976 = vsel %vm788, %v6969, %v6975
        %v6978 = vsel %vm791, %v6976, 0.0
        %6979 = vadd.xlane.f32.xlu0 %v6978
        %v6980 = vpop.xlane.xlu0 %6979
        %v6981 = vrcp.pop %v6980
        %v6983 = vlaneseq
        %v6984 = vshrl.u32 %v6983, 7
        %v6985 = vsub.s32 0, %v6984
        %v6986 = vrot.slane %v6981, %v6985
        %v6987 = vlaneseq
        %v6988 = vshrl.u32 %v6987, 7
        %v6989 = vsub.s32 1, %v6988
        %v6990 = vrot.slane %v6981, %v6989
        %v6991 = vlaneseq
        %v6992 = vshrl.u32 %v6991, 7
        %v6993 = vsub.s32 2, %v6992
        %v6994 = vrot.slane %v6981, %v6993
        %v6995 = vlaneseq
        %v6996 = vshrl.u32 %v6995, 7
        %v6997 = vsub.s32 3, %v6996
        %v6998 = vrot.slane %v6981, %v6997
        %v6999 = vlaneseq
        %v7000 = vshrl.u32 %v6999, 7
        %v7001 = vsub.s32 4, %v7000
        %v7002 = vrot.slane %v6981, %v7001
        %v7003 = vlaneseq
        %v7004 = vshrl.u32 %v7003, 7
        %v7005 = vsub.s32 5, %v7004
        %v7006 = vrot.slane %v6981, %v7005
        %v7007 = vlaneseq
        %v7008 = vshrl.u32 %v7007, 7
        %v7009 = vsub.s32 6, %v7008
        %v7010 = vrot.slane %v6981, %v7009
        %v7011 = vlaneseq
        %v7012 = vshrl.u32 %v7011, 7
        %v7013 = vsub.s32 7, %v7012
        %v7014 = vrot.slane %v6981, %v7013
        %v7023 = vmul.f32 %v6891, %v6986
        %v7024 = vmul.f32 %v6893, %v6990
        %v7025 = vmul.f32 %v6895, %v6994
        %v7026 = vmul.f32 %v6897, %v6998
        %v7027 = vmul.f32 %v6899, %v7002
        %v7028 = vmul.f32 %v6901, %v7006
        %v7029 = vmul.f32 %v6903, %v7010
        %v7030 = vmul.f32 %v6905, %v7014
        %7032 = vset.pattern.permute.xlu0 0
        %7033 = vperm.xlu0 %7032, %v6726
        %v7034 = vpop.permute.xlu0 %7033
        %7037 = vset.pattern.permute.xlu0 0
        %7038 = vperm.xlu0 %7037, %v6727
        %v7039 = vpop.permute.xlu0 %7038
        %7042 = vset.pattern.permute.xlu0 0
        %7043 = vperm.xlu0 %7042, %v6728
        %v7044 = vpop.permute.xlu0 %7043
        %7047 = vset.pattern.permute.xlu0 0
        %7048 = vperm.xlu0 %7047, %v6729
        %v7049 = vpop.permute.xlu0 %7048
        %7052 = vset.pattern.permute.xlu0 0
        %7053 = vperm.xlu0 %7052, %v6730
        %v7054 = vpop.permute.xlu0 %7053
        %7057 = vset.pattern.permute.xlu0 0
        %7058 = vperm.xlu0 %7057, %v6731
        %v7059 = vpop.permute.xlu0 %7058
        %7062 = vset.pattern.permute.xlu0 0
        %7063 = vperm.xlu0 %7062, %v6732
        %v7064 = vpop.permute.xlu0 %7063
        %7067 = vset.pattern.permute.xlu0 0
        %7068 = vperm.xlu0 %7067, %v6733
        %v7069 = vpop.permute.xlu0 %7068
        %v7071 = vmul.f32 %v7034, %v6148
        %v7072 = vmul.f32 %v7039, %v6149
        %v7073 = vmul.f32 %v7044, %v6150
        %v7074 = vmul.f32 %v7049, %v6151
        %v7075 = vmul.f32 %v7054, %v6152
        %v7076 = vmul.f32 %v7059, %v6153
        %v7077 = vmul.f32 %v7064, %v6154
        %v7078 = vmul.f32 %v7069, %v6155
        %v7079 = vsel %vm480, %v7071, 0.0
        %v7080 = vrot.slane %v7079, 4
        %v7081 = vadd.f32 %v7079, %v7080
        %v7082 = vrot.slane %v7081, 2
        %v7083 = vadd.f32 %v7081, %v7082
        %v7084 = vrot.slane %v7083, 1
        %v7085 = vadd.f32 %v7083, %v7084
        %v7086 = vsel %vm480, %v7072, 0.0
        %v7087 = vrot.slane %v7086, 4
        %v7088 = vadd.f32 %v7086, %v7087
        %v7089 = vrot.slane %v7088, 2
        %v7090 = vadd.f32 %v7088, %v7089
        %v7091 = vrot.slane %v7090, 1
        %v7092 = vadd.f32 %v7090, %v7091
        %v7093 = vsel %vm480, %v7073, 0.0
        %v7094 = vrot.slane %v7093, 4
        %v7095 = vadd.f32 %v7093, %v7094
        %v7096 = vrot.slane %v7095, 2
        %v7097 = vadd.f32 %v7095, %v7096
        %v7098 = vrot.slane %v7097, 1
        %v7099 = vadd.f32 %v7097, %v7098
        %v7100 = vsel %vm480, %v7074, 0.0
        %v7101 = vrot.slane %v7100, 4
        %v7102 = vadd.f32 %v7100, %v7101
        %v7103 = vrot.slane %v7102, 2
        %v7104 = vadd.f32 %v7102, %v7103
        %v7105 = vrot.slane %v7104, 1
        %v7106 = vadd.f32 %v7104, %v7105
        %v7107 = vsel %vm480, %v7075, 0.0
        %v7108 = vrot.slane %v7107, 4
        %v7109 = vadd.f32 %v7107, %v7108
        %v7110 = vrot.slane %v7109, 2
        %v7111 = vadd.f32 %v7109, %v7110
        %v7112 = vrot.slane %v7111, 1
        %v7113 = vadd.f32 %v7111, %v7112
        %v7114 = vsel %vm480, %v7076, 0.0
        %v7115 = vrot.slane %v7114, 4
        %v7116 = vadd.f32 %v7114, %v7115
        %v7117 = vrot.slane %v7116, 2
        %v7118 = vadd.f32 %v7116, %v7117
        %v7119 = vrot.slane %v7118, 1
        %v7120 = vadd.f32 %v7118, %v7119
        %v7121 = vsel %vm480, %v7077, 0.0
        %v7122 = vrot.slane %v7121, 4
        %v7123 = vadd.f32 %v7121, %v7122
        %v7124 = vrot.slane %v7123, 2
        %v7125 = vadd.f32 %v7123, %v7124
        %v7126 = vrot.slane %v7125, 1
        %v7127 = vadd.f32 %v7125, %v7126
        %v7128 = vsel %vm480, %v7078, 0.0
        %v7129 = vrot.slane %v7128, 4
        %v7130 = vadd.f32 %v7128, %v7129
        %v7131 = vrot.slane %v7130, 2
        %v7132 = vadd.f32 %v7130, %v7131
        %v7133 = vrot.slane %v7132, 1
        %v7134 = vadd.f32 %v7132, %v7133
        %v7136 = vcombine.high %v6182, %v6182
        %v7138 = vunpack.c.l.s4 1966171168
        %v7139 = vunpack.c.0.s8 %v7138
        %v7140 = vlaneseq
        %v7141 = vshrl.u32 %v7140, 7
        %v7142 = vsub.s32 %v7139, %v7141
        %v7143 = vrot.slane %v6182, %v7142
        %v7145 = vunpack.c.l.s4 1966171168
        %v7146 = vunpack.c.0.s8 %v7145
        %v7147 = vlaneseq
        %v7148 = vshrl.u32 %v7147, 7
        %v7149 = vsub.s32 %v7146, %v7148
        %v7150 = vrot.slane %v7136, %v7149
        %v7151 = vcombine.high %v7143, %v7143
        %v7152 = vcombine.high %v7150, %v7150
        %v7154 = vunpack.c.l.s4 1966171168
        %v7155 = vunpack.c.0.s8 %v7154
        %v7156 = vlaneseq
        %v7157 = vshrl.u32 %v7156, 7
        %v7158 = vsub.s32 %v7155, %v7157
        %v7159 = vrot.slane %v7143, %v7158
        %v7161 = vunpack.c.l.s4 1966171168
        %v7162 = vunpack.c.0.s8 %v7161
        %v7163 = vlaneseq
        %v7164 = vshrl.u32 %v7163, 7
        %v7165 = vsub.s32 %v7162, %v7164
        %v7166 = vrot.slane %v7150, %v7165
        %v7168 = vunpack.c.l.s4 1966171168
        %v7169 = vunpack.c.0.s8 %v7168
        %v7170 = vlaneseq
        %v7171 = vshrl.u32 %v7170, 7
        %v7172 = vsub.s32 %v7169, %v7171
        %v7173 = vrot.slane %v7151, %v7172
        %v7175 = vunpack.c.l.s4 1966171168
        %v7176 = vunpack.c.0.s8 %v7175
        %v7177 = vlaneseq
        %v7178 = vshrl.u32 %v7177, 7
        %v7179 = vsub.s32 %v7176, %v7178
        %v7180 = vrot.slane %v7152, %v7179
        %v7181 = vcombine.high %v7159, %v7159
        %v7182 = vcombine.high %v7166, %v7166
        %v7183 = vcombine.high %v7173, %v7173
        %v7184 = vcombine.high %v7180, %v7180
        %7186 = vset.pattern.permute.xlu0 0
        %7187 = vperm.xlu0 %7186, %v7023
        %v7188 = vpop.permute.xlu0 %7187
        %7191 = vset.pattern.permute.xlu0 0
        %7192 = vperm.xlu0 %7191, %v7024
        %v7193 = vpop.permute.xlu0 %7192
        %7196 = vset.pattern.permute.xlu0 0
        %7197 = vperm.xlu0 %7196, %v7025
        %v7198 = vpop.permute.xlu0 %7197
        %7201 = vset.pattern.permute.xlu0 0
        %7202 = vperm.xlu0 %7201, %v7026
        %v7203 = vpop.permute.xlu0 %7202
        %7206 = vset.pattern.permute.xlu0 0
        %7207 = vperm.xlu0 %7206, %v7027
        %v7208 = vpop.permute.xlu0 %7207
        %7211 = vset.pattern.permute.xlu0 0
        %7212 = vperm.xlu0 %7211, %v7028
        %v7213 = vpop.permute.xlu0 %7212
        %7216 = vset.pattern.permute.xlu0 0
        %7217 = vperm.xlu0 %7216, %v7029
        %v7218 = vpop.permute.xlu0 %7217
        %7221 = vset.pattern.permute.xlu0 0
        %7222 = vperm.xlu0 %7221, %v7030
        %v7223 = vpop.permute.xlu0 %7222
        %v7225 = vlaneseq
        %v7226 = vshrl.u32 %v7225, 7
        %v7227 = vsub.s32 0, %v7226
        %v7228 = vrot.slane %v7159, %v7227
        %v7229 = vlaneseq
        %v7230 = vshrl.u32 %v7229, 7
        %v7231 = vsub.s32 0, %v7230
        %v7232 = vrot.slane %v7173, %v7231
        %v7233 = vlaneseq
        %v7234 = vshrl.u32 %v7233, 7
        %v7235 = vsub.s32 0, %v7234
        %v7236 = vrot.slane %v7181, %v7235
        %v7237 = vlaneseq
        %v7238 = vshrl.u32 %v7237, 7
        %v7239 = vsub.s32 0, %v7238
        %v7240 = vrot.slane %v7183, %v7239
        %v7241 = vlaneseq
        %v7242 = vshrl.u32 %v7241, 7
        %v7243 = vsub.s32 0, %v7242
        %v7244 = vrot.slane %v7166, %v7243
        %v7245 = vlaneseq
        %v7246 = vshrl.u32 %v7245, 7
        %v7247 = vsub.s32 0, %v7246
        %v7248 = vrot.slane %v7180, %v7247
        %v7249 = vlaneseq
        %v7250 = vshrl.u32 %v7249, 7
        %v7251 = vsub.s32 0, %v7250
        %v7252 = vrot.slane %v7182, %v7251
        %v7253 = vlaneseq
        %v7254 = vshrl.u32 %v7253, 7
        %v7255 = vsub.s32 0, %v7254
        %v7256 = vrot.slane %v7184, %v7255
        %v7265 = vmul.f32 %v7188, %v7228
        %v7266 = vmul.f32 %v7193, %v7232
        %v7267 = vmul.f32 %v7198, %v7236
        %v7268 = vmul.f32 %v7203, %v7240
        %v7269 = vmul.f32 %v7208, %v7244
        %v7270 = vmul.f32 %v7213, %v7248
        %v7271 = vmul.f32 %v7218, %v7252
        %v7272 = vmul.f32 %v7223, %v7256
        %7281 = vrot.lane.b32.xlu0 %v7265, 48
        %v7282 = vpop.permute.xlu0 %7281
        %7283 = vrot.lane.b32.xlu0 %v7266, 48
        %v7284 = vpop.permute.xlu0 %7283
        %7285 = vrot.lane.b32.xlu0 %v7267, 48
        %v7286 = vpop.permute.xlu0 %7285
        %7287 = vrot.lane.b32.xlu0 %v7268, 48
        %v7288 = vpop.permute.xlu0 %7287
        %7289 = vrot.lane.b32.xlu0 %v7269, 48
        %v7290 = vpop.permute.xlu0 %7289
        %7291 = vrot.lane.b32.xlu0 %v7270, 48
        %v7292 = vpop.permute.xlu0 %7291
        %7293 = vrot.lane.b32.xlu0 %v7271, 48
        %v7294 = vpop.permute.xlu0 %7293
        %7295 = vrot.lane.b32.xlu0 %v7272, 48
        %v7296 = vpop.permute.xlu0 %7295
        %v7305 = vadd.f32 %v6148, %v7282
        %v7306 = vadd.f32 %v6149, %v7284
        %v7307 = vadd.f32 %v6150, %v7286
        %v7308 = vadd.f32 %v6151, %v7288
        %v7309 = vadd.f32 %v6152, %v7290
        %v7310 = vadd.f32 %v6153, %v7292
        %v7311 = vadd.f32 %v6154, %v7294
        %v7312 = vadd.f32 %v6155, %v7296
        %7314 = vrot.lane.b32.xlu0 %v6323, 64
        %v7315 = vpop.permute.xlu0 %7314
        %7317 = vst.msk [vmem:[%s368 + $0x8] sm:$0xff] %vm2690, %v7315
        %v7326 = vsel %vm776, %v7092, %v7085
        %v7327 = vsel %vm778, %v7099, %v7326
        %v7328 = vsel %vm780, %v7106, %v7327
        %v7329 = vsel %vm782, %v7113, %v7328
        %v7330 = vsel %vm784, %v7120, %v7329
        %v7331 = vsel %vm786, %v7127, %v7330
        %v7332 = vsel %vm788, %v7134, %v7331
        %7333 = vrot.lane.b32.xlu0 %v7332, 80
        %v7334 = vpop.permute.xlu0 %7333
        %vm7336 = vcmask 786048
        %7337 = vst.msk [vmem:[%s368 + $0x10] sm:$0xff] %vm7336, %v7334
        %v7338 = vld [vmem:[%s322 + $0x30] sm:$0xff]
        %v7339 = vld [vmem:[%s322 + $0x40] sm:$0xff]
        %7340 = vmatprep.subr.bf16.mxu0 0
        %7341 = vmatpush1.bf16.msra.mxu0 %v424
        %7342 = vmatprep.subr.bf16.mxu0 0
        %7343 = vmatpush1.bf16.msra.mxu0 %v425
        %7344 = vmatprep.subr.bf16.mxu0 0
        %7345 = vmatpush1.bf16.msra.mxu0 0
        %7346 = vmatprep.subr.bf16.mxu0 0
        %7347 = vmatpush1.bf16.msra.mxu0 0
        %7348 = vmatprep.subr.bf16.mxu0 0
        %7349 = vmatpush1.bf16.msra.mxu0 0
        %7350 = vmatprep.subr.bf16.mxu0 0
        %7351 = vmatpush1.bf16.msra.mxu0 0
        %7352 = vmatprep.subr.bf16.mxu0 0
        %7353 = vmatpush1.bf16.msra.mxu0 0
        %7354 = vmatprep.subr.bf16.mxu0 0
        %7355 = vmatpush1.bf16.msra.mxu0 0
        %7356 = vmatprep.subr.bf16.mxu0 0
        %7357 = vmatpush1.bf16.msra.mxu0 0
        %7358 = vmatprep.subr.bf16.mxu0 0
        %7359 = vmatpush1.bf16.msra.mxu0 0
        %7360 = vmatprep.subr.bf16.mxu0 0
        %7361 = vmatpush1.bf16.msra.mxu0 0
        %7362 = vmatprep.subr.bf16.mxu0 0
        %7363 = vmatpush1.bf16.msra.mxu0 0
        %7364 = vmatprep.subr.bf16.mxu0 0
        %7365 = vmatpush1.bf16.msra.mxu0 0
        %7366 = vmatprep.subr.bf16.mxu0 0
        %7367 = vmatpush1.bf16.msra.mxu0 0
        %7368 = vmatprep.subr.bf16.mxu0 0
        %7369 = vmatpush1.bf16.msra.mxu0 0
        %7370 = vmatprep.subr.bf16.mxu0 0
        %7371 = vmatpush1.bf16.msra.mxu0 0
        %7372 = vmatprep.mubr.bf16.mxu0 0
        %7373 = vmatmul.mubr.bf16.gmra.mrb[0].mxu0 %v6329
        %v7374 = vpop.f32.mrb[0].mxu0
        %v7375 = vadd.f32 0.0, %v7374
        %v7376 = vpop.f32.mrb[0].mxu0
        %v7377 = vpop.f32.mrb[0].mxu0
        %v7378 = vpop.f32.mrb[0].mxu0
        %7379 = vdwg.mxu0
        %v7380 = vadd.f32 %v7338, %v7375
        %v7381 = vpack.c.bf16 %v7085, %v7085
        %v7382 = vpack.c.bf16 %v7092, %v7092
        %v7383 = vpack.c.bf16 %v7099, %v7099
        %v7384 = vpack.c.bf16 %v7106, %v7106
        %v7385 = vpack.c.bf16 %v7113, %v7113
        %v7386 = vpack.c.bf16 %v7120, %v7120
        %v7387 = vpack.c.bf16 %v7127, %v7127
        %v7388 = vpack.c.bf16 %v7134, %v7134
        %v7397 = vunpack.c.l.b16 %v7381
        %v7398 = vunpack.c.l.b16 %v7382
        %v7399 = vunpack.c.l.b16 %v7383
        %v7400 = vunpack.c.l.b16 %v7384
        %v7401 = vunpack.c.l.b16 %v7385
        %v7402 = vunpack.c.l.b16 %v7386
        %v7403 = vunpack.c.l.b16 %v7387
        %v7404 = vunpack.c.l.b16 %v7388
        %v7405 = vsel %vm776, %v7398, %v7397
        %v7406 = vsel %vm778, %v7399, %v7405
        %v7407 = vsel %vm780, %v7400, %v7406
        %v7408 = vsel %vm782, %v7401, %v7407
        %v7409 = vsel %vm784, %v7402, %v7408
        %v7410 = vsel %vm786, %v7403, %v7409
        %v7411 = vsel %vm788, %v7404, %v7410
        %v7412 = vpack.c.b16 %v7411, %v7411
        %v7414 = vsel %vm480, %v7412, 0
        %7416 = vmatprep.subr.bf16.mxu0 0
        %7417 = vmatpush1.bf16.msra.mxu0 %v478
        %7418 = vmatprep.subr.bf16.mxu0 0
        %7419 = vmatpush1.bf16.msra.mxu0 0
        %7420 = vmatprep.subr.bf16.mxu0 0
        %7421 = vmatpush1.bf16.msra.mxu0 0
        %7422 = vmatprep.subr.bf16.mxu0 0
        %7423 = vmatpush1.bf16.msra.mxu0 0
        %7424 = vmatprep.subr.bf16.mxu0 0
        %7425 = vmatpush1.bf16.msra.mxu0 0
        %7426 = vmatprep.subr.bf16.mxu0 0
        %7427 = vmatpush1.bf16.msra.mxu0 0
        %7428 = vmatprep.subr.bf16.mxu0 0
        %7429 = vmatpush1.bf16.msra.mxu0 0
        %7430 = vmatprep.subr.bf16.mxu0 0
        %7431 = vmatpush1.bf16.msra.mxu0 0
        %7432 = vmatprep.subr.bf16.mxu0 0
        %7433 = vmatpush1.bf16.msra.mxu0 0
        %7434 = vmatprep.subr.bf16.mxu0 0
        %7435 = vmatpush1.bf16.msra.mxu0 0
        %7436 = vmatprep.subr.bf16.mxu0 0
        %7437 = vmatpush1.bf16.msra.mxu0 0
        %7438 = vmatprep.subr.bf16.mxu0 0
        %7439 = vmatpush1.bf16.msra.mxu0 0
        %7440 = vmatprep.subr.bf16.mxu0 0
        %7441 = vmatpush1.bf16.msra.mxu0 0
        %7442 = vmatprep.subr.bf16.mxu0 0
        %7443 = vmatpush1.bf16.msra.mxu0 0
        %7444 = vmatprep.subr.bf16.mxu0 0
        %7445 = vmatpush1.bf16.msra.mxu0 0
        %7446 = vmatprep.subr.bf16.mxu0 0
        %7447 = vmatpush1.bf16.msra.mxu0 0
        %7448 = vmatprep.mubr.bf16.mxu0 0
        %7449 = vmatmul.mubr.bf16.gmra.mrb[0].mxu0 %v7414
        %v7450 = vpop.f32.mrb[0].mxu0
        %v7451 = vadd.f32 0.0, %v7450
        %v7452 = vpop.f32.mrb[0].mxu0
        %v7453 = vpop.f32.mrb[0].mxu0
        %v7454 = vpop.f32.mrb[0].mxu0
        %7455 = vdwg.mxu0
        %v7456 = vadd.f32 %v7380, %v7451
        %v7457 = vxor.u32 %v7456, 2147483648
        %v7458 = vmul.f32 %v7457, 1.442695
        %v7459 = vpow.pop %v7458
        %v7460 = vadd.f32 %v7459, 1.0
        %v7461 = vrcp.pop %v7460
        %v7462 = vmul.f32 1.0, %v7461
        %v7463 = vtanh.pop %v7456
        %v7464 = vmul.f32 %v7462, %v6317
        %7466 = vrot.lane.b32.xlu0 %v7463, 64
        %v7467 = vpop.permute.xlu0 %7466
        %v7469 = vmul.f32 %v7462, %v7467
        %7471 = vrot.lane.b32.xlu0 %v7469, 32
        %v7472 = vpop.permute.xlu0 %7471
        %v7474 = vadd.f32 %v7464, %v7472
        %v7475 = vtanh.pop %v7474
        %7477 = vrot.lane.b32.xlu0 %v7475, 64
        %v7478 = vpop.permute.xlu0 %7477
        %v7480 = vmul.f32 %v7462, %v7478
        %v7481 = vpack.c.bf16 %v7480, %v7480
        %7483 = vrot.lane.b32.xlu0 %v7481, 32
        %v7484 = vpop.permute.xlu0 %7483
        %v7486 = vsel %vm428, %v7484, 0
        %7488 = vmatprep.subr.bf16.mxu0 0
        %7489 = vmatpush1.bf16.msra.mxu0 %v565
        %7490 = vmatprep.subr.bf16.mxu0 0
        %7491 = vmatpush1.bf16.msra.mxu0 %v566
        %7492 = vmatprep.subr.bf16.mxu0 0
        %7493 = vmatpush1.bf16.msra.mxu0 0
        %7494 = vmatprep.subr.bf16.mxu0 0
        %7495 = vmatpush1.bf16.msra.mxu0 0
        %7496 = vmatprep.subr.bf16.mxu0 0
        %7497 = vmatpush1.bf16.msra.mxu0 0
        %7498 = vmatprep.subr.bf16.mxu0 0
        %7499 = vmatpush1.bf16.msra.mxu0 0
        %7500 = vmatprep.subr.bf16.mxu0 0
        %7501 = vmatpush1.bf16.msra.mxu0 0
        %7502 = vmatprep.subr.bf16.mxu0 0
        %7503 = vmatpush1.bf16.msra.mxu0 0
        %7504 = vmatprep.subr.bf16.mxu0 0
        %7505 = vmatpush1.bf16.msra.mxu0 0
        %7506 = vmatprep.subr.bf16.mxu0 0
        %7507 = vmatpush1.bf16.msra.mxu0 0
        %7508 = vmatprep.subr.bf16.mxu0 0
        %7509 = vmatpush1.bf16.msra.mxu0 0
        %7510 = vmatprep.subr.bf16.mxu0 0
        %7511 = vmatpush1.bf16.msra.mxu0 0
        %7512 = vmatprep.subr.bf16.mxu0 0
        %7513 = vmatpush1.bf16.msra.mxu0 0
        %7514 = vmatprep.subr.bf16.mxu0 0
        %7515 = vmatpush1.bf16.msra.mxu0 0
        %7516 = vmatprep.subr.bf16.mxu0 0
        %7517 = vmatpush1.bf16.msra.mxu0 0
        %7518 = vmatprep.subr.bf16.mxu0 0
        %7519 = vmatpush1.bf16.msra.mxu0 0
        %7520 = vmatprep.mubr.bf16.mxu0 0
        %7521 = vmatmul.mubr.bf16.gmra.mrb[0].mxu0 %v7486
        %v7522 = vpop.f32.mrb[0].mxu0
        %v7523 = vadd.f32 0.0, %v7522
        %v7524 = vpop.f32.mrb[0].mxu0
        %v7525 = vpop.f32.mrb[0].mxu0
        %v7526 = vpop.f32.mrb[0].mxu0
        %7527 = vdwg.mxu0
        %v7529 = vcombine.high %v7523, %v7523
        %v7531 = vunpack.c.l.s4 1966171168
        %v7532 = vunpack.c.0.s8 %v7531
        %v7533 = vlaneseq
        %v7534 = vshrl.u32 %v7533, 7
        %v7535 = vsub.s32 %v7532, %v7534
        %v7536 = vrot.slane %v7523, %v7535
        %v7538 = vunpack.c.l.s4 1966171168
        %v7539 = vunpack.c.0.s8 %v7538
        %v7540 = vlaneseq
        %v7541 = vshrl.u32 %v7540, 7
        %v7542 = vsub.s32 %v7539, %v7541
        %v7543 = vrot.slane %v7529, %v7542
        %v7544 = vcombine.high %v7536, %v7536
        %v7545 = vcombine.high %v7543, %v7543
        %v7547 = vunpack.c.l.s4 1966171168
        %v7548 = vunpack.c.0.s8 %v7547
        %v7549 = vlaneseq
        %v7550 = vshrl.u32 %v7549, 7
        %v7551 = vsub.s32 %v7548, %v7550
        %v7552 = vrot.slane %v7536, %v7551
        %v7554 = vunpack.c.l.s4 1966171168
        %v7555 = vunpack.c.0.s8 %v7554
        %v7556 = vlaneseq
        %v7557 = vshrl.u32 %v7556, 7
        %v7558 = vsub.s32 %v7555, %v7557
        %v7559 = vrot.slane %v7543, %v7558
        %v7561 = vunpack.c.l.s4 1966171168
        %v7562 = vunpack.c.0.s8 %v7561
        %v7563 = vlaneseq
        %v7564 = vshrl.u32 %v7563, 7
        %v7565 = vsub.s32 %v7562, %v7564
        %v7566 = vrot.slane %v7544, %v7565
        %v7568 = vunpack.c.l.s4 1966171168
        %v7569 = vunpack.c.0.s8 %v7568
        %v7570 = vlaneseq
        %v7571 = vshrl.u32 %v7570, 7
        %v7572 = vsub.s32 %v7569, %v7571
        %v7573 = vrot.slane %v7545, %v7572
        %v7574 = vcombine.high %v7552, %v7552
        %v7575 = vcombine.high %v7559, %v7559
        %v7576 = vcombine.high %v7566, %v7566
        %v7577 = vcombine.high %v7573, %v7573
        %v7578 = vlaneseq
        %v7579 = vshrl.u32 %v7578, 7
        %v7580 = vsub.s32 0, %v7579
        %v7581 = vrot.slane %v7552, %v7580
        %v7582 = vlaneseq
        %v7583 = vshrl.u32 %v7582, 7
        %v7584 = vsub.s32 0, %v7583
        %v7585 = vrot.slane %v7566, %v7584
        %v7586 = vlaneseq
        %v7587 = vshrl.u32 %v7586, 7
        %v7588 = vsub.s32 0, %v7587
        %v7589 = vrot.slane %v7574, %v7588
        %v7590 = vlaneseq
        %v7591 = vshrl.u32 %v7590, 7
        %v7592 = vsub.s32 0, %v7591
        %v7593 = vrot.slane %v7576, %v7592
        %v7594 = vlaneseq
        %v7595 = vshrl.u32 %v7594, 7
        %v7596 = vsub.s32 0, %v7595
        %v7597 = vrot.slane %v7559, %v7596
        %v7598 = vlaneseq
        %v7599 = vshrl.u32 %v7598, 7
        %v7600 = vsub.s32 0, %v7599
        %v7601 = vrot.slane %v7573, %v7600
        %v7602 = vlaneseq
        %v7603 = vshrl.u32 %v7602, 7
        %v7604 = vsub.s32 0, %v7603
        %v7605 = vrot.slane %v7575, %v7604
        %v7606 = vlaneseq
        %v7607 = vshrl.u32 %v7606, 7
        %v7608 = vsub.s32 0, %v7607
        %v7609 = vrot.slane %v7577, %v7608
        %v7618 = vmul.f32 %v7305, %v7581
        %v7619 = vmul.f32 %v7306, %v7585
        %v7620 = vmul.f32 %v7307, %v7589
        %v7621 = vmul.f32 %v7308, %v7593
        %v7622 = vmul.f32 %v7309, %v7597
        %v7623 = vmul.f32 %v7310, %v7601
        %v7624 = vmul.f32 %v7311, %v7605
        %v7625 = vmul.f32 %v7312, %v7609
        %v7626 = vsel %vm480, %v7618, 0.0
        %7627 = vadd.xlane.f32.xlu0 %v7626
        %v7628 = vpop.xlane.xlu0 %7627
        %v7629 = vsel %vm480, %v7619, 0.0
        %7630 = vadd.xlane.f32.xlu0 %v7629
        %v7631 = vpop.xlane.xlu0 %7630
        %v7632 = vsel %vm480, %v7620, 0.0
        %7633 = vadd.xlane.f32.xlu0 %v7632
        %v7634 = vpop.xlane.xlu0 %7633
        %v7635 = vsel %vm480, %v7621, 0.0
        %7636 = vadd.xlane.f32.xlu0 %v7635
        %v7637 = vpop.xlane.xlu0 %7636
        %v7638 = vsel %vm480, %v7622, 0.0
        %7639 = vadd.xlane.f32.xlu0 %v7638
        %v7640 = vpop.xlane.xlu0 %7639
        %v7641 = vsel %vm480, %v7623, 0.0
        %7642 = vadd.xlane.f32.xlu0 %v7641
        %v7643 = vpop.xlane.xlu0 %7642
        %v7644 = vsel %vm480, %v7624, 0.0
        %7645 = vadd.xlane.f32.xlu0 %v7644
        %v7646 = vpop.xlane.xlu0 %7645
        %v7647 = vsel %vm480, %v7625, 0.0
        %7648 = vadd.xlane.f32.xlu0 %v7647
        %v7649 = vpop.xlane.xlu0 %7648
        %v7658 = vlaneseq
        %v7659 = vshrl.u32 %v7658, 7
        %v7660 = vsub.s32 %v743, %v7659
        %v7661 = vrot.slane %v7628, %v7660
        %v7662 = vlaneseq
        %v7663 = vshrl.u32 %v7662, 7
        %v7664 = vsub.s32 %v743, %v7663
        %v7665 = vrot.slane %v7631, %v7664
        %v7666 = vlaneseq
        %v7667 = vshrl.u32 %v7666, 7
        %v7668 = vsub.s32 %v743, %v7667
        %v7669 = vrot.slane %v7634, %v7668
        %v7670 = vlaneseq
        %v7671 = vshrl.u32 %v7670, 7
        %v7672 = vsub.s32 %v743, %v7671
        %v7673 = vrot.slane %v7637, %v7672
        %v7674 = vlaneseq
        %v7675 = vshrl.u32 %v7674, 7
        %v7676 = vsub.s32 %v743, %v7675
        %v7677 = vrot.slane %v7640, %v7676
        %v7678 = vlaneseq
        %v7679 = vshrl.u32 %v7678, 7
        %v7680 = vsub.s32 %v743, %v7679
        %v7681 = vrot.slane %v7643, %v7680
        %v7682 = vlaneseq
        %v7683 = vshrl.u32 %v7682, 7
        %v7684 = vsub.s32 %v743, %v7683
        %v7685 = vrot.slane %v7646, %v7684
        %v7686 = vlaneseq
        %v7687 = vshrl.u32 %v7686, 7
        %v7688 = vsub.s32 %v743, %v7687
        %v7689 = vrot.slane %v7649, %v7688
        %v7690 = vsel %vm776, %v7665, %v7661
        %v7691 = vsel %vm778, %v7669, %v7690
        %v7692 = vsel %vm780, %v7673, %v7691
        %v7693 = vsel %vm782, %v7677, %v7692
        %v7694 = vsel %vm784, %v7681, %v7693
        %v7695 = vsel %vm786, %v7685, %v7694
        %v7696 = vsel %vm788, %v7689, %v7695
        %v7698 = vsel %vm791, %v7696, -inf
        %7699 = vmax.xlane.f32.xlu0 %v7698
        %v7700 = vpop.xlane.xlu0 %7699
        %v7702 = vlaneseq
        %v7703 = vshrl.u32 %v7702, 7
        %v7704 = vsub.s32 0, %v7703
        %v7705 = vrot.slane %v7700, %v7704
        %v7706 = vlaneseq
        %v7707 = vshrl.u32 %v7706, 7
        %v7708 = vsub.s32 1, %v7707
        %v7709 = vrot.slane %v7700, %v7708
        %v7710 = vlaneseq
        %v7711 = vshrl.u32 %v7710, 7
        %v7712 = vsub.s32 2, %v7711
        %v7713 = vrot.slane %v7700, %v7712
        %v7714 = vlaneseq
        %v7715 = vshrl.u32 %v7714, 7
        %v7716 = vsub.s32 3, %v7715
        %v7717 = vrot.slane %v7700, %v7716
        %v7718 = vlaneseq
        %v7719 = vshrl.u32 %v7718, 7
        %v7720 = vsub.s32 4, %v7719
        %v7721 = vrot.slane %v7700, %v7720
        %v7722 = vlaneseq
        %v7723 = vshrl.u32 %v7722, 7
        %v7724 = vsub.s32 5, %v7723
        %v7725 = vrot.slane %v7700, %v7724
        %v7726 = vlaneseq
        %v7727 = vshrl.u32 %v7726, 7
        %v7728 = vsub.s32 6, %v7727
        %v7729 = vrot.slane %v7700, %v7728
        %v7730 = vlaneseq
        %v7731 = vshrl.u32 %v7730, 7
        %v7732 = vsub.s32 7, %v7731
        %v7733 = vrot.slane %v7700, %v7732
        %v7742 = vsub.f32 %v7628, %v7705
        %v7743 = vsub.f32 %v7631, %v7709
        %v7744 = vsub.f32 %v7634, %v7713
        %v7745 = vsub.f32 %v7637, %v7717
        %v7746 = vsub.f32 %v7640, %v7721
        %v7747 = vsub.f32 %v7643, %v7725
        %v7748 = vsub.f32 %v7646, %v7729
        %v7749 = vsub.f32 %v7649, %v7733
        %v7750 = vmul.f32 %v7742, 1.442695
        %v7751 = vpow.pop %v7750
        %v7752 = vmul.f32 %v7743, 1.442695
        %v7753 = vpow.pop %v7752
        %v7754 = vmul.f32 %v7744, 1.442695
        %v7755 = vpow.pop %v7754
        %v7756 = vmul.f32 %v7745, 1.442695
        %v7757 = vpow.pop %v7756
        %v7758 = vmul.f32 %v7746, 1.442695
        %v7759 = vpow.pop %v7758
        %v7760 = vmul.f32 %v7747, 1.442695
        %v7761 = vpow.pop %v7760
        %v7762 = vmul.f32 %v7748, 1.442695
        %v7763 = vpow.pop %v7762
        %v7764 = vmul.f32 %v7749, 1.442695
        %v7765 = vpow.pop %v7764
        %7774 = vset.pattern.permute.xlu0 0
        %7775 = vperm.xlu0 %7774, %v7751
        %v7776 = vpop.permute.xlu0 %7775
        %7777 = vset.pattern.permute.xlu0 0
        %7778 = vperm.xlu0 %7777, %v7753
        %v7779 = vpop.permute.xlu0 %7778
        %7780 = vset.pattern.permute.xlu0 0
        %7781 = vperm.xlu0 %7780, %v7755
        %v7782 = vpop.permute.xlu0 %7781
        %7783 = vset.pattern.permute.xlu0 0
        %7784 = vperm.xlu0 %7783, %v7757
        %v7785 = vpop.permute.xlu0 %7784
        %7786 = vset.pattern.permute.xlu0 0
        %7787 = vperm.xlu0 %7786, %v7759
        %v7788 = vpop.permute.xlu0 %7787
        %7789 = vset.pattern.permute.xlu0 0
        %7790 = vperm.xlu0 %7789, %v7761
        %v7791 = vpop.permute.xlu0 %7790
        %7792 = vset.pattern.permute.xlu0 0
        %7793 = vperm.xlu0 %7792, %v7763
        %v7794 = vpop.permute.xlu0 %7793
        %7795 = vset.pattern.permute.xlu0 0
        %7796 = vperm.xlu0 %7795, %v7765
        %v7797 = vpop.permute.xlu0 %7796
        %v7798 = vlaneseq
        %v7799 = vshrl.u32 %v7798, 7
        %v7800 = vsub.s32 %v743, %v7799
        %v7801 = vrot.slane %v7776, %v7800
        %v7802 = vlaneseq
        %v7803 = vshrl.u32 %v7802, 7
        %v7804 = vsub.s32 %v743, %v7803
        %v7805 = vrot.slane %v7779, %v7804
        %v7806 = vlaneseq
        %v7807 = vshrl.u32 %v7806, 7
        %v7808 = vsub.s32 %v743, %v7807
        %v7809 = vrot.slane %v7782, %v7808
        %v7810 = vlaneseq
        %v7811 = vshrl.u32 %v7810, 7
        %v7812 = vsub.s32 %v743, %v7811
        %v7813 = vrot.slane %v7785, %v7812
        %v7814 = vlaneseq
        %v7815 = vshrl.u32 %v7814, 7
        %v7816 = vsub.s32 %v743, %v7815
        %v7817 = vrot.slane %v7788, %v7816
        %v7818 = vlaneseq
        %v7819 = vshrl.u32 %v7818, 7
        %v7820 = vsub.s32 %v743, %v7819
        %v7821 = vrot.slane %v7791, %v7820
        %v7822 = vlaneseq
        %v7823 = vshrl.u32 %v7822, 7
        %v7824 = vsub.s32 %v743, %v7823
        %v7825 = vrot.slane %v7794, %v7824
        %v7826 = vlaneseq
        %v7827 = vshrl.u32 %v7826, 7
        %v7828 = vsub.s32 %v743, %v7827
        %v7829 = vrot.slane %v7797, %v7828
        %v7830 = vsel %vm776, %v7805, %v7801
        %v7831 = vsel %vm778, %v7809, %v7830
        %v7832 = vsel %vm780, %v7813, %v7831
        %v7833 = vsel %vm782, %v7817, %v7832
        %v7834 = vsel %vm784, %v7821, %v7833
        %v7835 = vsel %vm786, %v7825, %v7834
        %v7836 = vsel %vm788, %v7829, %v7835
        %v7838 = vsel %vm791, %v7836, 0.0
        %7839 = vadd.xlane.f32.xlu0 %v7838
        %v7840 = vpop.xlane.xlu0 %7839
        %v7841 = vrcp.pop %v7840
        %v7843 = vlaneseq
        %v7844 = vshrl.u32 %v7843, 7
        %v7845 = vsub.s32 0, %v7844
        %v7846 = vrot.slane %v7841, %v7845
        %v7847 = vlaneseq
        %v7848 = vshrl.u32 %v7847, 7
        %v7849 = vsub.s32 1, %v7848
        %v7850 = vrot.slane %v7841, %v7849
        %v7851 = vlaneseq
        %v7852 = vshrl.u32 %v7851, 7
        %v7853 = vsub.s32 2, %v7852
        %v7854 = vrot.slane %v7841, %v7853
        %v7855 = vlaneseq
        %v7856 = vshrl.u32 %v7855, 7
        %v7857 = vsub.s32 3, %v7856
        %v7858 = vrot.slane %v7841, %v7857
        %v7859 = vlaneseq
        %v7860 = vshrl.u32 %v7859, 7
        %v7861 = vsub.s32 4, %v7860
        %v7862 = vrot.slane %v7841, %v7861
        %v7863 = vlaneseq
        %v7864 = vshrl.u32 %v7863, 7
        %v7865 = vsub.s32 5, %v7864
        %v7866 = vrot.slane %v7841, %v7865
        %v7867 = vlaneseq
        %v7868 = vshrl.u32 %v7867, 7
        %v7869 = vsub.s32 6, %v7868
        %v7870 = vrot.slane %v7841, %v7869
        %v7871 = vlaneseq
        %v7872 = vshrl.u32 %v7871, 7
        %v7873 = vsub.s32 7, %v7872
        %v7874 = vrot.slane %v7841, %v7873
        %v7883 = vmul.f32 %v7751, %v7846
        %v7884 = vmul.f32 %v7753, %v7850
        %v7885 = vmul.f32 %v7755, %v7854
        %v7886 = vmul.f32 %v7757, %v7858
        %v7887 = vmul.f32 %v7759, %v7862
        %v7888 = vmul.f32 %v7761, %v7866
        %v7889 = vmul.f32 %v7763, %v7870
        %v7890 = vmul.f32 %v7765, %v7874
        %7891 = vrot.lane.b32.xlu0 %v7581, 112
        %v7892 = vpop.permute.xlu0 %7891
        %7893 = vrot.lane.b32.xlu0 %v7585, 112
        %v7894 = vpop.permute.xlu0 %7893
        %7895 = vrot.lane.b32.xlu0 %v7589, 112
        %v7896 = vpop.permute.xlu0 %7895
        %7897 = vrot.lane.b32.xlu0 %v7593, 112
        %v7898 = vpop.permute.xlu0 %7897
        %7899 = vrot.lane.b32.xlu0 %v7597, 112
        %v7900 = vpop.permute.xlu0 %7899
        %7901 = vrot.lane.b32.xlu0 %v7601, 112
        %v7902 = vpop.permute.xlu0 %7901
        %7903 = vrot.lane.b32.xlu0 %v7605, 112
        %v7904 = vpop.permute.xlu0 %7903
        %7905 = vrot.lane.b32.xlu0 %v7609, 112
        %v7906 = vpop.permute.xlu0 %7905
        %v7915 = vmul.f32 %v7305, %v7892
        %v7916 = vmul.f32 %v7306, %v7894
        %v7917 = vmul.f32 %v7307, %v7896
        %v7918 = vmul.f32 %v7308, %v7898
        %v7919 = vmul.f32 %v7309, %v7900
        %v7920 = vmul.f32 %v7310, %v7902
        %v7921 = vmul.f32 %v7311, %v7904
        %v7922 = vmul.f32 %v7312, %v7906
        %v7923 = vsel %vm480, %v7915, 0.0
        %7924 = vadd.xlane.f32.xlu0 %v7923
        %v7925 = vpop.xlane.xlu0 %7924
        %v7926 = vsel %vm480, %v7916, 0.0
        %7927 = vadd.xlane.f32.xlu0 %v7926
        %v7928 = vpop.xlane.xlu0 %7927
        %v7929 = vsel %vm480, %v7917, 0.0
        %7930 = vadd.xlane.f32.xlu0 %v7929
        %v7931 = vpop.xlane.xlu0 %7930
        %v7932 = vsel %vm480, %v7918, 0.0
        %7933 = vadd.xlane.f32.xlu0 %v7932
        %v7934 = vpop.xlane.xlu0 %7933
        %v7935 = vsel %vm480, %v7919, 0.0
        %7936 = vadd.xlane.f32.xlu0 %v7935
        %v7937 = vpop.xlane.xlu0 %7936
        %v7938 = vsel %vm480, %v7920, 0.0
        %7939 = vadd.xlane.f32.xlu0 %v7938
        %v7940 = vpop.xlane.xlu0 %7939
        %v7941 = vsel %vm480, %v7921, 0.0
        %7942 = vadd.xlane.f32.xlu0 %v7941
        %v7943 = vpop.xlane.xlu0 %7942
        %v7944 = vsel %vm480, %v7922, 0.0
        %7945 = vadd.xlane.f32.xlu0 %v7944
        %v7946 = vpop.xlane.xlu0 %7945
        %v7955 = vlaneseq
        %v7956 = vshrl.u32 %v7955, 7
        %v7957 = vsub.s32 %v743, %v7956
        %v7958 = vrot.slane %v7925, %v7957
        %v7959 = vlaneseq
        %v7960 = vshrl.u32 %v7959, 7
        %v7961 = vsub.s32 %v743, %v7960
        %v7962 = vrot.slane %v7928, %v7961
        %v7963 = vlaneseq
        %v7964 = vshrl.u32 %v7963, 7
        %v7965 = vsub.s32 %v743, %v7964
        %v7966 = vrot.slane %v7931, %v7965
        %v7967 = vlaneseq
        %v7968 = vshrl.u32 %v7967, 7
        %v7969 = vsub.s32 %v743, %v7968
        %v7970 = vrot.slane %v7934, %v7969
        %v7971 = vlaneseq
        %v7972 = vshrl.u32 %v7971, 7
        %v7973 = vsub.s32 %v743, %v7972
        %v7974 = vrot.slane %v7937, %v7973
        %v7975 = vlaneseq
        %v7976 = vshrl.u32 %v7975, 7
        %v7977 = vsub.s32 %v743, %v7976
        %v7978 = vrot.slane %v7940, %v7977
        %v7979 = vlaneseq
        %v7980 = vshrl.u32 %v7979, 7
        %v7981 = vsub.s32 %v743, %v7980
        %v7982 = vrot.slane %v7943, %v7981
        %v7983 = vlaneseq
        %v7984 = vshrl.u32 %v7983, 7
        %v7985 = vsub.s32 %v743, %v7984
        %v7986 = vrot.slane %v7946, %v7985
        %v7987 = vsel %vm776, %v7962, %v7958
        %v7988 = vsel %vm778, %v7966, %v7987
        %v7989 = vsel %vm780, %v7970, %v7988
        %v7990 = vsel %vm782, %v7974, %v7989
        %v7991 = vsel %vm784, %v7978, %v7990
        %v7992 = vsel %vm786, %v7982, %v7991
        %v7993 = vsel %vm788, %v7986, %v7992
        %v7995 = vsel %vm791, %v7993, -inf
        %7996 = vmax.xlane.f32.xlu0 %v7995
        %v7997 = vpop.xlane.xlu0 %7996
        %v7999 = vlaneseq
        %v8000 = vshrl.u32 %v7999, 7
        %v8001 = vsub.s32 0, %v8000
        %v8002 = vrot.slane %v7997, %v8001
        %v8003 = vlaneseq
        %v8004 = vshrl.u32 %v8003, 7
        %v8005 = vsub.s32 1, %v8004
        %v8006 = vrot.slane %v7997, %v8005
        %v8007 = vlaneseq
        %v8008 = vshrl.u32 %v8007, 7
        %v8009 = vsub.s32 2, %v8008
        %v8010 = vrot.slane %v7997, %v8009
        %v8011 = vlaneseq
        %v8012 = vshrl.u32 %v8011, 7
        %v8013 = vsub.s32 3, %v8012
        %v8014 = vrot.slane %v7997, %v8013
        %v8015 = vlaneseq
        %v8016 = vshrl.u32 %v8015, 7
        %v8017 = vsub.s32 4, %v8016
        %v8018 = vrot.slane %v7997, %v8017
        %v8019 = vlaneseq
        %v8020 = vshrl.u32 %v8019, 7
        %v8021 = vsub.s32 5, %v8020
        %v8022 = vrot.slane %v7997, %v8021
        %v8023 = vlaneseq
        %v8024 = vshrl.u32 %v8023, 7
        %v8025 = vsub.s32 6, %v8024
        %v8026 = vrot.slane %v7997, %v8025
        %v8027 = vlaneseq
        %v8028 = vshrl.u32 %v8027, 7
        %v8029 = vsub.s32 7, %v8028
        %v8030 = vrot.slane %v7997, %v8029
        %v8039 = vsub.f32 %v7925, %v8002
        %v8040 = vsub.f32 %v7928, %v8006
        %v8041 = vsub.f32 %v7931, %v8010
        %v8042 = vsub.f32 %v7934, %v8014
        %v8043 = vsub.f32 %v7937, %v8018
        %v8044 = vsub.f32 %v7940, %v8022
        %v8045 = vsub.f32 %v7943, %v8026
        %v8046 = vsub.f32 %v7946, %v8030
        %v8047 = vmul.f32 %v8039, 1.442695
        %v8048 = vpow.pop %v8047
        %v8049 = vmul.f32 %v8040, 1.442695
        %v8050 = vpow.pop %v8049
        %v8051 = vmul.f32 %v8041, 1.442695
        %v8052 = vpow.pop %v8051
        %v8053 = vmul.f32 %v8042, 1.442695
        %v8054 = vpow.pop %v8053
        %v8055 = vmul.f32 %v8043, 1.442695
        %v8056 = vpow.pop %v8055
        %v8057 = vmul.f32 %v8044, 1.442695
        %v8058 = vpow.pop %v8057
        %v8059 = vmul.f32 %v8045, 1.442695
        %v8060 = vpow.pop %v8059
        %v8061 = vmul.f32 %v8046, 1.442695
        %v8062 = vpow.pop %v8061
        %8071 = vset.pattern.permute.xlu0 0
        %8072 = vperm.xlu0 %8071, %v8048
        %v8073 = vpop.permute.xlu0 %8072
        %8074 = vset.pattern.permute.xlu0 0
        %8075 = vperm.xlu0 %8074, %v8050
        %v8076 = vpop.permute.xlu0 %8075
        %8077 = vset.pattern.permute.xlu0 0
        %8078 = vperm.xlu0 %8077, %v8052
        %v8079 = vpop.permute.xlu0 %8078
        %8080 = vset.pattern.permute.xlu0 0
        %8081 = vperm.xlu0 %8080, %v8054
        %v8082 = vpop.permute.xlu0 %8081
        %8083 = vset.pattern.permute.xlu0 0
        %8084 = vperm.xlu0 %8083, %v8056
        %v8085 = vpop.permute.xlu0 %8084
        %8086 = vset.pattern.permute.xlu0 0
        %8087 = vperm.xlu0 %8086, %v8058
        %v8088 = vpop.permute.xlu0 %8087
        %8089 = vset.pattern.permute.xlu0 0
        %8090 = vperm.xlu0 %8089, %v8060
        %v8091 = vpop.permute.xlu0 %8090
        %8092 = vset.pattern.permute.xlu0 0
        %8093 = vperm.xlu0 %8092, %v8062
        %v8094 = vpop.permute.xlu0 %8093
        %v8095 = vlaneseq
        %v8096 = vshrl.u32 %v8095, 7
        %v8097 = vsub.s32 %v743, %v8096
        %v8098 = vrot.slane %v8073, %v8097
        %v8099 = vlaneseq
        %v8100 = vshrl.u32 %v8099, 7
        %v8101 = vsub.s32 %v743, %v8100
        %v8102 = vrot.slane %v8076, %v8101
        %v8103 = vlaneseq
        %v8104 = vshrl.u32 %v8103, 7
        %v8105 = vsub.s32 %v743, %v8104
        %v8106 = vrot.slane %v8079, %v8105
        %v8107 = vlaneseq
        %v8108 = vshrl.u32 %v8107, 7
        %v8109 = vsub.s32 %v743, %v8108
        %v8110 = vrot.slane %v8082, %v8109
        %v8111 = vlaneseq
        %v8112 = vshrl.u32 %v8111, 7
        %v8113 = vsub.s32 %v743, %v8112
        %v8114 = vrot.slane %v8085, %v8113
        %v8115 = vlaneseq
        %v8116 = vshrl.u32 %v8115, 7
        %v8117 = vsub.s32 %v743, %v8116
        %v8118 = vrot.slane %v8088, %v8117
        %v8119 = vlaneseq
        %v8120 = vshrl.u32 %v8119, 7
        %v8121 = vsub.s32 %v743, %v8120
        %v8122 = vrot.slane %v8091, %v8121
        %v8123 = vlaneseq
        %v8124 = vshrl.u32 %v8123, 7
        %v8125 = vsub.s32 %v743, %v8124
        %v8126 = vrot.slane %v8094, %v8125
        %v8127 = vsel %vm776, %v8102, %v8098
        %v8128 = vsel %vm778, %v8106, %v8127
        %v8129 = vsel %vm780, %v8110, %v8128
        %v8130 = vsel %vm782, %v8114, %v8129
        %v8131 = vsel %vm784, %v8118, %v8130
        %v8132 = vsel %vm786, %v8122, %v8131
        %v8133 = vsel %vm788, %v8126, %v8132
        %v8135 = vsel %vm791, %v8133, 0.0
        %8136 = vadd.xlane.f32.xlu0 %v8135
        %v8137 = vpop.xlane.xlu0 %8136
        %v8138 = vrcp.pop %v8137
        %v8140 = vlaneseq
        %v8141 = vshrl.u32 %v8140, 7
        %v8142 = vsub.s32 0, %v8141
        %v8143 = vrot.slane %v8138, %v8142
        %v8144 = vlaneseq
        %v8145 = vshrl.u32 %v8144, 7
        %v8146 = vsub.s32 1, %v8145
        %v8147 = vrot.slane %v8138, %v8146
        %v8148 = vlaneseq
        %v8149 = vshrl.u32 %v8148, 7
        %v8150 = vsub.s32 2, %v8149
        %v8151 = vrot.slane %v8138, %v8150
        %v8152 = vlaneseq
        %v8153 = vshrl.u32 %v8152, 7
        %v8154 = vsub.s32 3, %v8153
        %v8155 = vrot.slane %v8138, %v8154
        %v8156 = vlaneseq
        %v8157 = vshrl.u32 %v8156, 7
        %v8158 = vsub.s32 4, %v8157
        %v8159 = vrot.slane %v8138, %v8158
        %v8160 = vlaneseq
        %v8161 = vshrl.u32 %v8160, 7
        %v8162 = vsub.s32 5, %v8161
        %v8163 = vrot.slane %v8138, %v8162
        %v8164 = vlaneseq
        %v8165 = vshrl.u32 %v8164, 7
        %v8166 = vsub.s32 6, %v8165
        %v8167 = vrot.slane %v8138, %v8166
        %v8168 = vlaneseq
        %v8169 = vshrl.u32 %v8168, 7
        %v8170 = vsub.s32 7, %v8169
        %v8171 = vrot.slane %v8138, %v8170
        %v8180 = vmul.f32 %v8048, %v8143
        %v8181 = vmul.f32 %v8050, %v8147
        %v8182 = vmul.f32 %v8052, %v8151
        %v8183 = vmul.f32 %v8054, %v8155
        %v8184 = vmul.f32 %v8056, %v8159
        %v8185 = vmul.f32 %v8058, %v8163
        %v8186 = vmul.f32 %v8060, %v8167
        %v8187 = vmul.f32 %v8062, %v8171
        %8189 = vset.pattern.permute.xlu0 0
        %8190 = vperm.xlu0 %8189, %v7883
        %v8191 = vpop.permute.xlu0 %8190
        %8194 = vset.pattern.permute.xlu0 0
        %8195 = vperm.xlu0 %8194, %v7884
        %v8196 = vpop.permute.xlu0 %8195
        %8199 = vset.pattern.permute.xlu0 0
        %8200 = vperm.xlu0 %8199, %v7885
        %v8201 = vpop.permute.xlu0 %8200
        %8204 = vset.pattern.permute.xlu0 0
        %8205 = vperm.xlu0 %8204, %v7886
        %v8206 = vpop.permute.xlu0 %8205
        %8209 = vset.pattern.permute.xlu0 0
        %8210 = vperm.xlu0 %8209, %v7887
        %v8211 = vpop.permute.xlu0 %8210
        %8214 = vset.pattern.permute.xlu0 0
        %8215 = vperm.xlu0 %8214, %v7888
        %v8216 = vpop.permute.xlu0 %8215
        %8219 = vset.pattern.permute.xlu0 0
        %8220 = vperm.xlu0 %8219, %v7889
        %v8221 = vpop.permute.xlu0 %8220
        %8224 = vset.pattern.permute.xlu0 0
        %8225 = vperm.xlu0 %8224, %v7890
        %v8226 = vpop.permute.xlu0 %8225
        %v8228 = vmul.f32 %v8191, %v7305
        %v8229 = vmul.f32 %v8196, %v7306
        %v8230 = vmul.f32 %v8201, %v7307
        %v8231 = vmul.f32 %v8206, %v7308
        %v8232 = vmul.f32 %v8211, %v7309
        %v8233 = vmul.f32 %v8216, %v7310
        %v8234 = vmul.f32 %v8221, %v7311
        %v8235 = vmul.f32 %v8226, %v7312
        %v8236 = vsel %vm480, %v8228, 0.0
        %v8237 = vrot.slane %v8236, 4
        %v8238 = vadd.f32 %v8236, %v8237
        %v8239 = vrot.slane %v8238, 2
        %v8240 = vadd.f32 %v8238, %v8239
        %v8241 = vrot.slane %v8240, 1
        %v8242 = vadd.f32 %v8240, %v8241
        %v8243 = vsel %vm480, %v8229, 0.0
        %v8244 = vrot.slane %v8243, 4
        %v8245 = vadd.f32 %v8243, %v8244
        %v8246 = vrot.slane %v8245, 2
        %v8247 = vadd.f32 %v8245, %v8246
        %v8248 = vrot.slane %v8247, 1
        %v8249 = vadd.f32 %v8247, %v8248
        %v8250 = vsel %vm480, %v8230, 0.0
        %v8251 = vrot.slane %v8250, 4
        %v8252 = vadd.f32 %v8250, %v8251
        %v8253 = vrot.slane %v8252, 2
        %v8254 = vadd.f32 %v8252, %v8253
        %v8255 = vrot.slane %v8254, 1
        %v8256 = vadd.f32 %v8254, %v8255
        %v8257 = vsel %vm480, %v8231, 0.0
        %v8258 = vrot.slane %v8257, 4
        %v8259 = vadd.f32 %v8257, %v8258
        %v8260 = vrot.slane %v8259, 2
        %v8261 = vadd.f32 %v8259, %v8260
        %v8262 = vrot.slane %v8261, 1
        %v8263 = vadd.f32 %v8261, %v8262
        %v8264 = vsel %vm480, %v8232, 0.0
        %v8265 = vrot.slane %v8264, 4
        %v8266 = vadd.f32 %v8264, %v8265
        %v8267 = vrot.slane %v8266, 2
        %v8268 = vadd.f32 %v8266, %v8267
        %v8269 = vrot.slane %v8268, 1
        %v8270 = vadd.f32 %v8268, %v8269
        %v8271 = vsel %vm480, %v8233, 0.0
        %v8272 = vrot.slane %v8271, 4
        %v8273 = vadd.f32 %v8271, %v8272
        %v8274 = vrot.slane %v8273, 2
        %v8275 = vadd.f32 %v8273, %v8274
        %v8276 = vrot.slane %v8275, 1
        %v8277 = vadd.f32 %v8275, %v8276
        %v8278 = vsel %vm480, %v8234, 0.0
        %v8279 = vrot.slane %v8278, 4
        %v8280 = vadd.f32 %v8278, %v8279
        %v8281 = vrot.slane %v8280, 2
        %v8282 = vadd.f32 %v8280, %v8281
        %v8283 = vrot.slane %v8282, 1
        %v8284 = vadd.f32 %v8282, %v8283
        %v8285 = vsel %vm480, %v8235, 0.0
        %v8286 = vrot.slane %v8285, 4
        %v8287 = vadd.f32 %v8285, %v8286
        %v8288 = vrot.slane %v8287, 2
        %v8289 = vadd.f32 %v8287, %v8288
        %v8290 = vrot.slane %v8289, 1
        %v8291 = vadd.f32 %v8289, %v8290
        %v8293 = vcombine.high %v7339, %v7339
        %v8295 = vunpack.c.l.s4 1966171168
        %v8296 = vunpack.c.0.s8 %v8295
        %v8297 = vlaneseq
        %v8298 = vshrl.u32 %v8297, 7
        %v8299 = vsub.s32 %v8296, %v8298
        %v8300 = vrot.slane %v7339, %v8299
        %v8302 = vunpack.c.l.s4 1966171168
        %v8303 = vunpack.c.0.s8 %v8302
        %v8304 = vlaneseq
        %v8305 = vshrl.u32 %v8304, 7
        %v8306 = vsub.s32 %v8303, %v8305
        %v8307 = vrot.slane %v8293, %v8306
        %v8308 = vcombine.high %v8300, %v8300
        %v8309 = vcombine.high %v8307, %v8307
        %v8311 = vunpack.c.l.s4 1966171168
        %v8312 = vunpack.c.0.s8 %v8311
        %v8313 = vlaneseq
        %v8314 = vshrl.u32 %v8313, 7
        %v8315 = vsub.s32 %v8312, %v8314
        %v8316 = vrot.slane %v8300, %v8315
        %v8318 = vunpack.c.l.s4 1966171168
        %v8319 = vunpack.c.0.s8 %v8318
        %v8320 = vlaneseq
        %v8321 = vshrl.u32 %v8320, 7
        %v8322 = vsub.s32 %v8319, %v8321
        %v8323 = vrot.slane %v8307, %v8322
        %v8325 = vunpack.c.l.s4 1966171168
        %v8326 = vunpack.c.0.s8 %v8325
        %v8327 = vlaneseq
        %v8328 = vshrl.u32 %v8327, 7
        %v8329 = vsub.s32 %v8326, %v8328
        %v8330 = vrot.slane %v8308, %v8329
        %v8332 = vunpack.c.l.s4 1966171168
        %v8333 = vunpack.c.0.s8 %v8332
        %v8334 = vlaneseq
        %v8335 = vshrl.u32 %v8334, 7
        %v8336 = vsub.s32 %v8333, %v8335
        %v8337 = vrot.slane %v8309, %v8336
        %v8338 = vcombine.high %v8316, %v8316
        %v8339 = vcombine.high %v8323, %v8323
        %v8340 = vcombine.high %v8330, %v8330
        %v8341 = vcombine.high %v8337, %v8337
        %8343 = vset.pattern.permute.xlu0 0
        %8344 = vperm.xlu0 %8343, %v8180
        %v8345 = vpop.permute.xlu0 %8344
        %8348 = vset.pattern.permute.xlu0 0
        %8349 = vperm.xlu0 %8348, %v8181
        %v8350 = vpop.permute.xlu0 %8349
        %8353 = vset.pattern.permute.xlu0 0
        %8354 = vperm.xlu0 %8353, %v8182
        %v8355 = vpop.permute.xlu0 %8354
        %8358 = vset.pattern.permute.xlu0 0
        %8359 = vperm.xlu0 %8358, %v8183
        %v8360 = vpop.permute.xlu0 %8359
        %8363 = vset.pattern.permute.xlu0 0
        %8364 = vperm.xlu0 %8363, %v8184
        %v8365 = vpop.permute.xlu0 %8364
        %8368 = vset.pattern.permute.xlu0 0
        %8369 = vperm.xlu0 %8368, %v8185
        %v8370 = vpop.permute.xlu0 %8369
        %8373 = vset.pattern.permute.xlu0 0
        %8374 = vperm.xlu0 %8373, %v8186
        %v8375 = vpop.permute.xlu0 %8374
        %8378 = vset.pattern.permute.xlu0 0
        %8379 = vperm.xlu0 %8378, %v8187
        %v8380 = vpop.permute.xlu0 %8379
        %v8382 = vlaneseq
        %v8383 = vshrl.u32 %v8382, 7
        %v8384 = vsub.s32 0, %v8383
        %v8385 = vrot.slane %v8316, %v8384
        %v8386 = vlaneseq
        %v8387 = vshrl.u32 %v8386, 7
        %v8388 = vsub.s32 0, %v8387
        %v8389 = vrot.slane %v8330, %v8388
        %v8390 = vlaneseq
        %v8391 = vshrl.u32 %v8390, 7
        %v8392 = vsub.s32 0, %v8391
        %v8393 = vrot.slane %v8338, %v8392
        %v8394 = vlaneseq
        %v8395 = vshrl.u32 %v8394, 7
        %v8396 = vsub.s32 0, %v8395
        %v8397 = vrot.slane %v8340, %v8396
        %v8398 = vlaneseq
        %v8399 = vshrl.u32 %v8398, 7
        %v8400 = vsub.s32 0, %v8399
        %v8401 = vrot.slane %v8323, %v8400
        %v8402 = vlaneseq
        %v8403 = vshrl.u32 %v8402, 7
        %v8404 = vsub.s32 0, %v8403
        %v8405 = vrot.slane %v8337, %v8404
        %v8406 = vlaneseq
        %v8407 = vshrl.u32 %v8406, 7
        %v8408 = vsub.s32 0, %v8407
        %v8409 = vrot.slane %v8339, %v8408
        %v8410 = vlaneseq
        %v8411 = vshrl.u32 %v8410, 7
        %v8412 = vsub.s32 0, %v8411
        %v8413 = vrot.slane %v8341, %v8412
        %v8422 = vmul.f32 %v8345, %v8385
        %v8423 = vmul.f32 %v8350, %v8389
        %v8424 = vmul.f32 %v8355, %v8393
        %v8425 = vmul.f32 %v8360, %v8397
        %v8426 = vmul.f32 %v8365, %v8401
        %v8427 = vmul.f32 %v8370, %v8405
        %v8428 = vmul.f32 %v8375, %v8409
        %v8429 = vmul.f32 %v8380, %v8413
        %8438 = vrot.lane.b32.xlu0 %v8422, 32
        %v8439 = vpop.permute.xlu0 %8438
        %8440 = vrot.lane.b32.xlu0 %v8423, 32
        %v8441 = vpop.permute.xlu0 %8440
        %8442 = vrot.lane.b32.xlu0 %v8424, 32
        %v8443 = vpop.permute.xlu0 %8442
        %8444 = vrot.lane.b32.xlu0 %v8425, 32
        %v8445 = vpop.permute.xlu0 %8444
        %8446 = vrot.lane.b32.xlu0 %v8426, 32
        %v8447 = vpop.permute.xlu0 %8446
        %8448 = vrot.lane.b32.xlu0 %v8427, 32
        %v8449 = vpop.permute.xlu0 %8448
        %8450 = vrot.lane.b32.xlu0 %v8428, 32
        %v8451 = vpop.permute.xlu0 %8450
        %8452 = vrot.lane.b32.xlu0 %v8429, 32
        %v8453 = vpop.permute.xlu0 %8452
        %v8462 = vadd.f32 %v7305, %v8439
        %v8463 = vadd.f32 %v7306, %v8441
        %v8464 = vadd.f32 %v7307, %v8443
        %v8465 = vadd.f32 %v7308, %v8445
        %v8466 = vadd.f32 %v7309, %v8447
        %v8467 = vadd.f32 %v7310, %v8449
        %v8468 = vadd.f32 %v7311, %v8451
        %v8469 = vadd.f32 %v7312, %v8453
        %8471 = vrot.lane.b32.xlu0 %v7480, 96
        %v8472 = vpop.permute.xlu0 %8471
        %8474 = vst.msk [vmem:[%s368 + $0x8] sm:$0xff] %vm3848, %v8472
        %v8483 = vsel %vm776, %v8249, %v8242
        %v8484 = vsel %vm778, %v8256, %v8483
        %v8485 = vsel %vm780, %v8263, %v8484
        %v8486 = vsel %vm782, %v8270, %v8485
        %v8487 = vsel %vm784, %v8277, %v8486
        %v8488 = vsel %vm786, %v8284, %v8487
        %v8489 = vsel %vm788, %v8291, %v8488
        %8490 = vrot.lane.b32.xlu0 %v8489, 96
        %v8491 = vpop.permute.xlu0 %8490
        %vm8493 = vcmask 917248
        %8494 = vst.msk [vmem:[%s368 + $0x10] sm:$0xff] %vm8493, %v8491
        %v8495 = vld [vmem:[%s322 + $0x38] sm:$0xff]
        %v8496 = vld [vmem:[%s322 + $0x40] sm:$0xff]
        %8497 = vmatprep.subr.bf16.mxu0 0
        %8498 = vmatpush1.bf16.msra.mxu0 %v424
        %8499 = vmatprep.subr.bf16.mxu0 0
        %8500 = vmatpush1.bf16.msra.mxu0 %v425
        %8501 = vmatprep.subr.bf16.mxu0 0
        %8502 = vmatpush1.bf16.msra.mxu0 0
        %8503 = vmatprep.subr.bf16.mxu0 0
        %8504 = vmatpush1.bf16.msra.mxu0 0
        %8505 = vmatprep.subr.bf16.mxu0 0
        %8506 = vmatpush1.bf16.msra.mxu0 0
        %8507 = vmatprep.subr.bf16.mxu0 0
        %8508 = vmatpush1.bf16.msra.mxu0 0
        %8509 = vmatprep.subr.bf16.mxu0 0
        %8510 = vmatpush1.bf16.msra.mxu0 0
        %8511 = vmatprep.subr.bf16.mxu0 0
        %8512 = vmatpush1.bf16.msra.mxu0 0
        %8513 = vmatprep.subr.bf16.mxu0 0
        %8514 = vmatpush1.bf16.msra.mxu0 0
        %8515 = vmatprep.subr.bf16.mxu0 0
        %8516 = vmatpush1.bf16.msra.mxu0 0
        %8517 = vmatprep.subr.bf16.mxu0 0
        %8518 = vmatpush1.bf16.msra.mxu0 0
        %8519 = vmatprep.subr.bf16.mxu0 0
        %8520 = vmatpush1.bf16.msra.mxu0 0
        %8521 = vmatprep.subr.bf16.mxu0 0
        %8522 = vmatpush1.bf16.msra.mxu0 0
        %8523 = vmatprep.subr.bf16.mxu0 0
        %8524 = vmatpush1.bf16.msra.mxu0 0
        %8525 = vmatprep.subr.bf16.mxu0 0
        %8526 = vmatpush1.bf16.msra.mxu0 0
        %8527 = vmatprep.subr.bf16.mxu0 0
        %8528 = vmatpush1.bf16.msra.mxu0 0
        %8529 = vmatprep.mubr.bf16.mxu0 0
        %8530 = vmatmul.mubr.bf16.gmra.mrb[0].mxu0 %v7486
        %v8531 = vpop.f32.mrb[0].mxu0
        %v8532 = vadd.f32 0.0, %v8531
        %v8533 = vpop.f32.mrb[0].mxu0
        %v8534 = vpop.f32.mrb[0].mxu0
        %v8535 = vpop.f32.mrb[0].mxu0
        %8536 = vdwg.mxu0
        %v8537 = vadd.f32 %v8495, %v8532
        %v8538 = vpack.c.bf16 %v8242, %v8242
        %v8539 = vpack.c.bf16 %v8249, %v8249
        %v8540 = vpack.c.bf16 %v8256, %v8256
        %v8541 = vpack.c.bf16 %v8263, %v8263
        %v8542 = vpack.c.bf16 %v8270, %v8270
        %v8543 = vpack.c.bf16 %v8277, %v8277
        %v8544 = vpack.c.bf16 %v8284, %v8284
        %v8545 = vpack.c.bf16 %v8291, %v8291
        %v8554 = vunpack.c.l.b16 %v8538
        %v8555 = vunpack.c.l.b16 %v8539
        %v8556 = vunpack.c.l.b16 %v8540
        %v8557 = vunpack.c.l.b16 %v8541
        %v8558 = vunpack.c.l.b16 %v8542
        %v8559 = vunpack.c.l.b16 %v8543
        %v8560 = vunpack.c.l.b16 %v8544
        %v8561 = vunpack.c.l.b16 %v8545
        %v8562 = vsel %vm776, %v8555, %v8554
        %v8563 = vsel %vm778, %v8556, %v8562
        %v8564 = vsel %vm780, %v8557, %v8563
        %v8565 = vsel %vm782, %v8558, %v8564
        %v8566 = vsel %vm784, %v8559, %v8565
        %v8567 = vsel %vm786, %v8560, %v8566
        %v8568 = vsel %vm788, %v8561, %v8567
        %v8569 = vpack.c.b16 %v8568, %v8568
        %v8571 = vsel %vm480, %v8569, 0
        %8573 = vmatprep.subr.bf16.mxu0 0
        %8574 = vmatpush1.bf16.msra.mxu0 %v478
        %8575 = vmatprep.subr.bf16.mxu0 0
        %8576 = vmatpush1.bf16.msra.mxu0 0
        %8577 = vmatprep.subr.bf16.mxu0 0
        %8578 = vmatpush1.bf16.msra.mxu0 0
        %8579 = vmatprep.subr.bf16.mxu0 0
        %8580 = vmatpush1.bf16.msra.mxu0 0
        %8581 = vmatprep.subr.bf16.mxu0 0
        %8582 = vmatpush1.bf16.msra.mxu0 0
        %8583 = vmatprep.subr.bf16.mxu0 0
        %8584 = vmatpush1.bf16.msra.mxu0 0
        %8585 = vmatprep.subr.bf16.mxu0 0
        %8586 = vmatpush1.bf16.msra.mxu0 0
        %8587 = vmatprep.subr.bf16.mxu0 0
        %8588 = vmatpush1.bf16.msra.mxu0 0
        %8589 = vmatprep.subr.bf16.mxu0 0
        %8590 = vmatpush1.bf16.msra.mxu0 0
        %8591 = vmatprep.subr.bf16.mxu0 0
        %8592 = vmatpush1.bf16.msra.mxu0 0
        %8593 = vmatprep.subr.bf16.mxu0 0
        %8594 = vmatpush1.bf16.msra.mxu0 0
        %8595 = vmatprep.subr.bf16.mxu0 0
        %8596 = vmatpush1.bf16.msra.mxu0 0
        %8597 = vmatprep.subr.bf16.mxu0 0
        %8598 = vmatpush1.bf16.msra.mxu0 0
        %8599 = vmatprep.subr.bf16.mxu0 0
        %8600 = vmatpush1.bf16.msra.mxu0 0
        %8601 = vmatprep.subr.bf16.mxu0 0
        %8602 = vmatpush1.bf16.msra.mxu0 0
        %8603 = vmatprep.subr.bf16.mxu0 0
        %8604 = vmatpush1.bf16.msra.mxu0 0
        %8605 = vmatprep.mubr.bf16.mxu0 0
        %8606 = vmatmul.mubr.bf16.gmra.mrb[0].mxu0 %v8571
        %v8607 = vpop.f32.mrb[0].mxu0
        %v8608 = vadd.f32 0.0, %v8607
        %v8609 = vpop.f32.mrb[0].mxu0
        %v8610 = vpop.f32.mrb[0].mxu0
        %v8611 = vpop.f32.mrb[0].mxu0
        %8612 = vdwg.mxu0
        %v8613 = vadd.f32 %v8537, %v8608
        %v8614 = vxor.u32 %v8613, 2147483648
        %v8615 = vmul.f32 %v8614, 1.442695
        %v8616 = vpow.pop %v8615
        %v8617 = vadd.f32 %v8616, 1.0
        %v8618 = vrcp.pop %v8617
        %v8619 = vmul.f32 1.0, %v8618
        %v8620 = vtanh.pop %v8613
        %v8621 = vmul.f32 %v8619, %v7474
        %8623 = vrot.lane.b32.xlu0 %v8620, 64
        %v8624 = vpop.permute.xlu0 %8623
        %v8626 = vmul.f32 %v8619, %v8624
        %8628 = vrot.lane.b32.xlu0 %v8626, 32
        %v8629 = vpop.permute.xlu0 %8628
        %v8631 = vadd.f32 %v8621, %v8629
        %v8632 = vtanh.pop %v8631
        %8634 = vrot.lane.b32.xlu0 %v8632, 64
        %v8635 = vpop.permute.xlu0 %8634
        %v8637 = vmul.f32 %v8619, %v8635
        %v8638 = vpack.c.bf16 %v8637, %v8637
        %8640 = vrot.lane.b32.xlu0 %v8638, 32
        %v8641 = vpop.permute.xlu0 %8640
        %v8643 = vsel %vm428, %v8641, 0
        %8645 = vmatprep.subr.bf16.mxu0 0
        %8646 = vmatpush1.bf16.msra.mxu0 %v565
        %8647 = vmatprep.subr.bf16.mxu0 0
        %8648 = vmatpush1.bf16.msra.mxu0 %v566
        %8649 = vmatprep.subr.bf16.mxu0 0
        %8650 = vmatpush1.bf16.msra.mxu0 0
        %8651 = vmatprep.subr.bf16.mxu0 0
        %8652 = vmatpush1.bf16.msra.mxu0 0
        %8653 = vmatprep.subr.bf16.mxu0 0
        %8654 = vmatpush1.bf16.msra.mxu0 0
        %8655 = vmatprep.subr.bf16.mxu0 0
        %8656 = vmatpush1.bf16.msra.mxu0 0
        %8657 = vmatprep.subr.bf16.mxu0 0
        %8658 = vmatpush1.bf16.msra.mxu0 0
        %8659 = vmatprep.subr.bf16.mxu0 0
        %8660 = vmatpush1.bf16.msra.mxu0 0
        %8661 = vmatprep.subr.bf16.mxu0 0
        %8662 = vmatpush1.bf16.msra.mxu0 0
        %8663 = vmatprep.subr.bf16.mxu0 0
        %8664 = vmatpush1.bf16.msra.mxu0 0
        %8665 = vmatprep.subr.bf16.mxu0 0
        %8666 = vmatpush1.bf16.msra.mxu0 0
        %8667 = vmatprep.subr.bf16.mxu0 0
        %8668 = vmatpush1.bf16.msra.mxu0 0
        %8669 = vmatprep.subr.bf16.mxu0 0
        %8670 = vmatpush1.bf16.msra.mxu0 0
        %8671 = vmatprep.subr.bf16.mxu0 0
        %8672 = vmatpush1.bf16.msra.mxu0 0
        %8673 = vmatprep.subr.bf16.mxu0 0
        %8674 = vmatpush1.bf16.msra.mxu0 0
        %8675 = vmatprep.subr.bf16.mxu0 0
        %8676 = vmatpush1.bf16.msra.mxu0 0
        %8677 = vmatprep.mubr.bf16.mxu0 0
        %8678 = vmatmul.mubr.bf16.gmra.mrb[0].mxu0 %v8643
        %v8679 = vpop.f32.mrb[0].mxu0
        %v8680 = vadd.f32 0.0, %v8679
        %v8681 = vpop.f32.mrb[0].mxu0
        %v8682 = vpop.f32.mrb[0].mxu0
        %v8683 = vpop.f32.mrb[0].mxu0
        %8684 = vdwg.mxu0
        %v8686 = vcombine.high %v8680, %v8680
        %v8688 = vunpack.c.l.s4 1966171168
        %v8689 = vunpack.c.0.s8 %v8688
        %v8690 = vlaneseq
        %v8691 = vshrl.u32 %v8690, 7
        %v8692 = vsub.s32 %v8689, %v8691
        %v8693 = vrot.slane %v8680, %v8692
        %v8695 = vunpack.c.l.s4 1966171168
        %v8696 = vunpack.c.0.s8 %v8695
        %v8697 = vlaneseq
        %v8698 = vshrl.u32 %v8697, 7
        %v8699 = vsub.s32 %v8696, %v8698
        %v8700 = vrot.slane %v8686, %v8699
        %v8701 = vcombine.high %v8693, %v8693
        %v8702 = vcombine.high %v8700, %v8700
        %v8704 = vunpack.c.l.s4 1966171168
        %v8705 = vunpack.c.0.s8 %v8704
        %v8706 = vlaneseq
        %v8707 = vshrl.u32 %v8706, 7
        %v8708 = vsub.s32 %v8705, %v8707
        %v8709 = vrot.slane %v8693, %v8708
        %v8711 = vunpack.c.l.s4 1966171168
        %v8712 = vunpack.c.0.s8 %v8711
        %v8713 = vlaneseq
        %v8714 = vshrl.u32 %v8713, 7
        %v8715 = vsub.s32 %v8712, %v8714
        %v8716 = vrot.slane %v8700, %v8715
        %v8718 = vunpack.c.l.s4 1966171168
        %v8719 = vunpack.c.0.s8 %v8718
        %v8720 = vlaneseq
        %v8721 = vshrl.u32 %v8720, 7
        %v8722 = vsub.s32 %v8719, %v8721
        %v8723 = vrot.slane %v8701, %v8722
        %v8725 = vunpack.c.l.s4 1966171168
        %v8726 = vunpack.c.0.s8 %v8725
        %v8727 = vlaneseq
        %v8728 = vshrl.u32 %v8727, 7
        %v8729 = vsub.s32 %v8726, %v8728
        %v8730 = vrot.slane %v8702, %v8729
        %v8731 = vcombine.high %v8709, %v8709
        %v8732 = vcombine.high %v8716, %v8716
        %v8733 = vcombine.high %v8723, %v8723
        %v8734 = vcombine.high %v8730, %v8730
        %v8735 = vlaneseq
        %v8736 = vshrl.u32 %v8735, 7
        %v8737 = vsub.s32 0, %v8736
        %v8738 = vrot.slane %v8709, %v8737
        %v8739 = vlaneseq
        %v8740 = vshrl.u32 %v8739, 7
        %v8741 = vsub.s32 0, %v8740
        %v8742 = vrot.slane %v8723, %v8741
        %v8743 = vlaneseq
        %v8744 = vshrl.u32 %v8743, 7
        %v8745 = vsub.s32 0, %v8744
        %v8746 = vrot.slane %v8731, %v8745
        %v8747 = vlaneseq
        %v8748 = vshrl.u32 %v8747, 7
        %v8749 = vsub.s32 0, %v8748
        %v8750 = vrot.slane %v8733, %v8749
        %v8751 = vlaneseq
        %v8752 = vshrl.u32 %v8751, 7
        %v8753 = vsub.s32 0, %v8752
        %v8754 = vrot.slane %v8716, %v8753
        %v8755 = vlaneseq
        %v8756 = vshrl.u32 %v8755, 7
        %v8757 = vsub.s32 0, %v8756
        %v8758 = vrot.slane %v8730, %v8757
        %v8759 = vlaneseq
        %v8760 = vshrl.u32 %v8759, 7
        %v8761 = vsub.s32 0, %v8760
        %v8762 = vrot.slane %v8732, %v8761
        %v8763 = vlaneseq
        %v8764 = vshrl.u32 %v8763, 7
        %v8765 = vsub.s32 0, %v8764
        %v8766 = vrot.slane %v8734, %v8765
        %v8775 = vmul.f32 %v8462, %v8738
        %v8776 = vmul.f32 %v8463, %v8742
        %v8777 = vmul.f32 %v8464, %v8746
        %v8778 = vmul.f32 %v8465, %v8750
        %v8779 = vmul.f32 %v8466, %v8754
        %v8780 = vmul.f32 %v8467, %v8758
        %v8781 = vmul.f32 %v8468, %v8762
        %v8782 = vmul.f32 %v8469, %v8766
        %v8783 = vsel %vm480, %v8775, 0.0
        %8784 = vadd.xlane.f32.xlu0 %v8783
        %v8785 = vpop.xlane.xlu0 %8784
        %v8786 = vsel %vm480, %v8776, 0.0
        %8787 = vadd.xlane.f32.xlu0 %v8786
        %v8788 = vpop.xlane.xlu0 %8787
        %v8789 = vsel %vm480, %v8777, 0.0
        %8790 = vadd.xlane.f32.xlu0 %v8789
        %v8791 = vpop.xlane.xlu0 %8790
        %v8792 = vsel %vm480, %v8778, 0.0
        %8793 = vadd.xlane.f32.xlu0 %v8792
        %v8794 = vpop.xlane.xlu0 %8793
        %v8795 = vsel %vm480, %v8779, 0.0
        %8796 = vadd.xlane.f32.xlu0 %v8795
        %v8797 = vpop.xlane.xlu0 %8796
        %v8798 = vsel %vm480, %v8780, 0.0
        %8799 = vadd.xlane.f32.xlu0 %v8798
        %v8800 = vpop.xlane.xlu0 %8799
        %v8801 = vsel %vm480, %v8781, 0.0
        %8802 = vadd.xlane.f32.xlu0 %v8801
        %v8803 = vpop.xlane.xlu0 %8802
        %v8804 = vsel %vm480, %v8782, 0.0
        %8805 = vadd.xlane.f32.xlu0 %v8804
        %v8806 = vpop.xlane.xlu0 %8805
        %v8815 = vlaneseq
        %v8816 = vshrl.u32 %v8815, 7
        %v8817 = vsub.s32 %v743, %v8816
        %v8818 = vrot.slane %v8785, %v8817
        %v8819 = vlaneseq
        %v8820 = vshrl.u32 %v8819, 7
        %v8821 = vsub.s32 %v743, %v8820
        %v8822 = vrot.slane %v8788, %v8821
        %v8823 = vlaneseq
        %v8824 = vshrl.u32 %v8823, 7
        %v8825 = vsub.s32 %v743, %v8824
        %v8826 = vrot.slane %v8791, %v8825
        %v8827 = vlaneseq
        %v8828 = vshrl.u32 %v8827, 7
        %v8829 = vsub.s32 %v743, %v8828
        %v8830 = vrot.slane %v8794, %v8829
        %v8831 = vlaneseq
        %v8832 = vshrl.u32 %v8831, 7
        %v8833 = vsub.s32 %v743, %v8832
        %v8834 = vrot.slane %v8797, %v8833
        %v8835 = vlaneseq
        %v8836 = vshrl.u32 %v8835, 7
        %v8837 = vsub.s32 %v743, %v8836
        %v8838 = vrot.slane %v8800, %v8837
        %v8839 = vlaneseq
        %v8840 = vshrl.u32 %v8839, 7
        %v8841 = vsub.s32 %v743, %v8840
        %v8842 = vrot.slane %v8803, %v8841
        %v8843 = vlaneseq
        %v8844 = vshrl.u32 %v8843, 7
        %v8845 = vsub.s32 %v743, %v8844
        %v8846 = vrot.slane %v8806, %v8845
        %v8847 = vsel %vm776, %v8822, %v8818
        %v8848 = vsel %vm778, %v8826, %v8847
        %v8849 = vsel %vm780, %v8830, %v8848
        %v8850 = vsel %vm782, %v8834, %v8849
        %v8851 = vsel %vm784, %v8838, %v8850
        %v8852 = vsel %vm786, %v8842, %v8851
        %v8853 = vsel %vm788, %v8846, %v8852
        %v8855 = vsel %vm791, %v8853, -inf
        %8856 = vmax.xlane.f32.xlu0 %v8855
        %v8857 = vpop.xlane.xlu0 %8856
        %v8859 = vlaneseq
        %v8860 = vshrl.u32 %v8859, 7
        %v8861 = vsub.s32 0, %v8860
        %v8862 = vrot.slane %v8857, %v8861
        %v8863 = vlaneseq
        %v8864 = vshrl.u32 %v8863, 7
        %v8865 = vsub.s32 1, %v8864
        %v8866 = vrot.slane %v8857, %v8865
        %v8867 = vlaneseq
        %v8868 = vshrl.u32 %v8867, 7
        %v8869 = vsub.s32 2, %v8868
        %v8870 = vrot.slane %v8857, %v8869
        %v8871 = vlaneseq
        %v8872 = vshrl.u32 %v8871, 7
        %v8873 = vsub.s32 3, %v8872
        %v8874 = vrot.slane %v8857, %v8873
        %v8875 = vlaneseq
        %v8876 = vshrl.u32 %v8875, 7
        %v8877 = vsub.s32 4, %v8876
        %v8878 = vrot.slane %v8857, %v8877
        %v8879 = vlaneseq
        %v8880 = vshrl.u32 %v8879, 7
        %v8881 = vsub.s32 5, %v8880
        %v8882 = vrot.slane %v8857, %v8881
        %v8883 = vlaneseq
        %v8884 = vshrl.u32 %v8883, 7
        %v8885 = vsub.s32 6, %v8884
        %v8886 = vrot.slane %v8857, %v8885
        %v8887 = vlaneseq
        %v8888 = vshrl.u32 %v8887, 7
        %v8889 = vsub.s32 7, %v8888
        %v8890 = vrot.slane %v8857, %v8889
        %v8899 = vsub.f32 %v8785, %v8862
        %v8900 = vsub.f32 %v8788, %v8866
        %v8901 = vsub.f32 %v8791, %v8870
        %v8902 = vsub.f32 %v8794, %v8874
        %v8903 = vsub.f32 %v8797, %v8878
        %v8904 = vsub.f32 %v8800, %v8882
        %v8905 = vsub.f32 %v8803, %v8886
        %v8906 = vsub.f32 %v8806, %v8890
        %v8907 = vmul.f32 %v8899, 1.442695
        %v8908 = vpow.pop %v8907
        %v8909 = vmul.f32 %v8900, 1.442695
        %v8910 = vpow.pop %v8909
        %v8911 = vmul.f32 %v8901, 1.442695
        %v8912 = vpow.pop %v8911
        %v8913 = vmul.f32 %v8902, 1.442695
        %v8914 = vpow.pop %v8913
        %v8915 = vmul.f32 %v8903, 1.442695
        %v8916 = vpow.pop %v8915
        %v8917 = vmul.f32 %v8904, 1.442695
        %v8918 = vpow.pop %v8917
        %v8919 = vmul.f32 %v8905, 1.442695
        %v8920 = vpow.pop %v8919
        %v8921 = vmul.f32 %v8906, 1.442695
        %v8922 = vpow.pop %v8921
        %8931 = vset.pattern.permute.xlu0 0
        %8932 = vperm.xlu0 %8931, %v8908
        %v8933 = vpop.permute.xlu0 %8932
        %8934 = vset.pattern.permute.xlu0 0
        %8935 = vperm.xlu0 %8934, %v8910
        %v8936 = vpop.permute.xlu0 %8935
        %8937 = vset.pattern.permute.xlu0 0
        %8938 = vperm.xlu0 %8937, %v8912
        %v8939 = vpop.permute.xlu0 %8938
        %8940 = vset.pattern.permute.xlu0 0
        %8941 = vperm.xlu0 %8940, %v8914
        %v8942 = vpop.permute.xlu0 %8941
        %8943 = vset.pattern.permute.xlu0 0
        %8944 = vperm.xlu0 %8943, %v8916
        %v8945 = vpop.permute.xlu0 %8944
        %8946 = vset.pattern.permute.xlu0 0
        %8947 = vperm.xlu0 %8946, %v8918
        %v8948 = vpop.permute.xlu0 %8947
        %8949 = vset.pattern.permute.xlu0 0
        %8950 = vperm.xlu0 %8949, %v8920
        %v8951 = vpop.permute.xlu0 %8950
        %8952 = vset.pattern.permute.xlu0 0
        %8953 = vperm.xlu0 %8952, %v8922
        %v8954 = vpop.permute.xlu0 %8953
        %v8955 = vlaneseq
        %v8956 = vshrl.u32 %v8955, 7
        %v8957 = vsub.s32 %v743, %v8956
        %v8958 = vrot.slane %v8933, %v8957
        %v8959 = vlaneseq
        %v8960 = vshrl.u32 %v8959, 7
        %v8961 = vsub.s32 %v743, %v8960
        %v8962 = vrot.slane %v8936, %v8961
        %v8963 = vlaneseq
        %v8964 = vshrl.u32 %v8963, 7
        %v8965 = vsub.s32 %v743, %v8964
        %v8966 = vrot.slane %v8939, %v8965
        %v8967 = vlaneseq
        %v8968 = vshrl.u32 %v8967, 7
        %v8969 = vsub.s32 %v743, %v8968
        %v8970 = vrot.slane %v8942, %v8969
        %v8971 = vlaneseq
        %v8972 = vshrl.u32 %v8971, 7
        %v8973 = vsub.s32 %v743, %v8972
        %v8974 = vrot.slane %v8945, %v8973
        %v8975 = vlaneseq
        %v8976 = vshrl.u32 %v8975, 7
        %v8977 = vsub.s32 %v743, %v8976
        %v8978 = vrot.slane %v8948, %v8977
        %v8979 = vlaneseq
        %v8980 = vshrl.u32 %v8979, 7
        %v8981 = vsub.s32 %v743, %v8980
        %v8982 = vrot.slane %v8951, %v8981
        %v8983 = vlaneseq
        %v8984 = vshrl.u32 %v8983, 7
        %v8985 = vsub.s32 %v743, %v8984
        %v8986 = vrot.slane %v8954, %v8985
        %v8987 = vsel %vm776, %v8962, %v8958
        %v8988 = vsel %vm778, %v8966, %v8987
        %v8989 = vsel %vm780, %v8970, %v8988
        %v8990 = vsel %vm782, %v8974, %v8989
        %v8991 = vsel %vm784, %v8978, %v8990
        %v8992 = vsel %vm786, %v8982, %v8991
        %v8993 = vsel %vm788, %v8986, %v8992
        %v8995 = vsel %vm791, %v8993, 0.0
        %8996 = vadd.xlane.f32.xlu0 %v8995
        %v8997 = vpop.xlane.xlu0 %8996
        %v8998 = vrcp.pop %v8997
        %v9000 = vlaneseq
        %v9001 = vshrl.u32 %v9000, 7
        %v9002 = vsub.s32 0, %v9001
        %v9003 = vrot.slane %v8998, %v9002
        %v9004 = vlaneseq
        %v9005 = vshrl.u32 %v9004, 7
        %v9006 = vsub.s32 1, %v9005
        %v9007 = vrot.slane %v8998, %v9006
        %v9008 = vlaneseq
        %v9009 = vshrl.u32 %v9008, 7
        %v9010 = vsub.s32 2, %v9009
        %v9011 = vrot.slane %v8998, %v9010
        %v9012 = vlaneseq
        %v9013 = vshrl.u32 %v9012, 7
        %v9014 = vsub.s32 3, %v9013
        %v9015 = vrot.slane %v8998, %v9014
        %v9016 = vlaneseq
        %v9017 = vshrl.u32 %v9016, 7
        %v9018 = vsub.s32 4, %v9017
        %v9019 = vrot.slane %v8998, %v9018
        %v9020 = vlaneseq
        %v9021 = vshrl.u32 %v9020, 7
        %v9022 = vsub.s32 5, %v9021
        %v9023 = vrot.slane %v8998, %v9022
        %v9024 = vlaneseq
        %v9025 = vshrl.u32 %v9024, 7
        %v9026 = vsub.s32 6, %v9025
        %v9027 = vrot.slane %v8998, %v9026
        %v9028 = vlaneseq
        %v9029 = vshrl.u32 %v9028, 7
        %v9030 = vsub.s32 7, %v9029
        %v9031 = vrot.slane %v8998, %v9030
        %v9040 = vmul.f32 %v8908, %v9003
        %v9041 = vmul.f32 %v8910, %v9007
        %v9042 = vmul.f32 %v8912, %v9011
        %v9043 = vmul.f32 %v8914, %v9015
        %v9044 = vmul.f32 %v8916, %v9019
        %v9045 = vmul.f32 %v8918, %v9023
        %v9046 = vmul.f32 %v8920, %v9027
        %v9047 = vmul.f32 %v8922, %v9031
        %9048 = vrot.lane.b32.xlu0 %v8738, 112
        %v9049 = vpop.permute.xlu0 %9048
        %9050 = vrot.lane.b32.xlu0 %v8742, 112
        %v9051 = vpop.permute.xlu0 %9050
        %9052 = vrot.lane.b32.xlu0 %v8746, 112
        %v9053 = vpop.permute.xlu0 %9052
        %9054 = vrot.lane.b32.xlu0 %v8750, 112
        %v9055 = vpop.permute.xlu0 %9054
        %9056 = vrot.lane.b32.xlu0 %v8754, 112
        %v9057 = vpop.permute.xlu0 %9056
        %9058 = vrot.lane.b32.xlu0 %v8758, 112
        %v9059 = vpop.permute.xlu0 %9058
        %9060 = vrot.lane.b32.xlu0 %v8762, 112
        %v9061 = vpop.permute.xlu0 %9060
        %9062 = vrot.lane.b32.xlu0 %v8766, 112
        %v9063 = vpop.permute.xlu0 %9062
        %v9072 = vmul.f32 %v8462, %v9049
        %v9073 = vmul.f32 %v8463, %v9051
        %v9074 = vmul.f32 %v8464, %v9053
        %v9075 = vmul.f32 %v8465, %v9055
        %v9076 = vmul.f32 %v8466, %v9057
        %v9077 = vmul.f32 %v8467, %v9059
        %v9078 = vmul.f32 %v8468, %v9061
        %v9079 = vmul.f32 %v8469, %v9063
        %v9080 = vsel %vm480, %v9072, 0.0
        %9081 = vadd.xlane.f32.xlu0 %v9080
        %v9082 = vpop.xlane.xlu0 %9081
        %v9083 = vsel %vm480, %v9073, 0.0
        %9084 = vadd.xlane.f32.xlu0 %v9083
        %v9085 = vpop.xlane.xlu0 %9084
        %v9086 = vsel %vm480, %v9074, 0.0
        %9087 = vadd.xlane.f32.xlu0 %v9086
        %v9088 = vpop.xlane.xlu0 %9087
        %v9089 = vsel %vm480, %v9075, 0.0
        %9090 = vadd.xlane.f32.xlu0 %v9089
        %v9091 = vpop.xlane.xlu0 %9090
        %v9092 = vsel %vm480, %v9076, 0.0
        %9093 = vadd.xlane.f32.xlu0 %v9092
        %v9094 = vpop.xlane.xlu0 %9093
        %v9095 = vsel %vm480, %v9077, 0.0
        %9096 = vadd.xlane.f32.xlu0 %v9095
        %v9097 = vpop.xlane.xlu0 %9096
        %v9098 = vsel %vm480, %v9078, 0.0
        %9099 = vadd.xlane.f32.xlu0 %v9098
        %v9100 = vpop.xlane.xlu0 %9099
        %v9101 = vsel %vm480, %v9079, 0.0
        %9102 = vadd.xlane.f32.xlu0 %v9101
        %v9103 = vpop.xlane.xlu0 %9102
        %v9112 = vlaneseq
        %v9113 = vshrl.u32 %v9112, 7
        %v9114 = vsub.s32 %v743, %v9113
        %v9115 = vrot.slane %v9082, %v9114
        %v9116 = vlaneseq
        %v9117 = vshrl.u32 %v9116, 7
        %v9118 = vsub.s32 %v743, %v9117
        %v9119 = vrot.slane %v9085, %v9118
        %v9120 = vlaneseq
        %v9121 = vshrl.u32 %v9120, 7
        %v9122 = vsub.s32 %v743, %v9121
        %v9123 = vrot.slane %v9088, %v9122
        %v9124 = vlaneseq
        %v9125 = vshrl.u32 %v9124, 7
        %v9126 = vsub.s32 %v743, %v9125
        %v9127 = vrot.slane %v9091, %v9126
        %v9128 = vlaneseq
        %v9129 = vshrl.u32 %v9128, 7
        %v9130 = vsub.s32 %v743, %v9129
        %v9131 = vrot.slane %v9094, %v9130
        %v9132 = vlaneseq
        %v9133 = vshrl.u32 %v9132, 7
        %v9134 = vsub.s32 %v743, %v9133
        %v9135 = vrot.slane %v9097, %v9134
        %v9136 = vlaneseq
        %v9137 = vshrl.u32 %v9136, 7
        %v9138 = vsub.s32 %v743, %v9137
        %v9139 = vrot.slane %v9100, %v9138
        %v9140 = vlaneseq
        %v9141 = vshrl.u32 %v9140, 7
        %v9142 = vsub.s32 %v743, %v9141
        %v9143 = vrot.slane %v9103, %v9142
        %v9144 = vsel %vm776, %v9119, %v9115
        %v9145 = vsel %vm778, %v9123, %v9144
        %v9146 = vsel %vm780, %v9127, %v9145
        %v9147 = vsel %vm782, %v9131, %v9146
        %v9148 = vsel %vm784, %v9135, %v9147
        %v9149 = vsel %vm786, %v9139, %v9148
        %v9150 = vsel %vm788, %v9143, %v9149
        %v9152 = vsel %vm791, %v9150, -inf
        %9153 = vmax.xlane.f32.xlu0 %v9152
        %v9154 = vpop.xlane.xlu0 %9153
        %v9156 = vlaneseq
        %v9157 = vshrl.u32 %v9156, 7
        %v9158 = vsub.s32 0, %v9157
        %v9159 = vrot.slane %v9154, %v9158
        %v9160 = vlaneseq
        %v9161 = vshrl.u32 %v9160, 7
        %v9162 = vsub.s32 1, %v9161
        %v9163 = vrot.slane %v9154, %v9162
        %v9164 = vlaneseq
        %v9165 = vshrl.u32 %v9164, 7
        %v9166 = vsub.s32 2, %v9165
        %v9167 = vrot.slane %v9154, %v9166
        %v9168 = vlaneseq
        %v9169 = vshrl.u32 %v9168, 7
        %v9170 = vsub.s32 3, %v9169
        %v9171 = vrot.slane %v9154, %v9170
        %v9172 = vlaneseq
        %v9173 = vshrl.u32 %v9172, 7
        %v9174 = vsub.s32 4, %v9173
        %v9175 = vrot.slane %v9154, %v9174
        %v9176 = vlaneseq
        %v9177 = vshrl.u32 %v9176, 7
        %v9178 = vsub.s32 5, %v9177
        %v9179 = vrot.slane %v9154, %v9178
        %v9180 = vlaneseq
        %v9181 = vshrl.u32 %v9180, 7
        %v9182 = vsub.s32 6, %v9181
        %v9183 = vrot.slane %v9154, %v9182
        %v9184 = vlaneseq
        %v9185 = vshrl.u32 %v9184, 7
        %v9186 = vsub.s32 7, %v9185
        %v9187 = vrot.slane %v9154, %v9186
        %v9196 = vsub.f32 %v9082, %v9159
        %v9197 = vsub.f32 %v9085, %v9163
        %v9198 = vsub.f32 %v9088, %v9167
        %v9199 = vsub.f32 %v9091, %v9171
        %v9200 = vsub.f32 %v9094, %v9175
        %v9201 = vsub.f32 %v9097, %v9179
        %v9202 = vsub.f32 %v9100, %v9183
        %v9203 = vsub.f32 %v9103, %v9187
        %v9204 = vmul.f32 %v9196, 1.442695
        %v9205 = vpow.pop %v9204
        %v9206 = vmul.f32 %v9197, 1.442695
        %v9207 = vpow.pop %v9206
        %v9208 = vmul.f32 %v9198, 1.442695
        %v9209 = vpow.pop %v9208
        %v9210 = vmul.f32 %v9199, 1.442695
        %v9211 = vpow.pop %v9210
        %v9212 = vmul.f32 %v9200, 1.442695
        %v9213 = vpow.pop %v9212
        %v9214 = vmul.f32 %v9201, 1.442695
        %v9215 = vpow.pop %v9214
        %v9216 = vmul.f32 %v9202, 1.442695
        %v9217 = vpow.pop %v9216
        %v9218 = vmul.f32 %v9203, 1.442695
        %v9219 = vpow.pop %v9218
        %9228 = vset.pattern.permute.xlu0 0
        %9229 = vperm.xlu0 %9228, %v9205
        %v9230 = vpop.permute.xlu0 %9229
        %9231 = vset.pattern.permute.xlu0 0
        %9232 = vperm.xlu0 %9231, %v9207
        %v9233 = vpop.permute.xlu0 %9232
        %9234 = vset.pattern.permute.xlu0 0
        %9235 = vperm.xlu0 %9234, %v9209
        %v9236 = vpop.permute.xlu0 %9235
        %9237 = vset.pattern.permute.xlu0 0
        %9238 = vperm.xlu0 %9237, %v9211
        %v9239 = vpop.permute.xlu0 %9238
        %9240 = vset.pattern.permute.xlu0 0
        %9241 = vperm.xlu0 %9240, %v9213
        %v9242 = vpop.permute.xlu0 %9241
        %9243 = vset.pattern.permute.xlu0 0
        %9244 = vperm.xlu0 %9243, %v9215
        %v9245 = vpop.permute.xlu0 %9244
        %9246 = vset.pattern.permute.xlu0 0
        %9247 = vperm.xlu0 %9246, %v9217
        %v9248 = vpop.permute.xlu0 %9247
        %9249 = vset.pattern.permute.xlu0 0
        %9250 = vperm.xlu0 %9249, %v9219
        %v9251 = vpop.permute.xlu0 %9250
        %v9252 = vlaneseq
        %v9253 = vshrl.u32 %v9252, 7
        %v9254 = vsub.s32 %v743, %v9253
        %v9255 = vrot.slane %v9230, %v9254
        %v9256 = vlaneseq
        %v9257 = vshrl.u32 %v9256, 7
        %v9258 = vsub.s32 %v743, %v9257
        %v9259 = vrot.slane %v9233, %v9258
        %v9260 = vlaneseq
        %v9261 = vshrl.u32 %v9260, 7
        %v9262 = vsub.s32 %v743, %v9261
        %v9263 = vrot.slane %v9236, %v9262
        %v9264 = vlaneseq
        %v9265 = vshrl.u32 %v9264, 7
        %v9266 = vsub.s32 %v743, %v9265
        %v9267 = vrot.slane %v9239, %v9266
        %v9268 = vlaneseq
        %v9269 = vshrl.u32 %v9268, 7
        %v9270 = vsub.s32 %v743, %v9269
        %v9271 = vrot.slane %v9242, %v9270
        %v9272 = vlaneseq
        %v9273 = vshrl.u32 %v9272, 7
        %v9274 = vsub.s32 %v743, %v9273
        %v9275 = vrot.slane %v9245, %v9274
        %v9276 = vlaneseq
        %v9277 = vshrl.u32 %v9276, 7
        %v9278 = vsub.s32 %v743, %v9277
        %v9279 = vrot.slane %v9248, %v9278
        %v9280 = vlaneseq
        %v9281 = vshrl.u32 %v9280, 7
        %v9282 = vsub.s32 %v743, %v9281
        %v9283 = vrot.slane %v9251, %v9282
        %v9284 = vsel %vm776, %v9259, %v9255
        %v9285 = vsel %vm778, %v9263, %v9284
        %v9286 = vsel %vm780, %v9267, %v9285
        %v9287 = vsel %vm782, %v9271, %v9286
        %v9288 = vsel %vm784, %v9275, %v9287
        %v9289 = vsel %vm786, %v9279, %v9288
        %v9290 = vsel %vm788, %v9283, %v9289
        %v9292 = vsel %vm791, %v9290, 0.0
        %9293 = vadd.xlane.f32.xlu0 %v9292
        %v9294 = vpop.xlane.xlu0 %9293
        %v9295 = vrcp.pop %v9294
        %v9297 = vlaneseq
        %v9298 = vshrl.u32 %v9297, 7
        %v9299 = vsub.s32 0, %v9298
        %v9300 = vrot.slane %v9295, %v9299
        %v9301 = vlaneseq
        %v9302 = vshrl.u32 %v9301, 7
        %v9303 = vsub.s32 1, %v9302
        %v9304 = vrot.slane %v9295, %v9303
        %v9305 = vlaneseq
        %v9306 = vshrl.u32 %v9305, 7
        %v9307 = vsub.s32 2, %v9306
        %v9308 = vrot.slane %v9295, %v9307
        %v9309 = vlaneseq
        %v9310 = vshrl.u32 %v9309, 7
        %v9311 = vsub.s32 3, %v9310
        %v9312 = vrot.slane %v9295, %v9311
        %v9313 = vlaneseq
        %v9314 = vshrl.u32 %v9313, 7
        %v9315 = vsub.s32 4, %v9314
        %v9316 = vrot.slane %v9295, %v9315
        %v9317 = vlaneseq
        %v9318 = vshrl.u32 %v9317, 7
        %v9319 = vsub.s32 5, %v9318
        %v9320 = vrot.slane %v9295, %v9319
        %v9321 = vlaneseq
        %v9322 = vshrl.u32 %v9321, 7
        %v9323 = vsub.s32 6, %v9322
        %v9324 = vrot.slane %v9295, %v9323
        %v9325 = vlaneseq
        %v9326 = vshrl.u32 %v9325, 7
        %v9327 = vsub.s32 7, %v9326
        %v9328 = vrot.slane %v9295, %v9327
        %v9337 = vmul.f32 %v9205, %v9300
        %v9338 = vmul.f32 %v9207, %v9304
        %v9339 = vmul.f32 %v9209, %v9308
        %v9340 = vmul.f32 %v9211, %v9312
        %v9341 = vmul.f32 %v9213, %v9316
        %v9342 = vmul.f32 %v9215, %v9320
        %v9343 = vmul.f32 %v9217, %v9324
        %v9344 = vmul.f32 %v9219, %v9328
        %9346 = vset.pattern.permute.xlu0 0
        %9347 = vperm.xlu0 %9346, %v9040
        %v9348 = vpop.permute.xlu0 %9347
        %9351 = vset.pattern.permute.xlu0 0
        %9352 = vperm.xlu0 %9351, %v9041
        %v9353 = vpop.permute.xlu0 %9352
        %9356 = vset.pattern.permute.xlu0 0
        %9357 = vperm.xlu0 %9356, %v9042
        %v9358 = vpop.permute.xlu0 %9357
        %9361 = vset.pattern.permute.xlu0 0
        %9362 = vperm.xlu0 %9361, %v9043
        %v9363 = vpop.permute.xlu0 %9362
        %9366 = vset.pattern.permute.xlu0 0
        %9367 = vperm.xlu0 %9366, %v9044
        %v9368 = vpop.permute.xlu0 %9367
        %9371 = vset.pattern.permute.xlu0 0
        %9372 = vperm.xlu0 %9371, %v9045
        %v9373 = vpop.permute.xlu0 %9372
        %9376 = vset.pattern.permute.xlu0 0
        %9377 = vperm.xlu0 %9376, %v9046
        %v9378 = vpop.permute.xlu0 %9377
        %9381 = vset.pattern.permute.xlu0 0
        %9382 = vperm.xlu0 %9381, %v9047
        %v9383 = vpop.permute.xlu0 %9382
        %v9385 = vmul.f32 %v9348, %v8462
        %v9386 = vmul.f32 %v9353, %v8463
        %v9387 = vmul.f32 %v9358, %v8464
        %v9388 = vmul.f32 %v9363, %v8465
        %v9389 = vmul.f32 %v9368, %v8466
        %v9390 = vmul.f32 %v9373, %v8467
        %v9391 = vmul.f32 %v9378, %v8468
        %v9392 = vmul.f32 %v9383, %v8469
        %v9393 = vsel %vm480, %v9385, 0.0
        %v9394 = vrot.slane %v9393, 4
        %v9395 = vadd.f32 %v9393, %v9394
        %v9396 = vrot.slane %v9395, 2
        %v9397 = vadd.f32 %v9395, %v9396
        %v9398 = vrot.slane %v9397, 1
        %v9399 = vadd.f32 %v9397, %v9398
        %v9400 = vsel %vm480, %v9386, 0.0
        %v9401 = vrot.slane %v9400, 4
        %v9402 = vadd.f32 %v9400, %v9401
        %v9403 = vrot.slane %v9402, 2
        %v9404 = vadd.f32 %v9402, %v9403
        %v9405 = vrot.slane %v9404, 1
        %v9406 = vadd.f32 %v9404, %v9405
        %v9407 = vsel %vm480, %v9387, 0.0
        %v9408 = vrot.slane %v9407, 4
        %v9409 = vadd.f32 %v9407, %v9408
        %v9410 = vrot.slane %v9409, 2
        %v9411 = vadd.f32 %v9409, %v9410
        %v9412 = vrot.slane %v9411, 1
        %v9413 = vadd.f32 %v9411, %v9412
        %v9414 = vsel %vm480, %v9388, 0.0
        %v9415 = vrot.slane %v9414, 4
        %v9416 = vadd.f32 %v9414, %v9415
        %v9417 = vrot.slane %v9416, 2
        %v9418 = vadd.f32 %v9416, %v9417
        %v9419 = vrot.slane %v9418, 1
        %v9420 = vadd.f32 %v9418, %v9419
        %v9421 = vsel %vm480, %v9389, 0.0
        %v9422 = vrot.slane %v9421, 4
        %v9423 = vadd.f32 %v9421, %v9422
        %v9424 = vrot.slane %v9423, 2
        %v9425 = vadd.f32 %v9423, %v9424
        %v9426 = vrot.slane %v9425, 1
        %v9427 = vadd.f32 %v9425, %v9426
        %v9428 = vsel %vm480, %v9390, 0.0
        %v9429 = vrot.slane %v9428, 4
        %v9430 = vadd.f32 %v9428, %v9429
        %v9431 = vrot.slane %v9430, 2
        %v9432 = vadd.f32 %v9430, %v9431
        %v9433 = vrot.slane %v9432, 1
        %v9434 = vadd.f32 %v9432, %v9433
        %v9435 = vsel %vm480, %v9391, 0.0
        %v9436 = vrot.slane %v9435, 4
        %v9437 = vadd.f32 %v9435, %v9436
        %v9438 = vrot.slane %v9437, 2
        %v9439 = vadd.f32 %v9437, %v9438
        %v9440 = vrot.slane %v9439, 1
        %v9441 = vadd.f32 %v9439, %v9440
        %v9442 = vsel %vm480, %v9392, 0.0
        %v9443 = vrot.slane %v9442, 4
        %v9444 = vadd.f32 %v9442, %v9443
        %v9445 = vrot.slane %v9444, 2
        %v9446 = vadd.f32 %v9444, %v9445
        %v9447 = vrot.slane %v9446, 1
        %v9448 = vadd.f32 %v9446, %v9447
        %v9450 = vcombine.high %v8496, %v8496
        %v9452 = vunpack.c.l.s4 1966171168
        %v9453 = vunpack.c.0.s8 %v9452
        %v9454 = vlaneseq
        %v9455 = vshrl.u32 %v9454, 7
        %v9456 = vsub.s32 %v9453, %v9455
        %v9457 = vrot.slane %v8496, %v9456
        %v9459 = vunpack.c.l.s4 1966171168
        %v9460 = vunpack.c.0.s8 %v9459
        %v9461 = vlaneseq
        %v9462 = vshrl.u32 %v9461, 7
        %v9463 = vsub.s32 %v9460, %v9462
        %v9464 = vrot.slane %v9450, %v9463
        %v9465 = vcombine.high %v9457, %v9457
        %v9466 = vcombine.high %v9464, %v9464
        %v9468 = vunpack.c.l.s4 1966171168
        %v9469 = vunpack.c.0.s8 %v9468
        %v9470 = vlaneseq
        %v9471 = vshrl.u32 %v9470, 7
        %v9472 = vsub.s32 %v9469, %v9471
        %v9473 = vrot.slane %v9457, %v9472
        %v9475 = vunpack.c.l.s4 1966171168
        %v9476 = vunpack.c.0.s8 %v9475
        %v9477 = vlaneseq
        %v9478 = vshrl.u32 %v9477, 7
        %v9479 = vsub.s32 %v9476, %v9478
        %v9480 = vrot.slane %v9464, %v9479
        %v9482 = vunpack.c.l.s4 1966171168
        %v9483 = vunpack.c.0.s8 %v9482
        %v9484 = vlaneseq
        %v9485 = vshrl.u32 %v9484, 7
        %v9486 = vsub.s32 %v9483, %v9485
        %v9487 = vrot.slane %v9465, %v9486
        %v9489 = vunpack.c.l.s4 1966171168
        %v9490 = vunpack.c.0.s8 %v9489
        %v9491 = vlaneseq
        %v9492 = vshrl.u32 %v9491, 7
        %v9493 = vsub.s32 %v9490, %v9492
        %v9494 = vrot.slane %v9466, %v9493
        %v9495 = vcombine.high %v9473, %v9473
        %v9496 = vcombine.high %v9480, %v9480
        %v9497 = vcombine.high %v9487, %v9487
        %v9498 = vcombine.high %v9494, %v9494
        %9500 = vset.pattern.permute.xlu0 0
        %9501 = vperm.xlu0 %9500, %v9337
        %v9502 = vpop.permute.xlu0 %9501
        %9505 = vset.pattern.permute.xlu0 0
        %9506 = vperm.xlu0 %9505, %v9338
        %v9507 = vpop.permute.xlu0 %9506
        %9510 = vset.pattern.permute.xlu0 0
        %9511 = vperm.xlu0 %9510, %v9339
        %v9512 = vpop.permute.xlu0 %9511
        %9515 = vset.pattern.permute.xlu0 0
        %9516 = vperm.xlu0 %9515, %v9340
        %v9517 = vpop.permute.xlu0 %9516
        %9520 = vset.pattern.permute.xlu0 0
        %9521 = vperm.xlu0 %9520, %v9341
        %v9522 = vpop.permute.xlu0 %9521
        %9525 = vset.pattern.permute.xlu0 0
        %9526 = vperm.xlu0 %9525, %v9342
        %v9527 = vpop.permute.xlu0 %9526
        %9530 = vset.pattern.permute.xlu0 0
        %9531 = vperm.xlu0 %9530, %v9343
        %v9532 = vpop.permute.xlu0 %9531
        %9535 = vset.pattern.permute.xlu0 0
        %9536 = vperm.xlu0 %9535, %v9344
        %v9537 = vpop.permute.xlu0 %9536
        %v9539 = vlaneseq
        %v9540 = vshrl.u32 %v9539, 7
        %v9541 = vsub.s32 0, %v9540
        %v9542 = vrot.slane %v9473, %v9541
        %v9543 = vlaneseq
        %v9544 = vshrl.u32 %v9543, 7
        %v9545 = vsub.s32 0, %v9544
        %v9546 = vrot.slane %v9487, %v9545
        %v9547 = vlaneseq
        %v9548 = vshrl.u32 %v9547, 7
        %v9549 = vsub.s32 0, %v9548
        %v9550 = vrot.slane %v9495, %v9549
        %v9551 = vlaneseq
        %v9552 = vshrl.u32 %v9551, 7
        %v9553 = vsub.s32 0, %v9552
        %v9554 = vrot.slane %v9497, %v9553
        %v9555 = vlaneseq
        %v9556 = vshrl.u32 %v9555, 7
        %v9557 = vsub.s32 0, %v9556
        %v9558 = vrot.slane %v9480, %v9557
        %v9559 = vlaneseq
        %v9560 = vshrl.u32 %v9559, 7
        %v9561 = vsub.s32 0, %v9560
        %v9562 = vrot.slane %v9494, %v9561
        %v9563 = vlaneseq
        %v9564 = vshrl.u32 %v9563, 7
        %v9565 = vsub.s32 0, %v9564
        %v9566 = vrot.slane %v9496, %v9565
        %v9567 = vlaneseq
        %v9568 = vshrl.u32 %v9567, 7
        %v9569 = vsub.s32 0, %v9568
        %v9570 = vrot.slane %v9498, %v9569
        %v9579 = vmul.f32 %v9502, %v9542
        %v9580 = vmul.f32 %v9507, %v9546
        %v9581 = vmul.f32 %v9512, %v9550
        %v9582 = vmul.f32 %v9517, %v9554
        %v9583 = vmul.f32 %v9522, %v9558
        %v9584 = vmul.f32 %v9527, %v9562
        %v9585 = vmul.f32 %v9532, %v9566
        %v9586 = vmul.f32 %v9537, %v9570
        %9595 = vrot.lane.b32.xlu0 %v9579, 16
        %v9596 = vpop.permute.xlu0 %9595
        %9597 = vrot.lane.b32.xlu0 %v9580, 16
        %v9598 = vpop.permute.xlu0 %9597
        %9599 = vrot.lane.b32.xlu0 %v9581, 16
        %v9600 = vpop.permute.xlu0 %9599
        %9601 = vrot.lane.b32.xlu0 %v9582, 16
        %v9602 = vpop.permute.xlu0 %9601
        %9603 = vrot.lane.b32.xlu0 %v9583, 16
        %v9604 = vpop.permute.xlu0 %9603
        %9605 = vrot.lane.b32.xlu0 %v9584, 16
        %v9606 = vpop.permute.xlu0 %9605
        %9607 = vrot.lane.b32.xlu0 %v9585, 16
        %v9608 = vpop.permute.xlu0 %9607
        %9609 = vrot.lane.b32.xlu0 %v9586, 16
        %v9610 = vpop.permute.xlu0 %9609
        %v9619 = vadd.f32 %v8462, %v9596
        %v9620 = vadd.f32 %v8463, %v9598
        %v9621 = vadd.f32 %v8464, %v9600
        %v9622 = vadd.f32 %v8465, %v9602
        %v9623 = vadd.f32 %v8466, %v9604
        %v9624 = vadd.f32 %v8467, %v9606
        %v9625 = vadd.f32 %v8468, %v9608
        %v9626 = vadd.f32 %v8469, %v9610
        %9627 = vst.msk [vmem:[%s368 + $0x8] sm:$0xff] %vm5002, %v8637
        %v9636 = vsel %vm776, %v9406, %v9399
        %v9637 = vsel %vm778, %v9413, %v9636
        %v9638 = vsel %vm780, %v9420, %v9637
        %v9639 = vsel %vm782, %v9427, %v9638
        %v9640 = vsel %vm784, %v9434, %v9639
        %v9641 = vsel %vm786, %v9441, %v9640
        %v9642 = vsel %vm788, %v9448, %v9641
        %9643 = vrot.lane.b32.xlu0 %v9642, 112
        %v9644 = vpop.permute.xlu0 %9643
        %vm9646 = vcmask 1048448
        %9647 = vst.msk [vmem:[%s368 + $0x10] sm:$0xff] %vm9646, %v9644
        %9649 = vrot.lane.b32.xlu0 %v8637, 32
        %v9650 = vpop.permute.xlu0 %9649
        %9652 = vst.msk [vmem:[#allocation2] sm:$0xff] %vm428, %v9650
        %9654 = vst.msk [vmem:[#allocation3] sm:$0xff] %vm480, %v9642
        %9656 = vrot.lane.b32.xlu0 %v8631, 96
        %v9657 = vpop.permute.xlu0 %9656
        %9659 = vst.msk [vmem:[#allocation4] sm:$0xff] %vm428, %v9657
        %9660 = vst.msk [vmem:[#allocation5] sm:$0xff] %vm480, %v9619
        %9661 = vst.msk [vmem:[#allocation5 + $0x8] sm:$0xff] %vm480, %v9620
        %9662 = vst.msk [vmem:[#allocation5 + $0x10] sm:$0xff] %vm480, %v9621
        %9663 = vst.msk [vmem:[#allocation5 + $0x18] sm:$0xff] %vm480, %v9622
        %9664 = vst.msk [vmem:[#allocation5 + $0x20] sm:$0xff] %vm480, %v9623
        %9665 = vst.msk [vmem:[#allocation5 + $0x28] sm:$0xff] %vm480, %v9624
        %9666 = vst.msk [vmem:[#allocation5 + $0x30] sm:$0xff] %vm480, %v9625
        %9667 = vst.msk [vmem:[#allocation5 + $0x38] sm:$0xff] %vm480, %v9626
        %s9668 = sand.u32 %s202, 1
        %s9669 = scalar_lea.sflag [#allocation8], %s9668
        %s9670 = sand.u32 %s202, 1
        %s9671 = smul.addr %s9670, 24
        %s9672 = scalar_lea.vmem [#allocation15], %s9671
        // Predicated region
        $region73: #{tpu_custom_call.1} parent=47 // pred_check
          %p9673 = pneg %p212
        $region74: #{tpu_custom_call.1} parent=47 // pred_check_branch
          %9675 = sbr.rel (%p9673) target = $region76
        $region75: #{tpu_custom_call.1} parent=47 // pred_region
          %s9676 = smul.u32 3, %s31
          %s9678 = ssub.s32 384, 384
          %9679 = vsyncadd %s9669, %s9678
          %s9680 = smul.addr %s30, 6
          %s9681 = sadd.s32 %s9676, %s9680
          %s9682 = smul.addr %s9681, 128
          %s9683 = scalar_lea.hbm %s7, %s9682
          %s9685 = sshll.u32 %s9672, 4
          %s9686 = int_to_ptr.vmem [resolvable:$true] %s9685
          %9688 = dma.vmem_to_hbm [thread:$0]  %s9686, 384, %s9683, %s9669
        $region76: #{tpu_custom_call.1} parent=47 // pred_fallthru
          _
      $region48: #{tpu_custom_call.1} parent=5 // pred_fallthru
        _
      %p9689 = scmp.le.s32.totalorder 2, %s21
      // Predicated region
      $region77: #{tpu_custom_call.1} parent=5 // pred_check
        %p9690 = pneg %p9689
      $region78: #{tpu_custom_call.1} parent=5 // pred_check_branch
        %9692 = sbr.rel (%p9690) target = $region80
      $region79: #{tpu_custom_call.1} parent=5 // pred_region
        %s9693 = ssub.s32 %s21, 2
        // Predicated region
        $region81: #{tpu_custom_call.1} parent=79 // pred_check
          %p9694 = pneg %p218
        $region82: #{tpu_custom_call.1} parent=79 // pred_check_branch
          %9696 = sbr.rel (%p9694) target = $region84
        $region83: #{tpu_custom_call.1} parent=79 // pred_region
          %s9697 = sand.u32 %s203, 1
          %s9698 = scalar_lea.sflag [#allocation8], %s9697
          %s9699 = sand.u32 %s203, 1
          %s9700 = smul.addr %s9699, 24
          %s9701 = scalar_lea.vmem [#allocation15], %s9700
          %9702 = dma.done %s9698, 384
        $region84: #{tpu_custom_call.1} parent=79 // pred_fallthru
          _
      $region80: #{tpu_custom_call.1} parent=5 // pred_fallthru
        _
    $region6: #{tpu_custom_call.1} parent=1 // loop_footer
      %s25 = sadd.s32 1, %s21
    $region7: #{tpu_custom_call.1} parent=1 // loop_footer_branch
      %20 = sbr.rel target = $region3
    $region8: #{tpu_custom_call.1} parent=1 // loop_exit
      _
    %9703 = vsyncpa [#allocation7], 1
    %s9704 = scalar_lea.sflag [#allocation7], 1
    %9705 = vsyncpa %s9704, 1
    %9706 = vsyncpa [#allocation10], 1
    %9707 = vsyncpa [#allocation13], 1
    %9708 = vsyncpa [#allocation8], 1
    %s9709 = scalar_lea.sflag [#allocation8], 1
    %9710 = vsyncpa %s9709, 1

</llo_original>
